<compile_context>
chip_gen: v5e
topology: v5e:2x2
jax: 0.10.0
libtpu: 0.0.40
codegen_flags: <defaults>
</compile_context>

<pallas_src>
import math
import functools

import jax
import jax.numpy as jnp
from jax.experimental import pallas as pl
from jax.experimental.pallas import tpu as pltpu

LN_EPS = 1e-6
RMS_EPS = 1e-5


# --------------------------------------------------------------------------
# Stage 1: LayerNorm1 (no affine) + modulate + QKV + per-head RMSNorm.
# Outputs q, k, v in (B, H, N, D) bf16; 1/sqrt(D) folded into q.
# --------------------------------------------------------------------------
def _qkv_kernel(x_ref, shift_ref, scale_ref,
                w_qkv_ref, b_qkv_ref, pool_ref, expand_ref, qw_ref, kw_ref,
                q_out, k_out, v_out):
    x = x_ref[0]                      # (TN, C) f32
    C = x.shape[-1]
    H = pool_ref.shape[1]
    D = C // H

    # LayerNorm (no affine) + adaLN modulate, in f32.
    mu = jnp.mean(x, axis=-1, keepdims=True)
    var = jnp.mean((x - mu) ** 2, axis=-1, keepdims=True)
    h = (x - mu) * jax.lax.rsqrt(var + LN_EPS)
    h = h * (1.0 + scale_ref[0]) + shift_ref[0]                    # (TN, C)

    # Fused QKV projection: bf16 operands, f32 accumulation.
    qkv = jnp.dot(h.astype(jnp.bfloat16), w_qkv_ref[...],
                  preferred_element_type=jnp.float32) + b_qkv_ref[...]   # (TN, 3C)

    # Lane-aligned slabs (offsets 0 / C / 2C are 128-aligned when C % 128 == 0).
    q = qkv[:, :C]
    k = qkv[:, C:2 * C]
    v = qkv[:, 2 * C:]

    # Per-head RMSNorm statistics on the MXU, fully lane-dense:
    #   mean-square per head via a (C, H) block-diagonal pooling matmul,
    #   rsqrt, then broadcast back to (TN, C) via a 0/1 (H, C) expand matmul.
    # (Replaces H lane-misaligned slices + H XLU reductions per tile.)
    def inv_rms(z):
        ms = jnp.dot(z * z, pool_ref[...],
                     preferred_element_type=jnp.float32)           # (TN, H)
        return jnp.dot(jax.lax.rsqrt(ms + RMS_EPS), expand_ref[...],
                       preferred_element_type=jnp.float32)         # (TN, C)

    qn = (q * inv_rms(q) * qw_ref[...]).astype(jnp.bfloat16)   # qw folds 1/sqrt(D)
    kn = (k * inv_rms(k) * kw_ref[...]).astype(jnp.bfloat16)
    vb = v.astype(jnp.bfloat16)

    # TODO(synk): the (B, H, N, D) layout with D < 128 keeps lane-masked stores
    # here; it is kept deliberately so the stage-2 hot loop stays relayout-free
    # (a (B, N, C) intermediate would force a per-kv-step head split instead).
    for hd in range(H):
        sl = slice(hd * D, (hd + 1) * D)
        q_out[0, hd] = qn[:, sl]
        k_out[0, hd] = kn[:, sl]
        v_out[0, hd] = vb[:, sl]


# --------------------------------------------------------------------------
# Stage 2: flash attention (online softmax over kv grid axis), fused output
# projection (single K=C matmul) + gated residual.
# Grid: (B, N//TQ, N//TK) with the kv axis as an "arbitrary" reduction axis.
# --------------------------------------------------------------------------
def _flash_attn_proj_kernel(q_ref, k_ref, v_ref, x_ref, gate_ref,
                            w_proj_ref, b_proj_ref,
                            o_ref,
                            m_sc, l_sc, acc_sc):
    kv = pl.program_id(2)

    @pl.when(kv == 0)
    def _init():
        m_sc[...] = jnp.full_like(m_sc[...], -jnp.inf)
        l_sc[...] = jnp.zeros_like(l_sc[...])
        acc_sc[...] = jnp.zeros_like(acc_sc[...])

    q = q_ref[0]      # (H, TQ, D) bf16 (1/sqrt(D) already folded in)
    k = k_ref[0]      # (H, TK, D) bf16
    v = v_ref[0]      # (H, TK, D) bf16

    # Head-batched scores on the MXU, f32 accumulation.
    s = jnp.einsum('hqd,hkd->hqk', q, k,
                   preferred_element_type=jnp.float32)             # (H, TQ, TK)

    m_prev = m_sc[...]
    m_new = jnp.maximum(m_prev, jnp.max(s, axis=-1, keepdims=True))
    alpha = jnp.exp(m_prev - m_new)
    # TODO(synk): if profiling shows the EUP is the binding slot on v6e/v7x,
    # compute exp in bf16 and fold the row-sum into the PV matmul (ones column
    # appended to v); left f32 here, which is also required on v5e.
    p = jnp.exp(s - m_new)
    l_sc[...] = alpha * l_sc[...] + jnp.sum(p, axis=-1, keepdims=True)
    acc_sc[...] = alpha * acc_sc[...] + jnp.einsum(
        'hqk,hkd->hqd', p.astype(jnp.bfloat16), v,
        preferred_element_type=jnp.float32)
    m_sc[...] = m_new

    @pl.when(kv == pl.num_programs(2) - 1)
    def _epilogue():
        H = acc_sc.shape[0]
        o = acc_sc[...] * pl.reciprocal(l_sc[...], approx=True)    # (H, TQ, D) f32
        # Concatenate heads into one lane-dense (TQ, C) operand and do a single
        # MXU-dense K=C projection matmul (instead of H K=D matmuls that keep a
        # (TQ, C) f32 accumulator bouncing through VMEM).
        o = jnp.concatenate([o[hd] for hd in range(H)], axis=-1)   # (TQ, C)
        attn_out = jnp.dot(o.astype(jnp.bfloat16), w_proj_ref[...],
                           preferred_element_type=jnp.float32) + b_proj_ref[...]
        o_ref[0] = x_ref[0] + gate_ref[0] * attn_out


# --------------------------------------------------------------------------
# Stage 3: LayerNorm2 (no affine) + modulate + MLP (fc1 -> SiLU -> fc2) + residual.
# Grid: (B, N//TN, HID//TH); the hidden axis is an "arbitrary" reduction axis
# (TH == HID -> single step, weights stay resident).
# --------------------------------------------------------------------------
def _mlp_kernel(x_ref, shift_ref, scale_ref, gate_ref,
                w_fc1_ref, b_fc1_ref, w_fc2_ref, b_fc2_ref,
                o_ref, h_sc, acc_sc):
    hk = pl.program_id(2)

    @pl.when(hk == 0)
    def _prologue():
        x = x_ref[0]                      # (TN, C) f32 (post-attention residual)
        mu = jnp.mean(x, axis=-1, keepdims=True)
        var = jnp.mean((x - mu) ** 2, axis=-1, keepdims=True)
        h = (x - mu) * jax.lax.rsqrt(var + LN_EPS)
        h = h * (1.0 + scale_ref[0]) + shift_ref[0]
        h_sc[...] = h.astype(jnp.bfloat16)
        acc_sc[...] = jnp.zeros_like(acc_sc[...])

    f1 = jnp.dot(h_sc[...], w_fc1_ref[...],
                 preferred_element_type=jnp.float32) + b_fc1_ref[...]   # (TN, th)
    f1 = f1 * jax.nn.sigmoid(f1)                                        # SiLU, f32
    acc_sc[...] += jnp.dot(f1.astype(jnp.bfloat16), w_fc2_ref[...],
                           preferred_element_type=jnp.float32)          # (TN, C)

    @pl.when(hk == pl.num_programs(2) - 1)
    def _epilogue():
        o_ref[0] = x_ref[0] + gate_ref[0] * (acc_sc[...] + b_fc2_ref[...])


# --------------------------------------------------------------------------
# Wrapper
# --------------------------------------------------------------------------
def _vmem_limit_bytes():
    # ~75% of physical VMEM: ~48 MiB on v7x (64 MiB/TC), ~96 MiB on v5e/v6e
    # (128 MiB) — leaves headroom for compiler-internal scratch/semaphores.
    try:
        cap = int(pltpu.get_tpu_info().vmem_capacity_bytes)
    except Exception:
        cap = 128 * 1024 * 1024
    return max(32 * 1024 * 1024, (cap * 3) // 4)


def dit_block(x, c, params, num_heads, *, tn=None, tq=None, tk=None, th=None,
              single_buffer_weights=True, vmem_limit_bytes=None):
    B, N, C = x.shape
    H = num_heads
    assert C % H == 0, "hidden size must be divisible by num_heads"
    D = C // H
    HID = params["w_fc1"].shape[1]

    # Production configs should use 128-aligned tiles >= 256; on v5e/v6e prefer
    # tq=512 in stage 2 (halves the K/V HBM re-stream); re-derive tile sizes for
    # v7x against its smaller VMEM.  th < HID tiles the MLP hidden dimension
    # (bounds stage-3 weight residency for VMEM-constrained v7x configs).
    tn = tn or min(N, 256)
    tq = tq or min(N, 256)
    tk = tk or min(N, 256)
    th = th or HID
    assert N % tn == 0 and N % tq == 0 and N % tk == 0 and HID % th == 0
    assert th == HID or th % 128 == 0

    f32, bf16 = jnp.float32, jnp.bfloat16
    vmem_limit = vmem_limit_bytes or _vmem_limit_bytes()

    # ---- adaLN branch hoisted out of the kernels (tiny M=1 matmul, big weight) ----
    c2 = c[:, 0, :].astype(f32)                                       # (B, C)
    ada = (c2 * jax.nn.sigmoid(c2)) @ params["w_ada"] + params["b_ada"][0]   # (B, 6C)
    (shift_msa, scale_msa, gate_msa,
     shift_mlp, scale_mlp, gate_mlp) = [m[:, None, :] for m in jnp.split(ada, 6, axis=-1)]

    # bf16 matmul operands (f32 accumulation inside the kernels).
    w_qkv = params["w_qkv"].astype(bf16)
    w_proj = params["w_proj"].astype(bf16)
    w_fc1 = params["w_fc1"].astype(bf16)
    w_fc2 = params["w_fc2"].astype(bf16)

    # Per-head RMS pooling / broadcast matrices + head-tiled RMS weights (f32).
    head_of = jnp.arange(C, dtype=jnp.int32) // D
    hids = jnp.arange(H, dtype=jnp.int32)
    pool = (head_of[:, None] == hids[None, :]).astype(f32) / D        # (C, H)
    expand = (hids[:, None] == head_of[None, :]).astype(f32)          # (H, C)
    qw_full = (jnp.tile(params["q_norm_w"][0], H) / math.sqrt(D))[None, :]  # (1, C)
    kw_full = jnp.tile(params["k_norm_w"][0], H)[None, :]                   # (1, C)

    def const_spec(arr):
        # Full-array block, constant index map -> stays VMEM-resident.  Blocks
        # that are never re-fetched don't need double buffering, so request a
        # single buffer (halves weight VMEM; critical on v7x's 64 MiB).
        idx = (0,) * arr.ndim
        index_map = lambda *_, _idx=idx: _idx
        if single_buffer_weights:
            return pl.BlockSpec(arr.shape, index_map,
                                pipeline_mode=pl.Buffered(buffer_count=1))
        return pl.BlockSpec(arr.shape, index_map)

    # Batch axis first, then token tiles: both parallel so v7x's two TensorCores
    # split the (B * N/t) parallel iteration space; the trailing reduction axes
    # are "arbitrary".
    cp2 = pltpu.CompilerParams(dimension_semantics=("parallel", "parallel"),
                               vmem_limit_bytes=vmem_limit)
    cp3 = pltpu.CompilerParams(
        dimension_semantics=("parallel", "parallel", "arbitrary"),
        vmem_limit_bytes=vmem_limit)

    # ---- Stage 1: LN1 + modulate + QKV + head RMSNorm -> q, k, v (B, H, N, D) bf16 ----
    q, k, v = pl.pallas_call(
        _qkv_kernel,
        grid=(B, N // tn),
        in_specs=[
            pl.BlockSpec((1, tn, C), lambda b, t: (b, t, 0)),   # x tile
            pl.BlockSpec((1, 1, C), lambda b, t: (b, 0, 0)),    # shift_msa
            pl.BlockSpec((1, 1, C), lambda b, t: (b, 0, 0)),    # scale_msa
            const_spec(w_qkv), const_spec(params["b_qkv"]),
            const_spec(pool), const_spec(expand),
            const_spec(qw_full), const_spec(kw_full),
        ],
        out_specs=(
            pl.BlockSpec((1, H, tn, D), lambda b, t: (b, 0, t, 0)),
            pl.BlockSpec((1, H, tn, D), lambda b, t: (b, 0, t, 0)),
            pl.BlockSpec((1, H, tn, D), lambda b, t: (b, 0, t, 0)),
        ),
        out_shape=(
            jax.ShapeDtypeStruct((B, H, N, D), bf16),
            jax.ShapeDtypeStruct((B, H, N, D), bf16),
            jax.ShapeDtypeStruct((B, H, N, D), bf16),
        ),
        compiler_params=cp2,
    )(x, shift_msa, scale_msa, w_qkv, params["b_qkv"], pool, expand, qw_full, kw_full)

    # ---- Stage 2: flash attention + output proj + gated residual -> x1 (B, N, C) f32 ----
    x1 = pl.pallas_call(
        _flash_attn_proj_kernel,
        grid=(B, N // tq, N // tk),
        in_specs=[
            pl.BlockSpec((1, H, tq, D), lambda b, qi, kv: (b, 0, qi, 0)),  # q
            pl.BlockSpec((1, H, tk, D), lambda b, qi, kv: (b, 0, kv, 0)),  # k
            pl.BlockSpec((1, H, tk, D), lambda b, qi, kv: (b, 0, kv, 0)),  # v
            pl.BlockSpec((1, tq, C), lambda b, qi, kv: (b, qi, 0)),        # x (residual)
            pl.BlockSpec((1, 1, C), lambda b, qi, kv: (b, 0, 0)),          # gate_msa
            const_spec(w_proj), const_spec(params["b_proj"]),
        ],
        out_specs=pl.BlockSpec((1, tq, C), lambda b, qi, kv: (b, qi, 0)),
        out_shape=jax.ShapeDtypeStruct((B, N, C), f32),
        scratch_shapes=[
            pltpu.VMEM((H, tq, 1), f32),   # running max m
            pltpu.VMEM((H, tq, 1), f32),   # running sum l
            pltpu.VMEM((H, tq, D), f32),   # output accumulator
        ],
        compiler_params=cp3,
    )(q, k, v, x, gate_msa, w_proj, params["b_proj"])

    # ---- Stage 3: LN2 + modulate + SiLU MLP + gated residual -> out (B, N, C) f32 ----
    if th == HID:
        # Single hidden step: weights resident (single-buffered), fetched once.
        w_fc1_spec = const_spec(w_fc1)
        b_fc1_spec = const_spec(params["b_fc1"])
        w_fc2_spec = const_spec(w_fc2)
    else:
        # Hidden-dim tiling: stream (C, th)/(th, C) slices (double-buffered).
        w_fc1_spec = pl.BlockSpec((C, th), lambda b, t, hk: (0, hk))
        b_fc1_spec = pl.BlockSpec((1, th), lambda b, t, hk: (0, hk))
        w_fc2_spec = pl.BlockSpec((th, C), lambda b, t, hk: (hk, 0))

    out = pl.pallas_call(
        _mlp_kernel,
        grid=(B, N // tn, HID // th),
        in_specs=[
            pl.BlockSpec((1, tn, C), lambda b, t, hk: (b, t, 0)),   # x1 tile
            pl.BlockSpec((1, 1, C), lambda b, t, hk: (b, 0, 0)),    # shift_mlp
            pl.BlockSpec((1, 1, C), lambda b, t, hk: (b, 0, 0)),    # scale_mlp
            pl.BlockSpec((1, 1, C), lambda b, t, hk: (b, 0, 0)),    # gate_mlp
            w_fc1_spec, b_fc1_spec, w_fc2_spec,
            const_spec(params["b_fc2"]),
        ],
        out_specs=pl.BlockSpec((1, tn, C), lambda b, t, hk: (b, t, 0)),
        out_shape=jax.ShapeDtypeStruct((B, N, C), f32),
        scratch_shapes=[
            pltpu.VMEM((tn, C), bf16),     # modulated LN2 activations
            pltpu.VMEM((tn, C), f32),      # fc2 partial-product accumulator
        ],
        compiler_params=cp3,
    )(x1, shift_mlp, scale_mlp, gate_mlp, w_fc1, params["b_fc1"],
      w_fc2, params["b_fc2"])

    return out


# ---------------- pure-JAX reference (for correctness check) ----------------
def dit_block_ref(x, c, p, num_heads):
    B, N, C = x.shape
    D = C // num_heads
    c2 = c[:, 0, :]                                        # (B, C)
    c_act = c2 * jax.nn.sigmoid(c2)
    ada = c_act @ p["w_ada"] + p["b_ada"][0]               # (B, 6C)
    sm, cm, gm, sl, cl, gl = jnp.split(ada, 6, axis=-1)
    sm, cm, gm, sl, cl, gl = [t[:, None, :] for t in (sm, cm, gm, sl, cl, gl)]

    def ln(z):
        mu = jnp.mean(z, -1, keepdims=True)
        var = jnp.mean((z - mu) ** 2, -1, keepdims=True)
        return (z - mu) * jax.lax.rsqrt(var + LN_EPS)

    h = ln(x) * (1.0 + cm) + sm
    qkv = h @ p["w_qkv"] + p["b_qkv"][0]                   # (B, N, 3C)
    q, k, v = jnp.split(qkv, 3, axis=-1)
    q = q.reshape(B, N, num_heads, D).transpose(0, 2, 1, 3)
    k = k.reshape(B, N, num_heads, D).transpose(0, 2, 1, 3)
    v = v.reshape(B, N, num_heads, D).transpose(0, 2, 1, 3)

    def rms(z, w):
        return z * jax.lax.rsqrt(jnp.mean(z * z, -1, keepdims=True) + RMS_EPS) * w[0]

    q = rms(q, p["q_norm_w"])
    k = rms(k, p["k_norm_w"])
    s = jnp.einsum("bhqd,bhkd->bhqk", q, k) / math.sqrt(D)
    a = jax.nn.softmax(s, axis=-1)
    o = jnp.einsum("bhqk,bhkd->bhqd", a, v)
    o = o.transpose(0, 2, 1, 3).reshape(B, N, C)
    attn_out = o @ p["w_proj"] + p["b_proj"][0]
    x1 = x + gm * attn_out

    h2 = ln(x1) * (1.0 + cl) + sl
    f1 = h2 @ p["w_fc1"] + p["b_fc1"][0]
    f1 = f1 * jax.nn.sigmoid(f1)
    f2 = f1 @ p["w_fc2"] + p["b_fc2"][0]
    return x1 + gl * f2


if __name__ == "__main__":
    B, N, C = 2, 16, 64
    NUM_HEADS = 4
    HEAD_DIM = C // NUM_HEADS
    MLP_HIDDEN = int(C * 4.0)
    TN = TQ = TK = 8     # token/kv tiles (exercise the tiled grid & flash loop)
    TH = 128             # MLP hidden tile (exercises the hidden reduction axis)

    key = jax.random.PRNGKey(0)
    ks = jax.random.split(key, 12)

    def w(k, shape, scale=0.05):
        return (scale * jax.random.normal(k, shape)).astype(jnp.float32)

    # Weights stored as (in, out), i.e. already-transposed nn.Linear weights.
    params = {
        "w_ada":  w(ks[0], (C, 6 * C)),
        "b_ada":  w(ks[1], (1, 6 * C)),
        "w_qkv":  w(ks[2], (C, 3 * C)),
        "b_qkv":  w(ks[3], (1, 3 * C)),
        "q_norm_w": jnp.ones((1, HEAD_DIM), jnp.float32),   # RMSNorm init = ones
        "k_norm_w": jnp.ones((1, HEAD_DIM), jnp.float32),
        "w_proj": w(ks[4], (C, C)),
        "b_proj": w(ks[5], (1, C)),
        "w_fc1":  w(ks[6], (C, MLP_HIDDEN)),
        "b_fc1":  w(ks[7], (1, MLP_HIDDEN)),
        "w_fc2":  w(ks[8], (MLP_HIDDEN, C)),
        "b_fc2":  w(ks[9], (1, C)),
    }

    x = jax.random.normal(ks[10], (B, N, C), jnp.float32)
    c = jax.random.normal(ks[11], (B, 1, C), jnp.float32)

    fn = jax.jit(functools.partial(dit_block, num_heads=NUM_HEADS,
                                   tn=TN, tq=TQ, tk=TK, th=TH))
    try:
        out = jax.block_until_ready(fn(x, c, params))
    except Exception:
        # TODO(synk): pipeline_mode=pl.Buffered(1) (single-buffered weight blocks)
        # not supported by this jax version; fall back to default double-buffered
        # constant blocks and the previously validated flat 64 MiB VMEM limit.
        fn = jax.jit(functools.partial(dit_block, num_heads=NUM_HEADS,
                                       tn=TN, tq=TQ, tk=TK, th=TH,
                                       single_buffer_weights=False,
                                       vmem_limit_bytes=64 * 1024 * 1024))
        out = jax.block_until_ready(fn(x, c, params))

    ref = jax.block_until_ready(dit_block_ref(x, c, params, NUM_HEADS))
    assert out.shape == (B, N, C)
    # bf16 matmul operands (f32 accumulation) vs f32 reference -> loose tolerance.
    assert jnp.allclose(out, ref, atol=2e-2, rtol=2e-2), (
        float(jnp.max(jnp.abs(out - ref))))

    print("KERNEL_OK")
</pallas_src>

<mosaic_0001>
module attributes {stable_mosaic.version = 11 : i64} {
  func.func @_flash_attn_proj_kernel(%arg0: i32, %arg1: i32, %arg2: i32, %arg3: memref<1x4x8x16xbf16, #tpu.memory_space<vmem>>, %arg4: memref<1x4x8x16xbf16, #tpu.memory_space<vmem>>, %arg5: memref<1x4x8x16xbf16, #tpu.memory_space<vmem>>, %arg6: memref<1x8x64xf32, #tpu.memory_space<vmem>>, %arg7: memref<1x1x64xf32, #tpu.memory_space<vmem>>, %arg8: memref<64x64xbf16, #tpu.memory_space<vmem>>, %arg9: memref<1x64xf32, #tpu.memory_space<vmem>>, %arg10: memref<1x8x64xf32, #tpu.memory_space<vmem>>, %arg11: memref<4x8x1xf32, #tpu.memory_space<vmem>>, %arg12: memref<4x8x1xf32, #tpu.memory_space<vmem>>, %arg13: memref<4x8x16xf32, #tpu.memory_space<vmem>>) attributes {dimension_semantics = [#tpu.dimension_semantics<parallel>, #tpu.dimension_semantics<parallel>, #tpu.dimension_semantics<arbitrary>], iteration_bounds = array<i64: 2, 2, 2>, scalar_prefetch = 0 : i64, scratch_operands = 3 : i64, tpu.core_type = #tpu.core_type<tc>, window_params = [{transform_indices = @transform_0, window_bounds = array<i64: 1, 4, 8, 16>}, {transform_indices = @transform_1, window_bounds = array<i64: 1, 4, 8, 16>}, {transform_indices = @transform_2, window_bounds = array<i64: 1, 4, 8, 16>}, {transform_indices = @transform_3, window_bounds = array<i64: 1, 8, 64>}, {transform_indices = @transform_4, window_bounds = array<i64: 1, 1, 64>}, {pipeline_mode = #tpu.pipeline_mode<synchronous>, transform_indices = @transform_5, window_bounds = array<i64: 64, 64>}, {pipeline_mode = #tpu.pipeline_mode<synchronous>, transform_indices = @transform_6, window_bounds = array<i64: 1, 64>}, {transform_indices = @transform_7, window_bounds = array<i64: 1, 8, 64>}]} {
    %c0_i32 = arith.constant 0 : i32
    %0 = arith.cmpi eq, %arg2, %c0_i32 : i32
    %1 = arith.extui %0 : i1 to i32
    %c0_i32_0 = arith.constant 0 : i32
    %2 = arith.cmpi ne, %1, %c0_i32_0 : i32
    scf.if %2 {
      %cst_34 = arith.constant 0xFF800000 : f32
      %36 = vector.broadcast %cst_34 : f32 to vector<4x8x1xf32>
      %c0_35 = arith.constant 0 : index
      %c0_36 = arith.constant 0 : index
      %c0_37 = arith.constant 0 : index
      %37 = vector.load %arg11[%c0_35, %c0_36, %c0_37] : memref<4x8x1xf32, #tpu.memory_space<vmem>>, vector<4x8x1xf32>
      tpu.vector_store %arg11[%c0_35, %c0_36, %c0_37], %36 {strides = array<i32>} : memref<4x8x1xf32, #tpu.memory_space<vmem>>, vector<4x8x1xf32>,
      %cst_38 = arith.constant 0.000000e+00 : f32
      %38 = vector.broadcast %cst_38 : f32 to vector<4x8x1xf32>
      %c0_39 = arith.constant 0 : index
      %c0_40 = arith.constant 0 : index
      %c0_41 = arith.constant 0 : index
      %39 = vector.load %arg12[%c0_39, %c0_40, %c0_41] : memref<4x8x1xf32, #tpu.memory_space<vmem>>, vector<4x8x1xf32>
      tpu.vector_store %arg12[%c0_39, %c0_40, %c0_41], %38 {strides = array<i32>} : memref<4x8x1xf32, #tpu.memory_space<vmem>>, vector<4x8x1xf32>,
      %cst_42 = arith.constant 0.000000e+00 : f32
      %40 = vector.broadcast %cst_42 : f32 to vector<4x8x16xf32>
      %c0_43 = arith.constant 0 : index
      %c0_44 = arith.constant 0 : index
      %c0_45 = arith.constant 0 : index
      %41 = vector.load %arg13[%c0_43, %c0_44, %c0_45] : memref<4x8x16xf32, #tpu.memory_space<vmem>>, vector<4x8x16xf32>
      tpu.vector_store %arg13[%c0_43, %c0_44, %c0_45], %40 {strides = array<i32>} : memref<4x8x16xf32, #tpu.memory_space<vmem>>, vector<4x8x16xf32>,
    } else {
    }
    %c0 = arith.constant 0 : index
    %c0_1 = arith.constant 0 : index
    %c0_2 = arith.constant 0 : index
    %c0_3 = arith.constant 0 : index
    %3 = vector.load %arg3[%c0, %c0_1, %c0_2, %c0_3] : memref<1x4x8x16xbf16, #tpu.memory_space<vmem>>, vector<1x4x8x16xbf16>
    %4 = vector.shape_cast %3 : vector<1x4x8x16xbf16> to vector<4x8x16xbf16>
    %c0_4 = arith.constant 0 : index
    %c0_5 = arith.constant 0 : index
    %c0_6 = arith.constant 0 : index
    %c0_7 = arith.constant 0 : index
    %5 = vector.load %arg4[%c0_4, %c0_5, %c0_6, %c0_7] : memref<1x4x8x16xbf16, #tpu.memory_space<vmem>>, vector<1x4x8x16xbf16>
    %6 = vector.shape_cast %5 : vector<1x4x8x16xbf16> to vector<4x8x16xbf16>
    %c0_8 = arith.constant 0 : index
    %c0_9 = arith.constant 0 : index
    %c0_10 = arith.constant 0 : index
    %c0_11 = arith.constant 0 : index
    %7 = vector.load %arg5[%c0_8, %c0_9, %c0_10, %c0_11] : memref<1x4x8x16xbf16, #tpu.memory_space<vmem>>, vector<1x4x8x16xbf16>
    %8 = vector.shape_cast %7 : vector<1x4x8x16xbf16> to vector<4x8x16xbf16>
    "tpu.trace_start"() <{level = 10 : i32, message = "hqd,hkd->hqk"}> : () -> ()
    %cst = arith.constant dense<0.000000e+00> : vector<4x8x8xf32>
    %9 = tpu.matmul %4, %6, %cst {dimension_numbers = #tpu.dot_dimension_numbers<[2], [2], [1], [1], [0, 0, 0, 1, 1, 1], [0], [0]>} : vector<4x8x16xbf16>, vector<4x8x16xbf16>, vector<4x8x8xf32> -> vector<4x8x8xf32>
    "tpu.trace_stop"() : () -> ()
    %c0_12 = arith.constant 0 : index
    %c0_13 = arith.constant 0 : index
    %c0_14 = arith.constant 0 : index
    %10 = vector.load %arg11[%c0_12, %c0_13, %c0_14] : memref<4x8x1xf32, #tpu.memory_space<vmem>>, vector<4x8x1xf32>
    %cst_15 = arith.constant dense<0xFF800000> : vector<4x8xf32>
    %11 = vector.multi_reduction <maximumf>, %9, %cst_15 [2] : vector<4x8x8xf32> to vector<4x8xf32>
    %12 = vector.shape_cast %11 : vector<4x8xf32> to vector<4x8x1xf32>
    %13 = arith.maximumf %10, %12 : vector<4x8x1xf32>
    %14 = arith.subf %10, %13 : vector<4x8x1xf32>
    %15 = math.exp %14 : vector<4x8x1xf32>
    %16 = vector.broadcast %13 : vector<4x8x1xf32> to vector<4x8x8xf32>
    %17 = arith.subf %9, %16 : vector<4x8x8xf32>
    %18 = math.exp %17 : vector<4x8x8xf32>
    %c0_16 = arith.constant 0 : index
    %c0_17 = arith.constant 0 : index
    %c0_18 = arith.constant 0 : index
    %19 = vector.load %arg12[%c0_16, %c0_17, %c0_18] : memref<4x8x1xf32, #tpu.memory_space<vmem>>, vector<4x8x1xf32>
    %20 = arith.mulf %15, %19 : vector<4x8x1xf32>
    %cst_19 = arith.constant dense<0.000000e+00> : vector<4x8xf32>
    %21 = vector.multi_reduction <add>, %18, %cst_19 [2] : vector<4x8x8xf32> to vector<4x8xf32>
    %22 = vector.shape_cast %21 : vector<4x8xf32> to vector<4x8x1xf32>
    %23 = arith.addf %20, %22 : vector<4x8x1xf32>
    %c0_20 = arith.constant 0 : index
    %c0_21 = arith.constant 0 : index
    %c0_22 = arith.constant 0 : index
    %24 = vector.load %arg12[%c0_20, %c0_21, %c0_22] : memref<4x8x1xf32, #tpu.memory_space<vmem>>, vector<4x8x1xf32>
    tpu.vector_store %arg12[%c0_20, %c0_21, %c0_22], %23 {strides = array<i32>} : memref<4x8x1xf32, #tpu.memory_space<vmem>>, vector<4x8x1xf32>,
    %c0_23 = arith.constant 0 : index
    %c0_24 = arith.constant 0 : index
    %c0_25 = arith.constant 0 : index
    %25 = vector.load %arg13[%c0_23, %c0_24, %c0_25] : memref<4x8x16xf32, #tpu.memory_space<vmem>>, vector<4x8x16xf32>
    %26 = vector.broadcast %15 : vector<4x8x1xf32> to vector<4x8x16xf32>
    %27 = arith.mulf %26, %25 : vector<4x8x16xf32>
    %28 = arith.truncf %18 : vector<4x8x8xf32> to vector<4x8x8xbf16>
    "tpu.trace_start"() <{level = 10 : i32, message = "hqk,hkd->hqd"}> : () -> ()
    %cst_26 = arith.constant dense<0.000000e+00> : vector<4x8x16xf32>
    %29 = tpu.matmul %28, %8, %cst_26 {dimension_numbers = #tpu.dot_dimension_numbers<[2], [1], [1], [2], [0, 0, 0, 1, 1, 2], [0], [0]>} : vector<4x8x8xbf16>, vector<4x8x16xbf16>, vector<4x8x16xf32> -> vector<4x8x16xf32>
    "tpu.trace_stop"() : () -> ()
    %30 = arith.addf %27, %29 : vector<4x8x16xf32>
    %c0_27 = arith.constant 0 : index
    %c0_28 = arith.constant 0 : index
    %c0_29 = arith.constant 0 : index
    %31 = vector.load %arg13[%c0_27, %c0_28, %c0_29] : memref<4x8x16xf32, #tpu.memory_space<vmem>>, vector<4x8x16xf32>
    tpu.vector_store %arg13[%c0_27, %c0_28, %c0_29], %30 {strides = array<i32>} : memref<4x8x16xf32, #tpu.memory_space<vmem>>, vector<4x8x16xf32>,
    %c0_30 = arith.constant 0 : index
    %c0_31 = arith.constant 0 : index
    %c0_32 = arith.constant 0 : index
    %32 = vector.load %arg11[%c0_30, %c0_31, %c0_32] : memref<4x8x1xf32, #tpu.memory_space<vmem>>, vector<4x8x1xf32>
    tpu.vector_store %arg11[%c0_30, %c0_31, %c0_32], %13 {strides = array<i32>} : memref<4x8x1xf32, #tpu.memory_space<vmem>>, vector<4x8x1xf32>,
    %c1_i32 = arith.constant 1 : i32
    %33 = arith.cmpi eq, %arg2, %c1_i32 : i32
    %34 = arith.extui %33 : i1 to i32
    %c0_i32_33 = arith.constant 0 : i32
    %35 = arith.cmpi ne, %34, %c0_i32_33 : i32
    scf.if %35 {
      %c0_34 = arith.constant 0 : index
      %c0_35 = arith.constant 0 : index
      %c0_36 = arith.constant 0 : index
      %36 = vector.load %arg13[%c0_34, %c0_35, %c0_36] : memref<4x8x16xf32, #tpu.memory_space<vmem>>, vector<4x8x16xf32>
      %c0_37 = arith.constant 0 : index
      %c0_38 = arith.constant 0 : index
      %c0_39 = arith.constant 0 : index
      %37 = vector.load %arg12[%c0_37, %c0_38, %c0_39] : memref<4x8x1xf32, #tpu.memory_space<vmem>>, vector<4x8x1xf32>
      %38 = tpu.reciprocal %37 {approx = true} : vector<4x8x1xf32> -> vector<4x8x1xf32>
      %39 = vector.broadcast %38 : vector<4x8x1xf32> to vector<4x8x16xf32>
      %40 = arith.mulf %36, %39 : vector<4x8x16xf32>
      %41 = vector.extract_strided_slice %40 {offsets = [0, 0, 0], sizes = [1, 8, 16], strides = [1, 1, 1]} : vector<4x8x16xf32> to vector<1x8x16xf32>
      %42 = vector.shape_cast %41 : vector<1x8x16xf32> to vector<8x16xf32>
      %43 = vector.extract_strided_slice %40 {offsets = [1, 0, 0], sizes = [1, 8, 16], strides = [1, 1, 1]} : vector<4x8x16xf32> to vector<1x8x16xf32>
      %44 = vector.shape_cast %43 : vector<1x8x16xf32> to vector<8x16xf32>
      %45 = vector.extract_strided_slice %40 {offsets = [2, 0, 0], sizes = [1, 8, 16], strides = [1, 1, 1]} : vector<4x8x16xf32> to vector<1x8x16xf32>
      %46 = vector.shape_cast %45 : vector<1x8x16xf32> to vector<8x16xf32>
      %47 = vector.extract_strided_slice %40 {offsets = [3, 0, 0], sizes = [1, 8, 16], strides = [1, 1, 1]} : vector<4x8x16xf32> to vector<1x8x16xf32>
      %48 = vector.shape_cast %47 : vector<1x8x16xf32> to vector<8x16xf32>
      %49 = tpu.concatenate %42, %44, %46, %48 in 1 : vector<8x16xf32>, vector<8x16xf32>, vector<8x16xf32>, vector<8x16xf32> -> vector<8x64xf32>
      %50 = arith.truncf %49 : vector<8x64xf32> to vector<8x64xbf16>
      %c0_40 = arith.constant 0 : index
      %c0_41 = arith.constant 0 : index
      %51 = vector.load %arg8[%c0_40, %c0_41] : memref<64x64xbf16, #tpu.memory_space<vmem>>, vector<64x64xbf16>
      %cst_42 = arith.constant dense<0.000000e+00> : vector<8x64xf32>
      %52 = tpu.matmul %50, %51, %cst_42 {dimension_numbers = #tpu.dot_dimension_numbers<[1], [0], [0], [1], [0, 0, 1, 1], [], []>} : vector<8x64xbf16>, vector<64x64xbf16>, vector<8x64xf32> -> vector<8x64xf32>
      %c0_43 = arith.constant 0 : index
      %c0_44 = arith.constant 0 : index
      %53 = vector.load %arg9[%c0_43, %c0_44] : memref<1x64xf32, #tpu.memory_space<vmem>>, vector<1x64xf32>
      %54 = vector.broadcast %53 : vector<1x64xf32> to vector<8x64xf32>
      %55 = arith.addf %52, %54 : vector<8x64xf32>
      %c0_45 = arith.constant 0 : index
      %c0_46 = arith.constant 0 : index
      %c0_47 = arith.constant 0 : index
      %56 = vector.load %arg6[%c0_45, %c0_46, %c0_47] : memref<1x8x64xf32, #tpu.memory_space<vmem>>, vector<1x8x64xf32>
      %57 = vector.shape_cast %56 : vector<1x8x64xf32> to vector<8x64xf32>
      %c0_48 = arith.constant 0 : index
      %c0_49 = arith.constant 0 : index
      %c0_50 = arith.constant 0 : index
      %58 = vector.load %arg7[%c0_48, %c0_49, %c0_50] : memref<1x1x64xf32, #tpu.memory_space<vmem>>, vector<1x1x64xf32>
      %59 = vector.shape_cast %58 : vector<1x1x64xf32> to vector<1x64xf32>
      %60 = vector.broadcast %59 : vector<1x64xf32> to vector<8x64xf32>
      %61 = arith.mulf %60, %55 : vector<8x64xf32>
      %62 = arith.addf %57, %61 : vector<8x64xf32>
      %c0_51 = arith.constant 0 : index
      %c0_52 = arith.constant 0 : index
      %c0_53 = arith.constant 0 : index
      %63 = vector.load %arg10[%c0_51, %c0_52, %c0_53] : memref<1x8x64xf32, #tpu.memory_space<vmem>>, vector<1x8x64xf32>
      %64 = vector.shape_cast %63 : vector<1x8x64xf32> to vector<8x64xf32>
      %65 = vector.shape_cast %62 : vector<8x64xf32> to vector<1x8x64xf32>
      tpu.vector_store %arg10[%c0_51, %c0_52, %c0_53], %65 {strides = array<i32>} : memref<1x8x64xf32, #tpu.memory_space<vmem>>, vector<1x8x64xf32>,
    } else {
    }
    return
  }
  func.func @transform_0(%arg0: i32, %arg1: i32, %arg2: i32) -> (i32, i32, i32, i32) {
    %c0_i32 = arith.constant 0 : i32
    %c0_i32_0 = arith.constant 0 : i32
    %c0_i32_1 = arith.constant 0 : i32
    return %arg0, %c0_i32, %arg1, %c0_i32_0 : i32, i32, i32, i32
  }
  func.func @transform_1(%arg0: i32, %arg1: i32, %arg2: i32) -> (i32, i32, i32, i32) {
    %c0_i32 = arith.constant 0 : i32
    %c0_i32_0 = arith.constant 0 : i32
    %c0_i32_1 = arith.constant 0 : i32
    return %arg0, %c0_i32, %arg2, %c0_i32_0 : i32, i32, i32, i32
  }
  func.func @transform_2(%arg0: i32, %arg1: i32, %arg2: i32) -> (i32, i32, i32, i32) {
    %c0_i32 = arith.constant 0 : i32
    %c0_i32_0 = arith.constant 0 : i32
    %c0_i32_1 = arith.constant 0 : i32
    return %arg0, %c0_i32, %arg2, %c0_i32_0 : i32, i32, i32, i32
  }
  func.func @transform_3(%arg0: i32, %arg1: i32, %arg2: i32) -> (i32, i32, i32) {
    %c0_i32 = arith.constant 0 : i32
    %c0_i32_0 = arith.constant 0 : i32
    return %arg0, %arg1, %c0_i32 : i32, i32, i32
  }
  func.func @transform_4(%arg0: i32, %arg1: i32, %arg2: i32) -> (i32, i32, i32) {
    %c0_i32 = arith.constant 0 : i32
    %c0_i32_0 = arith.constant 0 : i32
    %c0_i32_1 = arith.constant 0 : i32
    return %arg0, %c0_i32, %c0_i32_0 : i32, i32, i32
  }
  func.func @transform_5(%arg0: i32, %arg1: i32, %arg2: i32) -> (i32, i32) {
    %c0_i32 = arith.constant 0 : i32
    %c0_i32_0 = arith.constant 0 : i32
    %c0_i32_1 = arith.constant 0 : i32
    return %c0_i32, %c0_i32_0 : i32, i32
  }
  func.func @transform_6(%arg0: i32, %arg1: i32, %arg2: i32) -> (i32, i32) {
    %c0_i32 = arith.constant 0 : i32
    %c0_i32_0 = arith.constant 0 : i32
    %c0_i32_1 = arith.constant 0 : i32
    return %c0_i32, %c0_i32_0 : i32, i32
  }
  func.func @transform_7(%arg0: i32, %arg1: i32, %arg2: i32) -> (i32, i32, i32) {
    %c0_i32 = arith.constant 0 : i32
    %c0_i32_0 = arith.constant 0 : i32
    return %arg0, %arg1, %c0_i32 : i32, i32, i32
  }
}

module attributes {stable_mosaic.version = 11 : i64} {
  func.func @_qkv_kernel(%arg0: i32, %arg1: i32, %arg2: memref<1x8x64xf32, #tpu.memory_space<vmem>>, %arg3: memref<1x1x64xf32, #tpu.memory_space<vmem>>, %arg4: memref<1x1x64xf32, #tpu.memory_space<vmem>>, %arg5: memref<64x192xbf16, #tpu.memory_space<vmem>>, %arg6: memref<1x192xf32, #tpu.memory_space<vmem>>, %arg7: memref<64x4xf32, #tpu.memory_space<vmem>>, %arg8: memref<4x64xf32, #tpu.memory_space<vmem>>, %arg9: memref<1x64xf32, #tpu.memory_space<vmem>>, %arg10: memref<1x64xf32, #tpu.memory_space<vmem>>, %arg11: memref<1x4x8x16xbf16, #tpu.memory_space<vmem>>, %arg12: memref<1x4x8x16xbf16, #tpu.memory_space<vmem>>, %arg13: memref<1x4x8x16xbf16, #tpu.memory_space<vmem>>) attributes {dimension_semantics = [#tpu.dimension_semantics<parallel>, #tpu.dimension_semantics<parallel>], iteration_bounds = array<i64: 2, 2>, scalar_prefetch = 0 : i64, scratch_operands = 0 : i64, tpu.core_type = #tpu.core_type<tc>, window_params = [{transform_indices = @transform_0, window_bounds = array<i64: 1, 8, 64>}, {transform_indices = @transform_1, window_bounds = array<i64: 1, 1, 64>}, {transform_indices = @transform_2, window_bounds = array<i64: 1, 1, 64>}, {pipeline_mode = #tpu.pipeline_mode<synchronous>, transform_indices = @transform_3, window_bounds = array<i64: 64, 192>}, {pipeline_mode = #tpu.pipeline_mode<synchronous>, transform_indices = @transform_4, window_bounds = array<i64: 1, 192>}, {pipeline_mode = #tpu.pipeline_mode<synchronous>, transform_indices = @transform_5, window_bounds = array<i64: 64, 4>}, {pipeline_mode = #tpu.pipeline_mode<synchronous>, transform_indices = @transform_6, window_bounds = array<i64: 4, 64>}, {pipeline_mode = #tpu.pipeline_mode<synchronous>, transform_indices = @transform_7, window_bounds = array<i64: 1, 64>}, {pipeline_mode = #tpu.pipeline_mode<synchronous>, transform_indices = @transform_8, window_bounds = array<i64: 1, 64>}, {transform_indices = @transform_9, window_bounds = array<i64: 1, 4, 8, 16>}, {transform_indices = @transform_10, window_bounds = array<i64: 1, 4, 8, 16>}, {transform_indices = @transform_11, window_bounds = array<i64: 1, 4, 8, 16>}]} {
    %c0 = arith.constant 0 : index
    %c0_0 = arith.constant 0 : index
    %c0_1 = arith.constant 0 : index
    %0 = vector.load %arg2[%c0, %c0_0, %c0_1] : memref<1x8x64xf32, #tpu.memory_space<vmem>>, vector<1x8x64xf32>
    %1 = vector.shape_cast %0 : vector<1x8x64xf32> to vector<8x64xf32>
    %cst = arith.constant dense<0.000000e+00> : vector<8xf32>
    %2 = vector.multi_reduction <add>, %1, %cst [1] : vector<8x64xf32> to vector<8xf32>
    %3 = vector.shape_cast %2 : vector<8xf32> to vector<8x1xf32>
    %cst_2 = arith.constant 6.400000e+01 : f32
    %4 = vector.broadcast %cst_2 : f32 to vector<8x1xf32>
    %5 = arith.divf %3, %4 : vector<8x1xf32>
    %6 = vector.broadcast %5 : vector<8x1xf32> to vector<8x64xf32>
    %7 = arith.subf %1, %6 : vector<8x64xf32>
    %8 = arith.mulf %7, %7 : vector<8x64xf32>
    %cst_3 = arith.constant dense<0.000000e+00> : vector<8xf32>
    %9 = vector.multi_reduction <add>, %8, %cst_3 [1] : vector<8x64xf32> to vector<8xf32>
    %10 = vector.shape_cast %9 : vector<8xf32> to vector<8x1xf32>
    %cst_4 = arith.constant 6.400000e+01 : f32
    %11 = vector.broadcast %cst_4 : f32 to vector<8x1xf32>
    %12 = arith.divf %10, %11 : vector<8x1xf32>
    %13 = vector.broadcast %5 : vector<8x1xf32> to vector<8x64xf32>
    %14 = arith.subf %1, %13 : vector<8x64xf32>
    %cst_5 = arith.constant 9.99999997E-7 : f32
    %15 = vector.broadcast %cst_5 : f32 to vector<8x1xf32>
    %16 = arith.addf %12, %15 : vector<8x1xf32>
    %17 = math.rsqrt %16 : vector<8x1xf32>
    %18 = vector.broadcast %17 : vector<8x1xf32> to vector<8x64xf32>
    %19 = arith.mulf %14, %18 : vector<8x64xf32>
    %c0_6 = arith.constant 0 : index
    %c0_7 = arith.constant 0 : index
    %c0_8 = arith.constant 0 : index
    %20 = vector.load %arg4[%c0_6, %c0_7, %c0_8] : memref<1x1x64xf32, #tpu.memory_space<vmem>>, vector<1x1x64xf32>
    %21 = vector.shape_cast %20 : vector<1x1x64xf32> to vector<1x64xf32>
    %cst_9 = arith.constant 1.000000e+00 : f32
    %22 = vector.broadcast %cst_9 : f32 to vector<1x64xf32>
    %23 = arith.addf %22, %21 : vector<1x64xf32>
    %24 = vector.broadcast %23 : vector<1x64xf32> to vector<8x64xf32>
    %25 = arith.mulf %19, %24 : vector<8x64xf32>
    %c0_10 = arith.constant 0 : index
    %c0_11 = arith.constant 0 : index
    %c0_12 = arith.constant 0 : index
    %26 = vector.load %arg3[%c0_10, %c0_11, %c0_12] : memref<1x1x64xf32, #tpu.memory_space<vmem>>, vector<1x1x64xf32>
    %27 = vector.shape_cast %26 : vector<1x1x64xf32> to vector<1x64xf32>
    %28 = vector.broadcast %27 : vector<1x64xf32> to vector<8x64xf32>
    %29 = arith.addf %25, %28 : vector<8x64xf32>
    %30 = arith.truncf %29 : vector<8x64xf32> to vector<8x64xbf16>
    %c0_13 = arith.constant 0 : index
    %c0_14 = arith.constant 0 : index
    %31 = vector.load %arg5[%c0_13, %c0_14] : memref<64x192xbf16, #tpu.memory_space<vmem>>, vector<64x192xbf16>
    %cst_15 = arith.constant dense<0.000000e+00> : vector<8x192xf32>
    %32 = tpu.matmul %30, %31, %cst_15 {dimension_numbers = #tpu.dot_dimension_numbers<[1], [0], [0], [1], [0, 0, 1, 1], [], []>} : vector<8x64xbf16>, vector<64x192xbf16>, vector<8x192xf32> -> vector<8x192xf32>
    %c0_16 = arith.constant 0 : index
    %c0_17 = arith.constant 0 : index
    %33 = vector.load %arg6[%c0_16, %c0_17] : memref<1x192xf32, #tpu.memory_space<vmem>>, vector<1x192xf32>
    %34 = vector.broadcast %33 : vector<1x192xf32> to vector<8x192xf32>
    %35 = arith.addf %32, %34 : vector<8x192xf32>
    %36 = vector.extract_strided_slice %35 {offsets = [0, 0], sizes = [8, 64], strides = [1, 1]} : vector<8x192xf32> to vector<8x64xf32>
    %37 = vector.extract_strided_slice %35 {offsets = [0, 64], sizes = [8, 64], strides = [1, 1]} : vector<8x192xf32> to vector<8x64xf32>
    %38 = vector.extract_strided_slice %35 {offsets = [0, 128], sizes = [8, 64], strides = [1, 1]} : vector<8x192xf32> to vector<8x64xf32>
    %39 = arith.mulf %36, %36 : vector<8x64xf32>
    %c0_18 = arith.constant 0 : index
    %c0_19 = arith.constant 0 : index
    %40 = vector.load %arg7[%c0_18, %c0_19] : memref<64x4xf32, #tpu.memory_space<vmem>>, vector<64x4xf32>
    %cst_20 = arith.constant dense<0.000000e+00> : vector<8x4xf32>
    %41 = tpu.matmul %39, %40, %cst_20 {dimension_numbers = #tpu.dot_dimension_numbers<[1], [0], [0], [1], [0, 0, 1, 1], [], []>} : vector<8x64xf32>, vector<64x4xf32>, vector<8x4xf32> -> vector<8x4xf32>
    %cst_21 = arith.constant 9.99999974E-6 : f32
    %42 = vector.broadcast %cst_21 : f32 to vector<8x4xf32>
    %43 = arith.addf %41, %42 : vector<8x4xf32>
    %44 = math.rsqrt %43 : vector<8x4xf32>
    %c0_22 = arith.constant 0 : index
    %c0_23 = arith.constant 0 : index
    %45 = vector.load %arg8[%c0_22, %c0_23] : memref<4x64xf32, #tpu.memory_space<vmem>>, vector<4x64xf32>
    %cst_24 = arith.constant dense<0.000000e+00> : vector<8x64xf32>
    %46 = tpu.matmul %44, %45, %cst_24 {dimension_numbers = #tpu.dot_dimension_numbers<[1], [0], [0], [1], [0, 0, 1, 1], [], []>} : vector<8x4xf32>, vector<4x64xf32>, vector<8x64xf32> -> vector<8x64xf32>
    %47 = arith.mulf %36, %46 : vector<8x64xf32>
    %c0_25 = arith.constant 0 : index
    %c0_26 = arith.constant 0 : index
    %48 = vector.load %arg9[%c0_25, %c0_26] : memref<1x64xf32, #tpu.memory_space<vmem>>, vector<1x64xf32>
    %49 = vector.broadcast %48 : vector<1x64xf32> to vector<8x64xf32>
    %50 = arith.mulf %47, %49 : vector<8x64xf32>
    %51 = arith.truncf %50 : vector<8x64xf32> to vector<8x64xbf16>
    %52 = arith.mulf %37, %37 : vector<8x64xf32>
    %c0_27 = arith.constant 0 : index
    %c0_28 = arith.constant 0 : index
    %53 = vector.load %arg7[%c0_27, %c0_28] : memref<64x4xf32, #tpu.memory_space<vmem>>, vector<64x4xf32>
    %cst_29 = arith.constant dense<0.000000e+00> : vector<8x4xf32>
    %54 = tpu.matmul %52, %53, %cst_29 {dimension_numbers = #tpu.dot_dimension_numbers<[1], [0], [0], [1], [0, 0, 1, 1], [], []>} : vector<8x64xf32>, vector<64x4xf32>, vector<8x4xf32> -> vector<8x4xf32>
    %cst_30 = arith.constant 9.99999974E-6 : f32
    %55 = vector.broadcast %cst_30 : f32 to vector<8x4xf32>
    %56 = arith.addf %54, %55 : vector<8x4xf32>
    %57 = math.rsqrt %56 : vector<8x4xf32>
    %c0_31 = arith.constant 0 : index
    %c0_32 = arith.constant 0 : index
    %58 = vector.load %arg8[%c0_31, %c0_32] : memref<4x64xf32, #tpu.memory_space<vmem>>, vector<4x64xf32>
    %cst_33 = arith.constant dense<0.000000e+00> : vector<8x64xf32>
    %59 = tpu.matmul %57, %58, %cst_33 {dimension_numbers = #tpu.dot_dimension_numbers<[1], [0], [0], [1], [0, 0, 1, 1], [], []>} : vector<8x4xf32>, vector<4x64xf32>, vector<8x64xf32> -> vector<8x64xf32>
    %60 = arith.mulf %37, %59 : vector<8x64xf32>
    %c0_34 = arith.constant 0 : index
    %c0_35 = arith.constant 0 : index
    %61 = vector.load %arg10[%c0_34, %c0_35] : memref<1x64xf32, #tpu.memory_space<vmem>>, vector<1x64xf32>
    %62 = vector.broadcast %61 : vector<1x64xf32> to vector<8x64xf32>
    %63 = arith.mulf %60, %62 : vector<8x64xf32>
    %64 = arith.truncf %63 : vector<8x64xf32> to vector<8x64xbf16>
    %65 = arith.truncf %38 : vector<8x64xf32> to vector<8x64xbf16>
    %66 = vector.extract_strided_slice %51 {offsets = [0, 0], sizes = [8, 16], strides = [1, 1]} : vector<8x64xbf16> to vector<8x16xbf16>
    %c0_36 = arith.constant 0 : index
    %c0_37 = arith.constant 0 : index
    %c0_38 = arith.constant 0 : index
    %c0_39 = arith.constant 0 : index
    %67 = vector.load %arg11[%c0_36, %c0_37, %c0_38, %c0_39] : memref<1x4x8x16xbf16, #tpu.memory_space<vmem>>, vector<1x1x8x16xbf16>
    %68 = vector.shape_cast %67 : vector<1x1x8x16xbf16> to vector<8x16xbf16>
    %69 = vector.shape_cast %66 : vector<8x16xbf16> to vector<1x1x8x16xbf16>
    tpu.vector_store %arg11[%c0_36, %c0_37, %c0_38, %c0_39], %69 {strides = array<i32>} : memref<1x4x8x16xbf16, #tpu.memory_space<vmem>>, vector<1x1x8x16xbf16>,
    %70 = vector.extract_strided_slice %64 {offsets = [0, 0], sizes = [8, 16], strides = [1, 1]} : vector<8x64xbf16> to vector<8x16xbf16>
    %c0_40 = arith.constant 0 : index
    %c0_41 = arith.constant 0 : index
    %c0_42 = arith.constant 0 : index
    %c0_43 = arith.constant 0 : index
    %71 = vector.load %arg12[%c0_40, %c0_41, %c0_42, %c0_43] : memref<1x4x8x16xbf16, #tpu.memory_space<vmem>>, vector<1x1x8x16xbf16>
    %72 = vector.shape_cast %71 : vector<1x1x8x16xbf16> to vector<8x16xbf16>
    %73 = vector.shape_cast %70 : vector<8x16xbf16> to vector<1x1x8x16xbf16>
    tpu.vector_store %arg12[%c0_40, %c0_41, %c0_42, %c0_43], %73 {strides = array<i32>} : memref<1x4x8x16xbf16, #tpu.memory_space<vmem>>, vector<1x1x8x16xbf16>,
    %74 = vector.extract_strided_slice %65 {offsets = [0, 0], sizes = [8, 16], strides = [1, 1]} : vector<8x64xbf16> to vector<8x16xbf16>
    %c0_44 = arith.constant 0 : index
    %c0_45 = arith.constant 0 : index
    %c0_46 = arith.constant 0 : index
    %c0_47 = arith.constant 0 : index
    %75 = vector.load %arg13[%c0_44, %c0_45, %c0_46, %c0_47] : memref<1x4x8x16xbf16, #tpu.memory_space<vmem>>, vector<1x1x8x16xbf16>
    %76 = vector.shape_cast %75 : vector<1x1x8x16xbf16> to vector<8x16xbf16>
    %77 = vector.shape_cast %74 : vector<8x16xbf16> to vector<1x1x8x16xbf16>
    tpu.vector_store %arg13[%c0_44, %c0_45, %c0_46, %c0_47], %77 {strides = array<i32>} : memref<1x4x8x16xbf16, #tpu.memory_space<vmem>>, vector<1x1x8x16xbf16>,
    %78 = vector.extract_strided_slice %51 {offsets = [0, 16], sizes = [8, 16], strides = [1, 1]} : vector<8x64xbf16> to vector<8x16xbf16>
    %c0_48 = arith.constant 0 : index
    %c1 = arith.constant 1 : index
    %c0_49 = arith.constant 0 : index
    %c0_50 = arith.constant 0 : index
    %79 = vector.load %arg11[%c0_48, %c1, %c0_49, %c0_50] : memref<1x4x8x16xbf16, #tpu.memory_space<vmem>>, vector<1x1x8x16xbf16>
    %80 = vector.shape_cast %79 : vector<1x1x8x16xbf16> to vector<8x16xbf16>
    %81 = vector.shape_cast %78 : vector<8x16xbf16> to vector<1x1x8x16xbf16>
    tpu.vector_store %arg11[%c0_48, %c1, %c0_49, %c0_50], %81 {strides = array<i32>} : memref<1x4x8x16xbf16, #tpu.memory_space<vmem>>, vector<1x1x8x16xbf16>,
    %82 = vector.extract_strided_slice %64 {offsets = [0, 16], sizes = [8, 16], strides = [1, 1]} : vector<8x64xbf16> to vector<8x16xbf16>
    %c0_51 = arith.constant 0 : index
    %c1_52 = arith.constant 1 : index
    %c0_53 = arith.constant 0 : index
    %c0_54 = arith.constant 0 : index
    %83 = vector.load %arg12[%c0_51, %c1_52, %c0_53, %c0_54] : memref<1x4x8x16xbf16, #tpu.memory_space<vmem>>, vector<1x1x8x16xbf16>
    %84 = vector.shape_cast %83 : vector<1x1x8x16xbf16> to vector<8x16xbf16>
    %85 = vector.shape_cast %82 : vector<8x16xbf16> to vector<1x1x8x16xbf16>
    tpu.vector_store %arg12[%c0_51, %c1_52, %c0_53, %c0_54], %85 {strides = array<i32>} : memref<1x4x8x16xbf16, #tpu.memory_space<vmem>>, vector<1x1x8x16xbf16>,
    %86 = vector.extract_strided_slice %65 {offsets = [0, 16], sizes = [8, 16], strides = [1, 1]} : vector<8x64xbf16> to vector<8x16xbf16>
    %c0_55 = arith.constant 0 : index
    %c1_56 = arith.constant 1 : index
    %c0_57 = arith.constant 0 : index
    %c0_58 = arith.constant 0 : index
    %87 = vector.load %arg13[%c0_55, %c1_56, %c0_57, %c0_58] : memref<1x4x8x16xbf16, #tpu.memory_space<vmem>>, vector<1x1x8x16xbf16>
    %88 = vector.shape_cast %87 : vector<1x1x8x16xbf16> to vector<8x16xbf16>
    %89 = vector.shape_cast %86 : vector<8x16xbf16> to vector<1x1x8x16xbf16>
    tpu.vector_store %arg13[%c0_55, %c1_56, %c0_57, %c0_58], %89 {strides = array<i32>} : memref<1x4x8x16xbf16, #tpu.memory_space<vmem>>, vector<1x1x8x16xbf16>,
    %90 = vector.extract_strided_slice %51 {offsets = [0, 32], sizes = [8, 16], strides = [1, 1]} : vector<8x64xbf16> to vector<8x16xbf16>
    %c0_59 = arith.constant 0 : index
    %c2 = arith.constant 2 : index
    %c0_60 = arith.constant 0 : index
    %c0_61 = arith.constant 0 : index
    %91 = vector.load %arg11[%c0_59, %c2, %c0_60, %c0_61] : memref<1x4x8x16xbf16, #tpu.memory_space<vmem>>, vector<1x1x8x16xbf16>
    %92 = vector.shape_cast %91 : vector<1x1x8x16xbf16> to vector<8x16xbf16>
    %93 = vector.shape_cast %90 : vector<8x16xbf16> to vector<1x1x8x16xbf16>
    tpu.vector_store %arg11[%c0_59, %c2, %c0_60, %c0_61], %93 {strides = array<i32>} : memref<1x4x8x16xbf16, #tpu.memory_space<vmem>>, vector<1x1x8x16xbf16>,
    %94 = vector.extract_strided_slice %64 {offsets = [0, 32], sizes = [8, 16], strides = [1, 1]} : vector<8x64xbf16> to vector<8x16xbf16>
    %c0_62 = arith.constant 0 : index
    %c2_63 = arith.constant 2 : index
    %c0_64 = arith.constant 0 : index
    %c0_65 = arith.constant 0 : index
    %95 = vector.load %arg12[%c0_62, %c2_63, %c0_64, %c0_65] : memref<1x4x8x16xbf16, #tpu.memory_space<vmem>>, vector<1x1x8x16xbf16>
    %96 = vector.shape_cast %95 : vector<1x1x8x16xbf16> to vector<8x16xbf16>
    %97 = vector.shape_cast %94 : vector<8x16xbf16> to vector<1x1x8x16xbf16>
    tpu.vector_store %arg12[%c0_62, %c2_63, %c0_64, %c0_65], %97 {strides = array<i32>} : memref<1x4x8x16xbf16, #tpu.memory_space<vmem>>, vector<1x1x8x16xbf16>,
    %98 = vector.extract_strided_slice %65 {offsets = [0, 32], sizes = [8, 16], strides = [1, 1]} : vector<8x64xbf16> to vector<8x16xbf16>
    %c0_66 = arith.constant 0 : index
    %c2_67 = arith.constant 2 : index
    %c0_68 = arith.constant 0 : index
    %c0_69 = arith.constant 0 : index
    %99 = vector.load %arg13[%c0_66, %c2_67, %c0_68, %c0_69] : memref<1x4x8x16xbf16, #tpu.memory_space<vmem>>, vector<1x1x8x16xbf16>
    %100 = vector.shape_cast %99 : vector<1x1x8x16xbf16> to vector<8x16xbf16>
    %101 = vector.shape_cast %98 : vector<8x16xbf16> to vector<1x1x8x16xbf16>
    tpu.vector_store %arg13[%c0_66, %c2_67, %c0_68, %c0_69], %101 {strides = array<i32>} : memref<1x4x8x16xbf16, #tpu.memory_space<vmem>>, vector<1x1x8x16xbf16>,
    %102 = vector.extract_strided_slice %51 {offsets = [0, 48], sizes = [8, 16], strides = [1, 1]} : vector<8x64xbf16> to vector<8x16xbf16>
    %c0_70 = arith.constant 0 : index
    %c3 = arith.constant 3 : index
    %c0_71 = arith.constant 0 : index
    %c0_72 = arith.constant 0 : index
    %103 = vector.load %arg11[%c0_70, %c3, %c0_71, %c0_72] : memref<1x4x8x16xbf16, #tpu.memory_space<vmem>>, vector<1x1x8x16xbf16>
    %104 = vector.shape_cast %103 : vector<1x1x8x16xbf16> to vector<8x16xbf16>
    %105 = vector.shape_cast %102 : vector<8x16xbf16> to vector<1x1x8x16xbf16>
    tpu.vector_store %arg11[%c0_70, %c3, %c0_71, %c0_72], %105 {strides = array<i32>} : memref<1x4x8x16xbf16, #tpu.memory_space<vmem>>, vector<1x1x8x16xbf16>,
    %106 = vector.extract_strided_slice %64 {offsets = [0, 48], sizes = [8, 16], strides = [1, 1]} : vector<8x64xbf16> to vector<8x16xbf16>
    %c0_73 = arith.constant 0 : index
    %c3_74 = arith.constant 3 : index
    %c0_75 = arith.constant 0 : index
    %c0_76 = arith.constant 0 : index
    %107 = vector.load %arg12[%c0_73, %c3_74, %c0_75, %c0_76] : memref<1x4x8x16xbf16, #tpu.memory_space<vmem>>, vector<1x1x8x16xbf16>
    %108 = vector.shape_cast %107 : vector<1x1x8x16xbf16> to vector<8x16xbf16>
    %109 = vector.shape_cast %106 : vector<8x16xbf16> to vector<1x1x8x16xbf16>
    tpu.vector_store %arg12[%c0_73, %c3_74, %c0_75, %c0_76], %109 {strides = array<i32>} : memref<1x4x8x16xbf16, #tpu.memory_space<vmem>>, vector<1x1x8x16xbf16>,
    %110 = vector.extract_strided_slice %65 {offsets = [0, 48], sizes = [8, 16], strides = [1, 1]} : vector<8x64xbf16> to vector<8x16xbf16>
    %c0_77 = arith.constant 0 : index
    %c3_78 = arith.constant 3 : index
    %c0_79 = arith.constant 0 : index
    %c0_80 = arith.constant 0 : index
    %111 = vector.load %arg13[%c0_77, %c3_78, %c0_79, %c0_80] : memref<1x4x8x16xbf16, #tpu.memory_space<vmem>>, vector<1x1x8x16xbf16>
    %112 = vector.shape_cast %111 : vector<1x1x8x16xbf16> to vector<8x16xbf16>
    %113 = vector.shape_cast %110 : vector<8x16xbf16> to vector<1x1x8x16xbf16>
    tpu.vector_store %arg13[%c0_77, %c3_78, %c0_79, %c0_80], %113 {strides = array<i32>} : memref<1x4x8x16xbf16, #tpu.memory_space<vmem>>, vector<1x1x8x16xbf16>,
    return
  }
  func.func @transform_0(%arg0: i32, %arg1: i32) -> (i32, i32, i32) {
    %c0_i32 = arith.constant 0 : i32
    %c0_i32_0 = arith.constant 0 : i32
    return %arg0, %arg1, %c0_i32 : i32, i32, i32
  }
  func.func @transform_1(%arg0: i32, %arg1: i32) -> (i32, i32, i32) {
    %c0_i32 = arith.constant 0 : i32
    %c0_i32_0 = arith.constant 0 : i32
    %c0_i32_1 = arith.constant 0 : i32
    return %arg0, %c0_i32, %c0_i32_0 : i32, i32, i32
  }
  func.func @transform_2(%arg0: i32, %arg1: i32) -> (i32, i32, i32) {
    %c0_i32 = arith.constant 0 : i32
    %c0_i32_0 = arith.constant 0 : i32
    %c0_i32_1 = arith.constant 0 : i32
    return %arg0, %c0_i32, %c0_i32_0 : i32, i32, i32
  }
  func.func @transform_3(%arg0: i32, %arg1: i32) -> (i32, i32) {
    %c0_i32 = arith.constant 0 : i32
    %c0_i32_0 = arith.constant 0 : i32
    %c0_i32_1 = arith.constant 0 : i32
    return %c0_i32, %c0_i32_0 : i32, i32
  }
  func.func @transform_4(%arg0: i32, %arg1: i32) -> (i32, i32) {
    %c0_i32 = arith.constant 0 : i32
    %c0_i32_0 = arith.constant 0 : i32
    %c0_i32_1 = arith.constant 0 : i32
    return %c0_i32, %c0_i32_0 : i32, i32
  }
  func.func @transform_5(%arg0: i32, %arg1: i32) -> (i32, i32) {
    %c0_i32 = arith.constant 0 : i32
    %c0_i32_0 = arith.constant 0 : i32
    %c0_i32_1 = arith.constant 0 : i32
    return %c0_i32, %c0_i32_0 : i32, i32
  }
  func.func @transform_6(%arg0: i32, %arg1: i32) -> (i32, i32) {
    %c0_i32 = arith.constant 0 : i32
    %c0_i32_0 = arith.constant 0 : i32
    %c0_i32_1 = arith.constant 0 : i32
    return %c0_i32, %c0_i32_0 : i32, i32
  }
  func.func @transform_7(%arg0: i32, %arg1: i32) -> (i32, i32) {
    %c0_i32 = arith.constant 0 : i32
    %c0_i32_0 = arith.constant 0 : i32
    %c0_i32_1 = arith.constant 0 : i32
    return %c0_i32, %c0_i32_0 : i32, i32
  }
  func.func @transform_8(%arg0: i32, %arg1: i32) -> (i32, i32) {
    %c0_i32 = arith.constant 0 : i32
    %c0_i32_0 = arith.constant 0 : i32
    %c0_i32_1 = arith.constant 0 : i32
    return %c0_i32, %c0_i32_0 : i32, i32
  }
  func.func @transform_9(%arg0: i32, %arg1: i32) -> (i32, i32, i32, i32) {
    %c0_i32 = arith.constant 0 : i32
    %c0_i32_0 = arith.constant 0 : i32
    %c0_i32_1 = arith.constant 0 : i32
    return %arg0, %c0_i32, %arg1, %c0_i32_0 : i32, i32, i32, i32
  }
  func.func @transform_10(%arg0: i32, %arg1: i32) -> (i32, i32, i32, i32) {
    %c0_i32 = arith.constant 0 : i32
    %c0_i32_0 = arith.constant 0 : i32
    %c0_i32_1 = arith.constant 0 : i32
    return %arg0, %c0_i32, %arg1, %c0_i32_0 : i32, i32, i32, i32
  }
  func.func @transform_11(%arg0: i32, %arg1: i32) -> (i32, i32, i32, i32) {
    %c0_i32 = arith.constant 0 : i32
    %c0_i32_0 = arith.constant 0 : i32
    %c0_i32_1 = arith.constant 0 : i32
    return %arg0, %c0_i32, %arg1, %c0_i32_0 : i32, i32, i32, i32
  }
}

module attributes {stable_mosaic.version = 11 : i64} {
  func.func @_mlp_kernel(%arg0: i32, %arg1: i32, %arg2: i32, %arg3: memref<1x8x64xf32, #tpu.memory_space<vmem>>, %arg4: memref<1x1x64xf32, #tpu.memory_space<vmem>>, %arg5: memref<1x1x64xf32, #tpu.memory_space<vmem>>, %arg6: memref<1x1x64xf32, #tpu.memory_space<vmem>>, %arg7: memref<64x128xbf16, #tpu.memory_space<vmem>>, %arg8: memref<1x128xf32, #tpu.memory_space<vmem>>, %arg9: memref<128x64xbf16, #tpu.memory_space<vmem>>, %arg10: memref<1x64xf32, #tpu.memory_space<vmem>>, %arg11: memref<1x8x64xf32, #tpu.memory_space<vmem>>, %arg12: memref<8x64xbf16, #tpu.memory_space<vmem>>, %arg13: memref<8x64xf32, #tpu.memory_space<vmem>>) attributes {dimension_semantics = [#tpu.dimension_semantics<parallel>, #tpu.dimension_semantics<parallel>, #tpu.dimension_semantics<arbitrary>], iteration_bounds = array<i64: 2, 2, 2>, scalar_prefetch = 0 : i64, scratch_operands = 2 : i64, tpu.core_type = #tpu.core_type<tc>, window_params = [{transform_indices = @transform_0, window_bounds = array<i64: 1, 8, 64>}, {transform_indices = @transform_1, window_bounds = array<i64: 1, 1, 64>}, {transform_indices = @transform_2, window_bounds = array<i64: 1, 1, 64>}, {transform_indices = @transform_3, window_bounds = array<i64: 1, 1, 64>}, {transform_indices = @transform_4, window_bounds = array<i64: 64, 128>}, {transform_indices = @transform_5, window_bounds = array<i64: 1, 128>}, {transform_indices = @transform_6, window_bounds = array<i64: 128, 64>}, {pipeline_mode = #tpu.pipeline_mode<synchronous>, transform_indices = @transform_7, window_bounds = array<i64: 1, 64>}, {transform_indices = @transform_8, window_bounds = array<i64: 1, 8, 64>}]} {
    %c0_i32 = arith.constant 0 : i32
    %0 = arith.cmpi eq, %arg2, %c0_i32 : i32
    %1 = arith.extui %0 : i1 to i32
    %c0_i32_0 = arith.constant 0 : i32
    %2 = arith.cmpi ne, %1, %c0_i32_0 : i32
    scf.if %2 {
      %c0_15 = arith.constant 0 : index
      %c0_16 = arith.constant 0 : index
      %c0_17 = arith.constant 0 : index
      %24 = vector.load %arg3[%c0_15, %c0_16, %c0_17] : memref<1x8x64xf32, #tpu.memory_space<vmem>>, vector<1x8x64xf32>
      %25 = vector.shape_cast %24 : vector<1x8x64xf32> to vector<8x64xf32>
      %cst_18 = arith.constant dense<0.000000e+00> : vector<8xf32>
      %26 = vector.multi_reduction <add>, %25, %cst_18 [1] : vector<8x64xf32> to vector<8xf32>
      %27 = vector.shape_cast %26 : vector<8xf32> to vector<8x1xf32>
      %cst_19 = arith.constant 6.400000e+01 : f32
      %28 = vector.broadcast %cst_19 : f32 to vector<8x1xf32>
      %29 = arith.divf %27, %28 : vector<8x1xf32>
      %30 = vector.broadcast %29 : vector<8x1xf32> to vector<8x64xf32>
      %31 = arith.subf %25, %30 : vector<8x64xf32>
      %32 = arith.mulf %31, %31 : vector<8x64xf32>
      %cst_20 = arith.constant dense<0.000000e+00> : vector<8xf32>
      %33 = vector.multi_reduction <add>, %32, %cst_20 [1] : vector<8x64xf32> to vector<8xf32>
      %34 = vector.shape_cast %33 : vector<8xf32> to vector<8x1xf32>
      %cst_21 = arith.constant 6.400000e+01 : f32
      %35 = vector.broadcast %cst_21 : f32 to vector<8x1xf32>
      %36 = arith.divf %34, %35 : vector<8x1xf32>
      %37 = vector.broadcast %29 : vector<8x1xf32> to vector<8x64xf32>
      %38 = arith.subf %25, %37 : vector<8x64xf32>
      %cst_22 = arith.constant 9.99999997E-7 : f32
      %39 = vector.broadcast %cst_22 : f32 to vector<8x1xf32>
      %40 = arith.addf %36, %39 : vector<8x1xf32>
      %41 = math.rsqrt %40 : vector<8x1xf32>
      %42 = vector.broadcast %41 : vector<8x1xf32> to vector<8x64xf32>
      %43 = arith.mulf %38, %42 : vector<8x64xf32>
      %c0_23 = arith.constant 0 : index
      %c0_24 = arith.constant 0 : index
      %c0_25 = arith.constant 0 : index
      %44 = vector.load %arg5[%c0_23, %c0_24, %c0_25] : memref<1x1x64xf32, #tpu.memory_space<vmem>>, vector<1x1x64xf32>
      %45 = vector.shape_cast %44 : vector<1x1x64xf32> to vector<1x64xf32>
      %cst_26 = arith.constant 1.000000e+00 : f32
      %46 = vector.broadcast %cst_26 : f32 to vector<1x64xf32>
      %47 = arith.addf %46, %45 : vector<1x64xf32>
      %48 = vector.broadcast %47 : vector<1x64xf32> to vector<8x64xf32>
      %49 = arith.mulf %43, %48 : vector<8x64xf32>
      %c0_27 = arith.constant 0 : index
      %c0_28 = arith.constant 0 : index
      %c0_29 = arith.constant 0 : index
      %50 = vector.load %arg4[%c0_27, %c0_28, %c0_29] : memref<1x1x64xf32, #tpu.memory_space<vmem>>, vector<1x1x64xf32>
      %51 = vector.shape_cast %50 : vector<1x1x64xf32> to vector<1x64xf32>
      %52 = vector.broadcast %51 : vector<1x64xf32> to vector<8x64xf32>
      %53 = arith.addf %49, %52 : vector<8x64xf32>
      %54 = arith.truncf %53 : vector<8x64xf32> to vector<8x64xbf16>
      %c0_30 = arith.constant 0 : index
      %c0_31 = arith.constant 0 : index
      %55 = vector.load %arg12[%c0_30, %c0_31] : memref<8x64xbf16, #tpu.memory_space<vmem>>, vector<8x64xbf16>
      tpu.vector_store %arg12[%c0_30, %c0_31], %54 {strides = array<i32>} : memref<8x64xbf16, #tpu.memory_space<vmem>>, vector<8x64xbf16>,
      %cst_32 = arith.constant 0.000000e+00 : f32
      %56 = vector.broadcast %cst_32 : f32 to vector<8x64xf32>
      %c0_33 = arith.constant 0 : index
      %c0_34 = arith.constant 0 : index
      %57 = vector.load %arg13[%c0_33, %c0_34] : memref<8x64xf32, #tpu.memory_space<vmem>>, vector<8x64xf32>
      tpu.vector_store %arg13[%c0_33, %c0_34], %56 {strides = array<i32>} : memref<8x64xf32, #tpu.memory_space<vmem>>, vector<8x64xf32>,
    } else {
    }
    %c0 = arith.constant 0 : index
    %c0_1 = arith.constant 0 : index
    %3 = vector.load %arg12[%c0, %c0_1] : memref<8x64xbf16, #tpu.memory_space<vmem>>, vector<8x64xbf16>
    %c0_2 = arith.constant 0 : index
    %c0_3 = arith.constant 0 : index
    %4 = vector.load %arg7[%c0_2, %c0_3] : memref<64x128xbf16, #tpu.memory_space<vmem>>, vector<64x128xbf16>
    %cst = arith.constant dense<0.000000e+00> : vector<8x128xf32>
    %5 = tpu.matmul %3, %4, %cst {dimension_numbers = #tpu.dot_dimension_numbers<[1], [0], [0], [1], [0, 0, 1, 1], [], []>} : vector<8x64xbf16>, vector<64x128xbf16>, vector<8x128xf32> -> vector<8x128xf32>
    %c0_4 = arith.constant 0 : index
    %c0_5 = arith.constant 0 : index
    %6 = vector.load %arg8[%c0_4, %c0_5] : memref<1x128xf32, #tpu.memory_space<vmem>>, vector<1x128xf32>
    %7 = vector.broadcast %6 : vector<1x128xf32> to vector<8x128xf32>
    %8 = arith.addf %5, %7 : vector<8x128xf32>
    %9 = arith.negf %8 : vector<8x128xf32>
    %10 = math.exp %9 : vector<8x128xf32>
    %cst_6 = arith.constant 1.000000e+00 : f32
    %11 = vector.broadcast %cst_6 : f32 to vector<8x128xf32>
    %12 = arith.addf %11, %10 : vector<8x128xf32>
    %13 = arith.divf %11, %12 : vector<8x128xf32>
    %14 = arith.mulf %8, %13 : vector<8x128xf32>
    %c0_7 = arith.constant 0 : index
    %c0_8 = arith.constant 0 : index
    %15 = vector.load %arg13[%c0_7, %c0_8] : memref<8x64xf32, #tpu.memory_space<vmem>>, vector<8x64xf32>
    %16 = arith.truncf %14 : vector<8x128xf32> to vector<8x128xbf16>
    %c0_9 = arith.constant 0 : index
    %c0_10 = arith.constant 0 : index
    %17 = vector.load %arg9[%c0_9, %c0_10] : memref<128x64xbf16, #tpu.memory_space<vmem>>, vector<128x64xbf16>
    %cst_11 = arith.constant dense<0.000000e+00> : vector<8x64xf32>
    %18 = tpu.matmul %16, %17, %cst_11 {dimension_numbers = #tpu.dot_dimension_numbers<[1], [0], [0], [1], [0, 0, 1, 1], [], []>} : vector<8x128xbf16>, vector<128x64xbf16>, vector<8x64xf32> -> vector<8x64xf32>
    %19 = arith.addf %15, %18 : vector<8x64xf32>
    %c0_12 = arith.constant 0 : index
    %c0_13 = arith.constant 0 : index
    %20 = vector.load %arg13[%c0_12, %c0_13] : memref<8x64xf32, #tpu.memory_space<vmem>>, vector<8x64xf32>
    tpu.vector_store %arg13[%c0_12, %c0_13], %19 {strides = array<i32>} : memref<8x64xf32, #tpu.memory_space<vmem>>, vector<8x64xf32>,
    %c1_i32 = arith.constant 1 : i32
    %21 = arith.cmpi eq, %arg2, %c1_i32 : i32
    %22 = arith.extui %21 : i1 to i32
    %c0_i32_14 = arith.constant 0 : i32
    %23 = arith.cmpi ne, %22, %c0_i32_14 : i32
    scf.if %23 {
      %c0_15 = arith.constant 0 : index
      %c0_16 = arith.constant 0 : index
      %c0_17 = arith.constant 0 : index
      %24 = vector.load %arg3[%c0_15, %c0_16, %c0_17] : memref<1x8x64xf32, #tpu.memory_space<vmem>>, vector<1x8x64xf32>
      %25 = vector.shape_cast %24 : vector<1x8x64xf32> to vector<8x64xf32>
      %c0_18 = arith.constant 0 : index
      %c0_19 = arith.constant 0 : index
      %c0_20 = arith.constant 0 : index
      %26 = vector.load %arg6[%c0_18, %c0_19, %c0_20] : memref<1x1x64xf32, #tpu.memory_space<vmem>>, vector<1x1x64xf32>
      %27 = vector.shape_cast %26 : vector<1x1x64xf32> to vector<1x64xf32>
      %c0_21 = arith.constant 0 : index
      %c0_22 = arith.constant 0 : index
      %28 = vector.load %arg13[%c0_21, %c0_22] : memref<8x64xf32, #tpu.memory_space<vmem>>, vector<8x64xf32>
      %c0_23 = arith.constant 0 : index
      %c0_24 = arith.constant 0 : index
      %29 = vector.load %arg10[%c0_23, %c0_24] : memref<1x64xf32, #tpu.memory_space<vmem>>, vector<1x64xf32>
      %30 = vector.broadcast %29 : vector<1x64xf32> to vector<8x64xf32>
      %31 = arith.addf %28, %30 : vector<8x64xf32>
      %32 = vector.broadcast %27 : vector<1x64xf32> to vector<8x64xf32>
      %33 = arith.mulf %32, %31 : vector<8x64xf32>
      %34 = arith.addf %25, %33 : vector<8x64xf32>
      %c0_25 = arith.constant 0 : index
      %c0_26 = arith.constant 0 : index
      %c0_27 = arith.constant 0 : index
      %35 = vector.load %arg11[%c0_25, %c0_26, %c0_27] : memref<1x8x64xf32, #tpu.memory_space<vmem>>, vector<1x8x64xf32>
      %36 = vector.shape_cast %35 : vector<1x8x64xf32> to vector<8x64xf32>
      %37 = vector.shape_cast %34 : vector<8x64xf32> to vector<1x8x64xf32>
      tpu.vector_store %arg11[%c0_25, %c0_26, %c0_27], %37 {strides = array<i32>} : memref<1x8x64xf32, #tpu.memory_space<vmem>>, vector<1x8x64xf32>,
    } else {
    }
    return
  }
  func.func @transform_0(%arg0: i32, %arg1: i32, %arg2: i32) -> (i32, i32, i32) {
    %c0_i32 = arith.constant 0 : i32
    %c0_i32_0 = arith.constant 0 : i32
    return %arg0, %arg1, %c0_i32 : i32, i32, i32
  }
  func.func @transform_1(%arg0: i32, %arg1: i32, %arg2: i32) -> (i32, i32, i32) {
    %c0_i32 = arith.constant 0 : i32
    %c0_i32_0 = arith.constant 0 : i32
    %c0_i32_1 = arith.constant 0 : i32
    return %arg0, %c0_i32, %c0_i32_0 : i32, i32, i32
  }
  func.func @transform_2(%arg0: i32, %arg1: i32, %arg2: i32) -> (i32, i32, i32) {
    %c0_i32 = arith.constant 0 : i32
    %c0_i32_0 = arith.constant 0 : i32
    %c0_i32_1 = arith.constant 0 : i32
    return %arg0, %c0_i32, %c0_i32_0 : i32, i32, i32
  }
  func.func @transform_3(%arg0: i32, %arg1: i32, %arg2: i32) -> (i32, i32, i32) {
    %c0_i32 = arith.constant 0 : i32
    %c0_i32_0 = arith.constant 0 : i32
    %c0_i32_1 = arith.constant 0 : i32
    return %arg0, %c0_i32, %c0_i32_0 : i32, i32, i32
  }
  func.func @transform_4(%arg0: i32, %arg1: i32, %arg2: i32) -> (i32, i32) {
    %c0_i32 = arith.constant 0 : i32
    %c0_i32_0 = arith.constant 0 : i32
    return %c0_i32, %arg2 : i32, i32
  }
  func.func @transform_5(%arg0: i32, %arg1: i32, %arg2: i32) -> (i32, i32) {
    %c0_i32 = arith.constant 0 : i32
    %c0_i32_0 = arith.constant 0 : i32
    return %c0_i32, %arg2 : i32, i32
  }
  func.func @transform_6(%arg0: i32, %arg1: i32, %arg2: i32) -> (i32, i32) {
    %c0_i32 = arith.constant 0 : i32
    %c0_i32_0 = arith.constant 0 : i32
    return %arg2, %c0_i32 : i32, i32
  }
  func.func @transform_7(%arg0: i32, %arg1: i32, %arg2: i32) -> (i32, i32) {
    %c0_i32 = arith.constant 0 : i32
    %c0_i32_0 = arith.constant 0 : i32
    %c0_i32_1 = arith.constant 0 : i32
    return %c0_i32, %c0_i32_0 : i32, i32
  }
  func.func @transform_8(%arg0: i32, %arg1: i32, %arg2: i32) -> (i32, i32, i32) {
    %c0_i32 = arith.constant 0 : i32
    %c0_i32_0 = arith.constant 0 : i32
    return %arg0, %arg1, %c0_i32 : i32, i32, i32
  }
}

module attributes {stable_mosaic.version = 11 : i64} {
  func.func @_flash_attn_proj_kernel(%arg0: i32, %arg1: i32, %arg2: i32, %arg3: memref<1x4x8x16xbf16, #tpu.memory_space<vmem>>, %arg4: memref<1x4x8x16xbf16, #tpu.memory_space<vmem>>, %arg5: memref<1x4x8x16xbf16, #tpu.memory_space<vmem>>, %arg6: memref<1x8x64xf32, #tpu.memory_space<vmem>>, %arg7: memref<1x1x64xf32, #tpu.memory_space<vmem>>, %arg8: memref<64x64xbf16, #tpu.memory_space<vmem>>, %arg9: memref<1x64xf32, #tpu.memory_space<vmem>>, %arg10: memref<1x8x64xf32, #tpu.memory_space<vmem>>, %arg11: memref<4x8x1xf32, #tpu.memory_space<vmem>>, %arg12: memref<4x8x1xf32, #tpu.memory_space<vmem>>, %arg13: memref<4x8x16xf32, #tpu.memory_space<vmem>>) attributes {dimension_semantics = [#tpu.dimension_semantics<parallel>, #tpu.dimension_semantics<parallel>, #tpu.dimension_semantics<arbitrary>], iteration_bounds = array<i64: 2, 2, 2>, scalar_prefetch = 0 : i64, scratch_operands = 3 : i64, tpu.core_type = #tpu.core_type<tc>, window_params = [{transform_indices = @transform_0, window_bounds = array<i64: 1, 4, 8, 16>}, {transform_indices = @transform_1, window_bounds = array<i64: 1, 4, 8, 16>}, {transform_indices = @transform_2, window_bounds = array<i64: 1, 4, 8, 16>}, {transform_indices = @transform_3, window_bounds = array<i64: 1, 8, 64>}, {transform_indices = @transform_4, window_bounds = array<i64: 1, 1, 64>}, {pipeline_mode = #tpu.pipeline_mode<synchronous>, transform_indices = @transform_5, window_bounds = array<i64: 64, 64>}, {pipeline_mode = #tpu.pipeline_mode<synchronous>, transform_indices = @transform_6, window_bounds = array<i64: 1, 64>}, {transform_indices = @transform_7, window_bounds = array<i64: 1, 8, 64>}]} {
    %c0_i32 = arith.constant 0 : i32
    %0 = arith.cmpi eq, %arg2, %c0_i32 : i32
    %1 = arith.extui %0 : i1 to i32
    %c0_i32_0 = arith.constant 0 : i32
    %2 = arith.cmpi ne, %1, %c0_i32_0 : i32
    scf.if %2 {
      %cst_34 = arith.constant 0xFF800000 : f32
      %36 = vector.broadcast %cst_34 : f32 to vector<4x8x1xf32>
      %c0_35 = arith.constant 0 : index
      %c0_36 = arith.constant 0 : index
      %c0_37 = arith.constant 0 : index
      %37 = vector.load %arg11[%c0_35, %c0_36, %c0_37] : memref<4x8x1xf32, #tpu.memory_space<vmem>>, vector<4x8x1xf32>
      tpu.vector_store %arg11[%c0_35, %c0_36, %c0_37], %36 {strides = array<i32>} : memref<4x8x1xf32, #tpu.memory_space<vmem>>, vector<4x8x1xf32>,
      %cst_38 = arith.constant 0.000000e+00 : f32
      %38 = vector.broadcast %cst_38 : f32 to vector<4x8x1xf32>
      %c0_39 = arith.constant 0 : index
      %c0_40 = arith.constant 0 : index
      %c0_41 = arith.constant 0 : index
      %39 = vector.load %arg12[%c0_39, %c0_40, %c0_41] : memref<4x8x1xf32, #tpu.memory_space<vmem>>, vector<4x8x1xf32>
      tpu.vector_store %arg12[%c0_39, %c0_40, %c0_41], %38 {strides = array<i32>} : memref<4x8x1xf32, #tpu.memory_space<vmem>>, vector<4x8x1xf32>,
      %cst_42 = arith.constant 0.000000e+00 : f32
      %40 = vector.broadcast %cst_42 : f32 to vector<4x8x16xf32>
      %c0_43 = arith.constant 0 : index
      %c0_44 = arith.constant 0 : index
      %c0_45 = arith.constant 0 : index
      %41 = vector.load %arg13[%c0_43, %c0_44, %c0_45] : memref<4x8x16xf32, #tpu.memory_space<vmem>>, vector<4x8x16xf32>
      tpu.vector_store %arg13[%c0_43, %c0_44, %c0_45], %40 {strides = array<i32>} : memref<4x8x16xf32, #tpu.memory_space<vmem>>, vector<4x8x16xf32>,
    } else {
    }
    %c0 = arith.constant 0 : index
    %c0_1 = arith.constant 0 : index
    %c0_2 = arith.constant 0 : index
    %c0_3 = arith.constant 0 : index
    %3 = vector.load %arg3[%c0, %c0_1, %c0_2, %c0_3] : memref<1x4x8x16xbf16, #tpu.memory_space<vmem>>, vector<1x4x8x16xbf16>
    %4 = vector.shape_cast %3 : vector<1x4x8x16xbf16> to vector<4x8x16xbf16>
    %c0_4 = arith.constant 0 : index
    %c0_5 = arith.constant 0 : index
    %c0_6 = arith.constant 0 : index
    %c0_7 = arith.constant 0 : index
    %5 = vector.load %arg4[%c0_4, %c0_5, %c0_6, %c0_7] : memref<1x4x8x16xbf16, #tpu.memory_space<vmem>>, vector<1x4x8x16xbf16>
    %6 = vector.shape_cast %5 : vector<1x4x8x16xbf16> to vector<4x8x16xbf16>
    %c0_8 = arith.constant 0 : index
    %c0_9 = arith.constant 0 : index
    %c0_10 = arith.constant 0 : index
    %c0_11 = arith.constant 0 : index
    %7 = vector.load %arg5[%c0_8, %c0_9, %c0_10, %c0_11] : memref<1x4x8x16xbf16, #tpu.memory_space<vmem>>, vector<1x4x8x16xbf16>
    %8 = vector.shape_cast %7 : vector<1x4x8x16xbf16> to vector<4x8x16xbf16>
    "tpu.trace_start"() <{level = 10 : i32, message = "hqd,hkd->hqk"}> : () -> ()
    %cst = arith.constant dense<0.000000e+00> : vector<4x8x8xf32>
    %9 = tpu.matmul %4, %6, %cst {dimension_numbers = #tpu.dot_dimension_numbers<[2], [2], [1], [1], [0, 0, 0, 1, 1, 1], [0], [0]>} : vector<4x8x16xbf16>, vector<4x8x16xbf16>, vector<4x8x8xf32> -> vector<4x8x8xf32>
    "tpu.trace_stop"() : () -> ()
    %c0_12 = arith.constant 0 : index
    %c0_13 = arith.constant 0 : index
    %c0_14 = arith.constant 0 : index
    %10 = vector.load %arg11[%c0_12, %c0_13, %c0_14] : memref<4x8x1xf32, #tpu.memory_space<vmem>>, vector<4x8x1xf32>
    %cst_15 = arith.constant dense<0xFF800000> : vector<4x8xf32>
    %11 = vector.multi_reduction <maximumf>, %9, %cst_15 [2] : vector<4x8x8xf32> to vector<4x8xf32>
    %12 = vector.shape_cast %11 : vector<4x8xf32> to vector<4x8x1xf32>
    %13 = arith.maximumf %10, %12 : vector<4x8x1xf32>
    %14 = arith.subf %10, %13 : vector<4x8x1xf32>
    %15 = math.exp %14 : vector<4x8x1xf32>
    %16 = vector.broadcast %13 : vector<4x8x1xf32> to vector<4x8x8xf32>
    %17 = arith.subf %9, %16 : vector<4x8x8xf32>
    %18 = math.exp %17 : vector<4x8x8xf32>
    %c0_16 = arith.constant 0 : index
    %c0_17 = arith.constant 0 : index
    %c0_18 = arith.constant 0 : index
    %19 = vector.load %arg12[%c0_16, %c0_17, %c0_18] : memref<4x8x1xf32, #tpu.memory_space<vmem>>, vector<4x8x1xf32>
    %20 = arith.mulf %15, %19 : vector<4x8x1xf32>
    %cst_19 = arith.constant dense<0.000000e+00> : vector<4x8xf32>
    %21 = vector.multi_reduction <add>, %18, %cst_19 [2] : vector<4x8x8xf32> to vector<4x8xf32>
    %22 = vector.shape_cast %21 : vector<4x8xf32> to vector<4x8x1xf32>
    %23 = arith.addf %20, %22 : vector<4x8x1xf32>
    %c0_20 = arith.constant 0 : index
    %c0_21 = arith.constant 0 : index
    %c0_22 = arith.constant 0 : index
    %24 = vector.load %arg12[%c0_20, %c0_21, %c0_22] : memref<4x8x1xf32, #tpu.memory_space<vmem>>, vector<4x8x1xf32>
    tpu.vector_store %arg12[%c0_20, %c0_21, %c0_22], %23 {strides = array<i32>} : memref<4x8x1xf32, #tpu.memory_space<vmem>>, vector<4x8x1xf32>,
    %c0_23 = arith.constant 0 : index
    %c0_24 = arith.constant 0 : index
    %c0_25 = arith.constant 0 : index
    %25 = vector.load %arg13[%c0_23, %c0_24, %c0_25] : memref<4x8x16xf32, #tpu.memory_space<vmem>>, vector<4x8x16xf32>
    %26 = vector.broadcast %15 : vector<4x8x1xf32> to vector<4x8x16xf32>
    %27 = arith.mulf %26, %25 : vector<4x8x16xf32>
    %28 = arith.truncf %18 : vector<4x8x8xf32> to vector<4x8x8xbf16>
    "tpu.trace_start"() <{level = 10 : i32, message = "hqk,hkd->hqd"}> : () -> ()
    %cst_26 = arith.constant dense<0.000000e+00> : vector<4x8x16xf32>
    %29 = tpu.matmul %28, %8, %cst_26 {dimension_numbers = #tpu.dot_dimension_numbers<[2], [1], [1], [2], [0, 0, 0, 1, 1, 2], [0], [0]>} : vector<4x8x8xbf16>, vector<4x8x16xbf16>, vector<4x8x16xf32> -> vector<4x8x16xf32>
    "tpu.trace_stop"() : () -> ()
    %30 = arith.addf %27, %29 : vector<4x8x16xf32>
    %c0_27 = arith.constant 0 : index
    %c0_28 = arith.constant 0 : index
    %c0_29 = arith.constant 0 : index
    %31 = vector.load %arg13[%c0_27, %c0_28, %c0_29] : memref<4x8x16xf32, #tpu.memory_space<vmem>>, vector<4x8x16xf32>
    tpu.vector_store %arg13[%c0_27, %c0_28, %c0_29], %30 {strides = array<i32>} : memref<4x8x16xf32, #tpu.memory_space<vmem>>, vector<4x8x16xf32>,
    %c0_30 = arith.constant 0 : index
    %c0_31 = arith.constant 0 : index
    %c0_32 = arith.constant 0 : index
    %32 = vector.load %arg11[%c0_30, %c0_31, %c0_32] : memref<4x8x1xf32, #tpu.memory_space<vmem>>, vector<4x8x1xf32>
    tpu.vector_store %arg11[%c0_30, %c0_31, %c0_32], %13 {strides = array<i32>} : memref<4x8x1xf32, #tpu.memory_space<vmem>>, vector<4x8x1xf32>,
    %c1_i32 = arith.constant 1 : i32
    %33 = arith.cmpi eq, %arg2, %c1_i32 : i32
    %34 = arith.extui %33 : i1 to i32
    %c0_i32_33 = arith.constant 0 : i32
    %35 = arith.cmpi ne, %34, %c0_i32_33 : i32
    scf.if %35 {
      %c0_34 = arith.constant 0 : index
      %c0_35 = arith.constant 0 : index
      %c0_36 = arith.constant 0 : index
      %36 = vector.load %arg13[%c0_34, %c0_35, %c0_36] : memref<4x8x16xf32, #tpu.memory_space<vmem>>, vector<4x8x16xf32>
      %c0_37 = arith.constant 0 : index
      %c0_38 = arith.constant 0 : index
      %c0_39 = arith.constant 0 : index
      %37 = vector.load %arg12[%c0_37, %c0_38, %c0_39] : memref<4x8x1xf32, #tpu.memory_space<vmem>>, vector<4x8x1xf32>
      %38 = tpu.reciprocal %37 {approx = true} : vector<4x8x1xf32> -> vector<4x8x1xf32>
      %39 = vector.broadcast %38 : vector<4x8x1xf32> to vector<4x8x16xf32>
      %40 = arith.mulf %36, %39 : vector<4x8x16xf32>
      %41 = vector.extract_strided_slice %40 {offsets = [0, 0, 0], sizes = [1, 8, 16], strides = [1, 1, 1]} : vector<4x8x16xf32> to vector<1x8x16xf32>
      %42 = vector.shape_cast %41 : vector<1x8x16xf32> to vector<8x16xf32>
      %43 = vector.extract_strided_slice %40 {offsets = [1, 0, 0], sizes = [1, 8, 16], strides = [1, 1, 1]} : vector<4x8x16xf32> to vector<1x8x16xf32>
      %44 = vector.shape_cast %43 : vector<1x8x16xf32> to vector<8x16xf32>
      %45 = vector.extract_strided_slice %40 {offsets = [2, 0, 0], sizes = [1, 8, 16], strides = [1, 1, 1]} : vector<4x8x16xf32> to vector<1x8x16xf32>
      %46 = vector.shape_cast %45 : vector<1x8x16xf32> to vector<8x16xf32>
      %47 = vector.extract_strided_slice %40 {offsets = [3, 0, 0], sizes = [1, 8, 16], strides = [1, 1, 1]} : vector<4x8x16xf32> to vector<1x8x16xf32>
      %48 = vector.shape_cast %47 : vector<1x8x16xf32> to vector<8x16xf32>
      %49 = tpu.concatenate %42, %44, %46, %48 in 1 : vector<8x16xf32>, vector<8x16xf32>, vector<8x16xf32>, vector<8x16xf32> -> vector<8x64xf32>
      %50 = arith.truncf %49 : vector<8x64xf32> to vector<8x64xbf16>
      %c0_40 = arith.constant 0 : index
      %c0_41 = arith.constant 0 : index
      %51 = vector.load %arg8[%c0_40, %c0_41] : memref<64x64xbf16, #tpu.memory_space<vmem>>, vector<64x64xbf16>
      %cst_42 = arith.constant dense<0.000000e+00> : vector<8x64xf32>
      %52 = tpu.matmul %50, %51, %cst_42 {dimension_numbers = #tpu.dot_dimension_numbers<[1], [0], [0], [1], [0, 0, 1, 1], [], []>} : vector<8x64xbf16>, vector<64x64xbf16>, vector<8x64xf32> -> vector<8x64xf32>
      %c0_43 = arith.constant 0 : index
      %c0_44 = arith.constant 0 : index
      %53 = vector.load %arg9[%c0_43, %c0_44] : memref<1x64xf32, #tpu.memory_space<vmem>>, vector<1x64xf32>
      %54 = vector.broadcast %53 : vector<1x64xf32> to vector<8x64xf32>
      %55 = arith.addf %52, %54 : vector<8x64xf32>
      %c0_45 = arith.constant 0 : index
      %c0_46 = arith.constant 0 : index
      %c0_47 = arith.constant 0 : index
      %56 = vector.load %arg6[%c0_45, %c0_46, %c0_47] : memref<1x8x64xf32, #tpu.memory_space<vmem>>, vector<1x8x64xf32>
      %57 = vector.shape_cast %56 : vector<1x8x64xf32> to vector<8x64xf32>
      %c0_48 = arith.constant 0 : index
      %c0_49 = arith.constant 0 : index
      %c0_50 = arith.constant 0 : index
      %58 = vector.load %arg7[%c0_48, %c0_49, %c0_50] : memref<1x1x64xf32, #tpu.memory_space<vmem>>, vector<1x1x64xf32>
      %59 = vector.shape_cast %58 : vector<1x1x64xf32> to vector<1x64xf32>
      %60 = vector.broadcast %59 : vector<1x64xf32> to vector<8x64xf32>
      %61 = arith.mulf %60, %55 : vector<8x64xf32>
      %62 = arith.addf %57, %61 : vector<8x64xf32>
      %c0_51 = arith.constant 0 : index
      %c0_52 = arith.constant 0 : index
      %c0_53 = arith.constant 0 : index
      %63 = vector.load %arg10[%c0_51, %c0_52, %c0_53] : memref<1x8x64xf32, #tpu.memory_space<vmem>>, vector<1x8x64xf32>
      %64 = vector.shape_cast %63 : vector<1x8x64xf32> to vector<8x64xf32>
      %65 = vector.shape_cast %62 : vector<8x64xf32> to vector<1x8x64xf32>
      tpu.vector_store %arg10[%c0_51, %c0_52, %c0_53], %65 {strides = array<i32>} : memref<1x8x64xf32, #tpu.memory_space<vmem>>, vector<1x8x64xf32>,
    } else {
    }
    return
  }
  func.func @transform_0(%arg0: i32, %arg1: i32, %arg2: i32) -> (i32, i32, i32, i32) {
    %c0_i32 = arith.constant 0 : i32
    %c0_i32_0 = arith.constant 0 : i32
    %c0_i32_1 = arith.constant 0 : i32
    return %arg0, %c0_i32, %arg1, %c0_i32_0 : i32, i32, i32, i32
  }
  func.func @transform_1(%arg0: i32, %arg1: i32, %arg2: i32) -> (i32, i32, i32, i32) {
    %c0_i32 = arith.constant 0 : i32
    %c0_i32_0 = arith.constant 0 : i32
    %c0_i32_1 = arith.constant 0 : i32
    return %arg0, %c0_i32, %arg2, %c0_i32_0 : i32, i32, i32, i32
  }
  func.func @transform_2(%arg0: i32, %arg1: i32, %arg2: i32) -> (i32, i32, i32, i32) {
    %c0_i32 = arith.constant 0 : i32
    %c0_i32_0 = arith.constant 0 : i32
    %c0_i32_1 = arith.constant 0 : i32
    return %arg0, %c0_i32, %arg2, %c0_i32_0 : i32, i32, i32, i32
  }
  func.func @transform_3(%arg0: i32, %arg1: i32, %arg2: i32) -> (i32, i32, i32) {
    %c0_i32 = arith.constant 0 : i32
    %c0_i32_0 = arith.constant 0 : i32
    return %arg0, %arg1, %c0_i32 : i32, i32, i32
  }
  func.func @transform_4(%arg0: i32, %arg1: i32, %arg2: i32) -> (i32, i32, i32) {
    %c0_i32 = arith.constant 0 : i32
    %c0_i32_0 = arith.constant 0 : i32
    %c0_i32_1 = arith.constant 0 : i32
    return %arg0, %c0_i32, %c0_i32_0 : i32, i32, i32
  }
  func.func @transform_5(%arg0: i32, %arg1: i32, %arg2: i32) -> (i32, i32) {
    %c0_i32 = arith.constant 0 : i32
    %c0_i32_0 = arith.constant 0 : i32
    %c0_i32_1 = arith.constant 0 : i32
    return %c0_i32, %c0_i32_0 : i32, i32
  }
  func.func @transform_6(%arg0: i32, %arg1: i32, %arg2: i32) -> (i32, i32) {
    %c0_i32 = arith.constant 0 : i32
    %c0_i32_0 = arith.constant 0 : i32
    %c0_i32_1 = arith.constant 0 : i32
    return %c0_i32, %c0_i32_0 : i32, i32
  }
  func.func @transform_7(%arg0: i32, %arg1: i32, %arg2: i32) -> (i32, i32, i32) {
    %c0_i32 = arith.constant 0 : i32
    %c0_i32_0 = arith.constant 0 : i32
    return %arg0, %arg1, %c0_i32 : i32, i32, i32
  }
}

module attributes {stable_mosaic.version = 11 : i64} {
  func.func @_mlp_kernel(%arg0: i32, %arg1: i32, %arg2: i32, %arg3: memref<1x8x64xf32, #tpu.memory_space<vmem>>, %arg4: memref<1x1x64xf32, #tpu.memory_space<vmem>>, %arg5: memref<1x1x64xf32, #tpu.memory_space<vmem>>, %arg6: memref<1x1x64xf32, #tpu.memory_space<vmem>>, %arg7: memref<64x128xbf16, #tpu.memory_space<vmem>>, %arg8: memref<1x128xf32, #tpu.memory_space<vmem>>, %arg9: memref<128x64xbf16, #tpu.memory_space<vmem>>, %arg10: memref<1x64xf32, #tpu.memory_space<vmem>>, %arg11: memref<1x8x64xf32, #tpu.memory_space<vmem>>, %arg12: memref<8x64xbf16, #tpu.memory_space<vmem>>, %arg13: memref<8x64xf32, #tpu.memory_space<vmem>>) attributes {dimension_semantics = [#tpu.dimension_semantics<parallel>, #tpu.dimension_semantics<parallel>, #tpu.dimension_semantics<arbitrary>], iteration_bounds = array<i64: 2, 2, 2>, scalar_prefetch = 0 : i64, scratch_operands = 2 : i64, tpu.core_type = #tpu.core_type<tc>, window_params = [{transform_indices = @transform_0, window_bounds = array<i64: 1, 8, 64>}, {transform_indices = @transform_1, window_bounds = array<i64: 1, 1, 64>}, {transform_indices = @transform_2, window_bounds = array<i64: 1, 1, 64>}, {transform_indices = @transform_3, window_bounds = array<i64: 1, 1, 64>}, {transform_indices = @transform_4, window_bounds = array<i64: 64, 128>}, {transform_indices = @transform_5, window_bounds = array<i64: 1, 128>}, {transform_indices = @transform_6, window_bounds = array<i64: 128, 64>}, {pipeline_mode = #tpu.pipeline_mode<synchronous>, transform_indices = @transform_7, window_bounds = array<i64: 1, 64>}, {transform_indices = @transform_8, window_bounds = array<i64: 1, 8, 64>}]} {
    %c0_i32 = arith.constant 0 : i32
    %0 = arith.cmpi eq, %arg2, %c0_i32 : i32
    %1 = arith.extui %0 : i1 to i32
    %c0_i32_0 = arith.constant 0 : i32
    %2 = arith.cmpi ne, %1, %c0_i32_0 : i32
    scf.if %2 {
      %c0_15 = arith.constant 0 : index
      %c0_16 = arith.constant 0 : index
      %c0_17 = arith.constant 0 : index
      %24 = vector.load %arg3[%c0_15, %c0_16, %c0_17] : memref<1x8x64xf32, #tpu.memory_space<vmem>>, vector<1x8x64xf32>
      %25 = vector.shape_cast %24 : vector<1x8x64xf32> to vector<8x64xf32>
      %cst_18 = arith.constant dense<0.000000e+00> : vector<8xf32>
      %26 = vector.multi_reduction <add>, %25, %cst_18 [1] : vector<8x64xf32> to vector<8xf32>
      %27 = vector.shape_cast %26 : vector<8xf32> to vector<8x1xf32>
      %cst_19 = arith.constant 6.400000e+01 : f32
      %28 = vector.broadcast %cst_19 : f32 to vector<8x1xf32>
      %29 = arith.divf %27, %28 : vector<8x1xf32>
      %30 = vector.broadcast %29 : vector<8x1xf32> to vector<8x64xf32>
      %31 = arith.subf %25, %30 : vector<8x64xf32>
      %32 = arith.mulf %31, %31 : vector<8x64xf32>
      %cst_20 = arith.constant dense<0.000000e+00> : vector<8xf32>
      %33 = vector.multi_reduction <add>, %32, %cst_20 [1] : vector<8x64xf32> to vector<8xf32>
      %34 = vector.shape_cast %33 : vector<8xf32> to vector<8x1xf32>
      %cst_21 = arith.constant 6.400000e+01 : f32
      %35 = vector.broadcast %cst_21 : f32 to vector<8x1xf32>
      %36 = arith.divf %34, %35 : vector<8x1xf32>
      %37 = vector.broadcast %29 : vector<8x1xf32> to vector<8x64xf32>
      %38 = arith.subf %25, %37 : vector<8x64xf32>
      %cst_22 = arith.constant 9.99999997E-7 : f32
      %39 = vector.broadcast %cst_22 : f32 to vector<8x1xf32>
      %40 = arith.addf %36, %39 : vector<8x1xf32>
      %41 = math.rsqrt %40 : vector<8x1xf32>
      %42 = vector.broadcast %41 : vector<8x1xf32> to vector<8x64xf32>
      %43 = arith.mulf %38, %42 : vector<8x64xf32>
      %c0_23 = arith.constant 0 : index
      %c0_24 = arith.constant 0 : index
      %c0_25 = arith.constant 0 : index
      %44 = vector.load %arg5[%c0_23, %c0_24, %c0_25] : memref<1x1x64xf32, #tpu.memory_space<vmem>>, vector<1x1x64xf32>
      %45 = vector.shape_cast %44 : vector<1x1x64xf32> to vector<1x64xf32>
      %cst_26 = arith.constant 1.000000e+00 : f32
      %46 = vector.broadcast %cst_26 : f32 to vector<1x64xf32>
      %47 = arith.addf %46, %45 : vector<1x64xf32>
      %48 = vector.broadcast %47 : vector<1x64xf32> to vector<8x64xf32>
      %49 = arith.mulf %43, %48 : vector<8x64xf32>
      %c0_27 = arith.constant 0 : index
      %c0_28 = arith.constant 0 : index
      %c0_29 = arith.constant 0 : index
      %50 = vector.load %arg4[%c0_27, %c0_28, %c0_29] : memref<1x1x64xf32, #tpu.memory_space<vmem>>, vector<1x1x64xf32>
      %51 = vector.shape_cast %50 : vector<1x1x64xf32> to vector<1x64xf32>
      %52 = vector.broadcast %51 : vector<1x64xf32> to vector<8x64xf32>
      %53 = arith.addf %49, %52 : vector<8x64xf32>
      %54 = arith.truncf %53 : vector<8x64xf32> to vector<8x64xbf16>
      %c0_30 = arith.constant 0 : index
      %c0_31 = arith.constant 0 : index
      %55 = vector.load %arg12[%c0_30, %c0_31] : memref<8x64xbf16, #tpu.memory_space<vmem>>, vector<8x64xbf16>
      tpu.vector_store %arg12[%c0_30, %c0_31], %54 {strides = array<i32>} : memref<8x64xbf16, #tpu.memory_space<vmem>>, vector<8x64xbf16>,
      %cst_32 = arith.constant 0.000000e+00 : f32
      %56 = vector.broadcast %cst_32 : f32 to vector<8x64xf32>
      %c0_33 = arith.constant 0 : index
      %c0_34 = arith.constant 0 : index
      %57 = vector.load %arg13[%c0_33, %c0_34] : memref<8x64xf32, #tpu.memory_space<vmem>>, vector<8x64xf32>
      tpu.vector_store %arg13[%c0_33, %c0_34], %56 {strides = array<i32>} : memref<8x64xf32, #tpu.memory_space<vmem>>, vector<8x64xf32>,
    } else {
    }
    %c0 = arith.constant 0 : index
    %c0_1 = arith.constant 0 : index
    %3 = vector.load %arg12[%c0, %c0_1] : memref<8x64xbf16, #tpu.memory_space<vmem>>, vector<8x64xbf16>
    %c0_2 = arith.constant 0 : index
    %c0_3 = arith.constant 0 : index
    %4 = vector.load %arg7[%c0_2, %c0_3] : memref<64x128xbf16, #tpu.memory_space<vmem>>, vector<64x128xbf16>
    %cst = arith.constant dense<0.000000e+00> : vector<8x128xf32>
    %5 = tpu.matmul %3, %4, %cst {dimension_numbers = #tpu.dot_dimension_numbers<[1], [0], [0], [1], [0, 0, 1, 1], [], []>} : vector<8x64xbf16>, vector<64x128xbf16>, vector<8x128xf32> -> vector<8x128xf32>
    %c0_4 = arith.constant 0 : index
    %c0_5 = arith.constant 0 : index
    %6 = vector.load %arg8[%c0_4, %c0_5] : memref<1x128xf32, #tpu.memory_space<vmem>>, vector<1x128xf32>
    %7 = vector.broadcast %6 : vector<1x128xf32> to vector<8x128xf32>
    %8 = arith.addf %5, %7 : vector<8x128xf32>
    %9 = arith.negf %8 : vector<8x128xf32>
    %10 = math.exp %9 : vector<8x128xf32>
    %cst_6 = arith.constant 1.000000e+00 : f32
    %11 = vector.broadcast %cst_6 : f32 to vector<8x128xf32>
    %12 = arith.addf %11, %10 : vector<8x128xf32>
    %13 = arith.divf %11, %12 : vector<8x128xf32>
    %14 = arith.mulf %8, %13 : vector<8x128xf32>
    %c0_7 = arith.constant 0 : index
    %c0_8 = arith.constant 0 : index
    %15 = vector.load %arg13[%c0_7, %c0_8] : memref<8x64xf32, #tpu.memory_space<vmem>>, vector<8x64xf32>
    %16 = arith.truncf %14 : vector<8x128xf32> to vector<8x128xbf16>
    %c0_9 = arith.constant 0 : index
    %c0_10 = arith.constant 0 : index
    %17 = vector.load %arg9[%c0_9, %c0_10] : memref<128x64xbf16, #tpu.memory_space<vmem>>, vector<128x64xbf16>
    %cst_11 = arith.constant dense<0.000000e+00> : vector<8x64xf32>
    %18 = tpu.matmul %16, %17, %cst_11 {dimension_numbers = #tpu.dot_dimension_numbers<[1], [0], [0], [1], [0, 0, 1, 1], [], []>} : vector<8x128xbf16>, vector<128x64xbf16>, vector<8x64xf32> -> vector<8x64xf32>
    %19 = arith.addf %15, %18 : vector<8x64xf32>
    %c0_12 = arith.constant 0 : index
    %c0_13 = arith.constant 0 : index
    %20 = vector.load %arg13[%c0_12, %c0_13] : memref<8x64xf32, #tpu.memory_space<vmem>>, vector<8x64xf32>
    tpu.vector_store %arg13[%c0_12, %c0_13], %19 {strides = array<i32>} : memref<8x64xf32, #tpu.memory_space<vmem>>, vector<8x64xf32>,
    %c1_i32 = arith.constant 1 : i32
    %21 = arith.cmpi eq, %arg2, %c1_i32 : i32
    %22 = arith.extui %21 : i1 to i32
    %c0_i32_14 = arith.constant 0 : i32
    %23 = arith.cmpi ne, %22, %c0_i32_14 : i32
    scf.if %23 {
      %c0_15 = arith.constant 0 : index
      %c0_16 = arith.constant 0 : index
      %c0_17 = arith.constant 0 : index
      %24 = vector.load %arg3[%c0_15, %c0_16, %c0_17] : memref<1x8x64xf32, #tpu.memory_space<vmem>>, vector<1x8x64xf32>
      %25 = vector.shape_cast %24 : vector<1x8x64xf32> to vector<8x64xf32>
      %c0_18 = arith.constant 0 : index
      %c0_19 = arith.constant 0 : index
      %c0_20 = arith.constant 0 : index
      %26 = vector.load %arg6[%c0_18, %c0_19, %c0_20] : memref<1x1x64xf32, #tpu.memory_space<vmem>>, vector<1x1x64xf32>
      %27 = vector.shape_cast %26 : vector<1x1x64xf32> to vector<1x64xf32>
      %c0_21 = arith.constant 0 : index
      %c0_22 = arith.constant 0 : index
      %28 = vector.load %arg13[%c0_21, %c0_22] : memref<8x64xf32, #tpu.memory_space<vmem>>, vector<8x64xf32>
      %c0_23 = arith.constant 0 : index
      %c0_24 = arith.constant 0 : index
      %29 = vector.load %arg10[%c0_23, %c0_24] : memref<1x64xf32, #tpu.memory_space<vmem>>, vector<1x64xf32>
      %30 = vector.broadcast %29 : vector<1x64xf32> to vector<8x64xf32>
      %31 = arith.addf %28, %30 : vector<8x64xf32>
      %32 = vector.broadcast %27 : vector<1x64xf32> to vector<8x64xf32>
      %33 = arith.mulf %32, %31 : vector<8x64xf32>
      %34 = arith.addf %25, %33 : vector<8x64xf32>
      %c0_25 = arith.constant 0 : index
      %c0_26 = arith.constant 0 : index
      %c0_27 = arith.constant 0 : index
      %35 = vector.load %arg11[%c0_25, %c0_26, %c0_27] : memref<1x8x64xf32, #tpu.memory_space<vmem>>, vector<1x8x64xf32>
      %36 = vector.shape_cast %35 : vector<1x8x64xf32> to vector<8x64xf32>
      %37 = vector.shape_cast %34 : vector<8x64xf32> to vector<1x8x64xf32>
      tpu.vector_store %arg11[%c0_25, %c0_26, %c0_27], %37 {strides = array<i32>} : memref<1x8x64xf32, #tpu.memory_space<vmem>>, vector<1x8x64xf32>,
    } else {
    }
    return
  }
  func.func @transform_0(%arg0: i32, %arg1: i32, %arg2: i32) -> (i32, i32, i32) {
    %c0_i32 = arith.constant 0 : i32
    %c0_i32_0 = arith.constant 0 : i32
    return %arg0, %arg1, %c0_i32 : i32, i32, i32
  }
  func.func @transform_1(%arg0: i32, %arg1: i32, %arg2: i32) -> (i32, i32, i32) {
    %c0_i32 = arith.constant 0 : i32
    %c0_i32_0 = arith.constant 0 : i32
    %c0_i32_1 = arith.constant 0 : i32
    return %arg0, %c0_i32, %c0_i32_0 : i32, i32, i32
  }
  func.func @transform_2(%arg0: i32, %arg1: i32, %arg2: i32) -> (i32, i32, i32) {
    %c0_i32 = arith.constant 0 : i32
    %c0_i32_0 = arith.constant 0 : i32
    %c0_i32_1 = arith.constant 0 : i32
    return %arg0, %c0_i32, %c0_i32_0 : i32, i32, i32
  }
  func.func @transform_3(%arg0: i32, %arg1: i32, %arg2: i32) -> (i32, i32, i32) {
    %c0_i32 = arith.constant 0 : i32
    %c0_i32_0 = arith.constant 0 : i32
    %c0_i32_1 = arith.constant 0 : i32
    return %arg0, %c0_i32, %c0_i32_0 : i32, i32, i32
  }
  func.func @transform_4(%arg0: i32, %arg1: i32, %arg2: i32) -> (i32, i32) {
    %c0_i32 = arith.constant 0 : i32
    %c0_i32_0 = arith.constant 0 : i32
    return %c0_i32, %arg2 : i32, i32
  }
  func.func @transform_5(%arg0: i32, %arg1: i32, %arg2: i32) -> (i32, i32) {
    %c0_i32 = arith.constant 0 : i32
    %c0_i32_0 = arith.constant 0 : i32
    return %c0_i32, %arg2 : i32, i32
  }
  func.func @transform_6(%arg0: i32, %arg1: i32, %arg2: i32) -> (i32, i32) {
    %c0_i32 = arith.constant 0 : i32
    %c0_i32_0 = arith.constant 0 : i32
    return %arg2, %c0_i32 : i32, i32
  }
  func.func @transform_7(%arg0: i32, %arg1: i32, %arg2: i32) -> (i32, i32) {
    %c0_i32 = arith.constant 0 : i32
    %c0_i32_0 = arith.constant 0 : i32
    %c0_i32_1 = arith.constant 0 : i32
    return %c0_i32, %c0_i32_0 : i32, i32
  }
  func.func @transform_8(%arg0: i32, %arg1: i32, %arg2: i32) -> (i32, i32, i32) {
    %c0_i32 = arith.constant 0 : i32
    %c0_i32_0 = arith.constant 0 : i32
    return %arg0, %arg1, %c0_i32 : i32, i32, i32
  }
}

module attributes {stable_mosaic.version = 11 : i64} {
  func.func @_qkv_kernel(%arg0: i32, %arg1: i32, %arg2: memref<1x8x64xf32, #tpu.memory_space<vmem>>, %arg3: memref<1x1x64xf32, #tpu.memory_space<vmem>>, %arg4: memref<1x1x64xf32, #tpu.memory_space<vmem>>, %arg5: memref<64x192xbf16, #tpu.memory_space<vmem>>, %arg6: memref<1x192xf32, #tpu.memory_space<vmem>>, %arg7: memref<64x4xf32, #tpu.memory_space<vmem>>, %arg8: memref<4x64xf32, #tpu.memory_space<vmem>>, %arg9: memref<1x64xf32, #tpu.memory_space<vmem>>, %arg10: memref<1x64xf32, #tpu.memory_space<vmem>>, %arg11: memref<1x4x8x16xbf16, #tpu.memory_space<vmem>>, %arg12: memref<1x4x8x16xbf16, #tpu.memory_space<vmem>>, %arg13: memref<1x4x8x16xbf16, #tpu.memory_space<vmem>>) attributes {dimension_semantics = [#tpu.dimension_semantics<parallel>, #tpu.dimension_semantics<parallel>], iteration_bounds = array<i64: 2, 2>, scalar_prefetch = 0 : i64, scratch_operands = 0 : i64, tpu.core_type = #tpu.core_type<tc>, window_params = [{transform_indices = @transform_0, window_bounds = array<i64: 1, 8, 64>}, {transform_indices = @transform_1, window_bounds = array<i64: 1, 1, 64>}, {transform_indices = @transform_2, window_bounds = array<i64: 1, 1, 64>}, {pipeline_mode = #tpu.pipeline_mode<synchronous>, transform_indices = @transform_3, window_bounds = array<i64: 64, 192>}, {pipeline_mode = #tpu.pipeline_mode<synchronous>, transform_indices = @transform_4, window_bounds = array<i64: 1, 192>}, {pipeline_mode = #tpu.pipeline_mode<synchronous>, transform_indices = @transform_5, window_bounds = array<i64: 64, 4>}, {pipeline_mode = #tpu.pipeline_mode<synchronous>, transform_indices = @transform_6, window_bounds = array<i64: 4, 64>}, {pipeline_mode = #tpu.pipeline_mode<synchronous>, transform_indices = @transform_7, window_bounds = array<i64: 1, 64>}, {pipeline_mode = #tpu.pipeline_mode<synchronous>, transform_indices = @transform_8, window_bounds = array<i64: 1, 64>}, {transform_indices = @transform_9, window_bounds = array<i64: 1, 4, 8, 16>}, {transform_indices = @transform_10, window_bounds = array<i64: 1, 4, 8, 16>}, {transform_indices = @transform_11, window_bounds = array<i64: 1, 4, 8, 16>}]} {
    %c0 = arith.constant 0 : index
    %c0_0 = arith.constant 0 : index
    %c0_1 = arith.constant 0 : index
    %0 = vector.load %arg2[%c0, %c0_0, %c0_1] : memref<1x8x64xf32, #tpu.memory_space<vmem>>, vector<1x8x64xf32>
    %1 = vector.shape_cast %0 : vector<1x8x64xf32> to vector<8x64xf32>
    %cst = arith.constant dense<0.000000e+00> : vector<8xf32>
    %2 = vector.multi_reduction <add>, %1, %cst [1] : vector<8x64xf32> to vector<8xf32>
    %3 = vector.shape_cast %2 : vector<8xf32> to vector<8x1xf32>
    %cst_2 = arith.constant 6.400000e+01 : f32
    %4 = vector.broadcast %cst_2 : f32 to vector<8x1xf32>
    %5 = arith.divf %3, %4 : vector<8x1xf32>
    %6 = vector.broadcast %5 : vector<8x1xf32> to vector<8x64xf32>
    %7 = arith.subf %1, %6 : vector<8x64xf32>
    %8 = arith.mulf %7, %7 : vector<8x64xf32>
    %cst_3 = arith.constant dense<0.000000e+00> : vector<8xf32>
    %9 = vector.multi_reduction <add>, %8, %cst_3 [1] : vector<8x64xf32> to vector<8xf32>
    %10 = vector.shape_cast %9 : vector<8xf32> to vector<8x1xf32>
    %cst_4 = arith.constant 6.400000e+01 : f32
    %11 = vector.broadcast %cst_4 : f32 to vector<8x1xf32>
    %12 = arith.divf %10, %11 : vector<8x1xf32>
    %13 = vector.broadcast %5 : vector<8x1xf32> to vector<8x64xf32>
    %14 = arith.subf %1, %13 : vector<8x64xf32>
    %cst_5 = arith.constant 9.99999997E-7 : f32
    %15 = vector.broadcast %cst_5 : f32 to vector<8x1xf32>
    %16 = arith.addf %12, %15 : vector<8x1xf32>
    %17 = math.rsqrt %16 : vector<8x1xf32>
    %18 = vector.broadcast %17 : vector<8x1xf32> to vector<8x64xf32>
    %19 = arith.mulf %14, %18 : vector<8x64xf32>
    %c0_6 = arith.constant 0 : index
    %c0_7 = arith.constant 0 : index
    %c0_8 = arith.constant 0 : index
    %20 = vector.load %arg4[%c0_6, %c0_7, %c0_8] : memref<1x1x64xf32, #tpu.memory_space<vmem>>, vector<1x1x64xf32>
    %21 = vector.shape_cast %20 : vector<1x1x64xf32> to vector<1x64xf32>
    %cst_9 = arith.constant 1.000000e+00 : f32
    %22 = vector.broadcast %cst_9 : f32 to vector<1x64xf32>
    %23 = arith.addf %22, %21 : vector<1x64xf32>
    %24 = vector.broadcast %23 : vector<1x64xf32> to vector<8x64xf32>
    %25 = arith.mulf %19, %24 : vector<8x64xf32>
    %c0_10 = arith.constant 0 : index
    %c0_11 = arith.constant 0 : index
    %c0_12 = arith.constant 0 : index
    %26 = vector.load %arg3[%c0_10, %c0_11, %c0_12] : memref<1x1x64xf32, #tpu.memory_space<vmem>>, vector<1x1x64xf32>
    %27 = vector.shape_cast %26 : vector<1x1x64xf32> to vector<1x64xf32>
    %28 = vector.broadcast %27 : vector<1x64xf32> to vector<8x64xf32>
    %29 = arith.addf %25, %28 : vector<8x64xf32>
    %30 = arith.truncf %29 : vector<8x64xf32> to vector<8x64xbf16>
    %c0_13 = arith.constant 0 : index
    %c0_14 = arith.constant 0 : index
    %31 = vector.load %arg5[%c0_13, %c0_14] : memref<64x192xbf16, #tpu.memory_space<vmem>>, vector<64x192xbf16>
    %cst_15 = arith.constant dense<0.000000e+00> : vector<8x192xf32>
    %32 = tpu.matmul %30, %31, %cst_15 {dimension_numbers = #tpu.dot_dimension_numbers<[1], [0], [0], [1], [0, 0, 1, 1], [], []>} : vector<8x64xbf16>, vector<64x192xbf16>, vector<8x192xf32> -> vector<8x192xf32>
    %c0_16 = arith.constant 0 : index
    %c0_17 = arith.constant 0 : index
    %33 = vector.load %arg6[%c0_16, %c0_17] : memref<1x192xf32, #tpu.memory_space<vmem>>, vector<1x192xf32>
    %34 = vector.broadcast %33 : vector<1x192xf32> to vector<8x192xf32>
    %35 = arith.addf %32, %34 : vector<8x192xf32>
    %36 = vector.extract_strided_slice %35 {offsets = [0, 0], sizes = [8, 64], strides = [1, 1]} : vector<8x192xf32> to vector<8x64xf32>
    %37 = vector.extract_strided_slice %35 {offsets = [0, 64], sizes = [8, 64], strides = [1, 1]} : vector<8x192xf32> to vector<8x64xf32>
    %38 = vector.extract_strided_slice %35 {offsets = [0, 128], sizes = [8, 64], strides = [1, 1]} : vector<8x192xf32> to vector<8x64xf32>
    %39 = arith.mulf %36, %36 : vector<8x64xf32>
    %c0_18 = arith.constant 0 : index
    %c0_19 = arith.constant 0 : index
    %40 = vector.load %arg7[%c0_18, %c0_19] : memref<64x4xf32, #tpu.memory_space<vmem>>, vector<64x4xf32>
    %cst_20 = arith.constant dense<0.000000e+00> : vector<8x4xf32>
    %41 = tpu.matmul %39, %40, %cst_20 {dimension_numbers = #tpu.dot_dimension_numbers<[1], [0], [0], [1], [0, 0, 1, 1], [], []>} : vector<8x64xf32>, vector<64x4xf32>, vector<8x4xf32> -> vector<8x4xf32>
    %cst_21 = arith.constant 9.99999974E-6 : f32
    %42 = vector.broadcast %cst_21 : f32 to vector<8x4xf32>
    %43 = arith.addf %41, %42 : vector<8x4xf32>
    %44 = math.rsqrt %43 : vector<8x4xf32>
    %c0_22 = arith.constant 0 : index
    %c0_23 = arith.constant 0 : index
    %45 = vector.load %arg8[%c0_22, %c0_23] : memref<4x64xf32, #tpu.memory_space<vmem>>, vector<4x64xf32>
    %cst_24 = arith.constant dense<0.000000e+00> : vector<8x64xf32>
    %46 = tpu.matmul %44, %45, %cst_24 {dimension_numbers = #tpu.dot_dimension_numbers<[1], [0], [0], [1], [0, 0, 1, 1], [], []>} : vector<8x4xf32>, vector<4x64xf32>, vector<8x64xf32> -> vector<8x64xf32>
    %47 = arith.mulf %36, %46 : vector<8x64xf32>
    %c0_25 = arith.constant 0 : index
    %c0_26 = arith.constant 0 : index
    %48 = vector.load %arg9[%c0_25, %c0_26] : memref<1x64xf32, #tpu.memory_space<vmem>>, vector<1x64xf32>
    %49 = vector.broadcast %48 : vector<1x64xf32> to vector<8x64xf32>
    %50 = arith.mulf %47, %49 : vector<8x64xf32>
    %51 = arith.truncf %50 : vector<8x64xf32> to vector<8x64xbf16>
    %52 = arith.mulf %37, %37 : vector<8x64xf32>
    %c0_27 = arith.constant 0 : index
    %c0_28 = arith.constant 0 : index
    %53 = vector.load %arg7[%c0_27, %c0_28] : memref<64x4xf32, #tpu.memory_space<vmem>>, vector<64x4xf32>
    %cst_29 = arith.constant dense<0.000000e+00> : vector<8x4xf32>
    %54 = tpu.matmul %52, %53, %cst_29 {dimension_numbers = #tpu.dot_dimension_numbers<[1], [0], [0], [1], [0, 0, 1, 1], [], []>} : vector<8x64xf32>, vector<64x4xf32>, vector<8x4xf32> -> vector<8x4xf32>
    %cst_30 = arith.constant 9.99999974E-6 : f32
    %55 = vector.broadcast %cst_30 : f32 to vector<8x4xf32>
    %56 = arith.addf %54, %55 : vector<8x4xf32>
    %57 = math.rsqrt %56 : vector<8x4xf32>
    %c0_31 = arith.constant 0 : index
    %c0_32 = arith.constant 0 : index
    %58 = vector.load %arg8[%c0_31, %c0_32] : memref<4x64xf32, #tpu.memory_space<vmem>>, vector<4x64xf32>
    %cst_33 = arith.constant dense<0.000000e+00> : vector<8x64xf32>
    %59 = tpu.matmul %57, %58, %cst_33 {dimension_numbers = #tpu.dot_dimension_numbers<[1], [0], [0], [1], [0, 0, 1, 1], [], []>} : vector<8x4xf32>, vector<4x64xf32>, vector<8x64xf32> -> vector<8x64xf32>
    %60 = arith.mulf %37, %59 : vector<8x64xf32>
    %c0_34 = arith.constant 0 : index
    %c0_35 = arith.constant 0 : index
    %61 = vector.load %arg10[%c0_34, %c0_35] : memref<1x64xf32, #tpu.memory_space<vmem>>, vector<1x64xf32>
    %62 = vector.broadcast %61 : vector<1x64xf32> to vector<8x64xf32>
    %63 = arith.mulf %60, %62 : vector<8x64xf32>
    %64 = arith.truncf %63 : vector<8x64xf32> to vector<8x64xbf16>
    %65 = arith.truncf %38 : vector<8x64xf32> to vector<8x64xbf16>
    %66 = vector.extract_strided_slice %51 {offsets = [0, 0], sizes = [8, 16], strides = [1, 1]} : vector<8x64xbf16> to vector<8x16xbf16>
    %c0_36 = arith.constant 0 : index
    %c0_37 = arith.constant 0 : index
    %c0_38 = arith.constant 0 : index
    %c0_39 = arith.constant 0 : index
    %67 = vector.load %arg11[%c0_36, %c0_37, %c0_38, %c0_39] : memref<1x4x8x16xbf16, #tpu.memory_space<vmem>>, vector<1x1x8x16xbf16>
    %68 = vector.shape_cast %67 : vector<1x1x8x16xbf16> to vector<8x16xbf16>
    %69 = vector.shape_cast %66 : vector<8x16xbf16> to vector<1x1x8x16xbf16>
    tpu.vector_store %arg11[%c0_36, %c0_37, %c0_38, %c0_39], %69 {strides = array<i32>} : memref<1x4x8x16xbf16, #tpu.memory_space<vmem>>, vector<1x1x8x16xbf16>,
    %70 = vector.extract_strided_slice %64 {offsets = [0, 0], sizes = [8, 16], strides = [1, 1]} : vector<8x64xbf16> to vector<8x16xbf16>
    %c0_40 = arith.constant 0 : index
    %c0_41 = arith.constant 0 : index
    %c0_42 = arith.constant 0 : index
    %c0_43 = arith.constant 0 : index
    %71 = vector.load %arg12[%c0_40, %c0_41, %c0_42, %c0_43] : memref<1x4x8x16xbf16, #tpu.memory_space<vmem>>, vector<1x1x8x16xbf16>
    %72 = vector.shape_cast %71 : vector<1x1x8x16xbf16> to vector<8x16xbf16>
    %73 = vector.shape_cast %70 : vector<8x16xbf16> to vector<1x1x8x16xbf16>
    tpu.vector_store %arg12[%c0_40, %c0_41, %c0_42, %c0_43], %73 {strides = array<i32>} : memref<1x4x8x16xbf16, #tpu.memory_space<vmem>>, vector<1x1x8x16xbf16>,
    %74 = vector.extract_strided_slice %65 {offsets = [0, 0], sizes = [8, 16], strides = [1, 1]} : vector<8x64xbf16> to vector<8x16xbf16>
    %c0_44 = arith.constant 0 : index
    %c0_45 = arith.constant 0 : index
    %c0_46 = arith.constant 0 : index
    %c0_47 = arith.constant 0 : index
    %75 = vector.load %arg13[%c0_44, %c0_45, %c0_46, %c0_47] : memref<1x4x8x16xbf16, #tpu.memory_space<vmem>>, vector<1x1x8x16xbf16>
    %76 = vector.shape_cast %75 : vector<1x1x8x16xbf16> to vector<8x16xbf16>
    %77 = vector.shape_cast %74 : vector<8x16xbf16> to vector<1x1x8x16xbf16>
    tpu.vector_store %arg13[%c0_44, %c0_45, %c0_46, %c0_47], %77 {strides = array<i32>} : memref<1x4x8x16xbf16, #tpu.memory_space<vmem>>, vector<1x1x8x16xbf16>,
    %78 = vector.extract_strided_slice %51 {offsets = [0, 16], sizes = [8, 16], strides = [1, 1]} : vector<8x64xbf16> to vector<8x16xbf16>
    %c0_48 = arith.constant 0 : index
    %c1 = arith.constant 1 : index
    %c0_49 = arith.constant 0 : index
    %c0_50 = arith.constant 0 : index
    %79 = vector.load %arg11[%c0_48, %c1, %c0_49, %c0_50] : memref<1x4x8x16xbf16, #tpu.memory_space<vmem>>, vector<1x1x8x16xbf16>
    %80 = vector.shape_cast %79 : vector<1x1x8x16xbf16> to vector<8x16xbf16>
    %81 = vector.shape_cast %78 : vector<8x16xbf16> to vector<1x1x8x16xbf16>
    tpu.vector_store %arg11[%c0_48, %c1, %c0_49, %c0_50], %81 {strides = array<i32>} : memref<1x4x8x16xbf16, #tpu.memory_space<vmem>>, vector<1x1x8x16xbf16>,
    %82 = vector.extract_strided_slice %64 {offsets = [0, 16], sizes = [8, 16], strides = [1, 1]} : vector<8x64xbf16> to vector<8x16xbf16>
    %c0_51 = arith.constant 0 : index
    %c1_52 = arith.constant 1 : index
    %c0_53 = arith.constant 0 : index
    %c0_54 = arith.constant 0 : index
    %83 = vector.load %arg12[%c0_51, %c1_52, %c0_53, %c0_54] : memref<1x4x8x16xbf16, #tpu.memory_space<vmem>>, vector<1x1x8x16xbf16>
    %84 = vector.shape_cast %83 : vector<1x1x8x16xbf16> to vector<8x16xbf16>
    %85 = vector.shape_cast %82 : vector<8x16xbf16> to vector<1x1x8x16xbf16>
    tpu.vector_store %arg12[%c0_51, %c1_52, %c0_53, %c0_54], %85 {strides = array<i32>} : memref<1x4x8x16xbf16, #tpu.memory_space<vmem>>, vector<1x1x8x16xbf16>,
    %86 = vector.extract_strided_slice %65 {offsets = [0, 16], sizes = [8, 16], strides = [1, 1]} : vector<8x64xbf16> to vector<8x16xbf16>
    %c0_55 = arith.constant 0 : index
    %c1_56 = arith.constant 1 : index
    %c0_57 = arith.constant 0 : index
    %c0_58 = arith.constant 0 : index
    %87 = vector.load %arg13[%c0_55, %c1_56, %c0_57, %c0_58] : memref<1x4x8x16xbf16, #tpu.memory_space<vmem>>, vector<1x1x8x16xbf16>
    %88 = vector.shape_cast %87 : vector<1x1x8x16xbf16> to vector<8x16xbf16>
    %89 = vector.shape_cast %86 : vector<8x16xbf16> to vector<1x1x8x16xbf16>
    tpu.vector_store %arg13[%c0_55, %c1_56, %c0_57, %c0_58], %89 {strides = array<i32>} : memref<1x4x8x16xbf16, #tpu.memory_space<vmem>>, vector<1x1x8x16xbf16>,
    %90 = vector.extract_strided_slice %51 {offsets = [0, 32], sizes = [8, 16], strides = [1, 1]} : vector<8x64xbf16> to vector<8x16xbf16>
    %c0_59 = arith.constant 0 : index
    %c2 = arith.constant 2 : index
    %c0_60 = arith.constant 0 : index
    %c0_61 = arith.constant 0 : index
    %91 = vector.load %arg11[%c0_59, %c2, %c0_60, %c0_61] : memref<1x4x8x16xbf16, #tpu.memory_space<vmem>>, vector<1x1x8x16xbf16>
    %92 = vector.shape_cast %91 : vector<1x1x8x16xbf16> to vector<8x16xbf16>
    %93 = vector.shape_cast %90 : vector<8x16xbf16> to vector<1x1x8x16xbf16>
    tpu.vector_store %arg11[%c0_59, %c2, %c0_60, %c0_61], %93 {strides = array<i32>} : memref<1x4x8x16xbf16, #tpu.memory_space<vmem>>, vector<1x1x8x16xbf16>,
    %94 = vector.extract_strided_slice %64 {offsets = [0, 32], sizes = [8, 16], strides = [1, 1]} : vector<8x64xbf16> to vector<8x16xbf16>
    %c0_62 = arith.constant 0 : index
    %c2_63 = arith.constant 2 : index
    %c0_64 = arith.constant 0 : index
    %c0_65 = arith.constant 0 : index
    %95 = vector.load %arg12[%c0_62, %c2_63, %c0_64, %c0_65] : memref<1x4x8x16xbf16, #tpu.memory_space<vmem>>, vector<1x1x8x16xbf16>
    %96 = vector.shape_cast %95 : vector<1x1x8x16xbf16> to vector<8x16xbf16>
    %97 = vector.shape_cast %94 : vector<8x16xbf16> to vector<1x1x8x16xbf16>
    tpu.vector_store %arg12[%c0_62, %c2_63, %c0_64, %c0_65], %97 {strides = array<i32>} : memref<1x4x8x16xbf16, #tpu.memory_space<vmem>>, vector<1x1x8x16xbf16>,
    %98 = vector.extract_strided_slice %65 {offsets = [0, 32], sizes = [8, 16], strides = [1, 1]} : vector<8x64xbf16> to vector<8x16xbf16>
    %c0_66 = arith.constant 0 : index
    %c2_67 = arith.constant 2 : index
    %c0_68 = arith.constant 0 : index
    %c0_69 = arith.constant 0 : index
    %99 = vector.load %arg13[%c0_66, %c2_67, %c0_68, %c0_69] : memref<1x4x8x16xbf16, #tpu.memory_space<vmem>>, vector<1x1x8x16xbf16>
    %100 = vector.shape_cast %99 : vector<1x1x8x16xbf16> to vector<8x16xbf16>
    %101 = vector.shape_cast %98 : vector<8x16xbf16> to vector<1x1x8x16xbf16>
    tpu.vector_store %arg13[%c0_66, %c2_67, %c0_68, %c0_69], %101 {strides = array<i32>} : memref<1x4x8x16xbf16, #tpu.memory_space<vmem>>, vector<1x1x8x16xbf16>,
    %102 = vector.extract_strided_slice %51 {offsets = [0, 48], sizes = [8, 16], strides = [1, 1]} : vector<8x64xbf16> to vector<8x16xbf16>
    %c0_70 = arith.constant 0 : index
    %c3 = arith.constant 3 : index
    %c0_71 = arith.constant 0 : index
    %c0_72 = arith.constant 0 : index
    %103 = vector.load %arg11[%c0_70, %c3, %c0_71, %c0_72] : memref<1x4x8x16xbf16, #tpu.memory_space<vmem>>, vector<1x1x8x16xbf16>
    %104 = vector.shape_cast %103 : vector<1x1x8x16xbf16> to vector<8x16xbf16>
    %105 = vector.shape_cast %102 : vector<8x16xbf16> to vector<1x1x8x16xbf16>
    tpu.vector_store %arg11[%c0_70, %c3, %c0_71, %c0_72], %105 {strides = array<i32>} : memref<1x4x8x16xbf16, #tpu.memory_space<vmem>>, vector<1x1x8x16xbf16>,
    %106 = vector.extract_strided_slice %64 {offsets = [0, 48], sizes = [8, 16], strides = [1, 1]} : vector<8x64xbf16> to vector<8x16xbf16>
    %c0_73 = arith.constant 0 : index
    %c3_74 = arith.constant 3 : index
    %c0_75 = arith.constant 0 : index
    %c0_76 = arith.constant 0 : index
    %107 = vector.load %arg12[%c0_73, %c3_74, %c0_75, %c0_76] : memref<1x4x8x16xbf16, #tpu.memory_space<vmem>>, vector<1x1x8x16xbf16>
    %108 = vector.shape_cast %107 : vector<1x1x8x16xbf16> to vector<8x16xbf16>
    %109 = vector.shape_cast %106 : vector<8x16xbf16> to vector<1x1x8x16xbf16>
    tpu.vector_store %arg12[%c0_73, %c3_74, %c0_75, %c0_76], %109 {strides = array<i32>} : memref<1x4x8x16xbf16, #tpu.memory_space<vmem>>, vector<1x1x8x16xbf16>,
    %110 = vector.extract_strided_slice %65 {offsets = [0, 48], sizes = [8, 16], strides = [1, 1]} : vector<8x64xbf16> to vector<8x16xbf16>
    %c0_77 = arith.constant 0 : index
    %c3_78 = arith.constant 3 : index
    %c0_79 = arith.constant 0 : index
    %c0_80 = arith.constant 0 : index
    %111 = vector.load %arg13[%c0_77, %c3_78, %c0_79, %c0_80] : memref<1x4x8x16xbf16, #tpu.memory_space<vmem>>, vector<1x1x8x16xbf16>
    %112 = vector.shape_cast %111 : vector<1x1x8x16xbf16> to vector<8x16xbf16>
    %113 = vector.shape_cast %110 : vector<8x16xbf16> to vector<1x1x8x16xbf16>
    tpu.vector_store %arg13[%c0_77, %c3_78, %c0_79, %c0_80], %113 {strides = array<i32>} : memref<1x4x8x16xbf16, #tpu.memory_space<vmem>>, vector<1x1x8x16xbf16>,
    return
  }
  func.func @transform_0(%arg0: i32, %arg1: i32) -> (i32, i32, i32) {
    %c0_i32 = arith.constant 0 : i32
    %c0_i32_0 = arith.constant 0 : i32
    return %arg0, %arg1, %c0_i32 : i32, i32, i32
  }
  func.func @transform_1(%arg0: i32, %arg1: i32) -> (i32, i32, i32) {
    %c0_i32 = arith.constant 0 : i32
    %c0_i32_0 = arith.constant 0 : i32
    %c0_i32_1 = arith.constant 0 : i32
    return %arg0, %c0_i32, %c0_i32_0 : i32, i32, i32
  }
  func.func @transform_2(%arg0: i32, %arg1: i32) -> (i32, i32, i32) {
    %c0_i32 = arith.constant 0 : i32
    %c0_i32_0 = arith.constant 0 : i32
    %c0_i32_1 = arith.constant 0 : i32
    return %arg0, %c0_i32, %c0_i32_0 : i32, i32, i32
  }
  func.func @transform_3(%arg0: i32, %arg1: i32) -> (i32, i32) {
    %c0_i32 = arith.constant 0 : i32
    %c0_i32_0 = arith.constant 0 : i32
    %c0_i32_1 = arith.constant 0 : i32
    return %c0_i32, %c0_i32_0 : i32, i32
  }
  func.func @transform_4(%arg0: i32, %arg1: i32) -> (i32, i32) {
    %c0_i32 = arith.constant 0 : i32
    %c0_i32_0 = arith.constant 0 : i32
    %c0_i32_1 = arith.constant 0 : i32
    return %c0_i32, %c0_i32_0 : i32, i32
  }
  func.func @transform_5(%arg0: i32, %arg1: i32) -> (i32, i32) {
    %c0_i32 = arith.constant 0 : i32
    %c0_i32_0 = arith.constant 0 : i32
    %c0_i32_1 = arith.constant 0 : i32
    return %c0_i32, %c0_i32_0 : i32, i32
  }
  func.func @transform_6(%arg0: i32, %arg1: i32) -> (i32, i32) {
    %c0_i32 = arith.constant 0 : i32
    %c0_i32_0 = arith.constant 0 : i32
    %c0_i32_1 = arith.constant 0 : i32
    return %c0_i32, %c0_i32_0 : i32, i32
  }
  func.func @transform_7(%arg0: i32, %arg1: i32) -> (i32, i32) {
    %c0_i32 = arith.constant 0 : i32
    %c0_i32_0 = arith.constant 0 : i32
    %c0_i32_1 = arith.constant 0 : i32
    return %c0_i32, %c0_i32_0 : i32, i32
  }
  func.func @transform_8(%arg0: i32, %arg1: i32) -> (i32, i32) {
    %c0_i32 = arith.constant 0 : i32
    %c0_i32_0 = arith.constant 0 : i32
    %c0_i32_1 = arith.constant 0 : i32
    return %c0_i32, %c0_i32_0 : i32, i32
  }
  func.func @transform_9(%arg0: i32, %arg1: i32) -> (i32, i32, i32, i32) {
    %c0_i32 = arith.constant 0 : i32
    %c0_i32_0 = arith.constant 0 : i32
    %c0_i32_1 = arith.constant 0 : i32
    return %arg0, %c0_i32, %arg1, %c0_i32_0 : i32, i32, i32, i32
  }
  func.func @transform_10(%arg0: i32, %arg1: i32) -> (i32, i32, i32, i32) {
    %c0_i32 = arith.constant 0 : i32
    %c0_i32_0 = arith.constant 0 : i32
    %c0_i32_1 = arith.constant 0 : i32
    return %arg0, %c0_i32, %arg1, %c0_i32_0 : i32, i32, i32, i32
  }
  func.func @transform_11(%arg0: i32, %arg1: i32) -> (i32, i32, i32, i32) {
    %c0_i32 = arith.constant 0 : i32
    %c0_i32_0 = arith.constant 0 : i32
    %c0_i32_1 = arith.constant 0 : i32
    return %arg0, %c0_i32, %arg1, %c0_i32_0 : i32, i32, i32, i32
  }
}

</mosaic_0001>

<llo_original>
// kernel: dit_block.5
$region0: #{dit_block.5}
  #allocation0 [shape = 'u32[]', space=smem, size = 0x4, offset = 0x4, fixed_abs, tag = 'smem constant byte address 0x4 - core index']
  #allocation1 [shape = 'u32[72,128]{1,0:T(1,128)}', space=vmem, size = 0x9000, scoped, tag = 'internal scratch']
  #allocation2 [shape = 'bf16[8,64]{1,0:T(8,128)(2,1)}', space=vmem, size = 0x800, scoped, tag = 'scratch operand']
  #allocation3 [shape = 'f32[8,64]{1,0:T(8,128)}', space=vmem, size = 0x1000, scoped, tag = 'scratch operand']
  %s0 = inlined_call_operand.vmem [shape: f32[2,16,64], index: 0, kind: input, shape index: {}]
  %s1 = inlined_call_operand.vmem [shape: f32[2,1,64], index: 1, kind: input, shape index: {}]
  %s2 = inlined_call_operand.vmem [shape: f32[2,1,64], index: 2, kind: input, shape index: {}]
  %s3 = inlined_call_operand.vmem [shape: f32[2,1,64], index: 3, kind: input, shape index: {}]
  %s4 = inlined_call_operand.vmem [shape: bf16[64,256], index: 4, kind: input, shape index: {}]
  %s5 = inlined_call_operand.vmem [shape: f32[1,256], index: 5, kind: input, shape index: {}]
  %s6 = inlined_call_operand.vmem [shape: bf16[256,64], index: 6, kind: input, shape index: {}]
  %s7 = inlined_call_operand.vmem [shape: f32[1,64], index: 7, kind: input, shape index: {}]
  %s8 = inlined_call_operand.hbm [shape: f32[2,16,64], index: 8, kind: output, shape index: {}]
  %s9 = sld [smem:[#allocation0]]
  $region114: #{dit_block.5} parent=0
    _
  %s11 = ssub.s32 1, %s9
  %s12 = scalar_select 0, %s11, %s9
  $region1: #{dit_block.5} parent=0
    #allocation4 [shape = 'u8[32768]{0}', space=vmem, size = 0x8000, scoped, tag = 'input window, operand 4']
    #allocation5 [shape = 'u8[8192]{0}', space=vmem, size = 0x2000, scoped, tag = 'output window, operand 0']
    #allocation6 [shape = 's32[2]{0}', space=sflag, size = 0x8, scoped, tag = 'scoped memory for dit_block.5']
    %13 = vsyncpa [#allocation6], 0
    %s14 = scalar_lea.sflag [#allocation6], 1
    %15 = vsyncpa %s14, 0
    loop: start=0, step=1, limit=10
    $region2: #{dit_block.5} parent=1 // loop_pre_header
      _
    $region3: #{dit_block.5} parent=1 // loop_header
      %s17 = sphi 0, %s21
      %p18 = scmp.ge.s32.totalorder %s17, 10
      %s24 = sphi 0, %s43
      %s25 = sphi 0, %s39
      %s26 = sphi 0, %s35
      %s27 = sphi 0, %s24
      %s28 = sphi 0, %s25
      %s29 = sphi 0, %s26
      %s30 = sphi 0, %s27
      %s31 = sphi 0, %s28
      %s32 = sphi 0, %s29
      %s48 = sphi 0, %s50
      %s51 = sphi 0, %s48
      %s52 = sphi 0, %s51
      %s68 = sphi 0, %s52
      %s74 = sphi 0, %s76
      %s77 = sphi 0, %s74
      %s78 = sphi 0, %s77
      %s94 = sphi 0, %s78
      %s100 = sphi 0, %s102
      %s103 = sphi 0, %s100
      %s104 = sphi 0, %s103
      %s120 = sphi 0, %s104
      %s126 = sphi 0, %s128
      %s129 = sphi 0, %s126
      %s130 = sphi 0, %s129
      %s146 = sphi 0, %s130
      %s152 = sphi 0, %s154
      %s155 = sphi 0, %s152
      %s156 = sphi 0, %s155
      %s172 = sphi 0, %s156
      %s178 = sphi 0, %s180
      %s181 = sphi 0, %s178
      %s182 = sphi 0, %s181
      %s198 = sphi 0, %s182
      %s204 = sphi 0, %s206
      %s207 = sphi 0, %s204
      %s208 = sphi 0, %s207
      %s224 = sphi 0, %s208
      %s228 = sphi 0, %s228
      %s230 = sphi 0, %s228
      %s231 = sphi 0, %s230
      %s245 = sphi 0, %s231
      %s253 = sphi 0, %s255
      %s256 = sphi 0, %s253
      %s257 = sphi 0, %s256
      %s273 = sphi 0, %s257
    $region4: #{dit_block.5} parent=1 // loop_header_branch
      %20 = sbr.rel (%p18) target = $region8
    $region5: #{dit_block.5} parent=1 // loop_body
      %s22 = ssub.s32 %s17, 1
      %s23 = ssub.s32 %s17, 2
      %s33 = sadd.s32 1, %s26
      %p34 = scmp.ge.s32.totalorder %s33, 2
      %s35 = scalar_select %p34, 0, %s33
      %s36 = sadd.s32 1, %s25
      %s37 = scalar_select %p34, %s36, %s25
      %p38 = scmp.ge.s32.totalorder %s37, 2
      %s39 = scalar_select %p38, 0, %s37
      %s40 = sadd.s32 1, %s24
      %s41 = scalar_select %p38, %s40, %s24
      %p42 = scmp.ge.s32.totalorder %s41, 2
      %s43 = scalar_select %p42, 0, %s41
      %s44 = ssub.s32 %s24, %s43
      %s45 = ssub.s32 %s25, %s39
      %s46 = sor.u32 %s44, %s45
      %p47 = scmp.eq.s32.totalorder %s46, 0
      %s49 = sadd.s32 %s48, 1
      %s50 = scalar_select %p47, %s48, %s49
      %p53 = pneg %p47
      %p54 = scmp.eq.s32.totalorder %s17, 7
      %p55 = por %p53, %p54
      %p56 = scmp.ne.s32.totalorder %s48, %s51
      %p57 = scmp.eq.s32.totalorder %s17, 0
      %p58 = por %p56, %p57
      %p59 = scmp.ne.s32.totalorder %s48, %s51
      %p60 = scmp.eq.s32.totalorder %s22, 7
      %p61 = por %p59, %p60
      %p62 = scmp.ne.s32.totalorder %s51, %s52
      %p63 = scmp.eq.s32.totalorder %s22, 0
      %p64 = por %p62, %p63
      %p65 = scmp.ne.s32.totalorder %s51, %s52
      %p66 = scmp.eq.s32.totalorder %s23, 7
      %p67 = por %p65, %p66
      %p69 = scmp.ne.s32.totalorder %s52, %s68
      %p70 = scmp.eq.s32.totalorder %s23, 0
      %p71 = por %p69, %p70
      %s72 = ssub.s32 %s24, %s43
      %p73 = scmp.eq.s32.totalorder %s72, 0
      %s75 = sadd.s32 %s74, 1
      %s76 = scalar_select %p73, %s74, %s75
      %p79 = pneg %p73
      %p80 = scmp.eq.s32.totalorder %s17, 7
      %p81 = por %p79, %p80
      %p82 = scmp.ne.s32.totalorder %s74, %s77
      %p83 = scmp.eq.s32.totalorder %s17, 0
      %p84 = por %p82, %p83
      %p85 = scmp.ne.s32.totalorder %s74, %s77
      %p86 = scmp.eq.s32.totalorder %s22, 7
      %p87 = por %p85, %p86
      %p88 = scmp.ne.s32.totalorder %s77, %s78
      %p89 = scmp.eq.s32.totalorder %s22, 0
      %p90 = por %p88, %p89
      %p91 = scmp.ne.s32.totalorder %s77, %s78
      %p92 = scmp.eq.s32.totalorder %s23, 7
      %p93 = por %p91, %p92
      %p95 = scmp.ne.s32.totalorder %s78, %s94
      %p96 = scmp.eq.s32.totalorder %s23, 0
      %p97 = por %p95, %p96
      %s98 = ssub.s32 %s24, %s43
      %p99 = scmp.eq.s32.totalorder %s98, 0
      %s101 = sadd.s32 %s100, 1
      %s102 = scalar_select %p99, %s100, %s101
      %p105 = pneg %p99
      %p106 = scmp.eq.s32.totalorder %s17, 7
      %p107 = por %p105, %p106
      %p108 = scmp.ne.s32.totalorder %s100, %s103
      %p109 = scmp.eq.s32.totalorder %s17, 0
      %p110 = por %p108, %p109
      %p111 = scmp.ne.s32.totalorder %s100, %s103
      %p112 = scmp.eq.s32.totalorder %s22, 7
      %p113 = por %p111, %p112
      %p114 = scmp.ne.s32.totalorder %s103, %s104
      %p115 = scmp.eq.s32.totalorder %s22, 0
      %p116 = por %p114, %p115
      %p117 = scmp.ne.s32.totalorder %s103, %s104
      %p118 = scmp.eq.s32.totalorder %s23, 7
      %p119 = por %p117, %p118
      %p121 = scmp.ne.s32.totalorder %s104, %s120
      %p122 = scmp.eq.s32.totalorder %s23, 0
      %p123 = por %p121, %p122
      %s124 = ssub.s32 %s24, %s43
      %p125 = scmp.eq.s32.totalorder %s124, 0
      %s127 = sadd.s32 %s126, 1
      %s128 = scalar_select %p125, %s126, %s127
      %p131 = pneg %p125
      %p132 = scmp.eq.s32.totalorder %s17, 7
      %p133 = por %p131, %p132
      %p134 = scmp.ne.s32.totalorder %s126, %s129
      %p135 = scmp.eq.s32.totalorder %s17, 0
      %p136 = por %p134, %p135
      %p137 = scmp.ne.s32.totalorder %s126, %s129
      %p138 = scmp.eq.s32.totalorder %s22, 7
      %p139 = por %p137, %p138
      %p140 = scmp.ne.s32.totalorder %s129, %s130
      %p141 = scmp.eq.s32.totalorder %s22, 0
      %p142 = por %p140, %p141
      %p143 = scmp.ne.s32.totalorder %s129, %s130
      %p144 = scmp.eq.s32.totalorder %s23, 7
      %p145 = por %p143, %p144
      %p147 = scmp.ne.s32.totalorder %s130, %s146
      %p148 = scmp.eq.s32.totalorder %s23, 0
      %p149 = por %p147, %p148
      %s150 = ssub.s32 %s26, %s35
      %p151 = scmp.eq.s32.totalorder %s150, 0
      %s153 = sadd.s32 %s152, 1
      %s154 = scalar_select %p151, %s152, %s153
      %p157 = pneg %p151
      %p158 = scmp.eq.s32.totalorder %s17, 7
      %p159 = por %p157, %p158
      %p160 = scmp.ne.s32.totalorder %s152, %s155
      %p161 = scmp.eq.s32.totalorder %s17, 0
      %p162 = por %p160, %p161
      %p163 = scmp.ne.s32.totalorder %s152, %s155
      %p164 = scmp.eq.s32.totalorder %s22, 7
      %p165 = por %p163, %p164
      %p166 = scmp.ne.s32.totalorder %s155, %s156
      %p167 = scmp.eq.s32.totalorder %s22, 0
      %p168 = por %p166, %p167
      %p169 = scmp.ne.s32.totalorder %s155, %s156
      %p170 = scmp.eq.s32.totalorder %s23, 7
      %p171 = por %p169, %p170
      %p173 = scmp.ne.s32.totalorder %s156, %s172
      %p174 = scmp.eq.s32.totalorder %s23, 0
      %p175 = por %p173, %p174
      %s176 = ssub.s32 %s26, %s35
      %p177 = scmp.eq.s32.totalorder %s176, 0
      %s179 = sadd.s32 %s178, 1
      %s180 = scalar_select %p177, %s178, %s179
      %p183 = pneg %p177
      %p184 = scmp.eq.s32.totalorder %s17, 7
      %p185 = por %p183, %p184
      %p186 = scmp.ne.s32.totalorder %s178, %s181
      %p187 = scmp.eq.s32.totalorder %s17, 0
      %p188 = por %p186, %p187
      %p189 = scmp.ne.s32.totalorder %s178, %s181
      %p190 = scmp.eq.s32.totalorder %s22, 7
      %p191 = por %p189, %p190
      %p192 = scmp.ne.s32.totalorder %s181, %s182
      %p193 = scmp.eq.s32.totalorder %s22, 0
      %p194 = por %p192, %p193
      %p195 = scmp.ne.s32.totalorder %s181, %s182
      %p196 = scmp.eq.s32.totalorder %s23, 7
      %p197 = por %p195, %p196
      %p199 = scmp.ne.s32.totalorder %s182, %s198
      %p200 = scmp.eq.s32.totalorder %s23, 0
      %p201 = por %p199, %p200
      %s202 = ssub.s32 %s26, %s35
      %p203 = scmp.eq.s32.totalorder %s202, 0
      %s205 = sadd.s32 %s204, 1
      %s206 = scalar_select %p203, %s204, %s205
      %p209 = pneg %p203
      %p210 = scmp.eq.s32.totalorder %s17, 7
      %p211 = por %p209, %p210
      %p212 = scmp.ne.s32.totalorder %s204, %s207
      %p213 = scmp.eq.s32.totalorder %s17, 0
      %p214 = por %p212, %p213
      %p215 = scmp.ne.s32.totalorder %s204, %s207
      %p216 = scmp.eq.s32.totalorder %s22, 7
      %p217 = por %p215, %p216
      %p218 = scmp.ne.s32.totalorder %s207, %s208
      %p219 = scmp.eq.s32.totalorder %s22, 0
      %p220 = por %p218, %p219
      %p221 = scmp.ne.s32.totalorder %s207, %s208
      %p222 = scmp.eq.s32.totalorder %s23, 7
      %p223 = por %p221, %p222
      %p225 = scmp.ne.s32.totalorder %s208, %s224
      %p226 = scmp.eq.s32.totalorder %s23, 0
      %p227 = por %p225, %p226
      %s229 = sadd.s32 %s228, 1
      %p232 = scmp.eq.s32.totalorder %s17, 7
      %p233 = scmp.ne.s32.totalorder %s228, %s230
      %p234 = scmp.eq.s32.totalorder %s17, 0
      %p235 = por %p233, %p234
      %p236 = scmp.ne.s32.totalorder %s228, %s230
      %p237 = scmp.eq.s32.totalorder %s22, 7
      %p238 = por %p236, %p237
      %p239 = scmp.ne.s32.totalorder %s230, %s231
      %p240 = scmp.eq.s32.totalorder %s22, 0
      %p241 = por %p239, %p240
      %p242 = scmp.ne.s32.totalorder %s230, %s231
      %p243 = scmp.eq.s32.totalorder %s23, 7
      %p244 = por %p242, %p243
      %p246 = scmp.ne.s32.totalorder %s231, %s245
      %p247 = scmp.eq.s32.totalorder %s23, 0
      %p248 = por %p246, %p247
      %s249 = ssub.s32 %s24, %s43
      %s250 = ssub.s32 %s25, %s39
      %s251 = sor.u32 %s249, %s250
      %p252 = scmp.eq.s32.totalorder %s251, 0
      %s254 = sadd.s32 %s253, 1
      %s255 = scalar_select %p252, %s253, %s254
      %p258 = pneg %p252
      %p259 = scmp.eq.s32.totalorder %s17, 7
      %p260 = por %p258, %p259
      %p261 = scmp.ne.s32.totalorder %s253, %s256
      %p262 = scmp.eq.s32.totalorder %s17, 0
      %p263 = por %p261, %p262
      %p264 = scmp.ne.s32.totalorder %s253, %s256
      %p265 = scmp.eq.s32.totalorder %s22, 7
      %p266 = por %p264, %p265
      %p267 = scmp.ne.s32.totalorder %s256, %s257
      %p268 = scmp.eq.s32.totalorder %s22, 0
      %p269 = por %p267, %p268
      %p270 = scmp.ne.s32.totalorder %s256, %s257
      %p271 = scmp.eq.s32.totalorder %s23, 7
      %p272 = por %p270, %p271
      %p274 = scmp.ne.s32.totalorder %s257, %s273
      %p275 = scmp.eq.s32.totalorder %s23, 0
      %p276 = por %p274, %p275
      %p277 = scmp.le.s32.totalorder 1, %s17
      %p278 = scmp.lt.s32.totalorder %s17, 9
      %p279 = pnand %p277, %p278
      %p280 = pneg %p279
      // Predicated region
      $region9: #{dit_block.5} parent=5 // pred_check
        _
      $region10: #{dit_block.5} parent=5 // pred_check_branch
        %282 = sbr.rel (%p279) target = $region12
      $region11: #{dit_block.5} parent=5 // pred_region
        %s283 = ssub.s32 %s17, 1
        // Predicated region
        $region13: #{dit_block.5} parent=11 // pred_check
          %p284 = pneg %p241
        $region14: #{dit_block.5} parent=11 // pred_check_branch
          %286 = sbr.rel (%p284) target = $region16
        $region15: #{dit_block.5} parent=11 // pred_region
          _
        $region16: #{dit_block.5} parent=11 // pred_fallthru
          _
      $region12: #{dit_block.5} parent=5 // pred_fallthru
        _
      %p287 = scmp.lt.s32.totalorder %s17, 8
      // Predicated region
      $region17: #{dit_block.5} parent=5 // pred_check
        %p288 = pneg %p287
      $region18: #{dit_block.5} parent=5 // pred_check_branch
        %290 = sbr.rel (%p288) target = $region20
      $region19: #{dit_block.5} parent=5 // pred_region
        // Predicated region
        $region21: #{dit_block.5} parent=19 // pred_check
          %p291 = pneg %p58
        $region22: #{dit_block.5} parent=19 // pred_check_branch
          %293 = sbr.rel (%p291) target = $region24
        $region23: #{dit_block.5} parent=19 // pred_region
          %p294 = scmp.lt.s32.totalorder %s24, 1
          %s295 = scalar_select %p294, %s24, 1
          %p296 = scmp.lt.s32.totalorder %s25, 1
          %s297 = scalar_select %p296, %s25, 1
          %s298 = smul.addr %s295, 2
          %s299 = sadd.s32 %s297, %s298
          %s300 = smul.addr %s299, 8
          %s301 = scalar_lea.vmem %s0, %s300
        $region24: #{dit_block.5} parent=19 // pred_fallthru
          _
        // Predicated region
        $region25: #{dit_block.5} parent=19 // pred_check
          %p302 = pneg %p84
        $region26: #{dit_block.5} parent=19 // pred_check_branch
          %304 = sbr.rel (%p302) target = $region28
        $region27: #{dit_block.5} parent=19 // pred_region
          %p305 = scmp.lt.s32.totalorder %s24, 1
          %s306 = scalar_select %p305, %s24, 1
          %s307 = scalar_lea.vmem %s1, %s306
        $region28: #{dit_block.5} parent=19 // pred_fallthru
          _
        // Predicated region
        $region29: #{dit_block.5} parent=19 // pred_check
          %p308 = pneg %p110
        $region30: #{dit_block.5} parent=19 // pred_check_branch
          %310 = sbr.rel (%p308) target = $region32
        $region31: #{dit_block.5} parent=19 // pred_region
          %p311 = scmp.lt.s32.totalorder %s24, 1
          %s312 = scalar_select %p311, %s24, 1
          %s313 = scalar_lea.vmem %s2, %s312
        $region32: #{dit_block.5} parent=19 // pred_fallthru
          _
        // Predicated region
        $region33: #{dit_block.5} parent=19 // pred_check
          %p314 = pneg %p136
        $region34: #{dit_block.5} parent=19 // pred_check_branch
          %316 = sbr.rel (%p314) target = $region36
        $region35: #{dit_block.5} parent=19 // pred_region
          %p317 = scmp.lt.s32.totalorder %s24, 1
          %s318 = scalar_select %p317, %s24, 1
          %s319 = scalar_lea.vmem %s3, %s318
        $region36: #{dit_block.5} parent=19 // pred_fallthru
          _
        // Predicated region
        $region37: #{dit_block.5} parent=19 // pred_check
          %p320 = pneg %p162
        $region38: #{dit_block.5} parent=19 // pred_check_branch
          %322 = sbr.rel (%p320) target = $region40
        $region39: #{dit_block.5} parent=19 // pred_region
          %s323 = sand.u32 %s152, 1
          %s324 = sand.u32 %s152, 1
          %s325 = smul.addr %s324, 32
          %s326 = scalar_lea.vmem [#allocation4], %s325
          %s327 = smul.addr %s26, 4
          %s328 = scalar_lea.vmem %s4, %s327
          // Predicated region
          $region41: #{dit_block.5} parent=39 // pred_check
            _
          $region42: #{dit_block.5} parent=39 // pred_check_branch
            %330 = sbr.rel (0) target = $region44
          $region43: #{dit_block.5} parent=39 // pred_region
            // Predicated region
            $region45: #{dit_block.5} parent=43 // pred_check
              _
            $region46: #{dit_block.5} parent=43 // pred_check_branch
              %332 = sbr.rel target = $region48
            $region47: #{dit_block.5} parent=43 // pred_region
              // Predicated region
              $region60: #{dit_block.5} parent=47 // pred_check
                _
              $region61: #{dit_block.5} parent=47 // pred_check_branch
                %362 = sbr.rel (0) target = $region63
              $region62: #{dit_block.5} parent=47 // pred_region
                loop: start=0, step=1, limit=1
                $region64: #{dit_block.5} parent=62 // loop_pre_header
                  _
                $region65: #{dit_block.5} parent=62 // loop_header
                  %s364 = sphi 0, %s368
                  %p365 = scmp.ge.s32.totalorder %s364, 1
                  %s369 = sphi %s328, %s328
                  %s370 = sphi %s326, %s326
                $region66: #{dit_block.5} parent=62 // loop_header_branch
                  %367 = sbr.rel (%p365) target = $region70
                $region67: #{dit_block.5} parent=62 // loop_body
                  _
                $region68: #{dit_block.5} parent=62 // loop_footer
                  %s368 = sadd.s32 1, %s364
                $region69: #{dit_block.5} parent=62 // loop_footer_branch
                  %363 = sbr.rel target = $region65
                $region70: #{dit_block.5} parent=62 // loop_exit
                  _
                %s372 = ssub.s32 16, 1
                loop: start=0, step=1, limit=1
                $region71: #{dit_block.5} parent=62 // loop_pre_header
                  _
                $region72: #{dit_block.5} parent=62 // loop_header
                  %s374 = sphi 0, %s378
                  %p375 = scmp.ge.s32.totalorder %s374, 1
                  %s379 = sphi %s328, %s328
                  %s380 = sphi %s326, %s326
                $region73: #{dit_block.5} parent=62 // loop_header_branch
                  %377 = sbr.rel (%p375) target = $region77
                $region74: #{dit_block.5} parent=62 // loop_body
                  %v381 = vld [vmem:[%s379] sm:%s372]
                  %382 = vst [vmem:[%s380] sm:%s372] %v381
                  %v383 = vld [vmem:[%s379 + $0x8] sm:%s372]
                  %384 = vst [vmem:[%s380 + $0x4] sm:%s372] %v383
                  %v385 = vld [vmem:[%s379 + $0x10] sm:%s372]
                  %386 = vst [vmem:[%s380 + $0x8] sm:%s372] %v385
                  %v387 = vld [vmem:[%s379 + $0x18] sm:%s372]
                  %388 = vst [vmem:[%s380 + $0xc] sm:%s372] %v387
                  %v389 = vld [vmem:[%s379 + $0x20] sm:%s372]
                  %390 = vst [vmem:[%s380 + $0x10] sm:%s372] %v389
                  %v391 = vld [vmem:[%s379 + $0x28] sm:%s372]
                  %392 = vst [vmem:[%s380 + $0x14] sm:%s372] %v391
                  %v393 = vld [vmem:[%s379 + $0x30] sm:%s372]
                  %394 = vst [vmem:[%s380 + $0x18] sm:%s372] %v393
                  %v395 = vld [vmem:[%s379 + $0x38] sm:%s372]
                  %396 = vst [vmem:[%s380 + $0x1c] sm:%s372] %v395
                $region75: #{dit_block.5} parent=62 // loop_footer
                  %s378 = sadd.s32 1, %s374
                $region76: #{dit_block.5} parent=62 // loop_footer_branch
                  %373 = sbr.rel target = $region72
                $region77: #{dit_block.5} parent=62 // loop_exit
                  _
              $region63: #{dit_block.5} parent=47 // pred_fallthru
                _
            $region48: #{dit_block.5} parent=43 // pred_fallthru
              _
            // Predicated region
            $region49: #{dit_block.5} parent=43 // pred_check
              _
            $region50: #{dit_block.5} parent=43 // pred_check_branch
              %334 = sbr.rel (0) target = $region52
            $region51: #{dit_block.5} parent=43 // pred_region
              %s336 = ssub.s32 16, 1
              loop: start=0, step=1, limit=1
              $region53: #{dit_block.5} parent=51 // loop_pre_header
                _
              $region54: #{dit_block.5} parent=51 // loop_header
                %s338 = sphi 0, %s342
                %p339 = scmp.ge.s32.totalorder %s338, 1
                %s343 = sphi %s328, %s328
                %s344 = sphi %s326, %s326
              $region55: #{dit_block.5} parent=51 // loop_header_branch
                %341 = sbr.rel (%p339) target = $region59
              $region56: #{dit_block.5} parent=51 // loop_body
                %v345 = vld [vmem:[%s343] sm:%s336]
                %346 = vst [vmem:[%s344] sm:%s336] %v345
                %v347 = vld [vmem:[%s343 + $0x8] sm:%s336]
                %348 = vst [vmem:[%s344 + $0x4] sm:%s336] %v347
                %v349 = vld [vmem:[%s343 + $0x10] sm:%s336]
                %350 = vst [vmem:[%s344 + $0x8] sm:%s336] %v349
                %v351 = vld [vmem:[%s343 + $0x18] sm:%s336]
                %352 = vst [vmem:[%s344 + $0xc] sm:%s336] %v351
                %v353 = vld [vmem:[%s343 + $0x20] sm:%s336]
                %354 = vst [vmem:[%s344 + $0x10] sm:%s336] %v353
                %v355 = vld [vmem:[%s343 + $0x28] sm:%s336]
                %356 = vst [vmem:[%s344 + $0x14] sm:%s336] %v355
                %v357 = vld [vmem:[%s343 + $0x30] sm:%s336]
                %358 = vst [vmem:[%s344 + $0x18] sm:%s336] %v357
                %v359 = vld [vmem:[%s343 + $0x38] sm:%s336]
                %360 = vst [vmem:[%s344 + $0x1c] sm:%s336] %v359
              $region57: #{dit_block.5} parent=51 // loop_footer
                %s342 = sadd.s32 1, %s338
              $region58: #{dit_block.5} parent=51 // loop_footer_branch
                %337 = sbr.rel target = $region54
              $region59: #{dit_block.5} parent=51 // loop_exit
                _
            $region52: #{dit_block.5} parent=43 // pred_fallthru
              _
          $region44: #{dit_block.5} parent=39 // pred_fallthru
            _
          %397 = vnop
        $region40: #{dit_block.5} parent=19 // pred_fallthru
          _
        // Predicated region
        $region78: #{dit_block.5} parent=19 // pred_check
          %p398 = pneg %p188
        $region79: #{dit_block.5} parent=19 // pred_check_branch
          %400 = sbr.rel (%p398) target = $region81
        $region80: #{dit_block.5} parent=19 // pred_region
          %p401 = scmp.lt.s32.totalorder %s26, 1
          %s402 = scalar_select %p401, %s26, 1
          %s403 = scalar_lea.vmem %s5, %s402
        $region81: #{dit_block.5} parent=19 // pred_fallthru
          _
        // Predicated region
        $region82: #{dit_block.5} parent=19 // pred_check
          %p404 = pneg %p214
        $region83: #{dit_block.5} parent=19 // pred_check_branch
          %406 = sbr.rel (%p404) target = $region85
        $region84: #{dit_block.5} parent=19 // pred_region
          %s407 = smul.u32 16, %s26
          %p408 = scmp.lt.s32.totalorder %s407, 31
          %s409 = scalar_select %p408, %s407, 31
          %s410 = smul.addr %s409, 4
          %s411 = scalar_lea.vmem %s6, %s410
          %s412 = smul.u32 16, %s26
        $region85: #{dit_block.5} parent=19 // pred_fallthru
          _
      $region20: #{dit_block.5} parent=5 // pred_fallthru
        _
      %p413 = scmp.le.s32.totalorder 1, %s17
      %p414 = scmp.lt.s32.totalorder %s17, 9
      %p415 = pnand %p413, %p414
      %p416 = pneg %p415
      // Predicated region
      $region86: #{dit_block.5} parent=5 // pred_check
        _
      $region87: #{dit_block.5} parent=5 // pred_check_branch
        %418 = sbr.rel (%p415) target = $region89
      $region88: #{dit_block.5} parent=5 // pred_region
        %s419 = ssub.s32 %s17, 1
        %s420 = sand.u32 %s155, 1
        %s421 = sand.u32 %s155, 1
        %s422 = smul.addr %s421, 32
        %s423 = scalar_lea.vmem [#allocation4], %s422
        // Predicated region
        $region90: #{dit_block.5} parent=88 // pred_check
          %p424 = pneg %p168
        $region91: #{dit_block.5} parent=88 // pred_check_branch
          %426 = sbr.rel (%p424) target = $region93
        $region92: #{dit_block.5} parent=88 // pred_region
          _
        $region93: #{dit_block.5} parent=88 // pred_fallthru
          _
        %p427 = scmp.lt.s32.totalorder %s27, 1
        %s428 = scalar_select %p427, %s27, 1
        %p429 = scmp.lt.s32.totalorder %s28, 1
        %s430 = scalar_select %p429, %s28, 1
        %s431 = smul.addr %s428, 2
        %s432 = sadd.s32 %s430, %s431
        %s433 = smul.addr %s432, 8
        %s434 = scalar_lea.vmem %s0, %s433
        %p435 = pneg %p64
        %p436 = pneg %p61
        %p437 = scmp.lt.s32.totalorder %s27, 1
        %s438 = scalar_select %p437, %s27, 1
        %s439 = scalar_lea.vmem %s1, %s438
        %p440 = pneg %p90
        %p441 = pneg %p87
        %p442 = scmp.lt.s32.totalorder %s27, 1
        %s443 = scalar_select %p442, %s27, 1
        %s444 = scalar_lea.vmem %s2, %s443
        %p445 = pneg %p116
        %p446 = pneg %p113
        %p447 = scmp.lt.s32.totalorder %s27, 1
        %s448 = scalar_select %p447, %s27, 1
        %s449 = scalar_lea.vmem %s3, %s448
        %p450 = pneg %p142
        %p451 = pneg %p139
        %s452 = sand.u32 %s155, 1
        %s453 = sand.u32 %s155, 1
        %s454 = smul.addr %s453, 32
        %s455 = scalar_lea.vmem [#allocation4], %s454
        %p456 = pneg %p168
        %p457 = pneg %p165
        %p458 = scmp.lt.s32.totalorder %s29, 1
        %s459 = scalar_select %p458, %s29, 1
        %s460 = scalar_lea.vmem %s5, %s459
        %p461 = pneg %p194
        %p462 = pneg %p191
        %s463 = smul.u32 16, %s29
        %p464 = scmp.lt.s32.totalorder %s463, 31
        %s465 = scalar_select %p464, %s463, 31
        %s466 = smul.addr %s465, 4
        %s467 = scalar_lea.vmem %s6, %s466
        %p468 = pneg %p220
        %p469 = pneg %p217
        %p470 = pneg %p241
        %p471 = pneg %p238
        %p472 = pneg %p269
        %p473 = pneg %p266
        %s474 = sand.u32 %s256, 1
        %s475 = scalar_lea.sflag [#allocation6], %s474
        %s476 = sand.u32 %s256, 1
        %s477 = smul.addr %s476, 8
        %s478 = scalar_lea.vmem [#allocation5], %s477
        %p479 = scmp.lt.s32.totalorder %s27, 1
        %s480 = scalar_select %p479, %s27, 1
        %p481 = scmp.lt.s32.totalorder %s28, 1
        %s482 = scalar_select %p481, %s28, 1
        %s483 = smul.addr %s480, 2
        %s484 = sadd.s32 %s482, %s483
        %s485 = smul.addr %s484, 8
        %s486 = scalar_lea.vmem %s0, %s485
        %p487 = scmp.lt.s32.totalorder %s27, 1
        %s488 = scalar_select %p487, %s27, 1
        %s489 = scalar_lea.vmem %s1, %s488
        %p490 = scmp.lt.s32.totalorder %s27, 1
        %s491 = scalar_select %p490, %s27, 1
        %s492 = scalar_lea.vmem %s2, %s491
        %p493 = scmp.lt.s32.totalorder %s27, 1
        %s494 = scalar_select %p493, %s27, 1
        %s495 = scalar_lea.vmem %s3, %s494
        %p496 = scmp.lt.s32.totalorder %s29, 1
        %s497 = scalar_select %p496, %s29, 1
        %s498 = scalar_lea.vmem %s5, %s497
        %s499 = smul.u32 16, %s29
        %p500 = scmp.lt.s32.totalorder %s499, 31
        %s501 = scalar_select %p500, %s499, 31
        %s502 = smul.addr %s501, 4
        %s503 = scalar_lea.vmem %s6, %s502
        %s504 = smul.u32 16, %s29
        %p506 = scmp.eq.s32.totalorder %s29, 0
        // Predicated region
        $region94: #{dit_block.5} parent=88 // pred_check
          %p507 = pneg %p506
        $region95: #{dit_block.5} parent=88 // pred_check_branch
          %509 = sbr.rel (%p507) target = $region97
        $region96: #{dit_block.5} parent=88 // pred_region
          %v510 = vld [vmem:[%s486] sm:$0xff]
          %vm511 = vcmask 523264
          %v512 = vsel %vm511, %v510, 0.0
          %513 = vadd.xlane.f32.xlu0 %v512
          %v514 = vpop.xlane.xlu0 %513
          %v515 = vrcp.pop 64.0
          %v516 = vmul.f32 64.0, %v515
          %v517 = vsub.f32 1.0, %v516
          %v518 = vmul.f32 %v515, %v517
          %v519 = vadd.f32 %v515, %v518
          %vm520 = vweird.f32 %v515
          %v521 = vsel %vm520, %v515, %v519
          %v522 = vmul.f32 %v514, %v521
          %v523 = vsub.f32 %v510, %v522
          %v524 = vmul.f32 %v523, %v523
          %v525 = vsel %vm511, %v524, 0.0
          %526 = vadd.xlane.f32.xlu0 %v525
          %v527 = vpop.xlane.xlu0 %526
          %v528 = vmul.f32 %v527, %v521
          %v529 = vadd.f32 %v528, 1e-06
          %v530 = vrsqrt.pop %v529
          %v531 = vmul.f32 %v530, %v529
          %v532 = vmul.f32 %v531, %v530
          %v533 = vmul.f32 0.5, %v532
          %v534 = vsub.f32 1.5, %v533
          %v535 = vmul.f32 %v530, %v534
          %vm536 = vweird.f32 %v529
          %vm537 = vweird.f32 %v530
          %vm538 = vmor %vm536, %vm537
          %v539 = vsel %vm538, %v530, %v535
          %v540 = vmul.f32 %v523, %v539
          %v541 = vld [vmem:[%s492] sm:$0x1]
          %v542 = vadd.f32 %v541, 1.0
          %v544 = vperm.slane %v542, 0
          %v546 = vmul.f32 %v540, %v544
          %v547 = vld [vmem:[%s489] sm:$0x1]
          %v549 = vperm.slane %v547, 0
          %v551 = vadd.f32 %v546, %v549
          %v552 = vpack.c.bf16 %v551, %v551
          %vm553 = vcmask 519168
          %554 = vst.msk [vmem:[#allocation2] sm:$0xf] %vm553, %v552
          %555 = vst.msk [vmem:[#allocation3] sm:$0xff] %vm511, 0.0
        $region97: #{dit_block.5} parent=88 // pred_fallthru
          _
        %v556 = vld [vmem:[#allocation2] sm:$0xf]
        %v557 = vld [vmem:[%s423] sm:$0xf]
        %v558 = vld [vmem:[%s423 + $0x4] sm:$0xf]
        %v559 = vld [vmem:[%s423 + $0x8] sm:$0xf]
        %v560 = vld [vmem:[%s423 + $0xc] sm:$0xf]
        %v561 = vld [vmem:[%s423 + $0x10] sm:$0xf]
        %v562 = vld [vmem:[%s423 + $0x14] sm:$0xf]
        %v563 = vld [vmem:[%s423 + $0x18] sm:$0xf]
        %v564 = vld [vmem:[%s423 + $0x1c] sm:$0xf]
        %v565 = vld [vmem:[%s498] sm:$0x1]
        %v567 = vperm.slane %v565, 0
        %v577 = vunpack.c.l.b16 %v557
        %v578 = vunpack.c.l.b16 %v558
        %v579 = vunpack.c.l.b16 %v559
        %v580 = vunpack.c.l.b16 %v560
        %v581 = vunpack.c.l.b16 %v561
        %v582 = vunpack.c.l.b16 %v562
        %v583 = vunpack.c.l.b16 %v563
        %v584 = vunpack.c.l.b16 %v564
        %v585 = vpack.c.b16 %v578, %v577
        %v586 = vpack.c.b16 %v580, %v579
        %v587 = vpack.c.b16 %v582, %v581
        %v588 = vpack.c.b16 %v584, %v583
        %vm593 = vcmask 523264
        %v595 = vsel %vm593, %v556, 0
        %597 = vmatpush.bf16.msra.mxu0 0
        %598 = vmatpush.bf16.msra.mxu0 0
        %599 = vmatpush.bf16.msra.mxu0 0
        %600 = vmatpush.bf16.msra.mxu0 0
        %601 = vmatpush.bf16.msra.mxu0 %v588
        %602 = vmatpush.bf16.msra.mxu0 %v587
        %603 = vmatpush.bf16.msra.mxu0 %v586
        %604 = vmatpush.bf16.msra.mxu0 %v585
        %605 = vmatmul.bf16.gmra.mxu0 %v595
        %v606 = vpop.f32.mrf.mxu0
        %v607 = vadd.f32 %v567, %v606
        %v608 = vpop.f32.mrf.mxu0
        %609 = vdwg.mxu0
        %v610 = vxor.u32 %v607, 2147483648
        %v611 = vmul.f32 %v610, 1.442695
        %v612 = vpow.pop %v611
        %v613 = vadd.f32 %v612, 1.0
        %v614 = vrcp.pop %v613
        %v615 = vmul.f32 %v613, %v614
        %v616 = vsub.f32 1.0, %v615
        %v617 = vmul.f32 %v614, %v616
        %v618 = vadd.f32 %v614, %v617
        %vm619 = vweird.f32 %v613
        %vm620 = vweird.f32 %v614
        %vm621 = vmor %vm619, %vm620
        %v622 = vsel %vm621, %v614, %v618
        %v623 = vand.u32 2147483647, %v613
        %vm624 = vcmp.eq.f32.partialorder %v623, 8.507059e+37
        %v625 = vand.u32 %v613, 2147483648
        %v626 = vor.u32 1.1754944e-38, %v625
        %v627 = vsel %vm624, %v626, %v622
        %v628 = vmul.f32 1.0, %v627
        %v629 = vmul.f32 %v607, %v628
        %v630 = vld [vmem:[#allocation3] sm:$0xff]
        %v631 = vpack.c.bf16 %v629, %v629
        %v632 = vld [vmem:[%s503] sm:$0xf]
        %v633 = vld [vmem:[%s503 + $0x4] sm:$0xf]
        %v634 = vld [vmem:[%s503 + $0x8] sm:$0xf]
        %v635 = vld [vmem:[%s503 + $0xc] sm:$0xf]
        %v636 = vld [vmem:[%s503 + $0x10] sm:$0xf]
        %v637 = vld [vmem:[%s503 + $0x14] sm:$0xf]
        %v638 = vld [vmem:[%s503 + $0x18] sm:$0xf]
        %v639 = vld [vmem:[%s503 + $0x1c] sm:$0xf]
        %v640 = vld [vmem:[%s503 + $0x20] sm:$0xf]
        %v641 = vld [vmem:[%s503 + $0x24] sm:$0xf]
        %v642 = vld [vmem:[%s503 + $0x28] sm:$0xf]
        %v643 = vld [vmem:[%s503 + $0x2c] sm:$0xf]
        %v644 = vld [vmem:[%s503 + $0x30] sm:$0xf]
        %v645 = vld [vmem:[%s503 + $0x34] sm:$0xf]
        %v646 = vld [vmem:[%s503 + $0x38] sm:$0xf]
        %v647 = vld [vmem:[%s503 + $0x3c] sm:$0xf]
        %v664 = vunpack.c.l.b16 %v632
        %v665 = vunpack.c.l.b16 %v633
        %v666 = vunpack.c.l.b16 %v634
        %v667 = vunpack.c.l.b16 %v635
        %v668 = vunpack.c.l.b16 %v636
        %v669 = vunpack.c.l.b16 %v637
        %v670 = vunpack.c.l.b16 %v638
        %v671 = vunpack.c.l.b16 %v639
        %v672 = vunpack.c.l.b16 %v640
        %v673 = vunpack.c.l.b16 %v641
        %v674 = vunpack.c.l.b16 %v642
        %v675 = vunpack.c.l.b16 %v643
        %v676 = vunpack.c.l.b16 %v644
        %v677 = vunpack.c.l.b16 %v645
        %v678 = vunpack.c.l.b16 %v646
        %v679 = vunpack.c.l.b16 %v647
        %v680 = vpack.c.b16 %v665, %v664
        %v681 = vpack.c.b16 %v667, %v666
        %v682 = vpack.c.b16 %v669, %v668
        %v683 = vpack.c.b16 %v671, %v670
        %v684 = vpack.c.b16 %v673, %v672
        %v685 = vpack.c.b16 %v675, %v674
        %v686 = vpack.c.b16 %v677, %v676
        %v687 = vpack.c.b16 %v679, %v678
        %696 = vmatpush.bf16.msra.mxu0 %v687
        %697 = vmatpush.bf16.msra.mxu0 %v686
        %698 = vmatpush.bf16.msra.mxu0 %v685
        %699 = vmatpush.bf16.msra.mxu0 %v684
        %700 = vmatpush.bf16.msra.mxu0 %v683
        %701 = vmatpush.bf16.msra.mxu0 %v682
        %702 = vmatpush.bf16.msra.mxu0 %v681
        %703 = vmatpush.bf16.msra.mxu0 %v680
        %704 = vmatmul.bf16.gmra.mxu0 %v631
        %v705 = vpop.f32.mrf.mxu0
        %v706 = vadd.f32 0.0, %v705
        %v707 = vpop.f32.mrf.mxu0
        %708 = vdwg.mxu0
        %v709 = vadd.f32 %v630, %v706
        %710 = vst.msk [vmem:[#allocation3] sm:$0xff] %vm593, %v709
        %p711 = scmp.eq.s32.totalorder %s29, 1
        // Predicated region
        $region98: #{dit_block.5} parent=88 // pred_check
          %p712 = pneg %p711
        $region99: #{dit_block.5} parent=88 // pred_check_branch
          %714 = sbr.rel (%p712) target = $region101
        $region100: #{dit_block.5} parent=88 // pred_region
          %v715 = vld [vmem:[%s486] sm:$0xff]
          %v716 = vld [vmem:[%s495] sm:$0x1]
          %v717 = vld [vmem:[#allocation3] sm:$0xff]
          %v718 = vld [vmem:[%s7] sm:$0x1]
          %v720 = vperm.slane %v718, 0
          %v722 = vadd.f32 %v717, %v720
          %v724 = vperm.slane %v716, 0
          %v726 = vmul.f32 %v724, %v722
          %v727 = vadd.f32 %v715, %v726
          %728 = vst.msk [vmem:[%s478] sm:$0xff] %vm593, %v727
        $region101: #{dit_block.5} parent=88 // pred_fallthru
          _
        %s729 = sand.u32 %s256, 1
        %s730 = scalar_lea.sflag [#allocation6], %s729
        %s731 = sand.u32 %s256, 1
        %s732 = smul.addr %s731, 8
        %s733 = scalar_lea.vmem [#allocation5], %s732
        // Predicated region
        $region102: #{dit_block.5} parent=88 // pred_check
          %p734 = pneg %p266
        $region103: #{dit_block.5} parent=88 // pred_check_branch
          %736 = sbr.rel (%p734) target = $region105
        $region104: #{dit_block.5} parent=88 // pred_region
          %738 = vsyncadd %s730, 0
          %s739 = smul.addr %s27, 2
          %s740 = sadd.s32 %s28, %s739
          %s741 = smul.addr %s740, 8
          %s742 = scalar_lea.hbm %s8, %s741
          %s744 = sshll.u32 %s733, 4
          %s745 = int_to_ptr.vmem [resolvable:$true] %s744
          %s746 = sshll.u32 %s742, 4
          %s747 = int_to_ptr.hbm [resolvable:$true] %s746
          %749 = dma.vmem_to_hbm [thread:$0]  %s745, 128, %s747, %s730
        $region105: #{dit_block.5} parent=88 // pred_fallthru
          _
      $region89: #{dit_block.5} parent=5 // pred_fallthru
        _
      %p750 = scmp.le.s32.totalorder 2, %s17
      // Predicated region
      $region106: #{dit_block.5} parent=5 // pred_check
        %p751 = pneg %p750
      $region107: #{dit_block.5} parent=5 // pred_check_branch
        %753 = sbr.rel (%p751) target = $region109
      $region108: #{dit_block.5} parent=5 // pred_region
        %s754 = ssub.s32 %s17, 2
        // Predicated region
        $region110: #{dit_block.5} parent=108 // pred_check
          %p755 = pneg %p272
        $region111: #{dit_block.5} parent=108 // pred_check_branch
          %757 = sbr.rel (%p755) target = $region113
        $region112: #{dit_block.5} parent=108 // pred_region
          %s758 = sand.u32 %s257, 1
          %s759 = scalar_lea.sflag [#allocation6], %s758
          %s760 = sand.u32 %s257, 1
          %s761 = smul.addr %s760, 8
          %s762 = scalar_lea.vmem [#allocation5], %s761
          %764 = dma.done %s759, 128
        $region113: #{dit_block.5} parent=108 // pred_fallthru
          _
      $region109: #{dit_block.5} parent=5 // pred_fallthru
        _
    $region6: #{dit_block.5} parent=1 // loop_footer
      %s21 = sadd.s32 1, %s17
    $region7: #{dit_block.5} parent=1 // loop_footer_branch
      %16 = sbr.rel target = $region3
    $region8: #{dit_block.5} parent=1 // loop_exit
      _
    %765 = vsyncpa [#allocation6], 1
    %s766 = scalar_lea.sflag [#allocation6], 1
    %767 = vsyncpa %s766, 1

// kernel: dit_block.3
$region0: #{dit_block.3}
  #allocation0 [shape = 'u32[]', space=smem, size = 0x4, offset = 0x4, fixed_abs, tag = 'smem constant byte address 0x4 - core index']
  #allocation1 [shape = 'u32[72,128]{1,0:T(1,128)}', space=vmem, size = 0x9000, scoped, tag = 'internal scratch']
  %s0 = inlined_call_operand.vmem [shape: f32[2,16,64], index: 0, kind: input, shape index: {}]
  %s1 = inlined_call_operand.vmem [shape: f32[2,1,64], index: 1, kind: input, shape index: {}]
  %s2 = inlined_call_operand.vmem [shape: f32[2,1,64], index: 2, kind: input, shape index: {}]
  %s3 = inlined_call_operand.vmem [shape: bf16[64,192], index: 3, kind: input, shape index: {}]
  %s4 = inlined_call_operand.vmem [shape: f32[1,192], index: 4, kind: input, shape index: {}]
  %s5 = inlined_call_operand.vmem [shape: f32[64,4], index: 5, kind: input, shape index: {}]
  %s6 = inlined_call_operand.vmem [shape: f32[4,64], index: 6, kind: input, shape index: {}]
  %s7 = inlined_call_operand.vmem [shape: f32[1,64], index: 7, kind: input, shape index: {}]
  %s8 = inlined_call_operand.vmem [shape: f32[1,64], index: 8, kind: input, shape index: {}]
  %s9 = inlined_call_operand.vmem [shape: bf16[2,4,16,16], index: 9, kind: output, shape index: {0}]
  %s10 = inlined_call_operand.vmem [shape: bf16[2,4,16,16], index: 10, kind: output, shape index: {1}]
  %s11 = inlined_call_operand.vmem [shape: bf16[2,4,16,16], index: 11, kind: output, shape index: {2}]
  %12 = xla_tuple %s9, %s10, %s11
  %s13 = sld [smem:[#allocation0]]
  $region196: #{dit_block.3} parent=0
    _
  %s15 = ssub.s32 1, %s13
  %s16 = scalar_select 0, %s15, %s13
  $region1: #{dit_block.3} parent=0
    #allocation2 [shape = 'u8[16384]{0}', space=vmem, size = 0x4000, scoped, tag = 'output window, operand 0']
    #allocation3 [shape = 'u8[16384]{0}', space=vmem, size = 0x4000, scoped, tag = 'output window, operand 1']
    #allocation4 [shape = 'u8[16384]{0}', space=vmem, size = 0x4000, scoped, tag = 'output window, operand 2']
    loop: start=0, step=1, limit=6
    $region2: #{dit_block.3} parent=1 // loop_pre_header
      _
    $region3: #{dit_block.3} parent=1 // loop_header
      %s18 = sphi 0, %s22
      %p19 = scmp.ge.s32.totalorder %s18, 6
      %s25 = sphi 0, %s37
      %s26 = sphi 0, %s33
      %s27 = sphi 0, %s25
      %s28 = sphi 0, %s26
      %s29 = sphi 0, %s27
      %s30 = sphi 0, %s28
      %s42 = sphi 0, %s44
      %s45 = sphi 0, %s42
      %s46 = sphi 0, %s45
      %s62 = sphi 0, %s46
      %s68 = sphi 0, %s70
      %s71 = sphi 0, %s68
      %s72 = sphi 0, %s71
      %s88 = sphi 0, %s72
      %s94 = sphi 0, %s96
      %s97 = sphi 0, %s94
      %s98 = sphi 0, %s97
      %s114 = sphi 0, %s98
      %s118 = sphi 0, %s118
      %s120 = sphi 0, %s118
      %s121 = sphi 0, %s120
      %s135 = sphi 0, %s121
      %s139 = sphi 0, %s139
      %s141 = sphi 0, %s139
      %s142 = sphi 0, %s141
      %s156 = sphi 0, %s142
      %s160 = sphi 0, %s160
      %s162 = sphi 0, %s160
      %s163 = sphi 0, %s162
      %s177 = sphi 0, %s163
      %s181 = sphi 0, %s181
      %s183 = sphi 0, %s181
      %s184 = sphi 0, %s183
      %s198 = sphi 0, %s184
      %s202 = sphi 0, %s202
      %s204 = sphi 0, %s202
      %s205 = sphi 0, %s204
      %s219 = sphi 0, %s205
      %s223 = sphi 0, %s223
      %s225 = sphi 0, %s223
      %s226 = sphi 0, %s225
      %s240 = sphi 0, %s226
      %s248 = sphi 0, %s250
      %s251 = sphi 0, %s248
      %s252 = sphi 0, %s251
      %s268 = sphi 0, %s252
      %s276 = sphi 0, %s278
      %s279 = sphi 0, %s276
      %s280 = sphi 0, %s279
      %s296 = sphi 0, %s280
      %s304 = sphi 0, %s306
      %s307 = sphi 0, %s304
      %s308 = sphi 0, %s307
      %s324 = sphi 0, %s308
    $region4: #{dit_block.3} parent=1 // loop_header_branch
      %21 = sbr.rel (%p19) target = $region8
    $region5: #{dit_block.3} parent=1 // loop_body
      %s23 = ssub.s32 %s18, 1
      %s24 = ssub.s32 %s18, 2
      %s31 = sadd.s32 1, %s26
      %p32 = scmp.ge.s32.totalorder %s31, 2
      %s33 = scalar_select %p32, 0, %s31
      %s34 = sadd.s32 1, %s25
      %s35 = scalar_select %p32, %s34, %s25
      %p36 = scmp.ge.s32.totalorder %s35, 2
      %s37 = scalar_select %p36, 0, %s35
      %s38 = ssub.s32 %s25, %s37
      %s39 = ssub.s32 %s26, %s33
      %s40 = sor.u32 %s38, %s39
      %p41 = scmp.eq.s32.totalorder %s40, 0
      %s43 = sadd.s32 %s42, 1
      %s44 = scalar_select %p41, %s42, %s43
      %p47 = pneg %p41
      %p48 = scmp.eq.s32.totalorder %s18, 3
      %p49 = por %p47, %p48
      %p50 = scmp.ne.s32.totalorder %s42, %s45
      %p51 = scmp.eq.s32.totalorder %s18, 0
      %p52 = por %p50, %p51
      %p53 = scmp.ne.s32.totalorder %s42, %s45
      %p54 = scmp.eq.s32.totalorder %s23, 3
      %p55 = por %p53, %p54
      %p56 = scmp.ne.s32.totalorder %s45, %s46
      %p57 = scmp.eq.s32.totalorder %s23, 0
      %p58 = por %p56, %p57
      %p59 = scmp.ne.s32.totalorder %s45, %s46
      %p60 = scmp.eq.s32.totalorder %s24, 3
      %p61 = por %p59, %p60
      %p63 = scmp.ne.s32.totalorder %s46, %s62
      %p64 = scmp.eq.s32.totalorder %s24, 0
      %p65 = por %p63, %p64
      %s66 = ssub.s32 %s25, %s37
      %p67 = scmp.eq.s32.totalorder %s66, 0
      %s69 = sadd.s32 %s68, 1
      %s70 = scalar_select %p67, %s68, %s69
      %p73 = pneg %p67
      %p74 = scmp.eq.s32.totalorder %s18, 3
      %p75 = por %p73, %p74
      %p76 = scmp.ne.s32.totalorder %s68, %s71
      %p77 = scmp.eq.s32.totalorder %s18, 0
      %p78 = por %p76, %p77
      %p79 = scmp.ne.s32.totalorder %s68, %s71
      %p80 = scmp.eq.s32.totalorder %s23, 3
      %p81 = por %p79, %p80
      %p82 = scmp.ne.s32.totalorder %s71, %s72
      %p83 = scmp.eq.s32.totalorder %s23, 0
      %p84 = por %p82, %p83
      %p85 = scmp.ne.s32.totalorder %s71, %s72
      %p86 = scmp.eq.s32.totalorder %s24, 3
      %p87 = por %p85, %p86
      %p89 = scmp.ne.s32.totalorder %s72, %s88
      %p90 = scmp.eq.s32.totalorder %s24, 0
      %p91 = por %p89, %p90
      %s92 = ssub.s32 %s25, %s37
      %p93 = scmp.eq.s32.totalorder %s92, 0
      %s95 = sadd.s32 %s94, 1
      %s96 = scalar_select %p93, %s94, %s95
      %p99 = pneg %p93
      %p100 = scmp.eq.s32.totalorder %s18, 3
      %p101 = por %p99, %p100
      %p102 = scmp.ne.s32.totalorder %s94, %s97
      %p103 = scmp.eq.s32.totalorder %s18, 0
      %p104 = por %p102, %p103
      %p105 = scmp.ne.s32.totalorder %s94, %s97
      %p106 = scmp.eq.s32.totalorder %s23, 3
      %p107 = por %p105, %p106
      %p108 = scmp.ne.s32.totalorder %s97, %s98
      %p109 = scmp.eq.s32.totalorder %s23, 0
      %p110 = por %p108, %p109
      %p111 = scmp.ne.s32.totalorder %s97, %s98
      %p112 = scmp.eq.s32.totalorder %s24, 3
      %p113 = por %p111, %p112
      %p115 = scmp.ne.s32.totalorder %s98, %s114
      %p116 = scmp.eq.s32.totalorder %s24, 0
      %p117 = por %p115, %p116
      %s119 = sadd.s32 %s118, 1
      %p122 = scmp.eq.s32.totalorder %s18, 3
      %p123 = scmp.ne.s32.totalorder %s118, %s120
      %p124 = scmp.eq.s32.totalorder %s18, 0
      %p125 = por %p123, %p124
      %p126 = scmp.ne.s32.totalorder %s118, %s120
      %p127 = scmp.eq.s32.totalorder %s23, 3
      %p128 = por %p126, %p127
      %p129 = scmp.ne.s32.totalorder %s120, %s121
      %p130 = scmp.eq.s32.totalorder %s23, 0
      %p131 = por %p129, %p130
      %p132 = scmp.ne.s32.totalorder %s120, %s121
      %p133 = scmp.eq.s32.totalorder %s24, 3
      %p134 = por %p132, %p133
      %p136 = scmp.ne.s32.totalorder %s121, %s135
      %p137 = scmp.eq.s32.totalorder %s24, 0
      %p138 = por %p136, %p137
      %s140 = sadd.s32 %s139, 1
      %p143 = scmp.eq.s32.totalorder %s18, 3
      %p144 = scmp.ne.s32.totalorder %s139, %s141
      %p145 = scmp.eq.s32.totalorder %s18, 0
      %p146 = por %p144, %p145
      %p147 = scmp.ne.s32.totalorder %s139, %s141
      %p148 = scmp.eq.s32.totalorder %s23, 3
      %p149 = por %p147, %p148
      %p150 = scmp.ne.s32.totalorder %s141, %s142
      %p151 = scmp.eq.s32.totalorder %s23, 0
      %p152 = por %p150, %p151
      %p153 = scmp.ne.s32.totalorder %s141, %s142
      %p154 = scmp.eq.s32.totalorder %s24, 3
      %p155 = por %p153, %p154
      %p157 = scmp.ne.s32.totalorder %s142, %s156
      %p158 = scmp.eq.s32.totalorder %s24, 0
      %p159 = por %p157, %p158
      %s161 = sadd.s32 %s160, 1
      %p164 = scmp.eq.s32.totalorder %s18, 3
      %p165 = scmp.ne.s32.totalorder %s160, %s162
      %p166 = scmp.eq.s32.totalorder %s18, 0
      %p167 = por %p165, %p166
      %p168 = scmp.ne.s32.totalorder %s160, %s162
      %p169 = scmp.eq.s32.totalorder %s23, 3
      %p170 = por %p168, %p169
      %p171 = scmp.ne.s32.totalorder %s162, %s163
      %p172 = scmp.eq.s32.totalorder %s23, 0
      %p173 = por %p171, %p172
      %p174 = scmp.ne.s32.totalorder %s162, %s163
      %p175 = scmp.eq.s32.totalorder %s24, 3
      %p176 = por %p174, %p175
      %p178 = scmp.ne.s32.totalorder %s163, %s177
      %p179 = scmp.eq.s32.totalorder %s24, 0
      %p180 = por %p178, %p179
      %s182 = sadd.s32 %s181, 1
      %p185 = scmp.eq.s32.totalorder %s18, 3
      %p186 = scmp.ne.s32.totalorder %s181, %s183
      %p187 = scmp.eq.s32.totalorder %s18, 0
      %p188 = por %p186, %p187
      %p189 = scmp.ne.s32.totalorder %s181, %s183
      %p190 = scmp.eq.s32.totalorder %s23, 3
      %p191 = por %p189, %p190
      %p192 = scmp.ne.s32.totalorder %s183, %s184
      %p193 = scmp.eq.s32.totalorder %s23, 0
      %p194 = por %p192, %p193
      %p195 = scmp.ne.s32.totalorder %s183, %s184
      %p196 = scmp.eq.s32.totalorder %s24, 3
      %p197 = por %p195, %p196
      %p199 = scmp.ne.s32.totalorder %s184, %s198
      %p200 = scmp.eq.s32.totalorder %s24, 0
      %p201 = por %p199, %p200
      %s203 = sadd.s32 %s202, 1
      %p206 = scmp.eq.s32.totalorder %s18, 3
      %p207 = scmp.ne.s32.totalorder %s202, %s204
      %p208 = scmp.eq.s32.totalorder %s18, 0
      %p209 = por %p207, %p208
      %p210 = scmp.ne.s32.totalorder %s202, %s204
      %p211 = scmp.eq.s32.totalorder %s23, 3
      %p212 = por %p210, %p211
      %p213 = scmp.ne.s32.totalorder %s204, %s205
      %p214 = scmp.eq.s32.totalorder %s23, 0
      %p215 = por %p213, %p214
      %p216 = scmp.ne.s32.totalorder %s204, %s205
      %p217 = scmp.eq.s32.totalorder %s24, 3
      %p218 = por %p216, %p217
      %p220 = scmp.ne.s32.totalorder %s205, %s219
      %p221 = scmp.eq.s32.totalorder %s24, 0
      %p222 = por %p220, %p221
      %s224 = sadd.s32 %s223, 1
      %p227 = scmp.eq.s32.totalorder %s18, 3
      %p228 = scmp.ne.s32.totalorder %s223, %s225
      %p229 = scmp.eq.s32.totalorder %s18, 0
      %p230 = por %p228, %p229
      %p231 = scmp.ne.s32.totalorder %s223, %s225
      %p232 = scmp.eq.s32.totalorder %s23, 3
      %p233 = por %p231, %p232
      %p234 = scmp.ne.s32.totalorder %s225, %s226
      %p235 = scmp.eq.s32.totalorder %s23, 0
      %p236 = por %p234, %p235
      %p237 = scmp.ne.s32.totalorder %s225, %s226
      %p238 = scmp.eq.s32.totalorder %s24, 3
      %p239 = por %p237, %p238
      %p241 = scmp.ne.s32.totalorder %s226, %s240
      %p242 = scmp.eq.s32.totalorder %s24, 0
      %p243 = por %p241, %p242
      %s244 = ssub.s32 %s25, %s37
      %s245 = ssub.s32 %s26, %s33
      %s246 = sor.u32 %s244, %s245
      %p247 = scmp.eq.s32.totalorder %s246, 0
      %s249 = sadd.s32 %s248, 1
      %s250 = scalar_select %p247, %s248, %s249
      %p253 = pneg %p247
      %p254 = scmp.eq.s32.totalorder %s18, 3
      %p255 = por %p253, %p254
      %p256 = scmp.ne.s32.totalorder %s248, %s251
      %p257 = scmp.eq.s32.totalorder %s18, 0
      %p258 = por %p256, %p257
      %p259 = scmp.ne.s32.totalorder %s248, %s251
      %p260 = scmp.eq.s32.totalorder %s23, 3
      %p261 = por %p259, %p260
      %p262 = scmp.ne.s32.totalorder %s251, %s252
      %p263 = scmp.eq.s32.totalorder %s23, 0
      %p264 = por %p262, %p263
      %p265 = scmp.ne.s32.totalorder %s251, %s252
      %p266 = scmp.eq.s32.totalorder %s24, 3
      %p267 = por %p265, %p266
      %p269 = scmp.ne.s32.totalorder %s252, %s268
      %p270 = scmp.eq.s32.totalorder %s24, 0
      %p271 = por %p269, %p270
      %s272 = ssub.s32 %s25, %s37
      %s273 = ssub.s32 %s26, %s33
      %s274 = sor.u32 %s272, %s273
      %p275 = scmp.eq.s32.totalorder %s274, 0
      %s277 = sadd.s32 %s276, 1
      %s278 = scalar_select %p275, %s276, %s277
      %p281 = pneg %p275
      %p282 = scmp.eq.s32.totalorder %s18, 3
      %p283 = por %p281, %p282
      %p284 = scmp.ne.s32.totalorder %s276, %s279
      %p285 = scmp.eq.s32.totalorder %s18, 0
      %p286 = por %p284, %p285
      %p287 = scmp.ne.s32.totalorder %s276, %s279
      %p288 = scmp.eq.s32.totalorder %s23, 3
      %p289 = por %p287, %p288
      %p290 = scmp.ne.s32.totalorder %s279, %s280
      %p291 = scmp.eq.s32.totalorder %s23, 0
      %p292 = por %p290, %p291
      %p293 = scmp.ne.s32.totalorder %s279, %s280
      %p294 = scmp.eq.s32.totalorder %s24, 3
      %p295 = por %p293, %p294
      %p297 = scmp.ne.s32.totalorder %s280, %s296
      %p298 = scmp.eq.s32.totalorder %s24, 0
      %p299 = por %p297, %p298
      %s300 = ssub.s32 %s25, %s37
      %s301 = ssub.s32 %s26, %s33
      %s302 = sor.u32 %s300, %s301
      %p303 = scmp.eq.s32.totalorder %s302, 0
      %s305 = sadd.s32 %s304, 1
      %s306 = scalar_select %p303, %s304, %s305
      %p309 = pneg %p303
      %p310 = scmp.eq.s32.totalorder %s18, 3
      %p311 = por %p309, %p310
      %p312 = scmp.ne.s32.totalorder %s304, %s307
      %p313 = scmp.eq.s32.totalorder %s18, 0
      %p314 = por %p312, %p313
      %p315 = scmp.ne.s32.totalorder %s304, %s307
      %p316 = scmp.eq.s32.totalorder %s23, 3
      %p317 = por %p315, %p316
      %p318 = scmp.ne.s32.totalorder %s307, %s308
      %p319 = scmp.eq.s32.totalorder %s23, 0
      %p320 = por %p318, %p319
      %p321 = scmp.ne.s32.totalorder %s307, %s308
      %p322 = scmp.eq.s32.totalorder %s24, 3
      %p323 = por %p321, %p322
      %p325 = scmp.ne.s32.totalorder %s308, %s324
      %p326 = scmp.eq.s32.totalorder %s24, 0
      %p327 = por %p325, %p326
      %p328 = scmp.le.s32.totalorder 1, %s18
      %p329 = scmp.lt.s32.totalorder %s18, 5
      %p330 = pnand %p328, %p329
      %p331 = pneg %p330
      // Predicated region
      $region9: #{dit_block.3} parent=5 // pred_check
        _
      $region10: #{dit_block.3} parent=5 // pred_check_branch
        %333 = sbr.rel (%p330) target = $region12
      $region11: #{dit_block.3} parent=5 // pred_region
        %s334 = ssub.s32 %s18, 1
        // Predicated region
        $region13: #{dit_block.3} parent=11 // pred_check
          %p335 = pneg %p131
        $region14: #{dit_block.3} parent=11 // pred_check_branch
          %337 = sbr.rel (%p335) target = $region16
        $region15: #{dit_block.3} parent=11 // pred_region
          _
        $region16: #{dit_block.3} parent=11 // pred_fallthru
          _
        // Predicated region
        $region17: #{dit_block.3} parent=11 // pred_check
          %p338 = pneg %p152
        $region18: #{dit_block.3} parent=11 // pred_check_branch
          %340 = sbr.rel (%p338) target = $region20
        $region19: #{dit_block.3} parent=11 // pred_region
          _
        $region20: #{dit_block.3} parent=11 // pred_fallthru
          _
        // Predicated region
        $region21: #{dit_block.3} parent=11 // pred_check
          %p341 = pneg %p173
        $region22: #{dit_block.3} parent=11 // pred_check_branch
          %343 = sbr.rel (%p341) target = $region24
        $region23: #{dit_block.3} parent=11 // pred_region
          _
        $region24: #{dit_block.3} parent=11 // pred_fallthru
          _
        // Predicated region
        $region25: #{dit_block.3} parent=11 // pred_check
          %p344 = pneg %p194
        $region26: #{dit_block.3} parent=11 // pred_check_branch
          %346 = sbr.rel (%p344) target = $region28
        $region27: #{dit_block.3} parent=11 // pred_region
          _
        $region28: #{dit_block.3} parent=11 // pred_fallthru
          _
        // Predicated region
        $region29: #{dit_block.3} parent=11 // pred_check
          %p347 = pneg %p215
        $region30: #{dit_block.3} parent=11 // pred_check_branch
          %349 = sbr.rel (%p347) target = $region32
        $region31: #{dit_block.3} parent=11 // pred_region
          _
        $region32: #{dit_block.3} parent=11 // pred_fallthru
          _
        // Predicated region
        $region33: #{dit_block.3} parent=11 // pred_check
          %p350 = pneg %p236
        $region34: #{dit_block.3} parent=11 // pred_check_branch
          %352 = sbr.rel (%p350) target = $region36
        $region35: #{dit_block.3} parent=11 // pred_region
          _
        $region36: #{dit_block.3} parent=11 // pred_fallthru
          _
      $region12: #{dit_block.3} parent=5 // pred_fallthru
        _
      %p353 = scmp.lt.s32.totalorder %s18, 4
      // Predicated region
      $region37: #{dit_block.3} parent=5 // pred_check
        %p354 = pneg %p353
      $region38: #{dit_block.3} parent=5 // pred_check_branch
        %356 = sbr.rel (%p354) target = $region40
      $region39: #{dit_block.3} parent=5 // pred_region
        // Predicated region
        $region41: #{dit_block.3} parent=39 // pred_check
          %p357 = pneg %p52
        $region42: #{dit_block.3} parent=39 // pred_check_branch
          %359 = sbr.rel (%p357) target = $region44
        $region43: #{dit_block.3} parent=39 // pred_region
          %p360 = scmp.lt.s32.totalorder %s25, 1
          %s361 = scalar_select %p360, %s25, 1
          %p362 = scmp.lt.s32.totalorder %s26, 1
          %s363 = scalar_select %p362, %s26, 1
          %s364 = smul.addr %s361, 2
          %s365 = sadd.s32 %s363, %s364
          %s366 = smul.addr %s365, 8
          %s367 = scalar_lea.vmem %s0, %s366
        $region44: #{dit_block.3} parent=39 // pred_fallthru
          _
        // Predicated region
        $region45: #{dit_block.3} parent=39 // pred_check
          %p368 = pneg %p78
        $region46: #{dit_block.3} parent=39 // pred_check_branch
          %370 = sbr.rel (%p368) target = $region48
        $region47: #{dit_block.3} parent=39 // pred_region
          %p371 = scmp.lt.s32.totalorder %s25, 1
          %s372 = scalar_select %p371, %s25, 1
          %s373 = scalar_lea.vmem %s1, %s372
        $region48: #{dit_block.3} parent=39 // pred_fallthru
          _
        // Predicated region
        $region49: #{dit_block.3} parent=39 // pred_check
          %p374 = pneg %p104
        $region50: #{dit_block.3} parent=39 // pred_check_branch
          %376 = sbr.rel (%p374) target = $region52
        $region51: #{dit_block.3} parent=39 // pred_region
          %p377 = scmp.lt.s32.totalorder %s25, 1
          %s378 = scalar_select %p377, %s25, 1
          %s379 = scalar_lea.vmem %s2, %s378
        $region52: #{dit_block.3} parent=39 // pred_fallthru
          _
      $region40: #{dit_block.3} parent=5 // pred_fallthru
        _
      %p380 = scmp.le.s32.totalorder 1, %s18
      %p381 = scmp.lt.s32.totalorder %s18, 5
      %p382 = pnand %p380, %p381
      %p383 = pneg %p382
      // Predicated region
      $region53: #{dit_block.3} parent=5 // pred_check
        _
      $region54: #{dit_block.3} parent=5 // pred_check_branch
        %385 = sbr.rel (%p382) target = $region56
      $region55: #{dit_block.3} parent=5 // pred_region
        %s386 = ssub.s32 %s18, 1
        %p387 = scmp.lt.s32.totalorder %s27, 1
        %s388 = scalar_select %p387, %s27, 1
        %p389 = scmp.lt.s32.totalorder %s28, 1
        %s390 = scalar_select %p389, %s28, 1
        %s391 = smul.addr %s388, 2
        %s392 = sadd.s32 %s390, %s391
        %s393 = smul.addr %s392, 8
        %s394 = scalar_lea.vmem %s0, %s393
        %p395 = pneg %p58
        %p396 = pneg %p55
        %p397 = scmp.lt.s32.totalorder %s27, 1
        %s398 = scalar_select %p397, %s27, 1
        %s399 = scalar_lea.vmem %s1, %s398
        %p400 = pneg %p84
        %p401 = pneg %p81
        %p402 = scmp.lt.s32.totalorder %s27, 1
        %s403 = scalar_select %p402, %s27, 1
        %s404 = scalar_lea.vmem %s2, %s403
        %p405 = pneg %p110
        %p406 = pneg %p107
        %p407 = pneg %p131
        %p408 = pneg %p128
        %p409 = pneg %p152
        %p410 = pneg %p149
        %p411 = pneg %p173
        %p412 = pneg %p170
        %p413 = pneg %p194
        %p414 = pneg %p191
        %p415 = pneg %p215
        %p416 = pneg %p212
        %p417 = pneg %p236
        %p418 = pneg %p233
        %p419 = pneg %p264
        %p420 = pneg %p261
        %s421 = sand.u32 %s251, 1
        %s422 = sand.u32 %s251, 1
        %s423 = smul.addr %s422, 16
        %s424 = scalar_lea.vmem [#allocation2], %s423
        %p425 = pneg %p292
        %p426 = pneg %p289
        %s427 = sand.u32 %s279, 1
        %s428 = sand.u32 %s279, 1
        %s429 = smul.addr %s428, 16
        %s430 = scalar_lea.vmem [#allocation3], %s429
        %p431 = pneg %p320
        %p432 = pneg %p317
        %s433 = sand.u32 %s307, 1
        %s434 = sand.u32 %s307, 1
        %s435 = smul.addr %s434, 16
        %s436 = scalar_lea.vmem [#allocation4], %s435
        %p437 = scmp.lt.s32.totalorder %s27, 1
        %s438 = scalar_select %p437, %s27, 1
        %p439 = scmp.lt.s32.totalorder %s28, 1
        %s440 = scalar_select %p439, %s28, 1
        %s441 = smul.addr %s438, 2
        %s442 = sadd.s32 %s440, %s441
        %s443 = smul.addr %s442, 8
        %s444 = scalar_lea.vmem %s0, %s443
        %p445 = scmp.lt.s32.totalorder %s27, 1
        %s446 = scalar_select %p445, %s27, 1
        %s447 = scalar_lea.vmem %s1, %s446
        %p448 = scmp.lt.s32.totalorder %s27, 1
        %s449 = scalar_select %p448, %s27, 1
        %s450 = scalar_lea.vmem %s2, %s449
        %v452 = vld [vmem:[%s444] sm:$0xff]
        %vm453 = vcmask 523264
        %v454 = vsel %vm453, %v452, 0.0
        %455 = vadd.xlane.f32.xlu0 %v454
        %v456 = vpop.xlane.xlu0 %455
        %v457 = vrcp.pop 64.0
        %v458 = vmul.f32 64.0, %v457
        %v459 = vsub.f32 1.0, %v458
        %v460 = vmul.f32 %v457, %v459
        %v461 = vadd.f32 %v457, %v460
        %vm462 = vweird.f32 %v457
        %v463 = vsel %vm462, %v457, %v461
        %v464 = vmul.f32 %v456, %v463
        %v465 = vsub.f32 %v452, %v464
        %v466 = vmul.f32 %v465, %v465
        %v467 = vsel %vm453, %v466, 0.0
        %468 = vadd.xlane.f32.xlu0 %v467
        %v469 = vpop.xlane.xlu0 %468
        %v470 = vmul.f32 %v469, %v463
        %v471 = vadd.f32 %v470, 1e-06
        %v472 = vrsqrt.pop %v471
        %v473 = vmul.f32 %v472, %v471
        %v474 = vmul.f32 %v473, %v472
        %v475 = vmul.f32 0.5, %v474
        %v476 = vsub.f32 1.5, %v475
        %v477 = vmul.f32 %v472, %v476
        %vm478 = vweird.f32 %v471
        %vm479 = vweird.f32 %v472
        %vm480 = vmor %vm478, %vm479
        %v481 = vsel %vm480, %v472, %v477
        %v482 = vmul.f32 %v465, %v481
        %v483 = vld [vmem:[%s450] sm:$0x1]
        %v484 = vadd.f32 %v483, 1.0
        %v486 = vperm.slane %v484, 0
        %v488 = vmul.f32 %v482, %v486
        %v489 = vld [vmem:[%s447] sm:$0x1]
        %v491 = vperm.slane %v489, 0
        %v493 = vadd.f32 %v488, %v491
        %v494 = vpack.c.bf16 %v493, %v493
        %v495 = vld [vmem:[%s3] sm:$0xff]
        %v496 = vld [vmem:[%s3 + $0x8] sm:$0xff]
        %v497 = vld [vmem:[%s3 + $0x10] sm:$0xff]
        %v498 = vld [vmem:[%s3 + $0x18] sm:$0xff]
        %v499 = vld [vmem:[%s3 + $0x20] sm:$0xff]
        %v500 = vld [vmem:[%s3 + $0x28] sm:$0xff]
        %v501 = vld [vmem:[%s3 + $0x30] sm:$0xff]
        %v502 = vld [vmem:[%s3 + $0x38] sm:$0xff]
        %v503 = vld [vmem:[%s4] sm:$0x3]
        %v505 = vperm.slane %v503, 0
        %v506 = vperm.slane %v503, 1
        %v517 = vunpack.c.l.b16 %v495
        %v518 = vunpack.c.h.b16 %v495
        %v519 = vunpack.c.l.b16 %v496
        %v520 = vunpack.c.h.b16 %v496
        %v521 = vunpack.c.l.b16 %v497
        %v522 = vunpack.c.h.b16 %v497
        %v523 = vunpack.c.l.b16 %v498
        %v524 = vunpack.c.h.b16 %v498
        %v525 = vunpack.c.l.b16 %v499
        %v526 = vunpack.c.h.b16 %v499
        %v527 = vunpack.c.l.b16 %v500
        %v528 = vunpack.c.h.b16 %v500
        %v529 = vunpack.c.l.b16 %v501
        %v530 = vunpack.c.h.b16 %v501
        %v531 = vunpack.c.l.b16 %v502
        %v532 = vunpack.c.h.b16 %v502
        %v533 = vpack.c.b16 %v519, %v517
        %v534 = vpack.c.b16 %v520, %v518
        %v535 = vpack.c.b16 %v523, %v521
        %v536 = vpack.c.b16 %v524, %v522
        %v537 = vpack.c.b16 %v527, %v525
        %v538 = vpack.c.b16 %v528, %v526
        %v539 = vpack.c.b16 %v531, %v529
        %v540 = vpack.c.b16 %v532, %v530
        %v550 = vsel %vm453, %v494, 0
        %552 = vmatpush.bf16.msra.mxu0 0
        %553 = vmatpush.bf16.msra.mxu0 0
        %554 = vmatpush.bf16.msra.mxu0 0
        %555 = vmatpush.bf16.msra.mxu0 0
        %556 = vmatpush.bf16.msra.mxu0 %v539
        %557 = vmatpush.bf16.msra.mxu0 %v537
        %558 = vmatpush.bf16.msra.mxu0 %v535
        %559 = vmatpush.bf16.msra.mxu0 %v533
        %560 = vmatmul.bf16.gmra.mxu0 %v550
        %v561 = vpop.f32.mrf.mxu0
        %v562 = vadd.f32 %v505, %v561
        %v563 = vpop.f32.mrf.mxu0
        %564 = vdwg.mxu0
        %565 = vmatpush.bf16.msra.mxu0 0
        %566 = vmatpush.bf16.msra.mxu0 0
        %567 = vmatpush.bf16.msra.mxu0 0
        %568 = vmatpush.bf16.msra.mxu0 0
        %569 = vmatpush.bf16.msra.mxu0 %v540
        %570 = vmatpush.bf16.msra.mxu0 %v538
        %571 = vmatpush.bf16.msra.mxu0 %v536
        %572 = vmatpush.bf16.msra.mxu0 %v534
        %573 = vmatmul.bf16.gmra.mxu0 %v550
        %v574 = vpop.f32.mrf.mxu0
        %v575 = vadd.f32 %v506, %v574
        %v576 = vpop.f32.mrf.mxu0
        %577 = vdwg.mxu0
        %v578 = vmul.f32 %v562, %v562
        %v579 = vld [vmem:[%s5] sm:$0xff]
        %v580 = vld [vmem:[%s5 + $0x8] sm:$0xff]
        %v581 = vld [vmem:[%s5 + $0x10] sm:$0xff]
        %v582 = vld [vmem:[%s5 + $0x18] sm:$0xff]
        %v583 = vld [vmem:[%s5 + $0x20] sm:$0xff]
        %v584 = vld [vmem:[%s5 + $0x28] sm:$0xff]
        %v585 = vld [vmem:[%s5 + $0x30] sm:$0xff]
        %v586 = vld [vmem:[%s5 + $0x38] sm:$0xff]
        %v588 = vsel %vm453, %v578, 0
        %590 = vmatpush.msra.mxu0 0.0
        %591 = vmatpush.msra.mxu0 0.0
        %592 = vmatpush.msra.mxu0 0.0
        %593 = vmatpush.msra.mxu0 0.0
        %594 = vmatpush.msra.mxu0 0.0
        %595 = vmatpush.msra.mxu0 0.0
        %596 = vmatpush.msra.mxu0 0.0
        %597 = vmatpush.msra.mxu0 0.0
        %598 = vmatpush.msra.mxu0 %v586
        %599 = vmatpush.msra.mxu0 %v585
        %600 = vmatpush.msra.mxu0 %v584
        %601 = vmatpush.msra.mxu0 %v583
        %602 = vmatpush.msra.mxu0 %v582
        %603 = vmatpush.msra.mxu0 %v581
        %604 = vmatpush.msra.mxu0 %v580
        %605 = vmatpush.msra.mxu0 %v579
        %606 = vmatmul.f32.gmra.mxu0 %v588
        %v607 = vpop.f32.mrf.mxu0
        %v608 = vadd.f32 1e-05, %v607
        %609 = vdwg.mxu0
        %v610 = vrsqrt.pop %v608
        %v611 = vmul.f32 %v610, %v608
        %v612 = vmul.f32 %v611, %v610
        %v613 = vmul.f32 0.5, %v612
        %v614 = vsub.f32 1.5, %v613
        %v615 = vmul.f32 %v610, %v614
        %vm616 = vweird.f32 %v608
        %vm617 = vweird.f32 %v610
        %vm618 = vmor %vm616, %vm617
        %v619 = vsel %vm618, %v610, %v615
        %v620 = vld [vmem:[%s6] sm:$0xf]
        %vm621 = vcmask 31744
        %v623 = vsel %vm621, %v619, 0
        %vm625 = vcmask 1043456
        %v627 = vsel %vm625, %v620, 0
        %629 = vmatpush.msra.mxu0 0.0
        %630 = vmatpush.msra.mxu0 0.0
        %631 = vmatpush.msra.mxu0 0.0
        %632 = vmatpush.msra.mxu0 0.0
        %633 = vmatpush.msra.mxu0 0.0
        %634 = vmatpush.msra.mxu0 0.0
        %635 = vmatpush.msra.mxu0 0.0
        %636 = vmatpush.msra.mxu0 0.0
        %637 = vmatpush.msra.mxu0 0.0
        %638 = vmatpush.msra.mxu0 0.0
        %639 = vmatpush.msra.mxu0 0.0
        %640 = vmatpush.msra.mxu0 0.0
        %641 = vmatpush.msra.mxu0 0.0
        %642 = vmatpush.msra.mxu0 0.0
        %643 = vmatpush.msra.mxu0 0.0
        %644 = vmatpush.msra.mxu0 %v627
        %645 = vmatmul.f32.gmra.mxu0 %v623
        %v646 = vpop.f32.mrf.mxu0
        %v647 = vadd.f32 0.0, %v646
        %648 = vdwg.mxu0
        %v649 = vmul.f32 %v562, %v647
        %v650 = vld [vmem:[%s7] sm:$0x1]
        %v652 = vperm.slane %v650, 0
        %v654 = vmul.f32 %v649, %v652
        %v655 = vpack.c.bf16 %v654, %v654
        %656 = vrot.lane.b32.xlu0 %v578, 64
        %v657 = vpop.permute.xlu0 %656
        %v658 = vsel %vm453, %v657, 0
        %660 = vmatpush.msra.mxu0 0.0
        %661 = vmatpush.msra.mxu0 0.0
        %662 = vmatpush.msra.mxu0 0.0
        %663 = vmatpush.msra.mxu0 0.0
        %664 = vmatpush.msra.mxu0 0.0
        %665 = vmatpush.msra.mxu0 0.0
        %666 = vmatpush.msra.mxu0 0.0
        %667 = vmatpush.msra.mxu0 0.0
        %668 = vmatpush.msra.mxu0 %v586
        %669 = vmatpush.msra.mxu0 %v585
        %670 = vmatpush.msra.mxu0 %v584
        %671 = vmatpush.msra.mxu0 %v583
        %672 = vmatpush.msra.mxu0 %v582
        %673 = vmatpush.msra.mxu0 %v581
        %674 = vmatpush.msra.mxu0 %v580
        %675 = vmatpush.msra.mxu0 %v579
        %676 = vmatmul.f32.gmra.mxu0 %v658
        %v677 = vpop.f32.mrf.mxu0
        %v678 = vadd.f32 1e-05, %v677
        %679 = vdwg.mxu0
        %v680 = vrsqrt.pop %v678
        %v681 = vmul.f32 %v680, %v678
        %v682 = vmul.f32 %v681, %v680
        %v683 = vmul.f32 0.5, %v682
        %v684 = vsub.f32 1.5, %v683
        %v685 = vmul.f32 %v680, %v684
        %vm686 = vweird.f32 %v678
        %vm687 = vweird.f32 %v680
        %vm688 = vmor %vm686, %vm687
        %v689 = vsel %vm688, %v680, %v685
        %v691 = vsel %vm621, %v689, 0
        %693 = vmatpush.msra.mxu0 0.0
        %694 = vmatpush.msra.mxu0 0.0
        %695 = vmatpush.msra.mxu0 0.0
        %696 = vmatpush.msra.mxu0 0.0
        %697 = vmatpush.msra.mxu0 0.0
        %698 = vmatpush.msra.mxu0 0.0
        %699 = vmatpush.msra.mxu0 0.0
        %700 = vmatpush.msra.mxu0 0.0
        %701 = vmatpush.msra.mxu0 0.0
        %702 = vmatpush.msra.mxu0 0.0
        %703 = vmatpush.msra.mxu0 0.0
        %704 = vmatpush.msra.mxu0 0.0
        %705 = vmatpush.msra.mxu0 0.0
        %706 = vmatpush.msra.mxu0 0.0
        %707 = vmatpush.msra.mxu0 0.0
        %708 = vmatpush.msra.mxu0 %v627
        %709 = vmatmul.f32.gmra.mxu0 %v691
        %v710 = vpop.f32.mrf.mxu0
        %v711 = vadd.f32 0.0, %v710
        %712 = vdwg.mxu0
        %714 = vrot.lane.b32.xlu0 %v711, 64
        %v715 = vpop.permute.xlu0 %714
        %v717 = vmul.f32 %v562, %v715
        %v718 = vld [vmem:[%s8] sm:$0x1]
        %v720 = vperm.slane %v718, 0
        %721 = vrot.lane.b32.xlu0 %v720, 64
        %v722 = vpop.permute.xlu0 %721
        %v724 = vmul.f32 %v717, %v722
        %v725 = vpack.c.bf16 %v724, %v724
        %v726 = vpack.c.bf16 %v575, %v575
        %vm727 = vcmask 125952
        %728 = vst.msk [vmem:[%s424] sm:$0xf] %vm727, %v655
        %730 = vrot.lane.b32.xlu0 %v725, 64
        %v731 = vpop.permute.xlu0 %730
        %733 = vst.msk [vmem:[%s430] sm:$0xf] %vm727, %v731
        %734 = vst.msk [vmem:[%s436] sm:$0xf] %vm727, %v726
        %736 = vrot.lane.b32.xlu0 %v655, 112
        %v737 = vpop.permute.xlu0 %736
        %s739 = scalar_lea.vmem %s424, 4 [#allocation2]
        %740 = vst.msk [vmem:[%s739] sm:$0xf] %vm727, %v737
        %741 = vrot.lane.b32.xlu0 %v725, 48
        %v742 = vpop.permute.xlu0 %741
        %s744 = scalar_lea.vmem %s430, 4 [#allocation3]
        %745 = vst.msk [vmem:[%s744] sm:$0xf] %vm727, %v742
        %747 = vrot.lane.b32.xlu0 %v726, 112
        %v748 = vpop.permute.xlu0 %747
        %s750 = scalar_lea.vmem %s436, 4 [#allocation4]
        %751 = vst.msk [vmem:[%s750] sm:$0xf] %vm727, %v748
        %752 = vrot.lane.b32.xlu0 %v655, 96
        %v753 = vpop.permute.xlu0 %752
        %s755 = scalar_lea.vmem %s424, 8 [#allocation2]
        %756 = vst.msk [vmem:[%s755] sm:$0xf] %vm727, %v753
        %757 = vrot.lane.b32.xlu0 %v725, 32
        %v758 = vpop.permute.xlu0 %757
        %s760 = scalar_lea.vmem %s430, 8 [#allocation3]
        %761 = vst.msk [vmem:[%s760] sm:$0xf] %vm727, %v758
        %762 = vrot.lane.b32.xlu0 %v726, 96
        %v763 = vpop.permute.xlu0 %762
        %s765 = scalar_lea.vmem %s436, 8 [#allocation4]
        %766 = vst.msk [vmem:[%s765] sm:$0xf] %vm727, %v763
        %767 = vrot.lane.b32.xlu0 %v655, 80
        %v768 = vpop.permute.xlu0 %767
        %s770 = scalar_lea.vmem %s424, 12 [#allocation2]
        %771 = vst.msk [vmem:[%s770] sm:$0xf] %vm727, %v768
        %772 = vrot.lane.b32.xlu0 %v725, 16
        %v773 = vpop.permute.xlu0 %772
        %s775 = scalar_lea.vmem %s430, 12 [#allocation3]
        %776 = vst.msk [vmem:[%s775] sm:$0xf] %vm727, %v773
        %777 = vrot.lane.b32.xlu0 %v726, 80
        %v778 = vpop.permute.xlu0 %777
        %s780 = scalar_lea.vmem %s436, 12 [#allocation4]
        %781 = vst.msk [vmem:[%s780] sm:$0xf] %vm727, %v778
        %s782 = sand.u32 %s251, 1
        %s783 = sand.u32 %s251, 1
        %s784 = smul.addr %s783, 16
        %s785 = scalar_lea.vmem [#allocation2], %s784
        %s786 = sand.u32 %s279, 1
        %s787 = sand.u32 %s279, 1
        %s788 = smul.addr %s787, 16
        %s789 = scalar_lea.vmem [#allocation3], %s788
        %s790 = sand.u32 %s307, 1
        %s791 = sand.u32 %s307, 1
        %s792 = smul.addr %s791, 16
        %s793 = scalar_lea.vmem [#allocation4], %s792
        // Predicated region
        $region57: #{dit_block.3} parent=55 // pred_check
          %p794 = pneg %p261
        $region58: #{dit_block.3} parent=55 // pred_check_branch
          %796 = sbr.rel (%p794) target = $region60
        $region59: #{dit_block.3} parent=55 // pred_region
          %s797 = smul.addr %s27, 8
          %s798 = sadd.s32 %s28, %s797
          %s799 = smul.addr %s798, 4
          %s800 = scalar_lea.vmem %s9, %s799
          // Predicated region
          $region61: #{dit_block.3} parent=59 // pred_check
            _
          $region62: #{dit_block.3} parent=59 // pred_check_branch
            %802 = sbr.rel (0) target = $region64
          $region63: #{dit_block.3} parent=59 // pred_region
            // Predicated region
            $region65: #{dit_block.3} parent=63 // pred_check
              _
            $region66: #{dit_block.3} parent=63 // pred_check_branch
              %804 = sbr.rel target = $region68
            $region67: #{dit_block.3} parent=63 // pred_region
              // Predicated region
              $region80: #{dit_block.3} parent=67 // pred_check
                _
              $region81: #{dit_block.3} parent=67 // pred_check_branch
                %826 = sbr.rel (0) target = $region83
              $region82: #{dit_block.3} parent=67 // pred_region
                loop: start=0, step=1, limit=1
                $region84: #{dit_block.3} parent=82 // loop_pre_header
                  _
                $region85: #{dit_block.3} parent=82 // loop_header
                  %s828 = sphi 0, %s832
                  %p829 = scmp.ge.s32.totalorder %s828, 1
                  %s833 = sphi %s785, %s785
                  %s834 = sphi %s800, %s800
                $region86: #{dit_block.3} parent=82 // loop_header_branch
                  %831 = sbr.rel (%p829) target = $region90
                $region87: #{dit_block.3} parent=82 // loop_body
                  _
                $region88: #{dit_block.3} parent=82 // loop_footer
                  %s832 = sadd.s32 1, %s828
                $region89: #{dit_block.3} parent=82 // loop_footer_branch
                  %827 = sbr.rel target = $region85
                $region90: #{dit_block.3} parent=82 // loop_exit
                  _
                %s836 = ssub.s32 16, 1
                loop: start=0, step=1, limit=1
                $region91: #{dit_block.3} parent=82 // loop_pre_header
                  _
                $region92: #{dit_block.3} parent=82 // loop_header
                  %s838 = sphi 0, %s842
                  %p839 = scmp.ge.s32.totalorder %s838, 1
                  %s843 = sphi %s785, %s785
                  %s844 = sphi %s800, %s800
                $region93: #{dit_block.3} parent=82 // loop_header_branch
                  %841 = sbr.rel (%p839) target = $region97
                $region94: #{dit_block.3} parent=82 // loop_body
                  %v845 = vld [vmem:[%s843] sm:%s836]
                  %846 = vst [vmem:[%s844] sm:%s836] %v845
                  %v847 = vld [vmem:[%s843 + $0x4] sm:%s836]
                  %848 = vst [vmem:[%s844 + $0x8] sm:%s836] %v847
                  %v849 = vld [vmem:[%s843 + $0x8] sm:%s836]
                  %850 = vst [vmem:[%s844 + $0x10] sm:%s836] %v849
                  %v851 = vld [vmem:[%s843 + $0xc] sm:%s836]
                  %852 = vst [vmem:[%s844 + $0x18] sm:%s836] %v851
                $region95: #{dit_block.3} parent=82 // loop_footer
                  %s842 = sadd.s32 1, %s838
                $region96: #{dit_block.3} parent=82 // loop_footer_branch
                  %837 = sbr.rel target = $region92
                $region97: #{dit_block.3} parent=82 // loop_exit
                  _
              $region83: #{dit_block.3} parent=67 // pred_fallthru
                _
            $region68: #{dit_block.3} parent=63 // pred_fallthru
              _
            // Predicated region
            $region69: #{dit_block.3} parent=63 // pred_check
              _
            $region70: #{dit_block.3} parent=63 // pred_check_branch
              %806 = sbr.rel (0) target = $region72
            $region71: #{dit_block.3} parent=63 // pred_region
              %s808 = ssub.s32 16, 1
              loop: start=0, step=1, limit=1
              $region73: #{dit_block.3} parent=71 // loop_pre_header
                _
              $region74: #{dit_block.3} parent=71 // loop_header
                %s810 = sphi 0, %s814
                %p811 = scmp.ge.s32.totalorder %s810, 1
                %s815 = sphi %s785, %s785
                %s816 = sphi %s800, %s800
              $region75: #{dit_block.3} parent=71 // loop_header_branch
                %813 = sbr.rel (%p811) target = $region79
              $region76: #{dit_block.3} parent=71 // loop_body
                %v817 = vld [vmem:[%s815] sm:%s808]
                %818 = vst [vmem:[%s816] sm:%s808] %v817
                %v819 = vld [vmem:[%s815 + $0x4] sm:%s808]
                %820 = vst [vmem:[%s816 + $0x8] sm:%s808] %v819
                %v821 = vld [vmem:[%s815 + $0x8] sm:%s808]
                %822 = vst [vmem:[%s816 + $0x10] sm:%s808] %v821
                %v823 = vld [vmem:[%s815 + $0xc] sm:%s808]
                %824 = vst [vmem:[%s816 + $0x18] sm:%s808] %v823
              $region77: #{dit_block.3} parent=71 // loop_footer
                %s814 = sadd.s32 1, %s810
              $region78: #{dit_block.3} parent=71 // loop_footer_branch
                %809 = sbr.rel target = $region74
              $region79: #{dit_block.3} parent=71 // loop_exit
                _
            $region72: #{dit_block.3} parent=63 // pred_fallthru
              _
          $region64: #{dit_block.3} parent=59 // pred_fallthru
            _
          %853 = vnop
        $region60: #{dit_block.3} parent=55 // pred_fallthru
          _
        // Predicated region
        $region98: #{dit_block.3} parent=55 // pred_check
          %p854 = pneg %p289
        $region99: #{dit_block.3} parent=55 // pred_check_branch
          %856 = sbr.rel (%p854) target = $region101
        $region100: #{dit_block.3} parent=55 // pred_region
          %s857 = smul.addr %s27, 8
          %s858 = sadd.s32 %s28, %s857
          %s859 = smul.addr %s858, 4
          %s860 = scalar_lea.vmem %s10, %s859
          // Predicated region
          $region102: #{dit_block.3} parent=100 // pred_check
            _
          $region103: #{dit_block.3} parent=100 // pred_check_branch
            %862 = sbr.rel (0) target = $region105
          $region104: #{dit_block.3} parent=100 // pred_region
            // Predicated region
            $region106: #{dit_block.3} parent=104 // pred_check
              _
            $region107: #{dit_block.3} parent=104 // pred_check_branch
              %864 = sbr.rel target = $region109
            $region108: #{dit_block.3} parent=104 // pred_region
              // Predicated region
              $region121: #{dit_block.3} parent=108 // pred_check
                _
              $region122: #{dit_block.3} parent=108 // pred_check_branch
                %886 = sbr.rel (0) target = $region124
              $region123: #{dit_block.3} parent=108 // pred_region
                loop: start=0, step=1, limit=1
                $region125: #{dit_block.3} parent=123 // loop_pre_header
                  _
                $region126: #{dit_block.3} parent=123 // loop_header
                  %s888 = sphi 0, %s892
                  %p889 = scmp.ge.s32.totalorder %s888, 1
                  %s893 = sphi %s789, %s789
                  %s894 = sphi %s860, %s860
                $region127: #{dit_block.3} parent=123 // loop_header_branch
                  %891 = sbr.rel (%p889) target = $region131
                $region128: #{dit_block.3} parent=123 // loop_body
                  _
                $region129: #{dit_block.3} parent=123 // loop_footer
                  %s892 = sadd.s32 1, %s888
                $region130: #{dit_block.3} parent=123 // loop_footer_branch
                  %887 = sbr.rel target = $region126
                $region131: #{dit_block.3} parent=123 // loop_exit
                  _
                %s896 = ssub.s32 16, 1
                loop: start=0, step=1, limit=1
                $region132: #{dit_block.3} parent=123 // loop_pre_header
                  _
                $region133: #{dit_block.3} parent=123 // loop_header
                  %s898 = sphi 0, %s902
                  %p899 = scmp.ge.s32.totalorder %s898, 1
                  %s903 = sphi %s789, %s789
                  %s904 = sphi %s860, %s860
                $region134: #{dit_block.3} parent=123 // loop_header_branch
                  %901 = sbr.rel (%p899) target = $region138
                $region135: #{dit_block.3} parent=123 // loop_body
                  %v905 = vld [vmem:[%s903] sm:%s896]
                  %906 = vst [vmem:[%s904] sm:%s896] %v905
                  %v907 = vld [vmem:[%s903 + $0x4] sm:%s896]
                  %908 = vst [vmem:[%s904 + $0x8] sm:%s896] %v907
                  %v909 = vld [vmem:[%s903 + $0x8] sm:%s896]
                  %910 = vst [vmem:[%s904 + $0x10] sm:%s896] %v909
                  %v911 = vld [vmem:[%s903 + $0xc] sm:%s896]
                  %912 = vst [vmem:[%s904 + $0x18] sm:%s896] %v911
                $region136: #{dit_block.3} parent=123 // loop_footer
                  %s902 = sadd.s32 1, %s898
                $region137: #{dit_block.3} parent=123 // loop_footer_branch
                  %897 = sbr.rel target = $region133
                $region138: #{dit_block.3} parent=123 // loop_exit
                  _
              $region124: #{dit_block.3} parent=108 // pred_fallthru
                _
            $region109: #{dit_block.3} parent=104 // pred_fallthru
              _
            // Predicated region
            $region110: #{dit_block.3} parent=104 // pred_check
              _
            $region111: #{dit_block.3} parent=104 // pred_check_branch
              %866 = sbr.rel (0) target = $region113
            $region112: #{dit_block.3} parent=104 // pred_region
              %s868 = ssub.s32 16, 1
              loop: start=0, step=1, limit=1
              $region114: #{dit_block.3} parent=112 // loop_pre_header
                _
              $region115: #{dit_block.3} parent=112 // loop_header
                %s870 = sphi 0, %s874
                %p871 = scmp.ge.s32.totalorder %s870, 1
                %s875 = sphi %s789, %s789
                %s876 = sphi %s860, %s860
              $region116: #{dit_block.3} parent=112 // loop_header_branch
                %873 = sbr.rel (%p871) target = $region120
              $region117: #{dit_block.3} parent=112 // loop_body
                %v877 = vld [vmem:[%s875] sm:%s868]
                %878 = vst [vmem:[%s876] sm:%s868] %v877
                %v879 = vld [vmem:[%s875 + $0x4] sm:%s868]
                %880 = vst [vmem:[%s876 + $0x8] sm:%s868] %v879
                %v881 = vld [vmem:[%s875 + $0x8] sm:%s868]
                %882 = vst [vmem:[%s876 + $0x10] sm:%s868] %v881
                %v883 = vld [vmem:[%s875 + $0xc] sm:%s868]
                %884 = vst [vmem:[%s876 + $0x18] sm:%s868] %v883
              $region118: #{dit_block.3} parent=112 // loop_footer
                %s874 = sadd.s32 1, %s870
              $region119: #{dit_block.3} parent=112 // loop_footer_branch
                %869 = sbr.rel target = $region115
              $region120: #{dit_block.3} parent=112 // loop_exit
                _
            $region113: #{dit_block.3} parent=104 // pred_fallthru
              _
          $region105: #{dit_block.3} parent=100 // pred_fallthru
            _
          %913 = vnop
        $region101: #{dit_block.3} parent=55 // pred_fallthru
          _
        // Predicated region
        $region139: #{dit_block.3} parent=55 // pred_check
          %p914 = pneg %p317
        $region140: #{dit_block.3} parent=55 // pred_check_branch
          %916 = sbr.rel (%p914) target = $region142
        $region141: #{dit_block.3} parent=55 // pred_region
          %s917 = smul.addr %s27, 8
          %s918 = sadd.s32 %s28, %s917
          %s919 = smul.addr %s918, 4
          %s920 = scalar_lea.vmem %s11, %s919
          // Predicated region
          $region143: #{dit_block.3} parent=141 // pred_check
            _
          $region144: #{dit_block.3} parent=141 // pred_check_branch
            %922 = sbr.rel (0) target = $region146
          $region145: #{dit_block.3} parent=141 // pred_region
            // Predicated region
            $region147: #{dit_block.3} parent=145 // pred_check
              _
            $region148: #{dit_block.3} parent=145 // pred_check_branch
              %924 = sbr.rel target = $region150
            $region149: #{dit_block.3} parent=145 // pred_region
              // Predicated region
              $region162: #{dit_block.3} parent=149 // pred_check
                _
              $region163: #{dit_block.3} parent=149 // pred_check_branch
                %946 = sbr.rel (0) target = $region165
              $region164: #{dit_block.3} parent=149 // pred_region
                loop: start=0, step=1, limit=1
                $region166: #{dit_block.3} parent=164 // loop_pre_header
                  _
                $region167: #{dit_block.3} parent=164 // loop_header
                  %s948 = sphi 0, %s952
                  %p949 = scmp.ge.s32.totalorder %s948, 1
                  %s953 = sphi %s793, %s793
                  %s954 = sphi %s920, %s920
                $region168: #{dit_block.3} parent=164 // loop_header_branch
                  %951 = sbr.rel (%p949) target = $region172
                $region169: #{dit_block.3} parent=164 // loop_body
                  _
                $region170: #{dit_block.3} parent=164 // loop_footer
                  %s952 = sadd.s32 1, %s948
                $region171: #{dit_block.3} parent=164 // loop_footer_branch
                  %947 = sbr.rel target = $region167
                $region172: #{dit_block.3} parent=164 // loop_exit
                  _
                %s956 = ssub.s32 16, 1
                loop: start=0, step=1, limit=1
                $region173: #{dit_block.3} parent=164 // loop_pre_header
                  _
                $region174: #{dit_block.3} parent=164 // loop_header
                  %s958 = sphi 0, %s962
                  %p959 = scmp.ge.s32.totalorder %s958, 1
                  %s963 = sphi %s793, %s793
                  %s964 = sphi %s920, %s920
                $region175: #{dit_block.3} parent=164 // loop_header_branch
                  %961 = sbr.rel (%p959) target = $region179
                $region176: #{dit_block.3} parent=164 // loop_body
                  %v965 = vld [vmem:[%s963] sm:%s956]
                  %966 = vst [vmem:[%s964] sm:%s956] %v965
                  %v967 = vld [vmem:[%s963 + $0x4] sm:%s956]
                  %968 = vst [vmem:[%s964 + $0x8] sm:%s956] %v967
                  %v969 = vld [vmem:[%s963 + $0x8] sm:%s956]
                  %970 = vst [vmem:[%s964 + $0x10] sm:%s956] %v969
                  %v971 = vld [vmem:[%s963 + $0xc] sm:%s956]
                  %972 = vst [vmem:[%s964 + $0x18] sm:%s956] %v971
                $region177: #{dit_block.3} parent=164 // loop_footer
                  %s962 = sadd.s32 1, %s958
                $region178: #{dit_block.3} parent=164 // loop_footer_branch
                  %957 = sbr.rel target = $region174
                $region179: #{dit_block.3} parent=164 // loop_exit
                  _
              $region165: #{dit_block.3} parent=149 // pred_fallthru
                _
            $region150: #{dit_block.3} parent=145 // pred_fallthru
              _
            // Predicated region
            $region151: #{dit_block.3} parent=145 // pred_check
              _
            $region152: #{dit_block.3} parent=145 // pred_check_branch
              %926 = sbr.rel (0) target = $region154
            $region153: #{dit_block.3} parent=145 // pred_region
              %s928 = ssub.s32 16, 1
              loop: start=0, step=1, limit=1
              $region155: #{dit_block.3} parent=153 // loop_pre_header
                _
              $region156: #{dit_block.3} parent=153 // loop_header
                %s930 = sphi 0, %s934
                %p931 = scmp.ge.s32.totalorder %s930, 1
                %s935 = sphi %s793, %s793
                %s936 = sphi %s920, %s920
              $region157: #{dit_block.3} parent=153 // loop_header_branch
                %933 = sbr.rel (%p931) target = $region161
              $region158: #{dit_block.3} parent=153 // loop_body
                %v937 = vld [vmem:[%s935] sm:%s928]
                %938 = vst [vmem:[%s936] sm:%s928] %v937
                %v939 = vld [vmem:[%s935 + $0x4] sm:%s928]
                %940 = vst [vmem:[%s936 + $0x8] sm:%s928] %v939
                %v941 = vld [vmem:[%s935 + $0x8] sm:%s928]
                %942 = vst [vmem:[%s936 + $0x10] sm:%s928] %v941
                %v943 = vld [vmem:[%s935 + $0xc] sm:%s928]
                %944 = vst [vmem:[%s936 + $0x18] sm:%s928] %v943
              $region159: #{dit_block.3} parent=153 // loop_footer
                %s934 = sadd.s32 1, %s930
              $region160: #{dit_block.3} parent=153 // loop_footer_branch
                %929 = sbr.rel target = $region156
              $region161: #{dit_block.3} parent=153 // loop_exit
                _
            $region154: #{dit_block.3} parent=145 // pred_fallthru
              _
          $region146: #{dit_block.3} parent=141 // pred_fallthru
            _
          %973 = vnop
        $region142: #{dit_block.3} parent=55 // pred_fallthru
          _
      $region56: #{dit_block.3} parent=5 // pred_fallthru
        _
      %p974 = scmp.le.s32.totalorder 2, %s18
      // Predicated region
      $region180: #{dit_block.3} parent=5 // pred_check
        %p975 = pneg %p974
      $region181: #{dit_block.3} parent=5 // pred_check_branch
        %977 = sbr.rel (%p975) target = $region183
      $region182: #{dit_block.3} parent=5 // pred_region
        %s978 = ssub.s32 %s18, 2
        // Predicated region
        $region184: #{dit_block.3} parent=182 // pred_check
          %p979 = pneg %p267
        $region185: #{dit_block.3} parent=182 // pred_check_branch
          %981 = sbr.rel (%p979) target = $region187
        $region186: #{dit_block.3} parent=182 // pred_region
          %s982 = sand.u32 %s252, 1
          %s983 = sand.u32 %s252, 1
          %s984 = smul.addr %s983, 16
          %s985 = scalar_lea.vmem [#allocation2], %s984
        $region187: #{dit_block.3} parent=182 // pred_fallthru
          _
        // Predicated region
        $region188: #{dit_block.3} parent=182 // pred_check
          %p986 = pneg %p295
        $region189: #{dit_block.3} parent=182 // pred_check_branch
          %988 = sbr.rel (%p986) target = $region191
        $region190: #{dit_block.3} parent=182 // pred_region
          %s989 = sand.u32 %s280, 1
          %s990 = sand.u32 %s280, 1
          %s991 = smul.addr %s990, 16
          %s992 = scalar_lea.vmem [#allocation3], %s991
        $region191: #{dit_block.3} parent=182 // pred_fallthru
          _
        // Predicated region
        $region192: #{dit_block.3} parent=182 // pred_check
          %p993 = pneg %p323
        $region193: #{dit_block.3} parent=182 // pred_check_branch
          %995 = sbr.rel (%p993) target = $region195
        $region194: #{dit_block.3} parent=182 // pred_region
          %s996 = sand.u32 %s308, 1
          %s997 = sand.u32 %s308, 1
          %s998 = smul.addr %s997, 16
          %s999 = scalar_lea.vmem [#allocation4], %s998
        $region195: #{dit_block.3} parent=182 // pred_fallthru
          _
      $region183: #{dit_block.3} parent=5 // pred_fallthru
        _
    $region6: #{dit_block.3} parent=1 // loop_footer
      %s22 = sadd.s32 1, %s18
    $region7: #{dit_block.3} parent=1 // loop_footer_branch
      %17 = sbr.rel target = $region3
    $region8: #{dit_block.3} parent=1 // loop_exit
      _

// kernel: dit_block.4
$region0: #{dit_block.4}
  #allocation0 [shape = 'u32[]', space=smem, size = 0x4, offset = 0x4, fixed_abs, tag = 'smem constant byte address 0x4 - core index']
  #allocation1 [shape = 'u32[72,128]{1,0:T(1,128)}', space=vmem, size = 0x9000, scoped, tag = 'internal scratch']
  #allocation2 [shape = 'f32[4,8,1]{2,1,0:T(8,128)}', space=vmem, size = 0x4000, scoped, tag = 'scratch operand']
  #allocation3 [shape = 'f32[4,8,1]{2,1,0:T(8,128)}', space=vmem, size = 0x4000, scoped, tag = 'scratch operand']
  #allocation4 [shape = 'f32[4,8,16]{2,1,0:T(8,128)}', space=vmem, size = 0x4000, scoped, tag = 'scratch operand']
  %s0 = inlined_call_operand.vmem [shape: bf16[2,4,16,16], index: 0, kind: input, shape index: {}]
  %s1 = inlined_call_operand.vmem [shape: bf16[2,4,16,16], index: 1, kind: input, shape index: {}]
  %s2 = inlined_call_operand.vmem [shape: bf16[2,4,16,16], index: 2, kind: input, shape index: {}]
  %s3 = inlined_call_operand.vmem [shape: f32[2,16,64], index: 3, kind: input, shape index: {}]
  %s4 = inlined_call_operand.vmem [shape: f32[2,1,64], index: 4, kind: input, shape index: {}]
  %s5 = inlined_call_operand.vmem [shape: bf16[64,64], index: 5, kind: input, shape index: {}]
  %s6 = inlined_call_operand.vmem [shape: f32[1,64], index: 6, kind: input, shape index: {}]
  %s7 = inlined_call_operand.vmem [shape: f32[2,16,64], index: 7, kind: output, shape index: {}]
  %s8 = sld [smem:[#allocation0]]
  $region192: #{dit_block.4} parent=0
    _
  %s10 = ssub.s32 1, %s8
  %s11 = scalar_select 0, %s10, %s8
  $region1: #{dit_block.4} parent=0
    #allocation5 [shape = 'u8[16384]{0}', space=vmem, size = 0x4000, scoped, tag = 'input window, operand 0']
    #allocation6 [shape = 'u8[16384]{0}', space=vmem, size = 0x4000, scoped, tag = 'input window, operand 1']
    #allocation7 [shape = 'u8[16384]{0}', space=vmem, size = 0x4000, scoped, tag = 'input window, operand 2']
    loop: start=0, step=1, limit=10
    $region2: #{dit_block.4} parent=1 // loop_pre_header
      _
    $region3: #{dit_block.4} parent=1 // loop_header
      %s13 = sphi 0, %s17
      %p14 = scmp.ge.s32.totalorder %s13, 10
      %s20 = sphi 0, %s39
      %s21 = sphi 0, %s35
      %s22 = sphi 0, %s31
      %s23 = sphi 0, %s20
      %s24 = sphi 0, %s21
      %s25 = sphi 0, %s22
      %s26 = sphi 0, %s23
      %s27 = sphi 0, %s24
      %s28 = sphi 0, %s25
      %s44 = sphi 0, %s46
      %s47 = sphi 0, %s44
      %s48 = sphi 0, %s47
      %s64 = sphi 0, %s48
      %s72 = sphi 0, %s74
      %s75 = sphi 0, %s72
      %s76 = sphi 0, %s75
      %s92 = sphi 0, %s76
      %s100 = sphi 0, %s102
      %s103 = sphi 0, %s100
      %s104 = sphi 0, %s103
      %s120 = sphi 0, %s104
      %s128 = sphi 0, %s130
      %s131 = sphi 0, %s128
      %s132 = sphi 0, %s131
      %s148 = sphi 0, %s132
      %s154 = sphi 0, %s156
      %s157 = sphi 0, %s154
      %s158 = sphi 0, %s157
      %s174 = sphi 0, %s158
      %s178 = sphi 0, %s178
      %s180 = sphi 0, %s178
      %s181 = sphi 0, %s180
      %s195 = sphi 0, %s181
      %s199 = sphi 0, %s199
      %s201 = sphi 0, %s199
      %s202 = sphi 0, %s201
      %s216 = sphi 0, %s202
      %s224 = sphi 0, %s226
      %s227 = sphi 0, %s224
      %s228 = sphi 0, %s227
      %s244 = sphi 0, %s228
    $region4: #{dit_block.4} parent=1 // loop_header_branch
      %16 = sbr.rel (%p14) target = $region8
    $region5: #{dit_block.4} parent=1 // loop_body
      %s18 = ssub.s32 %s13, 1
      %s19 = ssub.s32 %s13, 2
      %s29 = sadd.s32 1, %s22
      %p30 = scmp.ge.s32.totalorder %s29, 2
      %s31 = scalar_select %p30, 0, %s29
      %s32 = sadd.s32 1, %s21
      %s33 = scalar_select %p30, %s32, %s21
      %p34 = scmp.ge.s32.totalorder %s33, 2
      %s35 = scalar_select %p34, 0, %s33
      %s36 = sadd.s32 1, %s20
      %s37 = scalar_select %p34, %s36, %s20
      %p38 = scmp.ge.s32.totalorder %s37, 2
      %s39 = scalar_select %p38, 0, %s37
      %s40 = ssub.s32 %s20, %s39
      %s41 = ssub.s32 %s21, %s35
      %s42 = sor.u32 %s40, %s41
      %p43 = scmp.eq.s32.totalorder %s42, 0
      %s45 = sadd.s32 %s44, 1
      %s46 = scalar_select %p43, %s44, %s45
      %p49 = pneg %p43
      %p50 = scmp.eq.s32.totalorder %s13, 7
      %p51 = por %p49, %p50
      %p52 = scmp.ne.s32.totalorder %s44, %s47
      %p53 = scmp.eq.s32.totalorder %s13, 0
      %p54 = por %p52, %p53
      %p55 = scmp.ne.s32.totalorder %s44, %s47
      %p56 = scmp.eq.s32.totalorder %s18, 7
      %p57 = por %p55, %p56
      %p58 = scmp.ne.s32.totalorder %s47, %s48
      %p59 = scmp.eq.s32.totalorder %s18, 0
      %p60 = por %p58, %p59
      %p61 = scmp.ne.s32.totalorder %s47, %s48
      %p62 = scmp.eq.s32.totalorder %s19, 7
      %p63 = por %p61, %p62
      %p65 = scmp.ne.s32.totalorder %s48, %s64
      %p66 = scmp.eq.s32.totalorder %s19, 0
      %p67 = por %p65, %p66
      %s68 = ssub.s32 %s20, %s39
      %s69 = ssub.s32 %s22, %s31
      %s70 = sor.u32 %s68, %s69
      %p71 = scmp.eq.s32.totalorder %s70, 0
      %s73 = sadd.s32 %s72, 1
      %s74 = scalar_select %p71, %s72, %s73
      %p77 = pneg %p71
      %p78 = scmp.eq.s32.totalorder %s13, 7
      %p79 = por %p77, %p78
      %p80 = scmp.ne.s32.totalorder %s72, %s75
      %p81 = scmp.eq.s32.totalorder %s13, 0
      %p82 = por %p80, %p81
      %p83 = scmp.ne.s32.totalorder %s72, %s75
      %p84 = scmp.eq.s32.totalorder %s18, 7
      %p85 = por %p83, %p84
      %p86 = scmp.ne.s32.totalorder %s75, %s76
      %p87 = scmp.eq.s32.totalorder %s18, 0
      %p88 = por %p86, %p87
      %p89 = scmp.ne.s32.totalorder %s75, %s76
      %p90 = scmp.eq.s32.totalorder %s19, 7
      %p91 = por %p89, %p90
      %p93 = scmp.ne.s32.totalorder %s76, %s92
      %p94 = scmp.eq.s32.totalorder %s19, 0
      %p95 = por %p93, %p94
      %s96 = ssub.s32 %s20, %s39
      %s97 = ssub.s32 %s22, %s31
      %s98 = sor.u32 %s96, %s97
      %p99 = scmp.eq.s32.totalorder %s98, 0
      %s101 = sadd.s32 %s100, 1
      %s102 = scalar_select %p99, %s100, %s101
      %p105 = pneg %p99
      %p106 = scmp.eq.s32.totalorder %s13, 7
      %p107 = por %p105, %p106
      %p108 = scmp.ne.s32.totalorder %s100, %s103
      %p109 = scmp.eq.s32.totalorder %s13, 0
      %p110 = por %p108, %p109
      %p111 = scmp.ne.s32.totalorder %s100, %s103
      %p112 = scmp.eq.s32.totalorder %s18, 7
      %p113 = por %p111, %p112
      %p114 = scmp.ne.s32.totalorder %s103, %s104
      %p115 = scmp.eq.s32.totalorder %s18, 0
      %p116 = por %p114, %p115
      %p117 = scmp.ne.s32.totalorder %s103, %s104
      %p118 = scmp.eq.s32.totalorder %s19, 7
      %p119 = por %p117, %p118
      %p121 = scmp.ne.s32.totalorder %s104, %s120
      %p122 = scmp.eq.s32.totalorder %s19, 0
      %p123 = por %p121, %p122
      %s124 = ssub.s32 %s20, %s39
      %s125 = ssub.s32 %s21, %s35
      %s126 = sor.u32 %s124, %s125
      %p127 = scmp.eq.s32.totalorder %s126, 0
      %s129 = sadd.s32 %s128, 1
      %s130 = scalar_select %p127, %s128, %s129
      %p133 = pneg %p127
      %p134 = scmp.eq.s32.totalorder %s13, 7
      %p135 = por %p133, %p134
      %p136 = scmp.ne.s32.totalorder %s128, %s131
      %p137 = scmp.eq.s32.totalorder %s13, 0
      %p138 = por %p136, %p137
      %p139 = scmp.ne.s32.totalorder %s128, %s131
      %p140 = scmp.eq.s32.totalorder %s18, 7
      %p141 = por %p139, %p140
      %p142 = scmp.ne.s32.totalorder %s131, %s132
      %p143 = scmp.eq.s32.totalorder %s18, 0
      %p144 = por %p142, %p143
      %p145 = scmp.ne.s32.totalorder %s131, %s132
      %p146 = scmp.eq.s32.totalorder %s19, 7
      %p147 = por %p145, %p146
      %p149 = scmp.ne.s32.totalorder %s132, %s148
      %p150 = scmp.eq.s32.totalorder %s19, 0
      %p151 = por %p149, %p150
      %s152 = ssub.s32 %s20, %s39
      %p153 = scmp.eq.s32.totalorder %s152, 0
      %s155 = sadd.s32 %s154, 1
      %s156 = scalar_select %p153, %s154, %s155
      %p159 = pneg %p153
      %p160 = scmp.eq.s32.totalorder %s13, 7
      %p161 = por %p159, %p160
      %p162 = scmp.ne.s32.totalorder %s154, %s157
      %p163 = scmp.eq.s32.totalorder %s13, 0
      %p164 = por %p162, %p163
      %p165 = scmp.ne.s32.totalorder %s154, %s157
      %p166 = scmp.eq.s32.totalorder %s18, 7
      %p167 = por %p165, %p166
      %p168 = scmp.ne.s32.totalorder %s157, %s158
      %p169 = scmp.eq.s32.totalorder %s18, 0
      %p170 = por %p168, %p169
      %p171 = scmp.ne.s32.totalorder %s157, %s158
      %p172 = scmp.eq.s32.totalorder %s19, 7
      %p173 = por %p171, %p172
      %p175 = scmp.ne.s32.totalorder %s158, %s174
      %p176 = scmp.eq.s32.totalorder %s19, 0
      %p177 = por %p175, %p176
      %s179 = sadd.s32 %s178, 1
      %p182 = scmp.eq.s32.totalorder %s13, 7
      %p183 = scmp.ne.s32.totalorder %s178, %s180
      %p184 = scmp.eq.s32.totalorder %s13, 0
      %p185 = por %p183, %p184
      %p186 = scmp.ne.s32.totalorder %s178, %s180
      %p187 = scmp.eq.s32.totalorder %s18, 7
      %p188 = por %p186, %p187
      %p189 = scmp.ne.s32.totalorder %s180, %s181
      %p190 = scmp.eq.s32.totalorder %s18, 0
      %p191 = por %p189, %p190
      %p192 = scmp.ne.s32.totalorder %s180, %s181
      %p193 = scmp.eq.s32.totalorder %s19, 7
      %p194 = por %p192, %p193
      %p196 = scmp.ne.s32.totalorder %s181, %s195
      %p197 = scmp.eq.s32.totalorder %s19, 0
      %p198 = por %p196, %p197
      %s200 = sadd.s32 %s199, 1
      %p203 = scmp.eq.s32.totalorder %s13, 7
      %p204 = scmp.ne.s32.totalorder %s199, %s201
      %p205 = scmp.eq.s32.totalorder %s13, 0
      %p206 = por %p204, %p205
      %p207 = scmp.ne.s32.totalorder %s199, %s201
      %p208 = scmp.eq.s32.totalorder %s18, 7
      %p209 = por %p207, %p208
      %p210 = scmp.ne.s32.totalorder %s201, %s202
      %p211 = scmp.eq.s32.totalorder %s18, 0
      %p212 = por %p210, %p211
      %p213 = scmp.ne.s32.totalorder %s201, %s202
      %p214 = scmp.eq.s32.totalorder %s19, 7
      %p215 = por %p213, %p214
      %p217 = scmp.ne.s32.totalorder %s202, %s216
      %p218 = scmp.eq.s32.totalorder %s19, 0
      %p219 = por %p217, %p218
      %s220 = ssub.s32 %s20, %s39
      %s221 = ssub.s32 %s21, %s35
      %s222 = sor.u32 %s220, %s221
      %p223 = scmp.eq.s32.totalorder %s222, 0
      %s225 = sadd.s32 %s224, 1
      %s226 = scalar_select %p223, %s224, %s225
      %p229 = pneg %p223
      %p230 = scmp.eq.s32.totalorder %s13, 7
      %p231 = por %p229, %p230
      %p232 = scmp.ne.s32.totalorder %s224, %s227
      %p233 = scmp.eq.s32.totalorder %s13, 0
      %p234 = por %p232, %p233
      %p235 = scmp.ne.s32.totalorder %s224, %s227
      %p236 = scmp.eq.s32.totalorder %s18, 7
      %p237 = por %p235, %p236
      %p238 = scmp.ne.s32.totalorder %s227, %s228
      %p239 = scmp.eq.s32.totalorder %s18, 0
      %p240 = por %p238, %p239
      %p241 = scmp.ne.s32.totalorder %s227, %s228
      %p242 = scmp.eq.s32.totalorder %s19, 7
      %p243 = por %p241, %p242
      %p245 = scmp.ne.s32.totalorder %s228, %s244
      %p246 = scmp.eq.s32.totalorder %s19, 0
      %p247 = por %p245, %p246
      %p248 = scmp.le.s32.totalorder 1, %s13
      %p249 = scmp.lt.s32.totalorder %s13, 9
      %p250 = pnand %p248, %p249
      %p251 = pneg %p250
      // Predicated region
      $region9: #{dit_block.4} parent=5 // pred_check
        _
      $region10: #{dit_block.4} parent=5 // pred_check_branch
        %253 = sbr.rel (%p250) target = $region12
      $region11: #{dit_block.4} parent=5 // pred_region
        %s254 = ssub.s32 %s13, 1
        // Predicated region
        $region13: #{dit_block.4} parent=11 // pred_check
          %p255 = pneg %p191
        $region14: #{dit_block.4} parent=11 // pred_check_branch
          %257 = sbr.rel (%p255) target = $region16
        $region15: #{dit_block.4} parent=11 // pred_region
          _
        $region16: #{dit_block.4} parent=11 // pred_fallthru
          _
        // Predicated region
        $region17: #{dit_block.4} parent=11 // pred_check
          %p258 = pneg %p212
        $region18: #{dit_block.4} parent=11 // pred_check_branch
          %260 = sbr.rel (%p258) target = $region20
        $region19: #{dit_block.4} parent=11 // pred_region
          _
        $region20: #{dit_block.4} parent=11 // pred_fallthru
          _
      $region12: #{dit_block.4} parent=5 // pred_fallthru
        _
      %p261 = scmp.lt.s32.totalorder %s13, 8
      // Predicated region
      $region21: #{dit_block.4} parent=5 // pred_check
        %p262 = pneg %p261
      $region22: #{dit_block.4} parent=5 // pred_check_branch
        %264 = sbr.rel (%p262) target = $region24
      $region23: #{dit_block.4} parent=5 // pred_region
        // Predicated region
        $region25: #{dit_block.4} parent=23 // pred_check
          %p265 = pneg %p54
        $region26: #{dit_block.4} parent=23 // pred_check_branch
          %267 = sbr.rel (%p265) target = $region28
        $region27: #{dit_block.4} parent=23 // pred_region
          %s268 = sand.u32 %s44, 1
          %s269 = sand.u32 %s44, 1
          %s270 = smul.addr %s269, 16
          %s271 = scalar_lea.vmem [#allocation5], %s270
          %s272 = smul.addr %s20, 8
          %s273 = sadd.s32 %s21, %s272
          %s274 = smul.addr %s273, 4
          %s275 = scalar_lea.vmem %s0, %s274
          // Predicated region
          $region29: #{dit_block.4} parent=27 // pred_check
            _
          $region30: #{dit_block.4} parent=27 // pred_check_branch
            %277 = sbr.rel (0) target = $region32
          $region31: #{dit_block.4} parent=27 // pred_region
            // Predicated region
            $region33: #{dit_block.4} parent=31 // pred_check
              _
            $region34: #{dit_block.4} parent=31 // pred_check_branch
              %279 = sbr.rel target = $region36
            $region35: #{dit_block.4} parent=31 // pred_region
              // Predicated region
              $region48: #{dit_block.4} parent=35 // pred_check
                _
              $region49: #{dit_block.4} parent=35 // pred_check_branch
                %301 = sbr.rel (0) target = $region51
              $region50: #{dit_block.4} parent=35 // pred_region
                loop: start=0, step=1, limit=1
                $region52: #{dit_block.4} parent=50 // loop_pre_header
                  _
                $region53: #{dit_block.4} parent=50 // loop_header
                  %s303 = sphi 0, %s307
                  %p304 = scmp.ge.s32.totalorder %s303, 1
                  %s308 = sphi %s275, %s275
                  %s309 = sphi %s271, %s271
                $region54: #{dit_block.4} parent=50 // loop_header_branch
                  %306 = sbr.rel (%p304) target = $region58
                $region55: #{dit_block.4} parent=50 // loop_body
                  _
                $region56: #{dit_block.4} parent=50 // loop_footer
                  %s307 = sadd.s32 1, %s303
                $region57: #{dit_block.4} parent=50 // loop_footer_branch
                  %302 = sbr.rel target = $region53
                $region58: #{dit_block.4} parent=50 // loop_exit
                  _
                %s311 = ssub.s32 16, 1
                loop: start=0, step=1, limit=1
                $region59: #{dit_block.4} parent=50 // loop_pre_header
                  _
                $region60: #{dit_block.4} parent=50 // loop_header
                  %s313 = sphi 0, %s317
                  %p314 = scmp.ge.s32.totalorder %s313, 1
                  %s318 = sphi %s275, %s275
                  %s319 = sphi %s271, %s271
                $region61: #{dit_block.4} parent=50 // loop_header_branch
                  %316 = sbr.rel (%p314) target = $region65
                $region62: #{dit_block.4} parent=50 // loop_body
                  %v320 = vld [vmem:[%s318] sm:%s311]
                  %321 = vst [vmem:[%s319] sm:%s311] %v320
                  %v322 = vld [vmem:[%s318 + $0x8] sm:%s311]
                  %323 = vst [vmem:[%s319 + $0x4] sm:%s311] %v322
                  %v324 = vld [vmem:[%s318 + $0x10] sm:%s311]
                  %325 = vst [vmem:[%s319 + $0x8] sm:%s311] %v324
                  %v326 = vld [vmem:[%s318 + $0x18] sm:%s311]
                  %327 = vst [vmem:[%s319 + $0xc] sm:%s311] %v326
                $region63: #{dit_block.4} parent=50 // loop_footer
                  %s317 = sadd.s32 1, %s313
                $region64: #{dit_block.4} parent=50 // loop_footer_branch
                  %312 = sbr.rel target = $region60
                $region65: #{dit_block.4} parent=50 // loop_exit
                  _
              $region51: #{dit_block.4} parent=35 // pred_fallthru
                _
            $region36: #{dit_block.4} parent=31 // pred_fallthru
              _
            // Predicated region
            $region37: #{dit_block.4} parent=31 // pred_check
              _
            $region38: #{dit_block.4} parent=31 // pred_check_branch
              %281 = sbr.rel (0) target = $region40
            $region39: #{dit_block.4} parent=31 // pred_region
              %s283 = ssub.s32 16, 1
              loop: start=0, step=1, limit=1
              $region41: #{dit_block.4} parent=39 // loop_pre_header
                _
              $region42: #{dit_block.4} parent=39 // loop_header
                %s285 = sphi 0, %s289
                %p286 = scmp.ge.s32.totalorder %s285, 1
                %s290 = sphi %s275, %s275
                %s291 = sphi %s271, %s271
              $region43: #{dit_block.4} parent=39 // loop_header_branch
                %288 = sbr.rel (%p286) target = $region47
              $region44: #{dit_block.4} parent=39 // loop_body
                %v292 = vld [vmem:[%s290] sm:%s283]
                %293 = vst [vmem:[%s291] sm:%s283] %v292
                %v294 = vld [vmem:[%s290 + $0x8] sm:%s283]
                %295 = vst [vmem:[%s291 + $0x4] sm:%s283] %v294
                %v296 = vld [vmem:[%s290 + $0x10] sm:%s283]
                %297 = vst [vmem:[%s291 + $0x8] sm:%s283] %v296
                %v298 = vld [vmem:[%s290 + $0x18] sm:%s283]
                %299 = vst [vmem:[%s291 + $0xc] sm:%s283] %v298
              $region45: #{dit_block.4} parent=39 // loop_footer
                %s289 = sadd.s32 1, %s285
              $region46: #{dit_block.4} parent=39 // loop_footer_branch
                %284 = sbr.rel target = $region42
              $region47: #{dit_block.4} parent=39 // loop_exit
                _
            $region40: #{dit_block.4} parent=31 // pred_fallthru
              _
          $region32: #{dit_block.4} parent=27 // pred_fallthru
            _
          %328 = vnop
        $region28: #{dit_block.4} parent=23 // pred_fallthru
          _
        // Predicated region
        $region66: #{dit_block.4} parent=23 // pred_check
          %p329 = pneg %p82
        $region67: #{dit_block.4} parent=23 // pred_check_branch
          %331 = sbr.rel (%p329) target = $region69
        $region68: #{dit_block.4} parent=23 // pred_region
          %s332 = sand.u32 %s72, 1
          %s333 = sand.u32 %s72, 1
          %s334 = smul.addr %s333, 16
          %s335 = scalar_lea.vmem [#allocation6], %s334
          %s336 = smul.addr %s20, 8
          %s337 = sadd.s32 %s22, %s336
          %s338 = smul.addr %s337, 4
          %s339 = scalar_lea.vmem %s1, %s338
          // Predicated region
          $region70: #{dit_block.4} parent=68 // pred_check
            _
          $region71: #{dit_block.4} parent=68 // pred_check_branch
            %341 = sbr.rel (0) target = $region73
          $region72: #{dit_block.4} parent=68 // pred_region
            // Predicated region
            $region74: #{dit_block.4} parent=72 // pred_check
              _
            $region75: #{dit_block.4} parent=72 // pred_check_branch
              %343 = sbr.rel target = $region77
            $region76: #{dit_block.4} parent=72 // pred_region
              // Predicated region
              $region89: #{dit_block.4} parent=76 // pred_check
                _
              $region90: #{dit_block.4} parent=76 // pred_check_branch
                %365 = sbr.rel (0) target = $region92
              $region91: #{dit_block.4} parent=76 // pred_region
                loop: start=0, step=1, limit=1
                $region93: #{dit_block.4} parent=91 // loop_pre_header
                  _
                $region94: #{dit_block.4} parent=91 // loop_header
                  %s367 = sphi 0, %s371
                  %p368 = scmp.ge.s32.totalorder %s367, 1
                  %s372 = sphi %s339, %s339
                  %s373 = sphi %s335, %s335
                $region95: #{dit_block.4} parent=91 // loop_header_branch
                  %370 = sbr.rel (%p368) target = $region99
                $region96: #{dit_block.4} parent=91 // loop_body
                  _
                $region97: #{dit_block.4} parent=91 // loop_footer
                  %s371 = sadd.s32 1, %s367
                $region98: #{dit_block.4} parent=91 // loop_footer_branch
                  %366 = sbr.rel target = $region94
                $region99: #{dit_block.4} parent=91 // loop_exit
                  _
                %s375 = ssub.s32 16, 1
                loop: start=0, step=1, limit=1
                $region100: #{dit_block.4} parent=91 // loop_pre_header
                  _
                $region101: #{dit_block.4} parent=91 // loop_header
                  %s377 = sphi 0, %s381
                  %p378 = scmp.ge.s32.totalorder %s377, 1
                  %s382 = sphi %s339, %s339
                  %s383 = sphi %s335, %s335
                $region102: #{dit_block.4} parent=91 // loop_header_branch
                  %380 = sbr.rel (%p378) target = $region106
                $region103: #{dit_block.4} parent=91 // loop_body
                  %v384 = vld [vmem:[%s382] sm:%s375]
                  %385 = vst [vmem:[%s383] sm:%s375] %v384
                  %v386 = vld [vmem:[%s382 + $0x8] sm:%s375]
                  %387 = vst [vmem:[%s383 + $0x4] sm:%s375] %v386
                  %v388 = vld [vmem:[%s382 + $0x10] sm:%s375]
                  %389 = vst [vmem:[%s383 + $0x8] sm:%s375] %v388
                  %v390 = vld [vmem:[%s382 + $0x18] sm:%s375]
                  %391 = vst [vmem:[%s383 + $0xc] sm:%s375] %v390
                $region104: #{dit_block.4} parent=91 // loop_footer
                  %s381 = sadd.s32 1, %s377
                $region105: #{dit_block.4} parent=91 // loop_footer_branch
                  %376 = sbr.rel target = $region101
                $region106: #{dit_block.4} parent=91 // loop_exit
                  _
              $region92: #{dit_block.4} parent=76 // pred_fallthru
                _
            $region77: #{dit_block.4} parent=72 // pred_fallthru
              _
            // Predicated region
            $region78: #{dit_block.4} parent=72 // pred_check
              _
            $region79: #{dit_block.4} parent=72 // pred_check_branch
              %345 = sbr.rel (0) target = $region81
            $region80: #{dit_block.4} parent=72 // pred_region
              %s347 = ssub.s32 16, 1
              loop: start=0, step=1, limit=1
              $region82: #{dit_block.4} parent=80 // loop_pre_header
                _
              $region83: #{dit_block.4} parent=80 // loop_header
                %s349 = sphi 0, %s353
                %p350 = scmp.ge.s32.totalorder %s349, 1
                %s354 = sphi %s339, %s339
                %s355 = sphi %s335, %s335
              $region84: #{dit_block.4} parent=80 // loop_header_branch
                %352 = sbr.rel (%p350) target = $region88
              $region85: #{dit_block.4} parent=80 // loop_body
                %v356 = vld [vmem:[%s354] sm:%s347]
                %357 = vst [vmem:[%s355] sm:%s347] %v356
                %v358 = vld [vmem:[%s354 + $0x8] sm:%s347]
                %359 = vst [vmem:[%s355 + $0x4] sm:%s347] %v358
                %v360 = vld [vmem:[%s354 + $0x10] sm:%s347]
                %361 = vst [vmem:[%s355 + $0x8] sm:%s347] %v360
                %v362 = vld [vmem:[%s354 + $0x18] sm:%s347]
                %363 = vst [vmem:[%s355 + $0xc] sm:%s347] %v362
              $region86: #{dit_block.4} parent=80 // loop_footer
                %s353 = sadd.s32 1, %s349
              $region87: #{dit_block.4} parent=80 // loop_footer_branch
                %348 = sbr.rel target = $region83
              $region88: #{dit_block.4} parent=80 // loop_exit
                _
            $region81: #{dit_block.4} parent=72 // pred_fallthru
              _
          $region73: #{dit_block.4} parent=68 // pred_fallthru
            _
          %392 = vnop
        $region69: #{dit_block.4} parent=23 // pred_fallthru
          _
        // Predicated region
        $region107: #{dit_block.4} parent=23 // pred_check
          %p393 = pneg %p110
        $region108: #{dit_block.4} parent=23 // pred_check_branch
          %395 = sbr.rel (%p393) target = $region110
        $region109: #{dit_block.4} parent=23 // pred_region
          %s396 = sand.u32 %s100, 1
          %s397 = sand.u32 %s100, 1
          %s398 = smul.addr %s397, 16
          %s399 = scalar_lea.vmem [#allocation7], %s398
          %s400 = smul.addr %s20, 8
          %s401 = sadd.s32 %s22, %s400
          %s402 = smul.addr %s401, 4
          %s403 = scalar_lea.vmem %s2, %s402
          // Predicated region
          $region111: #{dit_block.4} parent=109 // pred_check
            _
          $region112: #{dit_block.4} parent=109 // pred_check_branch
            %405 = sbr.rel (0) target = $region114
          $region113: #{dit_block.4} parent=109 // pred_region
            // Predicated region
            $region115: #{dit_block.4} parent=113 // pred_check
              _
            $region116: #{dit_block.4} parent=113 // pred_check_branch
              %407 = sbr.rel target = $region118
            $region117: #{dit_block.4} parent=113 // pred_region
              // Predicated region
              $region130: #{dit_block.4} parent=117 // pred_check
                _
              $region131: #{dit_block.4} parent=117 // pred_check_branch
                %429 = sbr.rel (0) target = $region133
              $region132: #{dit_block.4} parent=117 // pred_region
                loop: start=0, step=1, limit=1
                $region134: #{dit_block.4} parent=132 // loop_pre_header
                  _
                $region135: #{dit_block.4} parent=132 // loop_header
                  %s431 = sphi 0, %s435
                  %p432 = scmp.ge.s32.totalorder %s431, 1
                  %s436 = sphi %s403, %s403
                  %s437 = sphi %s399, %s399
                $region136: #{dit_block.4} parent=132 // loop_header_branch
                  %434 = sbr.rel (%p432) target = $region140
                $region137: #{dit_block.4} parent=132 // loop_body
                  _
                $region138: #{dit_block.4} parent=132 // loop_footer
                  %s435 = sadd.s32 1, %s431
                $region139: #{dit_block.4} parent=132 // loop_footer_branch
                  %430 = sbr.rel target = $region135
                $region140: #{dit_block.4} parent=132 // loop_exit
                  _
                %s439 = ssub.s32 16, 1
                loop: start=0, step=1, limit=1
                $region141: #{dit_block.4} parent=132 // loop_pre_header
                  _
                $region142: #{dit_block.4} parent=132 // loop_header
                  %s441 = sphi 0, %s445
                  %p442 = scmp.ge.s32.totalorder %s441, 1
                  %s446 = sphi %s403, %s403
                  %s447 = sphi %s399, %s399
                $region143: #{dit_block.4} parent=132 // loop_header_branch
                  %444 = sbr.rel (%p442) target = $region147
                $region144: #{dit_block.4} parent=132 // loop_body
                  %v448 = vld [vmem:[%s446] sm:%s439]
                  %449 = vst [vmem:[%s447] sm:%s439] %v448
                  %v450 = vld [vmem:[%s446 + $0x8] sm:%s439]
                  %451 = vst [vmem:[%s447 + $0x4] sm:%s439] %v450
                  %v452 = vld [vmem:[%s446 + $0x10] sm:%s439]
                  %453 = vst [vmem:[%s447 + $0x8] sm:%s439] %v452
                  %v454 = vld [vmem:[%s446 + $0x18] sm:%s439]
                  %455 = vst [vmem:[%s447 + $0xc] sm:%s439] %v454
                $region145: #{dit_block.4} parent=132 // loop_footer
                  %s445 = sadd.s32 1, %s441
                $region146: #{dit_block.4} parent=132 // loop_footer_branch
                  %440 = sbr.rel target = $region142
                $region147: #{dit_block.4} parent=132 // loop_exit
                  _
              $region133: #{dit_block.4} parent=117 // pred_fallthru
                _
            $region118: #{dit_block.4} parent=113 // pred_fallthru
              _
            // Predicated region
            $region119: #{dit_block.4} parent=113 // pred_check
              _
            $region120: #{dit_block.4} parent=113 // pred_check_branch
              %409 = sbr.rel (0) target = $region122
            $region121: #{dit_block.4} parent=113 // pred_region
              %s411 = ssub.s32 16, 1
              loop: start=0, step=1, limit=1
              $region123: #{dit_block.4} parent=121 // loop_pre_header
                _
              $region124: #{dit_block.4} parent=121 // loop_header
                %s413 = sphi 0, %s417
                %p414 = scmp.ge.s32.totalorder %s413, 1
                %s418 = sphi %s403, %s403
                %s419 = sphi %s399, %s399
              $region125: #{dit_block.4} parent=121 // loop_header_branch
                %416 = sbr.rel (%p414) target = $region129
              $region126: #{dit_block.4} parent=121 // loop_body
                %v420 = vld [vmem:[%s418] sm:%s411]
                %421 = vst [vmem:[%s419] sm:%s411] %v420
                %v422 = vld [vmem:[%s418 + $0x8] sm:%s411]
                %423 = vst [vmem:[%s419 + $0x4] sm:%s411] %v422
                %v424 = vld [vmem:[%s418 + $0x10] sm:%s411]
                %425 = vst [vmem:[%s419 + $0x8] sm:%s411] %v424
                %v426 = vld [vmem:[%s418 + $0x18] sm:%s411]
                %427 = vst [vmem:[%s419 + $0xc] sm:%s411] %v426
              $region127: #{dit_block.4} parent=121 // loop_footer
                %s417 = sadd.s32 1, %s413
              $region128: #{dit_block.4} parent=121 // loop_footer_branch
                %412 = sbr.rel target = $region124
              $region129: #{dit_block.4} parent=121 // loop_exit
                _
            $region122: #{dit_block.4} parent=113 // pred_fallthru
              _
          $region114: #{dit_block.4} parent=109 // pred_fallthru
            _
          %456 = vnop
        $region110: #{dit_block.4} parent=23 // pred_fallthru
          _
        // Predicated region
        $region148: #{dit_block.4} parent=23 // pred_check
          %p457 = pneg %p138
        $region149: #{dit_block.4} parent=23 // pred_check_branch
          %459 = sbr.rel (%p457) target = $region151
        $region150: #{dit_block.4} parent=23 // pred_region
          %p460 = scmp.lt.s32.totalorder %s20, 1
          %s461 = scalar_select %p460, %s20, 1
          %p462 = scmp.lt.s32.totalorder %s21, 1
          %s463 = scalar_select %p462, %s21, 1
          %s464 = smul.addr %s461, 2
          %s465 = sadd.s32 %s463, %s464
          %s466 = smul.addr %s465, 8
          %s467 = scalar_lea.vmem %s3, %s466
        $region151: #{dit_block.4} parent=23 // pred_fallthru
          _
        // Predicated region
        $region152: #{dit_block.4} parent=23 // pred_check
          %p468 = pneg %p164
        $region153: #{dit_block.4} parent=23 // pred_check_branch
          %470 = sbr.rel (%p468) target = $region155
        $region154: #{dit_block.4} parent=23 // pred_region
          %p471 = scmp.lt.s32.totalorder %s20, 1
          %s472 = scalar_select %p471, %s20, 1
          %s473 = scalar_lea.vmem %s4, %s472
        $region155: #{dit_block.4} parent=23 // pred_fallthru
          _
      $region24: #{dit_block.4} parent=5 // pred_fallthru
        _
      %p474 = scmp.le.s32.totalorder 1, %s13
      %p475 = scmp.lt.s32.totalorder %s13, 9
      %p476 = pnand %p474, %p475
      %p477 = pneg %p476
      // Predicated region
      $region156: #{dit_block.4} parent=5 // pred_check
        _
      $region157: #{dit_block.4} parent=5 // pred_check_branch
        %479 = sbr.rel (%p476) target = $region159
      $region158: #{dit_block.4} parent=5 // pred_region
        %s480 = ssub.s32 %s13, 1
        %s481 = sand.u32 %s47, 1
        %s482 = sand.u32 %s47, 1
        %s483 = smul.addr %s482, 16
        %s484 = scalar_lea.vmem [#allocation5], %s483
        // Predicated region
        $region160: #{dit_block.4} parent=158 // pred_check
          %p485 = pneg %p60
        $region161: #{dit_block.4} parent=158 // pred_check_branch
          %487 = sbr.rel (%p485) target = $region163
        $region162: #{dit_block.4} parent=158 // pred_region
          _
        $region163: #{dit_block.4} parent=158 // pred_fallthru
          _
        %s488 = sand.u32 %s75, 1
        %s489 = sand.u32 %s75, 1
        %s490 = smul.addr %s489, 16
        %s491 = scalar_lea.vmem [#allocation6], %s490
        // Predicated region
        $region164: #{dit_block.4} parent=158 // pred_check
          %p492 = pneg %p88
        $region165: #{dit_block.4} parent=158 // pred_check_branch
          %494 = sbr.rel (%p492) target = $region167
        $region166: #{dit_block.4} parent=158 // pred_region
          _
        $region167: #{dit_block.4} parent=158 // pred_fallthru
          _
        %s495 = sand.u32 %s103, 1
        %s496 = sand.u32 %s103, 1
        %s497 = smul.addr %s496, 16
        %s498 = scalar_lea.vmem [#allocation7], %s497
        // Predicated region
        $region168: #{dit_block.4} parent=158 // pred_check
          %p499 = pneg %p116
        $region169: #{dit_block.4} parent=158 // pred_check_branch
          %501 = sbr.rel (%p499) target = $region171
        $region170: #{dit_block.4} parent=158 // pred_region
          _
        $region171: #{dit_block.4} parent=158 // pred_fallthru
          _
        %s502 = sand.u32 %s47, 1
        %s503 = sand.u32 %s47, 1
        %s504 = smul.addr %s503, 16
        %s505 = scalar_lea.vmem [#allocation5], %s504
        %p506 = pneg %p60
        %p507 = pneg %p57
        %s508 = sand.u32 %s75, 1
        %s509 = sand.u32 %s75, 1
        %s510 = smul.addr %s509, 16
        %s511 = scalar_lea.vmem [#allocation6], %s510
        %p512 = pneg %p88
        %p513 = pneg %p85
        %s514 = sand.u32 %s103, 1
        %s515 = sand.u32 %s103, 1
        %s516 = smul.addr %s515, 16
        %s517 = scalar_lea.vmem [#allocation7], %s516
        %p518 = pneg %p116
        %p519 = pneg %p113
        %p520 = scmp.lt.s32.totalorder %s23, 1
        %s521 = scalar_select %p520, %s23, 1
        %p522 = scmp.lt.s32.totalorder %s24, 1
        %s523 = scalar_select %p522, %s24, 1
        %s524 = smul.addr %s521, 2
        %s525 = sadd.s32 %s523, %s524
        %s526 = smul.addr %s525, 8
        %s527 = scalar_lea.vmem %s3, %s526
        %p528 = pneg %p144
        %p529 = pneg %p141
        %p530 = scmp.lt.s32.totalorder %s23, 1
        %s531 = scalar_select %p530, %s23, 1
        %s532 = scalar_lea.vmem %s4, %s531
        %p533 = pneg %p170
        %p534 = pneg %p167
        %p535 = pneg %p191
        %p536 = pneg %p188
        %p537 = pneg %p212
        %p538 = pneg %p209
        %p539 = pneg %p240
        %p540 = pneg %p237
        %p541 = scmp.lt.s32.totalorder %s23, 1
        %s542 = scalar_select %p541, %s23, 1
        %p543 = scmp.lt.s32.totalorder %s24, 1
        %s544 = scalar_select %p543, %s24, 1
        %s545 = smul.addr %s542, 2
        %s546 = sadd.s32 %s544, %s545
        %s547 = smul.addr %s546, 8
        %s548 = scalar_lea.vmem %s7, %s547
        %p549 = scmp.lt.s32.totalorder %s23, 1
        %s550 = scalar_select %p549, %s23, 1
        %p551 = scmp.lt.s32.totalorder %s24, 1
        %s552 = scalar_select %p551, %s24, 1
        %s553 = smul.addr %s550, 2
        %s554 = sadd.s32 %s552, %s553
        %s555 = smul.addr %s554, 8
        %s556 = scalar_lea.vmem %s3, %s555
        %p557 = scmp.lt.s32.totalorder %s23, 1
        %s558 = scalar_select %p557, %s23, 1
        %s559 = scalar_lea.vmem %s4, %s558
        %p560 = scmp.lt.s32.totalorder %s23, 1
        %s561 = scalar_select %p560, %s23, 1
        %p562 = scmp.lt.s32.totalorder %s24, 1
        %s563 = scalar_select %p562, %s24, 1
        %s564 = smul.addr %s561, 2
        %s565 = sadd.s32 %s563, %s564
        %s566 = smul.addr %s565, 8
        %s567 = scalar_lea.vmem %s7, %s566
        %p569 = scmp.eq.s32.totalorder %s25, 0
        // Predicated region
        $region172: #{dit_block.4} parent=158 // pred_check
          %p570 = pneg %p569
        $region173: #{dit_block.4} parent=158 // pred_check_branch
          %572 = sbr.rel (%p570) target = $region175
        $region174: #{dit_block.4} parent=158 // pred_region
          %vm573 = vcmask 7168
          %574 = vst.msk [vmem:[#allocation2] sm:$0xff] %vm573, -inf
          %575 = vst.msk [vmem:[#allocation2 + $0x8] sm:$0xff] %vm573, -inf
          %576 = vst.msk [vmem:[#allocation2 + $0x10] sm:$0xff] %vm573, -inf
          %577 = vst.msk [vmem:[#allocation2 + $0x18] sm:$0xff] %vm573, -inf
          %578 = vst.msk [vmem:[#allocation3] sm:$0xff] %vm573, 0.0
          %579 = vst.msk [vmem:[#allocation3 + $0x8] sm:$0xff] %vm573, 0.0
          %580 = vst.msk [vmem:[#allocation3 + $0x10] sm:$0xff] %vm573, 0.0
          %581 = vst.msk [vmem:[#allocation3 + $0x18] sm:$0xff] %vm573, 0.0
          %vm582 = vcmask 130048
          %583 = vst.msk [vmem:[#allocation4] sm:$0xff] %vm582, 0.0
          %584 = vst.msk [vmem:[#allocation4 + $0x8] sm:$0xff] %vm582, 0.0
          %585 = vst.msk [vmem:[#allocation4 + $0x10] sm:$0xff] %vm582, 0.0
          %586 = vst.msk [vmem:[#allocation4 + $0x18] sm:$0xff] %vm582, 0.0
        $region175: #{dit_block.4} parent=158 // pred_fallthru
          _
        %v587 = vld [vmem:[%s484] sm:$0xf]
        %v588 = vld [vmem:[%s484 + $0x4] sm:$0xf]
        %v589 = vld [vmem:[%s484 + $0x8] sm:$0xf]
        %v590 = vld [vmem:[%s484 + $0xc] sm:$0xf]
        %v591 = vld [vmem:[%s491] sm:$0xf]
        %v592 = vld [vmem:[%s491 + $0x4] sm:$0xf]
        %v593 = vld [vmem:[%s491 + $0x8] sm:$0xf]
        %v594 = vld [vmem:[%s491 + $0xc] sm:$0xf]
        %v595 = vld [vmem:[%s498] sm:$0xf]
        %v596 = vld [vmem:[%s498 + $0x4] sm:$0xf]
        %v597 = vld [vmem:[%s498 + $0x8] sm:$0xf]
        %v598 = vld [vmem:[%s498 + $0xc] sm:$0xf]
        %vm599 = vcmask 130048
        %v601 = vsel %vm599, %v587, 0
        %v604 = vsel %vm599, %v591, 0
        %606 = vmatpush.bf16.xpose.msra.mxu0 0
        %607 = vmatpush.bf16.xpose.msra.mxu0 0
        %608 = vmatpush.bf16.xpose.msra.mxu0 0
        %609 = vmatpush.bf16.xpose.msra.mxu0 0
        %610 = vmatpush.bf16.xpose.msra.mxu0 0
        %611 = vmatpush.bf16.xpose.msra.mxu0 0
        %612 = vmatpush.bf16.xpose.msra.mxu0 0
        %613 = vmatpush.bf16.xpose.msra.mxu0 %v604
        %614 = vmatmul.bf16.gmra.mxu0 %v601
        %v615 = vpop.f32.mrf.mxu0
        %v616 = vadd.f32 0.0, %v615
        %v617 = vpop.f32.mrf.mxu0
        %618 = vdwg.mxu0
        %v620 = vsel %vm599, %v588, 0
        %v623 = vsel %vm599, %v592, 0
        %625 = vmatpush.bf16.xpose.msra.mxu0 0
        %626 = vmatpush.bf16.xpose.msra.mxu0 0
        %627 = vmatpush.bf16.xpose.msra.mxu0 0
        %628 = vmatpush.bf16.xpose.msra.mxu0 0
        %629 = vmatpush.bf16.xpose.msra.mxu0 0
        %630 = vmatpush.bf16.xpose.msra.mxu0 0
        %631 = vmatpush.bf16.xpose.msra.mxu0 0
        %632 = vmatpush.bf16.xpose.msra.mxu0 %v623
        %633 = vmatmul.bf16.gmra.mxu0 %v620
        %v634 = vpop.f32.mrf.mxu0
        %v635 = vadd.f32 0.0, %v634
        %v636 = vpop.f32.mrf.mxu0
        %637 = vdwg.mxu0
        %v639 = vsel %vm599, %v589, 0
        %v642 = vsel %vm599, %v593, 0
        %644 = vmatpush.bf16.xpose.msra.mxu0 0
        %645 = vmatpush.bf16.xpose.msra.mxu0 0
        %646 = vmatpush.bf16.xpose.msra.mxu0 0
        %647 = vmatpush.bf16.xpose.msra.mxu0 0
        %648 = vmatpush.bf16.xpose.msra.mxu0 0
        %649 = vmatpush.bf16.xpose.msra.mxu0 0
        %650 = vmatpush.bf16.xpose.msra.mxu0 0
        %651 = vmatpush.bf16.xpose.msra.mxu0 %v642
        %652 = vmatmul.bf16.gmra.mxu0 %v639
        %v653 = vpop.f32.mrf.mxu0
        %v654 = vadd.f32 0.0, %v653
        %v655 = vpop.f32.mrf.mxu0
        %656 = vdwg.mxu0
        %v658 = vsel %vm599, %v590, 0
        %v661 = vsel %vm599, %v594, 0
        %663 = vmatpush.bf16.xpose.msra.mxu0 0
        %664 = vmatpush.bf16.xpose.msra.mxu0 0
        %665 = vmatpush.bf16.xpose.msra.mxu0 0
        %666 = vmatpush.bf16.xpose.msra.mxu0 0
        %667 = vmatpush.bf16.xpose.msra.mxu0 0
        %668 = vmatpush.bf16.xpose.msra.mxu0 0
        %669 = vmatpush.bf16.xpose.msra.mxu0 0
        %670 = vmatpush.bf16.xpose.msra.mxu0 %v661
        %671 = vmatmul.bf16.gmra.mxu0 %v658
        %v672 = vpop.f32.mrf.mxu0
        %v673 = vadd.f32 0.0, %v672
        %v674 = vpop.f32.mrf.mxu0
        %675 = vdwg.mxu0
        %v676 = vld [vmem:[#allocation2] sm:$0xff]
        %v677 = vld [vmem:[#allocation2 + $0x8] sm:$0xff]
        %v678 = vld [vmem:[#allocation2 + $0x10] sm:$0xff]
        %v679 = vld [vmem:[#allocation2 + $0x18] sm:$0xff]
        %vm680 = vcmask 64512
        %v681 = vsel %vm680, %v616, -inf
        %682 = vmax.xlane.f32.xlu0 %v681
        %v683 = vpop.xlane.xlu0 %682
        %v684 = vsel %vm680, %v635, -inf
        %685 = vmax.xlane.f32.xlu0 %v684
        %v686 = vpop.xlane.xlu0 %685
        %v687 = vsel %vm680, %v654, -inf
        %688 = vmax.xlane.f32.xlu0 %v687
        %v689 = vpop.xlane.xlu0 %688
        %v690 = vsel %vm680, %v673, -inf
        %691 = vmax.xlane.f32.xlu0 %v690
        %v692 = vpop.xlane.xlu0 %691
        %v693 = vmax.f32 %v676, %v683
        %v694 = vmax.f32 %v677, %v686
        %v695 = vmax.f32 %v678, %v689
        %v696 = vmax.f32 %v679, %v692
        %v697 = vsub.f32 %v676, %v693
        %v698 = vsub.f32 %v677, %v694
        %v699 = vsub.f32 %v678, %v695
        %v700 = vsub.f32 %v679, %v696
        %v701 = vmul.f32 %v697, 1.442695
        %v702 = vpow.pop %v701
        %v703 = vmul.f32 %v698, 1.442695
        %v704 = vpow.pop %v703
        %v705 = vmul.f32 %v699, 1.442695
        %v706 = vpow.pop %v705
        %v707 = vmul.f32 %v700, 1.442695
        %v708 = vpow.pop %v707
        %710 = vset.pattern.permute.xlu0 0
        %711 = vperm.xlu0 %710, %v693
        %v712 = vpop.permute.xlu0 %711
        %715 = vset.pattern.permute.xlu0 0
        %716 = vperm.xlu0 %715, %v694
        %v717 = vpop.permute.xlu0 %716
        %720 = vset.pattern.permute.xlu0 0
        %721 = vperm.xlu0 %720, %v695
        %v722 = vpop.permute.xlu0 %721
        %725 = vset.pattern.permute.xlu0 0
        %726 = vperm.xlu0 %725, %v696
        %v727 = vpop.permute.xlu0 %726
        %v729 = vsub.f32 %v616, %v712
        %v730 = vsub.f32 %v635, %v717
        %v731 = vsub.f32 %v654, %v722
        %v732 = vsub.f32 %v673, %v727
        %v733 = vmul.f32 %v729, 1.442695
        %v734 = vpow.pop %v733
        %v735 = vmul.f32 %v730, 1.442695
        %v736 = vpow.pop %v735
        %v737 = vmul.f32 %v731, 1.442695
        %v738 = vpow.pop %v737
        %v739 = vmul.f32 %v732, 1.442695
        %v740 = vpow.pop %v739
        %v741 = vld [vmem:[#allocation3] sm:$0xff]
        %v742 = vld [vmem:[#allocation3 + $0x8] sm:$0xff]
        %v743 = vld [vmem:[#allocation3 + $0x10] sm:$0xff]
        %v744 = vld [vmem:[#allocation3 + $0x18] sm:$0xff]
        %v745 = vmul.f32 %v702, %v741
        %v746 = vmul.f32 %v704, %v742
        %v747 = vmul.f32 %v706, %v743
        %v748 = vmul.f32 %v708, %v744
        %v749 = vsel %vm680, %v734, 0.0
        %750 = vadd.xlane.f32.xlu0 %v749
        %v751 = vpop.xlane.xlu0 %750
        %v752 = vsel %vm680, %v736, 0.0
        %753 = vadd.xlane.f32.xlu0 %v752
        %v754 = vpop.xlane.xlu0 %753
        %v755 = vsel %vm680, %v738, 0.0
        %756 = vadd.xlane.f32.xlu0 %v755
        %v757 = vpop.xlane.xlu0 %756
        %v758 = vsel %vm680, %v740, 0.0
        %759 = vadd.xlane.f32.xlu0 %v758
        %v760 = vpop.xlane.xlu0 %759
        %v761 = vadd.f32 %v745, %v751
        %v762 = vadd.f32 %v746, %v754
        %v763 = vadd.f32 %v747, %v757
        %v764 = vadd.f32 %v748, %v760
        %vm765 = vcmask 7168
        %766 = vst.msk [vmem:[#allocation3] sm:$0xff] %vm765, %v761
        %767 = vst.msk [vmem:[#allocation3 + $0x8] sm:$0xff] %vm765, %v762
        %768 = vst.msk [vmem:[#allocation3 + $0x10] sm:$0xff] %vm765, %v763
        %769 = vst.msk [vmem:[#allocation3 + $0x18] sm:$0xff] %vm765, %v764
        %v770 = vld [vmem:[#allocation4] sm:$0xff]
        %v771 = vld [vmem:[#allocation4 + $0x8] sm:$0xff]
        %v772 = vld [vmem:[#allocation4 + $0x10] sm:$0xff]
        %v773 = vld [vmem:[#allocation4 + $0x18] sm:$0xff]
        %775 = vset.pattern.permute.xlu0 0
        %776 = vperm.xlu0 %775, %v702
        %v777 = vpop.permute.xlu0 %776
        %780 = vset.pattern.permute.xlu0 0
        %781 = vperm.xlu0 %780, %v704
        %v782 = vpop.permute.xlu0 %781
        %785 = vset.pattern.permute.xlu0 0
        %786 = vperm.xlu0 %785, %v706
        %v787 = vpop.permute.xlu0 %786
        %790 = vset.pattern.permute.xlu0 0
        %791 = vperm.xlu0 %790, %v708
        %v792 = vpop.permute.xlu0 %791
        %v794 = vmul.f32 %v777, %v770
        %v795 = vmul.f32 %v782, %v771
        %v796 = vmul.f32 %v787, %v772
        %v797 = vmul.f32 %v792, %v773
        %v798 = vpack.c.bf16 %v734, %v734
        %v799 = vpack.c.bf16 %v736, %v736
        %v800 = vpack.c.bf16 %v738, %v738
        %v801 = vpack.c.bf16 %v740, %v740
        %v803 = vsel %vm680, %v798, 0
        %vm805 = vcmask 1043456
        %v807 = vsel %vm805, %v595, 0
        %809 = vmatpush.bf16.msra.mxu0 0
        %810 = vmatpush.bf16.msra.mxu0 0
        %811 = vmatpush.bf16.msra.mxu0 0
        %812 = vmatpush.bf16.msra.mxu0 0
        %813 = vmatpush.bf16.msra.mxu0 0
        %814 = vmatpush.bf16.msra.mxu0 0
        %815 = vmatpush.bf16.msra.mxu0 0
        %816 = vmatpush.bf16.msra.mxu0 %v807
        %817 = vmatmul.bf16.gmra.mxu0 %v803
        %v818 = vpop.f32.mrf.mxu0
        %v819 = vadd.f32 0.0, %v818
        %v820 = vpop.f32.mrf.mxu0
        %821 = vdwg.mxu0
        %v823 = vsel %vm680, %v799, 0
        %v826 = vsel %vm805, %v596, 0
        %828 = vmatpush.bf16.msra.mxu0 0
        %829 = vmatpush.bf16.msra.mxu0 0
        %830 = vmatpush.bf16.msra.mxu0 0
        %831 = vmatpush.bf16.msra.mxu0 0
        %832 = vmatpush.bf16.msra.mxu0 0
        %833 = vmatpush.bf16.msra.mxu0 0
        %834 = vmatpush.bf16.msra.mxu0 0
        %835 = vmatpush.bf16.msra.mxu0 %v826
        %836 = vmatmul.bf16.gmra.mxu0 %v823
        %v837 = vpop.f32.mrf.mxu0
        %v838 = vadd.f32 0.0, %v837
        %v839 = vpop.f32.mrf.mxu0
        %840 = vdwg.mxu0
        %v842 = vsel %vm680, %v800, 0
        %v845 = vsel %vm805, %v597, 0
        %847 = vmatpush.bf16.msra.mxu0 0
        %848 = vmatpush.bf16.msra.mxu0 0
        %849 = vmatpush.bf16.msra.mxu0 0
        %850 = vmatpush.bf16.msra.mxu0 0
        %851 = vmatpush.bf16.msra.mxu0 0
        %852 = vmatpush.bf16.msra.mxu0 0
        %853 = vmatpush.bf16.msra.mxu0 0
        %854 = vmatpush.bf16.msra.mxu0 %v845
        %855 = vmatmul.bf16.gmra.mxu0 %v842
        %v856 = vpop.f32.mrf.mxu0
        %v857 = vadd.f32 0.0, %v856
        %v858 = vpop.f32.mrf.mxu0
        %859 = vdwg.mxu0
        %v861 = vsel %vm680, %v801, 0
        %v864 = vsel %vm805, %v598, 0
        %866 = vmatpush.bf16.msra.mxu0 0
        %867 = vmatpush.bf16.msra.mxu0 0
        %868 = vmatpush.bf16.msra.mxu0 0
        %869 = vmatpush.bf16.msra.mxu0 0
        %870 = vmatpush.bf16.msra.mxu0 0
        %871 = vmatpush.bf16.msra.mxu0 0
        %872 = vmatpush.bf16.msra.mxu0 0
        %873 = vmatpush.bf16.msra.mxu0 %v864
        %874 = vmatmul.bf16.gmra.mxu0 %v861
        %v875 = vpop.f32.mrf.mxu0
        %v876 = vadd.f32 0.0, %v875
        %v877 = vpop.f32.mrf.mxu0
        %878 = vdwg.mxu0
        %v879 = vadd.f32 %v794, %v819
        %v880 = vadd.f32 %v795, %v838
        %v881 = vadd.f32 %v796, %v857
        %v882 = vadd.f32 %v797, %v876
        %883 = vst.msk [vmem:[#allocation4] sm:$0xff] %vm599, %v879
        %884 = vst.msk [vmem:[#allocation4 + $0x8] sm:$0xff] %vm599, %v880
        %885 = vst.msk [vmem:[#allocation4 + $0x10] sm:$0xff] %vm599, %v881
        %886 = vst.msk [vmem:[#allocation4 + $0x18] sm:$0xff] %vm599, %v882
        %887 = vst.msk [vmem:[#allocation2] sm:$0xff] %vm765, %v693
        %888 = vst.msk [vmem:[#allocation2 + $0x8] sm:$0xff] %vm765, %v694
        %889 = vst.msk [vmem:[#allocation2 + $0x10] sm:$0xff] %vm765, %v695
        %890 = vst.msk [vmem:[#allocation2 + $0x18] sm:$0xff] %vm765, %v696
        %p891 = scmp.eq.s32.totalorder %s25, 1
        // Predicated region
        $region176: #{dit_block.4} parent=158 // pred_check
          %p892 = pneg %p891
        $region177: #{dit_block.4} parent=158 // pred_check_branch
          %894 = sbr.rel (%p892) target = $region179
        $region178: #{dit_block.4} parent=158 // pred_region
          %v895 = vld [vmem:[#allocation4] sm:$0xff]
          %v896 = vld [vmem:[#allocation4 + $0x8] sm:$0xff]
          %v897 = vld [vmem:[#allocation4 + $0x10] sm:$0xff]
          %v898 = vld [vmem:[#allocation4 + $0x18] sm:$0xff]
          %v899 = vld [vmem:[#allocation3] sm:$0xff]
          %v900 = vld [vmem:[#allocation3 + $0x8] sm:$0xff]
          %v901 = vld [vmem:[#allocation3 + $0x10] sm:$0xff]
          %v902 = vld [vmem:[#allocation3 + $0x18] sm:$0xff]
          %v903 = vrcp.pop %v899
          %v904 = vrcp.pop %v900
          %v905 = vrcp.pop %v901
          %v906 = vrcp.pop %v902
          %908 = vset.pattern.permute.xlu0 0
          %909 = vperm.xlu0 %908, %v903
          %v910 = vpop.permute.xlu0 %909
          %913 = vset.pattern.permute.xlu0 0
          %914 = vperm.xlu0 %913, %v904
          %v915 = vpop.permute.xlu0 %914
          %918 = vset.pattern.permute.xlu0 0
          %919 = vperm.xlu0 %918, %v905
          %v920 = vpop.permute.xlu0 %919
          %923 = vset.pattern.permute.xlu0 0
          %924 = vperm.xlu0 %923, %v906
          %v925 = vpop.permute.xlu0 %924
          %v927 = vmul.f32 %v895, %v910
          %v928 = vmul.f32 %v896, %v915
          %v929 = vmul.f32 %v897, %v920
          %v930 = vmul.f32 %v898, %v925
          %932 = vrot.lane.b32.xlu0 %v928, 16
          %v933 = vpop.permute.xlu0 %932
          %936 = vrot.lane.b32.xlu0 %v929, 32
          %v937 = vpop.permute.xlu0 %936
          %940 = vrot.lane.b32.xlu0 %v930, 48
          %v941 = vpop.permute.xlu0 %940
          %v943 = vsel %vm599, %v927, %v933
          %vm944 = vcmask 261120
          %v945 = vsel %vm944, %v943, %v937
          %vm946 = vcmask 392192
          %v947 = vsel %vm946, %v945, %v941
          %v948 = vpack.c.bf16 %v947, %v947
          %v949 = vld [vmem:[%s5] sm:$0xf]
          %v950 = vld [vmem:[%s5 + $0x4] sm:$0xf]
          %v951 = vld [vmem:[%s5 + $0x8] sm:$0xf]
          %v952 = vld [vmem:[%s5 + $0xc] sm:$0xf]
          %v953 = vld [vmem:[%s5 + $0x10] sm:$0xf]
          %v954 = vld [vmem:[%s5 + $0x14] sm:$0xf]
          %v955 = vld [vmem:[%s5 + $0x18] sm:$0xf]
          %v956 = vld [vmem:[%s5 + $0x1c] sm:$0xf]
          %v957 = vld [vmem:[%s6] sm:$0x1]
          %v959 = vperm.slane %v957, 0
          %v969 = vunpack.c.l.b16 %v949
          %v970 = vunpack.c.l.b16 %v950
          %v971 = vunpack.c.l.b16 %v951
          %v972 = vunpack.c.l.b16 %v952
          %v973 = vunpack.c.l.b16 %v953
          %v974 = vunpack.c.l.b16 %v954
          %v975 = vunpack.c.l.b16 %v955
          %v976 = vunpack.c.l.b16 %v956
          %v977 = vpack.c.b16 %v970, %v969
          %v978 = vpack.c.b16 %v972, %v971
          %v979 = vpack.c.b16 %v974, %v973
          %v980 = vpack.c.b16 %v976, %v975
          %vm985 = vcmask 523264
          %v987 = vsel %vm985, %v948, 0
          %989 = vmatpush.bf16.msra.mxu0 0
          %990 = vmatpush.bf16.msra.mxu0 0
          %991 = vmatpush.bf16.msra.mxu0 0
          %992 = vmatpush.bf16.msra.mxu0 0
          %993 = vmatpush.bf16.msra.mxu0 %v980
          %994 = vmatpush.bf16.msra.mxu0 %v979
          %995 = vmatpush.bf16.msra.mxu0 %v978
          %996 = vmatpush.bf16.msra.mxu0 %v977
          %997 = vmatmul.bf16.gmra.mxu0 %v987
          %v998 = vpop.f32.mrf.mxu0
          %v999 = vadd.f32 %v959, %v998
          %v1000 = vpop.f32.mrf.mxu0
          %1001 = vdwg.mxu0
          %v1002 = vld [vmem:[%s556] sm:$0xff]
          %v1003 = vld [vmem:[%s559] sm:$0x1]
          %v1005 = vperm.slane %v1003, 0
          %v1007 = vmul.f32 %v1005, %v999
          %v1008 = vadd.f32 %v1002, %v1007
          %1009 = vst.msk [vmem:[%s567] sm:$0xff] %vm985, %v1008
        $region179: #{dit_block.4} parent=158 // pred_fallthru
          _
        %p1010 = scmp.lt.s32.totalorder %s23, 1
        %s1011 = scalar_select %p1010, %s23, 1
        %p1012 = scmp.lt.s32.totalorder %s24, 1
        %s1013 = scalar_select %p1012, %s24, 1
        %s1014 = smul.addr %s1011, 2
        %s1015 = sadd.s32 %s1013, %s1014
        %s1016 = smul.addr %s1015, 8
        %s1017 = scalar_lea.vmem %s7, %s1016
        // Predicated region
        $region180: #{dit_block.4} parent=158 // pred_check
          %p1018 = pneg %p237
        $region181: #{dit_block.4} parent=158 // pred_check_branch
          %1020 = sbr.rel (%p1018) target = $region183
        $region182: #{dit_block.4} parent=158 // pred_region
          _
        $region183: #{dit_block.4} parent=158 // pred_fallthru
          _
      $region159: #{dit_block.4} parent=5 // pred_fallthru
        _
      %p1021 = scmp.le.s32.totalorder 2, %s13
      // Predicated region
      $region184: #{dit_block.4} parent=5 // pred_check
        %p1022 = pneg %p1021
      $region185: #{dit_block.4} parent=5 // pred_check_branch
        %1024 = sbr.rel (%p1022) target = $region187
      $region186: #{dit_block.4} parent=5 // pred_region
        %s1025 = ssub.s32 %s13, 2
        // Predicated region
        $region188: #{dit_block.4} parent=186 // pred_check
          %p1026 = pneg %p243
        $region189: #{dit_block.4} parent=186 // pred_check_branch
          %1028 = sbr.rel (%p1026) target = $region191
        $region190: #{dit_block.4} parent=186 // pred_region
          %p1029 = scmp.lt.s32.totalorder %s26, 1
          %s1030 = scalar_select %p1029, %s26, 1
          %p1031 = scmp.lt.s32.totalorder %s27, 1
          %s1032 = scalar_select %p1031, %s27, 1
          %s1033 = smul.addr %s1030, 2
          %s1034 = sadd.s32 %s1032, %s1033
          %s1035 = smul.addr %s1034, 8
          %s1036 = scalar_lea.vmem %s7, %s1035
        $region191: #{dit_block.4} parent=186 // pred_fallthru
          _
      $region187: #{dit_block.4} parent=5 // pred_fallthru
        _
    $region6: #{dit_block.4} parent=1 // loop_footer
      %s17 = sadd.s32 1, %s13
    $region7: #{dit_block.4} parent=1 // loop_footer_branch
      %12 = sbr.rel target = $region3
    $region8: #{dit_block.4} parent=1 // loop_exit
      _

// kernel: dit_block.4
$region0: #{dit_block.4}
  #allocation0 [shape = 'u32[]', space=smem, size = 0x4, offset = 0x4, fixed_abs, tag = 'smem constant byte address 0x4 - core index']
  #allocation1 [shape = 'u32[72,128]{1,0:T(1,128)}', space=vmem, size = 0x9000, scoped, tag = 'internal scratch']
  #allocation2 [shape = 'f32[4,8,1]{2,1,0:T(8,128)}', space=vmem, size = 0x4000, scoped, tag = 'scratch operand']
  #allocation3 [shape = 'f32[4,8,1]{2,1,0:T(8,128)}', space=vmem, size = 0x4000, scoped, tag = 'scratch operand']
  #allocation4 [shape = 'f32[4,8,16]{2,1,0:T(8,128)}', space=vmem, size = 0x4000, scoped, tag = 'scratch operand']
  %s0 = inlined_call_operand.vmem [shape: bf16[2,4,16,16], index: 0, kind: input, shape index: {}]
  %s1 = inlined_call_operand.vmem [shape: bf16[2,4,16,16], index: 1, kind: input, shape index: {}]
  %s2 = inlined_call_operand.vmem [shape: bf16[2,4,16,16], index: 2, kind: input, shape index: {}]
  %s3 = inlined_call_operand.vmem [shape: f32[2,16,64], index: 3, kind: input, shape index: {}]
  %s4 = inlined_call_operand.vmem [shape: f32[2,1,64], index: 4, kind: input, shape index: {}]
  %s5 = inlined_call_operand.vmem [shape: bf16[64,64], index: 5, kind: input, shape index: {}]
  %s6 = inlined_call_operand.vmem [shape: f32[1,64], index: 6, kind: input, shape index: {}]
  %s7 = inlined_call_operand.vmem [shape: f32[2,16,64], index: 7, kind: output, shape index: {}]
  %s8 = sld [smem:[#allocation0]]
  $region192: #{dit_block.4} parent=0
    _
  %s10 = ssub.s32 1, %s8
  %s11 = scalar_select 0, %s10, %s8
  $region1: #{dit_block.4} parent=0
    #allocation5 [shape = 'u8[16384]{0}', space=vmem, size = 0x4000, scoped, tag = 'input window, operand 0']
    #allocation6 [shape = 'u8[16384]{0}', space=vmem, size = 0x4000, scoped, tag = 'input window, operand 1']
    #allocation7 [shape = 'u8[16384]{0}', space=vmem, size = 0x4000, scoped, tag = 'input window, operand 2']
    loop: start=0, step=1, limit=10
    $region2: #{dit_block.4} parent=1 // loop_pre_header
      _
    $region3: #{dit_block.4} parent=1 // loop_header
      %s13 = sphi 0, %s17
      %p14 = scmp.ge.s32.totalorder %s13, 10
      %s20 = sphi 0, %s39
      %s21 = sphi 0, %s35
      %s22 = sphi 0, %s31
      %s23 = sphi 0, %s20
      %s24 = sphi 0, %s21
      %s25 = sphi 0, %s22
      %s26 = sphi 0, %s23
      %s27 = sphi 0, %s24
      %s28 = sphi 0, %s25
      %s44 = sphi 0, %s46
      %s47 = sphi 0, %s44
      %s48 = sphi 0, %s47
      %s64 = sphi 0, %s48
      %s72 = sphi 0, %s74
      %s75 = sphi 0, %s72
      %s76 = sphi 0, %s75
      %s92 = sphi 0, %s76
      %s100 = sphi 0, %s102
      %s103 = sphi 0, %s100
      %s104 = sphi 0, %s103
      %s120 = sphi 0, %s104
      %s128 = sphi 0, %s130
      %s131 = sphi 0, %s128
      %s132 = sphi 0, %s131
      %s148 = sphi 0, %s132
      %s154 = sphi 0, %s156
      %s157 = sphi 0, %s154
      %s158 = sphi 0, %s157
      %s174 = sphi 0, %s158
      %s178 = sphi 0, %s178
      %s180 = sphi 0, %s178
      %s181 = sphi 0, %s180
      %s195 = sphi 0, %s181
      %s199 = sphi 0, %s199
      %s201 = sphi 0, %s199
      %s202 = sphi 0, %s201
      %s216 = sphi 0, %s202
      %s224 = sphi 0, %s226
      %s227 = sphi 0, %s224
      %s228 = sphi 0, %s227
      %s244 = sphi 0, %s228
    $region4: #{dit_block.4} parent=1 // loop_header_branch
      %16 = sbr.rel (%p14) target = $region8
    $region5: #{dit_block.4} parent=1 // loop_body
      %s18 = ssub.s32 %s13, 1
      %s19 = ssub.s32 %s13, 2
      %s29 = sadd.s32 1, %s22
      %p30 = scmp.ge.s32.totalorder %s29, 2
      %s31 = scalar_select %p30, 0, %s29
      %s32 = sadd.s32 1, %s21
      %s33 = scalar_select %p30, %s32, %s21
      %p34 = scmp.ge.s32.totalorder %s33, 2
      %s35 = scalar_select %p34, 0, %s33
      %s36 = sadd.s32 1, %s20
      %s37 = scalar_select %p34, %s36, %s20
      %p38 = scmp.ge.s32.totalorder %s37, 2
      %s39 = scalar_select %p38, 0, %s37
      %s40 = ssub.s32 %s20, %s39
      %s41 = ssub.s32 %s21, %s35
      %s42 = sor.u32 %s40, %s41
      %p43 = scmp.eq.s32.totalorder %s42, 0
      %s45 = sadd.s32 %s44, 1
      %s46 = scalar_select %p43, %s44, %s45
      %p49 = pneg %p43
      %p50 = scmp.eq.s32.totalorder %s13, 7
      %p51 = por %p49, %p50
      %p52 = scmp.ne.s32.totalorder %s44, %s47
      %p53 = scmp.eq.s32.totalorder %s13, 0
      %p54 = por %p52, %p53
      %p55 = scmp.ne.s32.totalorder %s44, %s47
      %p56 = scmp.eq.s32.totalorder %s18, 7
      %p57 = por %p55, %p56
      %p58 = scmp.ne.s32.totalorder %s47, %s48
      %p59 = scmp.eq.s32.totalorder %s18, 0
      %p60 = por %p58, %p59
      %p61 = scmp.ne.s32.totalorder %s47, %s48
      %p62 = scmp.eq.s32.totalorder %s19, 7
      %p63 = por %p61, %p62
      %p65 = scmp.ne.s32.totalorder %s48, %s64
      %p66 = scmp.eq.s32.totalorder %s19, 0
      %p67 = por %p65, %p66
      %s68 = ssub.s32 %s20, %s39
      %s69 = ssub.s32 %s22, %s31
      %s70 = sor.u32 %s68, %s69
      %p71 = scmp.eq.s32.totalorder %s70, 0
      %s73 = sadd.s32 %s72, 1
      %s74 = scalar_select %p71, %s72, %s73
      %p77 = pneg %p71
      %p78 = scmp.eq.s32.totalorder %s13, 7
      %p79 = por %p77, %p78
      %p80 = scmp.ne.s32.totalorder %s72, %s75
      %p81 = scmp.eq.s32.totalorder %s13, 0
      %p82 = por %p80, %p81
      %p83 = scmp.ne.s32.totalorder %s72, %s75
      %p84 = scmp.eq.s32.totalorder %s18, 7
      %p85 = por %p83, %p84
      %p86 = scmp.ne.s32.totalorder %s75, %s76
      %p87 = scmp.eq.s32.totalorder %s18, 0
      %p88 = por %p86, %p87
      %p89 = scmp.ne.s32.totalorder %s75, %s76
      %p90 = scmp.eq.s32.totalorder %s19, 7
      %p91 = por %p89, %p90
      %p93 = scmp.ne.s32.totalorder %s76, %s92
      %p94 = scmp.eq.s32.totalorder %s19, 0
      %p95 = por %p93, %p94
      %s96 = ssub.s32 %s20, %s39
      %s97 = ssub.s32 %s22, %s31
      %s98 = sor.u32 %s96, %s97
      %p99 = scmp.eq.s32.totalorder %s98, 0
      %s101 = sadd.s32 %s100, 1
      %s102 = scalar_select %p99, %s100, %s101
      %p105 = pneg %p99
      %p106 = scmp.eq.s32.totalorder %s13, 7
      %p107 = por %p105, %p106
      %p108 = scmp.ne.s32.totalorder %s100, %s103
      %p109 = scmp.eq.s32.totalorder %s13, 0
      %p110 = por %p108, %p109
      %p111 = scmp.ne.s32.totalorder %s100, %s103
      %p112 = scmp.eq.s32.totalorder %s18, 7
      %p113 = por %p111, %p112
      %p114 = scmp.ne.s32.totalorder %s103, %s104
      %p115 = scmp.eq.s32.totalorder %s18, 0
      %p116 = por %p114, %p115
      %p117 = scmp.ne.s32.totalorder %s103, %s104
      %p118 = scmp.eq.s32.totalorder %s19, 7
      %p119 = por %p117, %p118
      %p121 = scmp.ne.s32.totalorder %s104, %s120
      %p122 = scmp.eq.s32.totalorder %s19, 0
      %p123 = por %p121, %p122
      %s124 = ssub.s32 %s20, %s39
      %s125 = ssub.s32 %s21, %s35
      %s126 = sor.u32 %s124, %s125
      %p127 = scmp.eq.s32.totalorder %s126, 0
      %s129 = sadd.s32 %s128, 1
      %s130 = scalar_select %p127, %s128, %s129
      %p133 = pneg %p127
      %p134 = scmp.eq.s32.totalorder %s13, 7
      %p135 = por %p133, %p134
      %p136 = scmp.ne.s32.totalorder %s128, %s131
      %p137 = scmp.eq.s32.totalorder %s13, 0
      %p138 = por %p136, %p137
      %p139 = scmp.ne.s32.totalorder %s128, %s131
      %p140 = scmp.eq.s32.totalorder %s18, 7
      %p141 = por %p139, %p140
      %p142 = scmp.ne.s32.totalorder %s131, %s132
      %p143 = scmp.eq.s32.totalorder %s18, 0
      %p144 = por %p142, %p143
      %p145 = scmp.ne.s32.totalorder %s131, %s132
      %p146 = scmp.eq.s32.totalorder %s19, 7
      %p147 = por %p145, %p146
      %p149 = scmp.ne.s32.totalorder %s132, %s148
      %p150 = scmp.eq.s32.totalorder %s19, 0
      %p151 = por %p149, %p150
      %s152 = ssub.s32 %s20, %s39
      %p153 = scmp.eq.s32.totalorder %s152, 0
      %s155 = sadd.s32 %s154, 1
      %s156 = scalar_select %p153, %s154, %s155
      %p159 = pneg %p153
      %p160 = scmp.eq.s32.totalorder %s13, 7
      %p161 = por %p159, %p160
      %p162 = scmp.ne.s32.totalorder %s154, %s157
      %p163 = scmp.eq.s32.totalorder %s13, 0
      %p164 = por %p162, %p163
      %p165 = scmp.ne.s32.totalorder %s154, %s157
      %p166 = scmp.eq.s32.totalorder %s18, 7
      %p167 = por %p165, %p166
      %p168 = scmp.ne.s32.totalorder %s157, %s158
      %p169 = scmp.eq.s32.totalorder %s18, 0
      %p170 = por %p168, %p169
      %p171 = scmp.ne.s32.totalorder %s157, %s158
      %p172 = scmp.eq.s32.totalorder %s19, 7
      %p173 = por %p171, %p172
      %p175 = scmp.ne.s32.totalorder %s158, %s174
      %p176 = scmp.eq.s32.totalorder %s19, 0
      %p177 = por %p175, %p176
      %s179 = sadd.s32 %s178, 1
      %p182 = scmp.eq.s32.totalorder %s13, 7
      %p183 = scmp.ne.s32.totalorder %s178, %s180
      %p184 = scmp.eq.s32.totalorder %s13, 0
      %p185 = por %p183, %p184
      %p186 = scmp.ne.s32.totalorder %s178, %s180
      %p187 = scmp.eq.s32.totalorder %s18, 7
      %p188 = por %p186, %p187
      %p189 = scmp.ne.s32.totalorder %s180, %s181
      %p190 = scmp.eq.s32.totalorder %s18, 0
      %p191 = por %p189, %p190
      %p192 = scmp.ne.s32.totalorder %s180, %s181
      %p193 = scmp.eq.s32.totalorder %s19, 7
      %p194 = por %p192, %p193
      %p196 = scmp.ne.s32.totalorder %s181, %s195
      %p197 = scmp.eq.s32.totalorder %s19, 0
      %p198 = por %p196, %p197
      %s200 = sadd.s32 %s199, 1
      %p203 = scmp.eq.s32.totalorder %s13, 7
      %p204 = scmp.ne.s32.totalorder %s199, %s201
      %p205 = scmp.eq.s32.totalorder %s13, 0
      %p206 = por %p204, %p205
      %p207 = scmp.ne.s32.totalorder %s199, %s201
      %p208 = scmp.eq.s32.totalorder %s18, 7
      %p209 = por %p207, %p208
      %p210 = scmp.ne.s32.totalorder %s201, %s202
      %p211 = scmp.eq.s32.totalorder %s18, 0
      %p212 = por %p210, %p211
      %p213 = scmp.ne.s32.totalorder %s201, %s202
      %p214 = scmp.eq.s32.totalorder %s19, 7
      %p215 = por %p213, %p214
      %p217 = scmp.ne.s32.totalorder %s202, %s216
      %p218 = scmp.eq.s32.totalorder %s19, 0
      %p219 = por %p217, %p218
      %s220 = ssub.s32 %s20, %s39
      %s221 = ssub.s32 %s21, %s35
      %s222 = sor.u32 %s220, %s221
      %p223 = scmp.eq.s32.totalorder %s222, 0
      %s225 = sadd.s32 %s224, 1
      %s226 = scalar_select %p223, %s224, %s225
      %p229 = pneg %p223
      %p230 = scmp.eq.s32.totalorder %s13, 7
      %p231 = por %p229, %p230
      %p232 = scmp.ne.s32.totalorder %s224, %s227
      %p233 = scmp.eq.s32.totalorder %s13, 0
      %p234 = por %p232, %p233
      %p235 = scmp.ne.s32.totalorder %s224, %s227
      %p236 = scmp.eq.s32.totalorder %s18, 7
      %p237 = por %p235, %p236
      %p238 = scmp.ne.s32.totalorder %s227, %s228
      %p239 = scmp.eq.s32.totalorder %s18, 0
      %p240 = por %p238, %p239
      %p241 = scmp.ne.s32.totalorder %s227, %s228
      %p242 = scmp.eq.s32.totalorder %s19, 7
      %p243 = por %p241, %p242
      %p245 = scmp.ne.s32.totalorder %s228, %s244
      %p246 = scmp.eq.s32.totalorder %s19, 0
      %p247 = por %p245, %p246
      %p248 = scmp.le.s32.totalorder 1, %s13
      %p249 = scmp.lt.s32.totalorder %s13, 9
      %p250 = pnand %p248, %p249
      %p251 = pneg %p250
      // Predicated region
      $region9: #{dit_block.4} parent=5 // pred_check
        _
      $region10: #{dit_block.4} parent=5 // pred_check_branch
        %253 = sbr.rel (%p250) target = $region12
      $region11: #{dit_block.4} parent=5 // pred_region
        %s254 = ssub.s32 %s13, 1
        // Predicated region
        $region13: #{dit_block.4} parent=11 // pred_check
          %p255 = pneg %p191
        $region14: #{dit_block.4} parent=11 // pred_check_branch
          %257 = sbr.rel (%p255) target = $region16
        $region15: #{dit_block.4} parent=11 // pred_region
          _
        $region16: #{dit_block.4} parent=11 // pred_fallthru
          _
        // Predicated region
        $region17: #{dit_block.4} parent=11 // pred_check
          %p258 = pneg %p212
        $region18: #{dit_block.4} parent=11 // pred_check_branch
          %260 = sbr.rel (%p258) target = $region20
        $region19: #{dit_block.4} parent=11 // pred_region
          _
        $region20: #{dit_block.4} parent=11 // pred_fallthru
          _
      $region12: #{dit_block.4} parent=5 // pred_fallthru
        _
      %p261 = scmp.lt.s32.totalorder %s13, 8
      // Predicated region
      $region21: #{dit_block.4} parent=5 // pred_check
        %p262 = pneg %p261
      $region22: #{dit_block.4} parent=5 // pred_check_branch
        %264 = sbr.rel (%p262) target = $region24
      $region23: #{dit_block.4} parent=5 // pred_region
        // Predicated region
        $region25: #{dit_block.4} parent=23 // pred_check
          %p265 = pneg %p54
        $region26: #{dit_block.4} parent=23 // pred_check_branch
          %267 = sbr.rel (%p265) target = $region28
        $region27: #{dit_block.4} parent=23 // pred_region
          %s268 = sand.u32 %s44, 1
          %s269 = sand.u32 %s44, 1
          %s270 = smul.addr %s269, 16
          %s271 = scalar_lea.vmem [#allocation5], %s270
          %s272 = smul.addr %s20, 8
          %s273 = sadd.s32 %s21, %s272
          %s274 = smul.addr %s273, 4
          %s275 = scalar_lea.vmem %s0, %s274
          // Predicated region
          $region29: #{dit_block.4} parent=27 // pred_check
            _
          $region30: #{dit_block.4} parent=27 // pred_check_branch
            %277 = sbr.rel (0) target = $region32
          $region31: #{dit_block.4} parent=27 // pred_region
            // Predicated region
            $region33: #{dit_block.4} parent=31 // pred_check
              _
            $region34: #{dit_block.4} parent=31 // pred_check_branch
              %279 = sbr.rel target = $region36
            $region35: #{dit_block.4} parent=31 // pred_region
              // Predicated region
              $region48: #{dit_block.4} parent=35 // pred_check
                _
              $region49: #{dit_block.4} parent=35 // pred_check_branch
                %301 = sbr.rel (0) target = $region51
              $region50: #{dit_block.4} parent=35 // pred_region
                loop: start=0, step=1, limit=1
                $region52: #{dit_block.4} parent=50 // loop_pre_header
                  _
                $region53: #{dit_block.4} parent=50 // loop_header
                  %s303 = sphi 0, %s307
                  %p304 = scmp.ge.s32.totalorder %s303, 1
                  %s308 = sphi %s275, %s275
                  %s309 = sphi %s271, %s271
                $region54: #{dit_block.4} parent=50 // loop_header_branch
                  %306 = sbr.rel (%p304) target = $region58
                $region55: #{dit_block.4} parent=50 // loop_body
                  _
                $region56: #{dit_block.4} parent=50 // loop_footer
                  %s307 = sadd.s32 1, %s303
                $region57: #{dit_block.4} parent=50 // loop_footer_branch
                  %302 = sbr.rel target = $region53
                $region58: #{dit_block.4} parent=50 // loop_exit
                  _
                %s311 = ssub.s32 16, 1
                loop: start=0, step=1, limit=1
                $region59: #{dit_block.4} parent=50 // loop_pre_header
                  _
                $region60: #{dit_block.4} parent=50 // loop_header
                  %s313 = sphi 0, %s317
                  %p314 = scmp.ge.s32.totalorder %s313, 1
                  %s318 = sphi %s275, %s275
                  %s319 = sphi %s271, %s271
                $region61: #{dit_block.4} parent=50 // loop_header_branch
                  %316 = sbr.rel (%p314) target = $region65
                $region62: #{dit_block.4} parent=50 // loop_body
                  %v320 = vld [vmem:[%s318] sm:%s311]
                  %321 = vst [vmem:[%s319] sm:%s311] %v320
                  %v322 = vld [vmem:[%s318 + $0x8] sm:%s311]
                  %323 = vst [vmem:[%s319 + $0x4] sm:%s311] %v322
                  %v324 = vld [vmem:[%s318 + $0x10] sm:%s311]
                  %325 = vst [vmem:[%s319 + $0x8] sm:%s311] %v324
                  %v326 = vld [vmem:[%s318 + $0x18] sm:%s311]
                  %327 = vst [vmem:[%s319 + $0xc] sm:%s311] %v326
                $region63: #{dit_block.4} parent=50 // loop_footer
                  %s317 = sadd.s32 1, %s313
                $region64: #{dit_block.4} parent=50 // loop_footer_branch
                  %312 = sbr.rel target = $region60
                $region65: #{dit_block.4} parent=50 // loop_exit
                  _
              $region51: #{dit_block.4} parent=35 // pred_fallthru
                _
            $region36: #{dit_block.4} parent=31 // pred_fallthru
              _
            // Predicated region
            $region37: #{dit_block.4} parent=31 // pred_check
              _
            $region38: #{dit_block.4} parent=31 // pred_check_branch
              %281 = sbr.rel (0) target = $region40
            $region39: #{dit_block.4} parent=31 // pred_region
              %s283 = ssub.s32 16, 1
              loop: start=0, step=1, limit=1
              $region41: #{dit_block.4} parent=39 // loop_pre_header
                _
              $region42: #{dit_block.4} parent=39 // loop_header
                %s285 = sphi 0, %s289
                %p286 = scmp.ge.s32.totalorder %s285, 1
                %s290 = sphi %s275, %s275
                %s291 = sphi %s271, %s271
              $region43: #{dit_block.4} parent=39 // loop_header_branch
                %288 = sbr.rel (%p286) target = $region47
              $region44: #{dit_block.4} parent=39 // loop_body
                %v292 = vld [vmem:[%s290] sm:%s283]
                %293 = vst [vmem:[%s291] sm:%s283] %v292
                %v294 = vld [vmem:[%s290 + $0x8] sm:%s283]
                %295 = vst [vmem:[%s291 + $0x4] sm:%s283] %v294
                %v296 = vld [vmem:[%s290 + $0x10] sm:%s283]
                %297 = vst [vmem:[%s291 + $0x8] sm:%s283] %v296
                %v298 = vld [vmem:[%s290 + $0x18] sm:%s283]
                %299 = vst [vmem:[%s291 + $0xc] sm:%s283] %v298
              $region45: #{dit_block.4} parent=39 // loop_footer
                %s289 = sadd.s32 1, %s285
              $region46: #{dit_block.4} parent=39 // loop_footer_branch
                %284 = sbr.rel target = $region42
              $region47: #{dit_block.4} parent=39 // loop_exit
                _
            $region40: #{dit_block.4} parent=31 // pred_fallthru
              _
          $region32: #{dit_block.4} parent=27 // pred_fallthru
            _
          %328 = vnop
        $region28: #{dit_block.4} parent=23 // pred_fallthru
          _
        // Predicated region
        $region66: #{dit_block.4} parent=23 // pred_check
          %p329 = pneg %p82
        $region67: #{dit_block.4} parent=23 // pred_check_branch
          %331 = sbr.rel (%p329) target = $region69
        $region68: #{dit_block.4} parent=23 // pred_region
          %s332 = sand.u32 %s72, 1
          %s333 = sand.u32 %s72, 1
          %s334 = smul.addr %s333, 16
          %s335 = scalar_lea.vmem [#allocation6], %s334
          %s336 = smul.addr %s20, 8
          %s337 = sadd.s32 %s22, %s336
          %s338 = smul.addr %s337, 4
          %s339 = scalar_lea.vmem %s1, %s338
          // Predicated region
          $region70: #{dit_block.4} parent=68 // pred_check
            _
          $region71: #{dit_block.4} parent=68 // pred_check_branch
            %341 = sbr.rel (0) target = $region73
          $region72: #{dit_block.4} parent=68 // pred_region
            // Predicated region
            $region74: #{dit_block.4} parent=72 // pred_check
              _
            $region75: #{dit_block.4} parent=72 // pred_check_branch
              %343 = sbr.rel target = $region77
            $region76: #{dit_block.4} parent=72 // pred_region
              // Predicated region
              $region89: #{dit_block.4} parent=76 // pred_check
                _
              $region90: #{dit_block.4} parent=76 // pred_check_branch
                %365 = sbr.rel (0) target = $region92
              $region91: #{dit_block.4} parent=76 // pred_region
                loop: start=0, step=1, limit=1
                $region93: #{dit_block.4} parent=91 // loop_pre_header
                  _
                $region94: #{dit_block.4} parent=91 // loop_header
                  %s367 = sphi 0, %s371
                  %p368 = scmp.ge.s32.totalorder %s367, 1
                  %s372 = sphi %s339, %s339
                  %s373 = sphi %s335, %s335
                $region95: #{dit_block.4} parent=91 // loop_header_branch
                  %370 = sbr.rel (%p368) target = $region99
                $region96: #{dit_block.4} parent=91 // loop_body
                  _
                $region97: #{dit_block.4} parent=91 // loop_footer
                  %s371 = sadd.s32 1, %s367
                $region98: #{dit_block.4} parent=91 // loop_footer_branch
                  %366 = sbr.rel target = $region94
                $region99: #{dit_block.4} parent=91 // loop_exit
                  _
                %s375 = ssub.s32 16, 1
                loop: start=0, step=1, limit=1
                $region100: #{dit_block.4} parent=91 // loop_pre_header
                  _
                $region101: #{dit_block.4} parent=91 // loop_header
                  %s377 = sphi 0, %s381
                  %p378 = scmp.ge.s32.totalorder %s377, 1
                  %s382 = sphi %s339, %s339
                  %s383 = sphi %s335, %s335
                $region102: #{dit_block.4} parent=91 // loop_header_branch
                  %380 = sbr.rel (%p378) target = $region106
                $region103: #{dit_block.4} parent=91 // loop_body
                  %v384 = vld [vmem:[%s382] sm:%s375]
                  %385 = vst [vmem:[%s383] sm:%s375] %v384
                  %v386 = vld [vmem:[%s382 + $0x8] sm:%s375]
                  %387 = vst [vmem:[%s383 + $0x4] sm:%s375] %v386
                  %v388 = vld [vmem:[%s382 + $0x10] sm:%s375]
                  %389 = vst [vmem:[%s383 + $0x8] sm:%s375] %v388
                  %v390 = vld [vmem:[%s382 + $0x18] sm:%s375]
                  %391 = vst [vmem:[%s383 + $0xc] sm:%s375] %v390
                $region104: #{dit_block.4} parent=91 // loop_footer
                  %s381 = sadd.s32 1, %s377
                $region105: #{dit_block.4} parent=91 // loop_footer_branch
                  %376 = sbr.rel target = $region101
                $region106: #{dit_block.4} parent=91 // loop_exit
                  _
              $region92: #{dit_block.4} parent=76 // pred_fallthru
                _
            $region77: #{dit_block.4} parent=72 // pred_fallthru
              _
            // Predicated region
            $region78: #{dit_block.4} parent=72 // pred_check
              _
            $region79: #{dit_block.4} parent=72 // pred_check_branch
              %345 = sbr.rel (0) target = $region81
            $region80: #{dit_block.4} parent=72 // pred_region
              %s347 = ssub.s32 16, 1
              loop: start=0, step=1, limit=1
              $region82: #{dit_block.4} parent=80 // loop_pre_header
                _
              $region83: #{dit_block.4} parent=80 // loop_header
                %s349 = sphi 0, %s353
                %p350 = scmp.ge.s32.totalorder %s349, 1
                %s354 = sphi %s339, %s339
                %s355 = sphi %s335, %s335
              $region84: #{dit_block.4} parent=80 // loop_header_branch
                %352 = sbr.rel (%p350) target = $region88
              $region85: #{dit_block.4} parent=80 // loop_body
                %v356 = vld [vmem:[%s354] sm:%s347]
                %357 = vst [vmem:[%s355] sm:%s347] %v356
                %v358 = vld [vmem:[%s354 + $0x8] sm:%s347]
                %359 = vst [vmem:[%s355 + $0x4] sm:%s347] %v358
                %v360 = vld [vmem:[%s354 + $0x10] sm:%s347]
                %361 = vst [vmem:[%s355 + $0x8] sm:%s347] %v360
                %v362 = vld [vmem:[%s354 + $0x18] sm:%s347]
                %363 = vst [vmem:[%s355 + $0xc] sm:%s347] %v362
              $region86: #{dit_block.4} parent=80 // loop_footer
                %s353 = sadd.s32 1, %s349
              $region87: #{dit_block.4} parent=80 // loop_footer_branch
                %348 = sbr.rel target = $region83
              $region88: #{dit_block.4} parent=80 // loop_exit
                _
            $region81: #{dit_block.4} parent=72 // pred_fallthru
              _
          $region73: #{dit_block.4} parent=68 // pred_fallthru
            _
          %392 = vnop
        $region69: #{dit_block.4} parent=23 // pred_fallthru
          _
        // Predicated region
        $region107: #{dit_block.4} parent=23 // pred_check
          %p393 = pneg %p110
        $region108: #{dit_block.4} parent=23 // pred_check_branch
          %395 = sbr.rel (%p393) target = $region110
        $region109: #{dit_block.4} parent=23 // pred_region
          %s396 = sand.u32 %s100, 1
          %s397 = sand.u32 %s100, 1
          %s398 = smul.addr %s397, 16
          %s399 = scalar_lea.vmem [#allocation7], %s398
          %s400 = smul.addr %s20, 8
          %s401 = sadd.s32 %s22, %s400
          %s402 = smul.addr %s401, 4
          %s403 = scalar_lea.vmem %s2, %s402
          // Predicated region
          $region111: #{dit_block.4} parent=109 // pred_check
            _
          $region112: #{dit_block.4} parent=109 // pred_check_branch
            %405 = sbr.rel (0) target = $region114
          $region113: #{dit_block.4} parent=109 // pred_region
            // Predicated region
            $region115: #{dit_block.4} parent=113 // pred_check
              _
            $region116: #{dit_block.4} parent=113 // pred_check_branch
              %407 = sbr.rel target = $region118
            $region117: #{dit_block.4} parent=113 // pred_region
              // Predicated region
              $region130: #{dit_block.4} parent=117 // pred_check
                _
              $region131: #{dit_block.4} parent=117 // pred_check_branch
                %429 = sbr.rel (0) target = $region133
              $region132: #{dit_block.4} parent=117 // pred_region
                loop: start=0, step=1, limit=1
                $region134: #{dit_block.4} parent=132 // loop_pre_header
                  _
                $region135: #{dit_block.4} parent=132 // loop_header
                  %s431 = sphi 0, %s435
                  %p432 = scmp.ge.s32.totalorder %s431, 1
                  %s436 = sphi %s403, %s403
                  %s437 = sphi %s399, %s399
                $region136: #{dit_block.4} parent=132 // loop_header_branch
                  %434 = sbr.rel (%p432) target = $region140
                $region137: #{dit_block.4} parent=132 // loop_body
                  _
                $region138: #{dit_block.4} parent=132 // loop_footer
                  %s435 = sadd.s32 1, %s431
                $region139: #{dit_block.4} parent=132 // loop_footer_branch
                  %430 = sbr.rel target = $region135
                $region140: #{dit_block.4} parent=132 // loop_exit
                  _
                %s439 = ssub.s32 16, 1
                loop: start=0, step=1, limit=1
                $region141: #{dit_block.4} parent=132 // loop_pre_header
                  _
                $region142: #{dit_block.4} parent=132 // loop_header
                  %s441 = sphi 0, %s445
                  %p442 = scmp.ge.s32.totalorder %s441, 1
                  %s446 = sphi %s403, %s403
                  %s447 = sphi %s399, %s399
                $region143: #{dit_block.4} parent=132 // loop_header_branch
                  %444 = sbr.rel (%p442) target = $region147
                $region144: #{dit_block.4} parent=132 // loop_body
                  %v448 = vld [vmem:[%s446] sm:%s439]
                  %449 = vst [vmem:[%s447] sm:%s439] %v448
                  %v450 = vld [vmem:[%s446 + $0x8] sm:%s439]
                  %451 = vst [vmem:[%s447 + $0x4] sm:%s439] %v450
                  %v452 = vld [vmem:[%s446 + $0x10] sm:%s439]
                  %453 = vst [vmem:[%s447 + $0x8] sm:%s439] %v452
                  %v454 = vld [vmem:[%s446 + $0x18] sm:%s439]
                  %455 = vst [vmem:[%s447 + $0xc] sm:%s439] %v454
                $region145: #{dit_block.4} parent=132 // loop_footer
                  %s445 = sadd.s32 1, %s441
                $region146: #{dit_block.4} parent=132 // loop_footer_branch
                  %440 = sbr.rel target = $region142
                $region147: #{dit_block.4} parent=132 // loop_exit
                  _
              $region133: #{dit_block.4} parent=117 // pred_fallthru
                _
            $region118: #{dit_block.4} parent=113 // pred_fallthru
              _
            // Predicated region
            $region119: #{dit_block.4} parent=113 // pred_check
              _
            $region120: #{dit_block.4} parent=113 // pred_check_branch
              %409 = sbr.rel (0) target = $region122
            $region121: #{dit_block.4} parent=113 // pred_region
              %s411 = ssub.s32 16, 1
              loop: start=0, step=1, limit=1
              $region123: #{dit_block.4} parent=121 // loop_pre_header
                _
              $region124: #{dit_block.4} parent=121 // loop_header
                %s413 = sphi 0, %s417
                %p414 = scmp.ge.s32.totalorder %s413, 1
                %s418 = sphi %s403, %s403
                %s419 = sphi %s399, %s399
              $region125: #{dit_block.4} parent=121 // loop_header_branch
                %416 = sbr.rel (%p414) target = $region129
              $region126: #{dit_block.4} parent=121 // loop_body
                %v420 = vld [vmem:[%s418] sm:%s411]
                %421 = vst [vmem:[%s419] sm:%s411] %v420
                %v422 = vld [vmem:[%s418 + $0x8] sm:%s411]
                %423 = vst [vmem:[%s419 + $0x4] sm:%s411] %v422
                %v424 = vld [vmem:[%s418 + $0x10] sm:%s411]
                %425 = vst [vmem:[%s419 + $0x8] sm:%s411] %v424
                %v426 = vld [vmem:[%s418 + $0x18] sm:%s411]
                %427 = vst [vmem:[%s419 + $0xc] sm:%s411] %v426
              $region127: #{dit_block.4} parent=121 // loop_footer
                %s417 = sadd.s32 1, %s413
              $region128: #{dit_block.4} parent=121 // loop_footer_branch
                %412 = sbr.rel target = $region124
              $region129: #{dit_block.4} parent=121 // loop_exit
                _
            $region122: #{dit_block.4} parent=113 // pred_fallthru
              _
          $region114: #{dit_block.4} parent=109 // pred_fallthru
            _
          %456 = vnop
        $region110: #{dit_block.4} parent=23 // pred_fallthru
          _
        // Predicated region
        $region148: #{dit_block.4} parent=23 // pred_check
          %p457 = pneg %p138
        $region149: #{dit_block.4} parent=23 // pred_check_branch
          %459 = sbr.rel (%p457) target = $region151
        $region150: #{dit_block.4} parent=23 // pred_region
          %p460 = scmp.lt.s32.totalorder %s20, 1
          %s461 = scalar_select %p460, %s20, 1
          %p462 = scmp.lt.s32.totalorder %s21, 1
          %s463 = scalar_select %p462, %s21, 1
          %s464 = smul.addr %s461, 2
          %s465 = sadd.s32 %s463, %s464
          %s466 = smul.addr %s465, 8
          %s467 = scalar_lea.vmem %s3, %s466
        $region151: #{dit_block.4} parent=23 // pred_fallthru
          _
        // Predicated region
        $region152: #{dit_block.4} parent=23 // pred_check
          %p468 = pneg %p164
        $region153: #{dit_block.4} parent=23 // pred_check_branch
          %470 = sbr.rel (%p468) target = $region155
        $region154: #{dit_block.4} parent=23 // pred_region
          %p471 = scmp.lt.s32.totalorder %s20, 1
          %s472 = scalar_select %p471, %s20, 1
          %s473 = scalar_lea.vmem %s4, %s472
        $region155: #{dit_block.4} parent=23 // pred_fallthru
          _
      $region24: #{dit_block.4} parent=5 // pred_fallthru
        _
      %p474 = scmp.le.s32.totalorder 1, %s13
      %p475 = scmp.lt.s32.totalorder %s13, 9
      %p476 = pnand %p474, %p475
      %p477 = pneg %p476
      // Predicated region
      $region156: #{dit_block.4} parent=5 // pred_check
        _
      $region157: #{dit_block.4} parent=5 // pred_check_branch
        %479 = sbr.rel (%p476) target = $region159
      $region158: #{dit_block.4} parent=5 // pred_region
        %s480 = ssub.s32 %s13, 1
        %s481 = sand.u32 %s47, 1
        %s482 = sand.u32 %s47, 1
        %s483 = smul.addr %s482, 16
        %s484 = scalar_lea.vmem [#allocation5], %s483
        // Predicated region
        $region160: #{dit_block.4} parent=158 // pred_check
          %p485 = pneg %p60
        $region161: #{dit_block.4} parent=158 // pred_check_branch
          %487 = sbr.rel (%p485) target = $region163
        $region162: #{dit_block.4} parent=158 // pred_region
          _
        $region163: #{dit_block.4} parent=158 // pred_fallthru
          _
        %s488 = sand.u32 %s75, 1
        %s489 = sand.u32 %s75, 1
        %s490 = smul.addr %s489, 16
        %s491 = scalar_lea.vmem [#allocation6], %s490
        // Predicated region
        $region164: #{dit_block.4} parent=158 // pred_check
          %p492 = pneg %p88
        $region165: #{dit_block.4} parent=158 // pred_check_branch
          %494 = sbr.rel (%p492) target = $region167
        $region166: #{dit_block.4} parent=158 // pred_region
          _
        $region167: #{dit_block.4} parent=158 // pred_fallthru
          _
        %s495 = sand.u32 %s103, 1
        %s496 = sand.u32 %s103, 1
        %s497 = smul.addr %s496, 16
        %s498 = scalar_lea.vmem [#allocation7], %s497
        // Predicated region
        $region168: #{dit_block.4} parent=158 // pred_check
          %p499 = pneg %p116
        $region169: #{dit_block.4} parent=158 // pred_check_branch
          %501 = sbr.rel (%p499) target = $region171
        $region170: #{dit_block.4} parent=158 // pred_region
          _
        $region171: #{dit_block.4} parent=158 // pred_fallthru
          _
        %s502 = sand.u32 %s47, 1
        %s503 = sand.u32 %s47, 1
        %s504 = smul.addr %s503, 16
        %s505 = scalar_lea.vmem [#allocation5], %s504
        %p506 = pneg %p60
        %p507 = pneg %p57
        %s508 = sand.u32 %s75, 1
        %s509 = sand.u32 %s75, 1
        %s510 = smul.addr %s509, 16
        %s511 = scalar_lea.vmem [#allocation6], %s510
        %p512 = pneg %p88
        %p513 = pneg %p85
        %s514 = sand.u32 %s103, 1
        %s515 = sand.u32 %s103, 1
        %s516 = smul.addr %s515, 16
        %s517 = scalar_lea.vmem [#allocation7], %s516
        %p518 = pneg %p116
        %p519 = pneg %p113
        %p520 = scmp.lt.s32.totalorder %s23, 1
        %s521 = scalar_select %p520, %s23, 1
        %p522 = scmp.lt.s32.totalorder %s24, 1
        %s523 = scalar_select %p522, %s24, 1
        %s524 = smul.addr %s521, 2
        %s525 = sadd.s32 %s523, %s524
        %s526 = smul.addr %s525, 8
        %s527 = scalar_lea.vmem %s3, %s526
        %p528 = pneg %p144
        %p529 = pneg %p141
        %p530 = scmp.lt.s32.totalorder %s23, 1
        %s531 = scalar_select %p530, %s23, 1
        %s532 = scalar_lea.vmem %s4, %s531
        %p533 = pneg %p170
        %p534 = pneg %p167
        %p535 = pneg %p191
        %p536 = pneg %p188
        %p537 = pneg %p212
        %p538 = pneg %p209
        %p539 = pneg %p240
        %p540 = pneg %p237
        %p541 = scmp.lt.s32.totalorder %s23, 1
        %s542 = scalar_select %p541, %s23, 1
        %p543 = scmp.lt.s32.totalorder %s24, 1
        %s544 = scalar_select %p543, %s24, 1
        %s545 = smul.addr %s542, 2
        %s546 = sadd.s32 %s544, %s545
        %s547 = smul.addr %s546, 8
        %s548 = scalar_lea.vmem %s7, %s547
        %p549 = scmp.lt.s32.totalorder %s23, 1
        %s550 = scalar_select %p549, %s23, 1
        %p551 = scmp.lt.s32.totalorder %s24, 1
        %s552 = scalar_select %p551, %s24, 1
        %s553 = smul.addr %s550, 2
        %s554 = sadd.s32 %s552, %s553
        %s555 = smul.addr %s554, 8
        %s556 = scalar_lea.vmem %s3, %s555
        %p557 = scmp.lt.s32.totalorder %s23, 1
        %s558 = scalar_select %p557, %s23, 1
        %s559 = scalar_lea.vmem %s4, %s558
        %p560 = scmp.lt.s32.totalorder %s23, 1
        %s561 = scalar_select %p560, %s23, 1
        %p562 = scmp.lt.s32.totalorder %s24, 1
        %s563 = scalar_select %p562, %s24, 1
        %s564 = smul.addr %s561, 2
        %s565 = sadd.s32 %s563, %s564
        %s566 = smul.addr %s565, 8
        %s567 = scalar_lea.vmem %s7, %s566
        %p569 = scmp.eq.s32.totalorder %s25, 0
        // Predicated region
        $region172: #{dit_block.4} parent=158 // pred_check
          %p570 = pneg %p569
        $region173: #{dit_block.4} parent=158 // pred_check_branch
          %572 = sbr.rel (%p570) target = $region175
        $region174: #{dit_block.4} parent=158 // pred_region
          %vm573 = vcmask 7168
          %574 = vst.msk [vmem:[#allocation2] sm:$0xff] %vm573, -inf
          %575 = vst.msk [vmem:[#allocation2 + $0x8] sm:$0xff] %vm573, -inf
          %576 = vst.msk [vmem:[#allocation2 + $0x10] sm:$0xff] %vm573, -inf
          %577 = vst.msk [vmem:[#allocation2 + $0x18] sm:$0xff] %vm573, -inf
          %578 = vst.msk [vmem:[#allocation3] sm:$0xff] %vm573, 0.0
          %579 = vst.msk [vmem:[#allocation3 + $0x8] sm:$0xff] %vm573, 0.0
          %580 = vst.msk [vmem:[#allocation3 + $0x10] sm:$0xff] %vm573, 0.0
          %581 = vst.msk [vmem:[#allocation3 + $0x18] sm:$0xff] %vm573, 0.0
          %vm582 = vcmask 130048
          %583 = vst.msk [vmem:[#allocation4] sm:$0xff] %vm582, 0.0
          %584 = vst.msk [vmem:[#allocation4 + $0x8] sm:$0xff] %vm582, 0.0
          %585 = vst.msk [vmem:[#allocation4 + $0x10] sm:$0xff] %vm582, 0.0
          %586 = vst.msk [vmem:[#allocation4 + $0x18] sm:$0xff] %vm582, 0.0
        $region175: #{dit_block.4} parent=158 // pred_fallthru
          _
        %v587 = vld [vmem:[%s484] sm:$0xf]
        %v588 = vld [vmem:[%s484 + $0x4] sm:$0xf]
        %v589 = vld [vmem:[%s484 + $0x8] sm:$0xf]
        %v590 = vld [vmem:[%s484 + $0xc] sm:$0xf]
        %v591 = vld [vmem:[%s491] sm:$0xf]
        %v592 = vld [vmem:[%s491 + $0x4] sm:$0xf]
        %v593 = vld [vmem:[%s491 + $0x8] sm:$0xf]
        %v594 = vld [vmem:[%s491 + $0xc] sm:$0xf]
        %v595 = vld [vmem:[%s498] sm:$0xf]
        %v596 = vld [vmem:[%s498 + $0x4] sm:$0xf]
        %v597 = vld [vmem:[%s498 + $0x8] sm:$0xf]
        %v598 = vld [vmem:[%s498 + $0xc] sm:$0xf]
        %vm599 = vcmask 130048
        %v601 = vsel %vm599, %v587, 0
        %v604 = vsel %vm599, %v591, 0
        %606 = vmatpush.bf16.xpose.msra.mxu0 0
        %607 = vmatpush.bf16.xpose.msra.mxu0 0
        %608 = vmatpush.bf16.xpose.msra.mxu0 0
        %609 = vmatpush.bf16.xpose.msra.mxu0 0
        %610 = vmatpush.bf16.xpose.msra.mxu0 0
        %611 = vmatpush.bf16.xpose.msra.mxu0 0
        %612 = vmatpush.bf16.xpose.msra.mxu0 0
        %613 = vmatpush.bf16.xpose.msra.mxu0 %v604
        %614 = vmatmul.bf16.gmra.mxu0 %v601
        %v615 = vpop.f32.mrf.mxu0
        %v616 = vadd.f32 0.0, %v615
        %v617 = vpop.f32.mrf.mxu0
        %618 = vdwg.mxu0
        %v620 = vsel %vm599, %v588, 0
        %v623 = vsel %vm599, %v592, 0
        %625 = vmatpush.bf16.xpose.msra.mxu0 0
        %626 = vmatpush.bf16.xpose.msra.mxu0 0
        %627 = vmatpush.bf16.xpose.msra.mxu0 0
        %628 = vmatpush.bf16.xpose.msra.mxu0 0
        %629 = vmatpush.bf16.xpose.msra.mxu0 0
        %630 = vmatpush.bf16.xpose.msra.mxu0 0
        %631 = vmatpush.bf16.xpose.msra.mxu0 0
        %632 = vmatpush.bf16.xpose.msra.mxu0 %v623
        %633 = vmatmul.bf16.gmra.mxu0 %v620
        %v634 = vpop.f32.mrf.mxu0
        %v635 = vadd.f32 0.0, %v634
        %v636 = vpop.f32.mrf.mxu0
        %637 = vdwg.mxu0
        %v639 = vsel %vm599, %v589, 0
        %v642 = vsel %vm599, %v593, 0
        %644 = vmatpush.bf16.xpose.msra.mxu0 0
        %645 = vmatpush.bf16.xpose.msra.mxu0 0
        %646 = vmatpush.bf16.xpose.msra.mxu0 0
        %647 = vmatpush.bf16.xpose.msra.mxu0 0
        %648 = vmatpush.bf16.xpose.msra.mxu0 0
        %649 = vmatpush.bf16.xpose.msra.mxu0 0
        %650 = vmatpush.bf16.xpose.msra.mxu0 0
        %651 = vmatpush.bf16.xpose.msra.mxu0 %v642
        %652 = vmatmul.bf16.gmra.mxu0 %v639
        %v653 = vpop.f32.mrf.mxu0
        %v654 = vadd.f32 0.0, %v653
        %v655 = vpop.f32.mrf.mxu0
        %656 = vdwg.mxu0
        %v658 = vsel %vm599, %v590, 0
        %v661 = vsel %vm599, %v594, 0
        %663 = vmatpush.bf16.xpose.msra.mxu0 0
        %664 = vmatpush.bf16.xpose.msra.mxu0 0
        %665 = vmatpush.bf16.xpose.msra.mxu0 0
        %666 = vmatpush.bf16.xpose.msra.mxu0 0
        %667 = vmatpush.bf16.xpose.msra.mxu0 0
        %668 = vmatpush.bf16.xpose.msra.mxu0 0
        %669 = vmatpush.bf16.xpose.msra.mxu0 0
        %670 = vmatpush.bf16.xpose.msra.mxu0 %v661
        %671 = vmatmul.bf16.gmra.mxu0 %v658
        %v672 = vpop.f32.mrf.mxu0
        %v673 = vadd.f32 0.0, %v672
        %v674 = vpop.f32.mrf.mxu0
        %675 = vdwg.mxu0
        %v676 = vld [vmem:[#allocation2] sm:$0xff]
        %v677 = vld [vmem:[#allocation2 + $0x8] sm:$0xff]
        %v678 = vld [vmem:[#allocation2 + $0x10] sm:$0xff]
        %v679 = vld [vmem:[#allocation2 + $0x18] sm:$0xff]
        %vm680 = vcmask 64512
        %v681 = vsel %vm680, %v616, -inf
        %682 = vmax.xlane.f32.xlu0 %v681
        %v683 = vpop.xlane.xlu0 %682
        %v684 = vsel %vm680, %v635, -inf
        %685 = vmax.xlane.f32.xlu0 %v684
        %v686 = vpop.xlane.xlu0 %685
        %v687 = vsel %vm680, %v654, -inf
        %688 = vmax.xlane.f32.xlu0 %v687
        %v689 = vpop.xlane.xlu0 %688
        %v690 = vsel %vm680, %v673, -inf
        %691 = vmax.xlane.f32.xlu0 %v690
        %v692 = vpop.xlane.xlu0 %691
        %v693 = vmax.f32 %v676, %v683
        %v694 = vmax.f32 %v677, %v686
        %v695 = vmax.f32 %v678, %v689
        %v696 = vmax.f32 %v679, %v692
        %v697 = vsub.f32 %v676, %v693
        %v698 = vsub.f32 %v677, %v694
        %v699 = vsub.f32 %v678, %v695
        %v700 = vsub.f32 %v679, %v696
        %v701 = vmul.f32 %v697, 1.442695
        %v702 = vpow.pop %v701
        %v703 = vmul.f32 %v698, 1.442695
        %v704 = vpow.pop %v703
        %v705 = vmul.f32 %v699, 1.442695
        %v706 = vpow.pop %v705
        %v707 = vmul.f32 %v700, 1.442695
        %v708 = vpow.pop %v707
        %710 = vset.pattern.permute.xlu0 0
        %711 = vperm.xlu0 %710, %v693
        %v712 = vpop.permute.xlu0 %711
        %715 = vset.pattern.permute.xlu0 0
        %716 = vperm.xlu0 %715, %v694
        %v717 = vpop.permute.xlu0 %716
        %720 = vset.pattern.permute.xlu0 0
        %721 = vperm.xlu0 %720, %v695
        %v722 = vpop.permute.xlu0 %721
        %725 = vset.pattern.permute.xlu0 0
        %726 = vperm.xlu0 %725, %v696
        %v727 = vpop.permute.xlu0 %726
        %v729 = vsub.f32 %v616, %v712
        %v730 = vsub.f32 %v635, %v717
        %v731 = vsub.f32 %v654, %v722
        %v732 = vsub.f32 %v673, %v727
        %v733 = vmul.f32 %v729, 1.442695
        %v734 = vpow.pop %v733
        %v735 = vmul.f32 %v730, 1.442695
        %v736 = vpow.pop %v735
        %v737 = vmul.f32 %v731, 1.442695
        %v738 = vpow.pop %v737
        %v739 = vmul.f32 %v732, 1.442695
        %v740 = vpow.pop %v739
        %v741 = vld [vmem:[#allocation3] sm:$0xff]
        %v742 = vld [vmem:[#allocation3 + $0x8] sm:$0xff]
        %v743 = vld [vmem:[#allocation3 + $0x10] sm:$0xff]
        %v744 = vld [vmem:[#allocation3 + $0x18] sm:$0xff]
        %v745 = vmul.f32 %v702, %v741
        %v746 = vmul.f32 %v704, %v742
        %v747 = vmul.f32 %v706, %v743
        %v748 = vmul.f32 %v708, %v744
        %v749 = vsel %vm680, %v734, 0.0
        %750 = vadd.xlane.f32.xlu0 %v749
        %v751 = vpop.xlane.xlu0 %750
        %v752 = vsel %vm680, %v736, 0.0
        %753 = vadd.xlane.f32.xlu0 %v752
        %v754 = vpop.xlane.xlu0 %753
        %v755 = vsel %vm680, %v738, 0.0
        %756 = vadd.xlane.f32.xlu0 %v755
        %v757 = vpop.xlane.xlu0 %756
        %v758 = vsel %vm680, %v740, 0.0
        %759 = vadd.xlane.f32.xlu0 %v758
        %v760 = vpop.xlane.xlu0 %759
        %v761 = vadd.f32 %v745, %v751
        %v762 = vadd.f32 %v746, %v754
        %v763 = vadd.f32 %v747, %v757
        %v764 = vadd.f32 %v748, %v760
        %vm765 = vcmask 7168
        %766 = vst.msk [vmem:[#allocation3] sm:$0xff] %vm765, %v761
        %767 = vst.msk [vmem:[#allocation3 + $0x8] sm:$0xff] %vm765, %v762
        %768 = vst.msk [vmem:[#allocation3 + $0x10] sm:$0xff] %vm765, %v763
        %769 = vst.msk [vmem:[#allocation3 + $0x18] sm:$0xff] %vm765, %v764
        %v770 = vld [vmem:[#allocation4] sm:$0xff]
        %v771 = vld [vmem:[#allocation4 + $0x8] sm:$0xff]
        %v772 = vld [vmem:[#allocation4 + $0x10] sm:$0xff]
        %v773 = vld [vmem:[#allocation4 + $0x18] sm:$0xff]
        %775 = vset.pattern.permute.xlu0 0
        %776 = vperm.xlu0 %775, %v702
        %v777 = vpop.permute.xlu0 %776
        %780 = vset.pattern.permute.xlu0 0
        %781 = vperm.xlu0 %780, %v704
        %v782 = vpop.permute.xlu0 %781
        %785 = vset.pattern.permute.xlu0 0
        %786 = vperm.xlu0 %785, %v706
        %v787 = vpop.permute.xlu0 %786
        %790 = vset.pattern.permute.xlu0 0
        %791 = vperm.xlu0 %790, %v708
        %v792 = vpop.permute.xlu0 %791
        %v794 = vmul.f32 %v777, %v770
        %v795 = vmul.f32 %v782, %v771
        %v796 = vmul.f32 %v787, %v772
        %v797 = vmul.f32 %v792, %v773
        %v798 = vpack.c.bf16 %v734, %v734
        %v799 = vpack.c.bf16 %v736, %v736
        %v800 = vpack.c.bf16 %v738, %v738
        %v801 = vpack.c.bf16 %v740, %v740
        %v803 = vsel %vm680, %v798, 0
        %vm805 = vcmask 1043456
        %v807 = vsel %vm805, %v595, 0
        %809 = vmatpush.bf16.msra.mxu0 0
        %810 = vmatpush.bf16.msra.mxu0 0
        %811 = vmatpush.bf16.msra.mxu0 0
        %812 = vmatpush.bf16.msra.mxu0 0
        %813 = vmatpush.bf16.msra.mxu0 0
        %814 = vmatpush.bf16.msra.mxu0 0
        %815 = vmatpush.bf16.msra.mxu0 0
        %816 = vmatpush.bf16.msra.mxu0 %v807
        %817 = vmatmul.bf16.gmra.mxu0 %v803
        %v818 = vpop.f32.mrf.mxu0
        %v819 = vadd.f32 0.0, %v818
        %v820 = vpop.f32.mrf.mxu0
        %821 = vdwg.mxu0
        %v823 = vsel %vm680, %v799, 0
        %v826 = vsel %vm805, %v596, 0
        %828 = vmatpush.bf16.msra.mxu0 0
        %829 = vmatpush.bf16.msra.mxu0 0
        %830 = vmatpush.bf16.msra.mxu0 0
        %831 = vmatpush.bf16.msra.mxu0 0
        %832 = vmatpush.bf16.msra.mxu0 0
        %833 = vmatpush.bf16.msra.mxu0 0
        %834 = vmatpush.bf16.msra.mxu0 0
        %835 = vmatpush.bf16.msra.mxu0 %v826
        %836 = vmatmul.bf16.gmra.mxu0 %v823
        %v837 = vpop.f32.mrf.mxu0
        %v838 = vadd.f32 0.0, %v837
        %v839 = vpop.f32.mrf.mxu0
        %840 = vdwg.mxu0
        %v842 = vsel %vm680, %v800, 0
        %v845 = vsel %vm805, %v597, 0
        %847 = vmatpush.bf16.msra.mxu0 0
        %848 = vmatpush.bf16.msra.mxu0 0
        %849 = vmatpush.bf16.msra.mxu0 0
        %850 = vmatpush.bf16.msra.mxu0 0
        %851 = vmatpush.bf16.msra.mxu0 0
        %852 = vmatpush.bf16.msra.mxu0 0
        %853 = vmatpush.bf16.msra.mxu0 0
        %854 = vmatpush.bf16.msra.mxu0 %v845
        %855 = vmatmul.bf16.gmra.mxu0 %v842
        %v856 = vpop.f32.mrf.mxu0
        %v857 = vadd.f32 0.0, %v856
        %v858 = vpop.f32.mrf.mxu0
        %859 = vdwg.mxu0
        %v861 = vsel %vm680, %v801, 0
        %v864 = vsel %vm805, %v598, 0
        %866 = vmatpush.bf16.msra.mxu0 0
        %867 = vmatpush.bf16.msra.mxu0 0
        %868 = vmatpush.bf16.msra.mxu0 0
        %869 = vmatpush.bf16.msra.mxu0 0
        %870 = vmatpush.bf16.msra.mxu0 0
        %871 = vmatpush.bf16.msra.mxu0 0
        %872 = vmatpush.bf16.msra.mxu0 0
        %873 = vmatpush.bf16.msra.mxu0 %v864
        %874 = vmatmul.bf16.gmra.mxu0 %v861
        %v875 = vpop.f32.mrf.mxu0
        %v876 = vadd.f32 0.0, %v875
        %v877 = vpop.f32.mrf.mxu0
        %878 = vdwg.mxu0
        %v879 = vadd.f32 %v794, %v819
        %v880 = vadd.f32 %v795, %v838
        %v881 = vadd.f32 %v796, %v857
        %v882 = vadd.f32 %v797, %v876
        %883 = vst.msk [vmem:[#allocation4] sm:$0xff] %vm599, %v879
        %884 = vst.msk [vmem:[#allocation4 + $0x8] sm:$0xff] %vm599, %v880
        %885 = vst.msk [vmem:[#allocation4 + $0x10] sm:$0xff] %vm599, %v881
        %886 = vst.msk [vmem:[#allocation4 + $0x18] sm:$0xff] %vm599, %v882
        %887 = vst.msk [vmem:[#allocation2] sm:$0xff] %vm765, %v693
        %888 = vst.msk [vmem:[#allocation2 + $0x8] sm:$0xff] %vm765, %v694
        %889 = vst.msk [vmem:[#allocation2 + $0x10] sm:$0xff] %vm765, %v695
        %890 = vst.msk [vmem:[#allocation2 + $0x18] sm:$0xff] %vm765, %v696
        %p891 = scmp.eq.s32.totalorder %s25, 1
        // Predicated region
        $region176: #{dit_block.4} parent=158 // pred_check
          %p892 = pneg %p891
        $region177: #{dit_block.4} parent=158 // pred_check_branch
          %894 = sbr.rel (%p892) target = $region179
        $region178: #{dit_block.4} parent=158 // pred_region
          %v895 = vld [vmem:[#allocation4] sm:$0xff]
          %v896 = vld [vmem:[#allocation4 + $0x8] sm:$0xff]
          %v897 = vld [vmem:[#allocation4 + $0x10] sm:$0xff]
          %v898 = vld [vmem:[#allocation4 + $0x18] sm:$0xff]
          %v899 = vld [vmem:[#allocation3] sm:$0xff]
          %v900 = vld [vmem:[#allocation3 + $0x8] sm:$0xff]
          %v901 = vld [vmem:[#allocation3 + $0x10] sm:$0xff]
          %v902 = vld [vmem:[#allocation3 + $0x18] sm:$0xff]
          %v903 = vrcp.pop %v899
          %v904 = vrcp.pop %v900
          %v905 = vrcp.pop %v901
          %v906 = vrcp.pop %v902
          %908 = vset.pattern.permute.xlu0 0
          %909 = vperm.xlu0 %908, %v903
          %v910 = vpop.permute.xlu0 %909
          %913 = vset.pattern.permute.xlu0 0
          %914 = vperm.xlu0 %913, %v904
          %v915 = vpop.permute.xlu0 %914
          %918 = vset.pattern.permute.xlu0 0
          %919 = vperm.xlu0 %918, %v905
          %v920 = vpop.permute.xlu0 %919
          %923 = vset.pattern.permute.xlu0 0
          %924 = vperm.xlu0 %923, %v906
          %v925 = vpop.permute.xlu0 %924
          %v927 = vmul.f32 %v895, %v910
          %v928 = vmul.f32 %v896, %v915
          %v929 = vmul.f32 %v897, %v920
          %v930 = vmul.f32 %v898, %v925
          %932 = vrot.lane.b32.xlu0 %v928, 16
          %v933 = vpop.permute.xlu0 %932
          %936 = vrot.lane.b32.xlu0 %v929, 32
          %v937 = vpop.permute.xlu0 %936
          %940 = vrot.lane.b32.xlu0 %v930, 48
          %v941 = vpop.permute.xlu0 %940
          %v943 = vsel %vm599, %v927, %v933
          %vm944 = vcmask 261120
          %v945 = vsel %vm944, %v943, %v937
          %vm946 = vcmask 392192
          %v947 = vsel %vm946, %v945, %v941
          %v948 = vpack.c.bf16 %v947, %v947
          %v949 = vld [vmem:[%s5] sm:$0xf]
          %v950 = vld [vmem:[%s5 + $0x4] sm:$0xf]
          %v951 = vld [vmem:[%s5 + $0x8] sm:$0xf]
          %v952 = vld [vmem:[%s5 + $0xc] sm:$0xf]
          %v953 = vld [vmem:[%s5 + $0x10] sm:$0xf]
          %v954 = vld [vmem:[%s5 + $0x14] sm:$0xf]
          %v955 = vld [vmem:[%s5 + $0x18] sm:$0xf]
          %v956 = vld [vmem:[%s5 + $0x1c] sm:$0xf]
          %v957 = vld [vmem:[%s6] sm:$0x1]
          %v959 = vperm.slane %v957, 0
          %v969 = vunpack.c.l.b16 %v949
          %v970 = vunpack.c.l.b16 %v950
          %v971 = vunpack.c.l.b16 %v951
          %v972 = vunpack.c.l.b16 %v952
          %v973 = vunpack.c.l.b16 %v953
          %v974 = vunpack.c.l.b16 %v954
          %v975 = vunpack.c.l.b16 %v955
          %v976 = vunpack.c.l.b16 %v956
          %v977 = vpack.c.b16 %v970, %v969
          %v978 = vpack.c.b16 %v972, %v971
          %v979 = vpack.c.b16 %v974, %v973
          %v980 = vpack.c.b16 %v976, %v975
          %vm985 = vcmask 523264
          %v987 = vsel %vm985, %v948, 0
          %989 = vmatpush.bf16.msra.mxu0 0
          %990 = vmatpush.bf16.msra.mxu0 0
          %991 = vmatpush.bf16.msra.mxu0 0
          %992 = vmatpush.bf16.msra.mxu0 0
          %993 = vmatpush.bf16.msra.mxu0 %v980
          %994 = vmatpush.bf16.msra.mxu0 %v979
          %995 = vmatpush.bf16.msra.mxu0 %v978
          %996 = vmatpush.bf16.msra.mxu0 %v977
          %997 = vmatmul.bf16.gmra.mxu0 %v987
          %v998 = vpop.f32.mrf.mxu0
          %v999 = vadd.f32 %v959, %v998
          %v1000 = vpop.f32.mrf.mxu0
          %1001 = vdwg.mxu0
          %v1002 = vld [vmem:[%s556] sm:$0xff]
          %v1003 = vld [vmem:[%s559] sm:$0x1]
          %v1005 = vperm.slane %v1003, 0
          %v1007 = vmul.f32 %v1005, %v999
          %v1008 = vadd.f32 %v1002, %v1007
          %1009 = vst.msk [vmem:[%s567] sm:$0xff] %vm985, %v1008
        $region179: #{dit_block.4} parent=158 // pred_fallthru
          _
        %p1010 = scmp.lt.s32.totalorder %s23, 1
        %s1011 = scalar_select %p1010, %s23, 1
        %p1012 = scmp.lt.s32.totalorder %s24, 1
        %s1013 = scalar_select %p1012, %s24, 1
        %s1014 = smul.addr %s1011, 2
        %s1015 = sadd.s32 %s1013, %s1014
        %s1016 = smul.addr %s1015, 8
        %s1017 = scalar_lea.vmem %s7, %s1016
        // Predicated region
        $region180: #{dit_block.4} parent=158 // pred_check
          %p1018 = pneg %p237
        $region181: #{dit_block.4} parent=158 // pred_check_branch
          %1020 = sbr.rel (%p1018) target = $region183
        $region182: #{dit_block.4} parent=158 // pred_region
          _
        $region183: #{dit_block.4} parent=158 // pred_fallthru
          _
      $region159: #{dit_block.4} parent=5 // pred_fallthru
        _
      %p1021 = scmp.le.s32.totalorder 2, %s13
      // Predicated region
      $region184: #{dit_block.4} parent=5 // pred_check
        %p1022 = pneg %p1021
      $region185: #{dit_block.4} parent=5 // pred_check_branch
        %1024 = sbr.rel (%p1022) target = $region187
      $region186: #{dit_block.4} parent=5 // pred_region
        %s1025 = ssub.s32 %s13, 2
        // Predicated region
        $region188: #{dit_block.4} parent=186 // pred_check
          %p1026 = pneg %p243
        $region189: #{dit_block.4} parent=186 // pred_check_branch
          %1028 = sbr.rel (%p1026) target = $region191
        $region190: #{dit_block.4} parent=186 // pred_region
          %p1029 = scmp.lt.s32.totalorder %s26, 1
          %s1030 = scalar_select %p1029, %s26, 1
          %p1031 = scmp.lt.s32.totalorder %s27, 1
          %s1032 = scalar_select %p1031, %s27, 1
          %s1033 = smul.addr %s1030, 2
          %s1034 = sadd.s32 %s1032, %s1033
          %s1035 = smul.addr %s1034, 8
          %s1036 = scalar_lea.vmem %s7, %s1035
        $region191: #{dit_block.4} parent=186 // pred_fallthru
          _
      $region187: #{dit_block.4} parent=5 // pred_fallthru
        _
    $region6: #{dit_block.4} parent=1 // loop_footer
      %s17 = sadd.s32 1, %s13
    $region7: #{dit_block.4} parent=1 // loop_footer_branch
      %12 = sbr.rel target = $region3
    $region8: #{dit_block.4} parent=1 // loop_exit
      _

// kernel: dit_block.5
$region0: #{dit_block.5}
  #allocation0 [shape = 'u32[]', space=smem, size = 0x4, offset = 0x4, fixed_abs, tag = 'smem constant byte address 0x4 - core index']
  #allocation1 [shape = 'u32[72,128]{1,0:T(1,128)}', space=vmem, size = 0x9000, scoped, tag = 'internal scratch']
  #allocation2 [shape = 'bf16[8,64]{1,0:T(8,128)(2,1)}', space=vmem, size = 0x800, scoped, tag = 'scratch operand']
  #allocation3 [shape = 'f32[8,64]{1,0:T(8,128)}', space=vmem, size = 0x1000, scoped, tag = 'scratch operand']
  %s0 = inlined_call_operand.vmem [shape: f32[2,16,64], index: 0, kind: input, shape index: {}]
  %s1 = inlined_call_operand.vmem [shape: f32[2,1,64], index: 1, kind: input, shape index: {}]
  %s2 = inlined_call_operand.vmem [shape: f32[2,1,64], index: 2, kind: input, shape index: {}]
  %s3 = inlined_call_operand.vmem [shape: f32[2,1,64], index: 3, kind: input, shape index: {}]
  %s4 = inlined_call_operand.vmem [shape: bf16[64,256], index: 4, kind: input, shape index: {}]
  %s5 = inlined_call_operand.vmem [shape: f32[1,256], index: 5, kind: input, shape index: {}]
  %s6 = inlined_call_operand.vmem [shape: bf16[256,64], index: 6, kind: input, shape index: {}]
  %s7 = inlined_call_operand.vmem [shape: f32[1,64], index: 7, kind: input, shape index: {}]
  %s8 = inlined_call_operand.hbm [shape: f32[2,16,64], index: 8, kind: output, shape index: {}]
  %s9 = sld [smem:[#allocation0]]
  $region114: #{dit_block.5} parent=0
    _
  %s11 = ssub.s32 1, %s9
  %s12 = scalar_select 0, %s11, %s9
  $region1: #{dit_block.5} parent=0
    #allocation4 [shape = 'u8[32768]{0}', space=vmem, size = 0x8000, scoped, tag = 'input window, operand 4']
    #allocation5 [shape = 'u8[8192]{0}', space=vmem, size = 0x2000, scoped, tag = 'output window, operand 0']
    #allocation6 [shape = 's32[2]{0}', space=sflag, size = 0x8, scoped, tag = 'scoped memory for dit_block.5']
    %13 = vsyncpa [#allocation6], 0
    %s14 = scalar_lea.sflag [#allocation6], 1
    %15 = vsyncpa %s14, 0
    loop: start=0, step=1, limit=10
    $region2: #{dit_block.5} parent=1 // loop_pre_header
      _
    $region3: #{dit_block.5} parent=1 // loop_header
      %s17 = sphi 0, %s21
      %p18 = scmp.ge.s32.totalorder %s17, 10
      %s24 = sphi 0, %s43
      %s25 = sphi 0, %s39
      %s26 = sphi 0, %s35
      %s27 = sphi 0, %s24
      %s28 = sphi 0, %s25
      %s29 = sphi 0, %s26
      %s30 = sphi 0, %s27
      %s31 = sphi 0, %s28
      %s32 = sphi 0, %s29
      %s48 = sphi 0, %s50
      %s51 = sphi 0, %s48
      %s52 = sphi 0, %s51
      %s68 = sphi 0, %s52
      %s74 = sphi 0, %s76
      %s77 = sphi 0, %s74
      %s78 = sphi 0, %s77
      %s94 = sphi 0, %s78
      %s100 = sphi 0, %s102
      %s103 = sphi 0, %s100
      %s104 = sphi 0, %s103
      %s120 = sphi 0, %s104
      %s126 = sphi 0, %s128
      %s129 = sphi 0, %s126
      %s130 = sphi 0, %s129
      %s146 = sphi 0, %s130
      %s152 = sphi 0, %s154
      %s155 = sphi 0, %s152
      %s156 = sphi 0, %s155
      %s172 = sphi 0, %s156
      %s178 = sphi 0, %s180
      %s181 = sphi 0, %s178
      %s182 = sphi 0, %s181
      %s198 = sphi 0, %s182
      %s204 = sphi 0, %s206
      %s207 = sphi 0, %s204
      %s208 = sphi 0, %s207
      %s224 = sphi 0, %s208
      %s228 = sphi 0, %s228
      %s230 = sphi 0, %s228
      %s231 = sphi 0, %s230
      %s245 = sphi 0, %s231
      %s253 = sphi 0, %s255
      %s256 = sphi 0, %s253
      %s257 = sphi 0, %s256
      %s273 = sphi 0, %s257
    $region4: #{dit_block.5} parent=1 // loop_header_branch
      %20 = sbr.rel (%p18) target = $region8
    $region5: #{dit_block.5} parent=1 // loop_body
      %s22 = ssub.s32 %s17, 1
      %s23 = ssub.s32 %s17, 2
      %s33 = sadd.s32 1, %s26
      %p34 = scmp.ge.s32.totalorder %s33, 2
      %s35 = scalar_select %p34, 0, %s33
      %s36 = sadd.s32 1, %s25
      %s37 = scalar_select %p34, %s36, %s25
      %p38 = scmp.ge.s32.totalorder %s37, 2
      %s39 = scalar_select %p38, 0, %s37
      %s40 = sadd.s32 1, %s24
      %s41 = scalar_select %p38, %s40, %s24
      %p42 = scmp.ge.s32.totalorder %s41, 2
      %s43 = scalar_select %p42, 0, %s41
      %s44 = ssub.s32 %s24, %s43
      %s45 = ssub.s32 %s25, %s39
      %s46 = sor.u32 %s44, %s45
      %p47 = scmp.eq.s32.totalorder %s46, 0
      %s49 = sadd.s32 %s48, 1
      %s50 = scalar_select %p47, %s48, %s49
      %p53 = pneg %p47
      %p54 = scmp.eq.s32.totalorder %s17, 7
      %p55 = por %p53, %p54
      %p56 = scmp.ne.s32.totalorder %s48, %s51
      %p57 = scmp.eq.s32.totalorder %s17, 0
      %p58 = por %p56, %p57
      %p59 = scmp.ne.s32.totalorder %s48, %s51
      %p60 = scmp.eq.s32.totalorder %s22, 7
      %p61 = por %p59, %p60
      %p62 = scmp.ne.s32.totalorder %s51, %s52
      %p63 = scmp.eq.s32.totalorder %s22, 0
      %p64 = por %p62, %p63
      %p65 = scmp.ne.s32.totalorder %s51, %s52
      %p66 = scmp.eq.s32.totalorder %s23, 7
      %p67 = por %p65, %p66
      %p69 = scmp.ne.s32.totalorder %s52, %s68
      %p70 = scmp.eq.s32.totalorder %s23, 0
      %p71 = por %p69, %p70
      %s72 = ssub.s32 %s24, %s43
      %p73 = scmp.eq.s32.totalorder %s72, 0
      %s75 = sadd.s32 %s74, 1
      %s76 = scalar_select %p73, %s74, %s75
      %p79 = pneg %p73
      %p80 = scmp.eq.s32.totalorder %s17, 7
      %p81 = por %p79, %p80
      %p82 = scmp.ne.s32.totalorder %s74, %s77
      %p83 = scmp.eq.s32.totalorder %s17, 0
      %p84 = por %p82, %p83
      %p85 = scmp.ne.s32.totalorder %s74, %s77
      %p86 = scmp.eq.s32.totalorder %s22, 7
      %p87 = por %p85, %p86
      %p88 = scmp.ne.s32.totalorder %s77, %s78
      %p89 = scmp.eq.s32.totalorder %s22, 0
      %p90 = por %p88, %p89
      %p91 = scmp.ne.s32.totalorder %s77, %s78
      %p92 = scmp.eq.s32.totalorder %s23, 7
      %p93 = por %p91, %p92
      %p95 = scmp.ne.s32.totalorder %s78, %s94
      %p96 = scmp.eq.s32.totalorder %s23, 0
      %p97 = por %p95, %p96
      %s98 = ssub.s32 %s24, %s43
      %p99 = scmp.eq.s32.totalorder %s98, 0
      %s101 = sadd.s32 %s100, 1
      %s102 = scalar_select %p99, %s100, %s101
      %p105 = pneg %p99
      %p106 = scmp.eq.s32.totalorder %s17, 7
      %p107 = por %p105, %p106
      %p108 = scmp.ne.s32.totalorder %s100, %s103
      %p109 = scmp.eq.s32.totalorder %s17, 0
      %p110 = por %p108, %p109
      %p111 = scmp.ne.s32.totalorder %s100, %s103
      %p112 = scmp.eq.s32.totalorder %s22, 7
      %p113 = por %p111, %p112
      %p114 = scmp.ne.s32.totalorder %s103, %s104
      %p115 = scmp.eq.s32.totalorder %s22, 0
      %p116 = por %p114, %p115
      %p117 = scmp.ne.s32.totalorder %s103, %s104
      %p118 = scmp.eq.s32.totalorder %s23, 7
      %p119 = por %p117, %p118
      %p121 = scmp.ne.s32.totalorder %s104, %s120
      %p122 = scmp.eq.s32.totalorder %s23, 0
      %p123 = por %p121, %p122
      %s124 = ssub.s32 %s24, %s43
      %p125 = scmp.eq.s32.totalorder %s124, 0
      %s127 = sadd.s32 %s126, 1
      %s128 = scalar_select %p125, %s126, %s127
      %p131 = pneg %p125
      %p132 = scmp.eq.s32.totalorder %s17, 7
      %p133 = por %p131, %p132
      %p134 = scmp.ne.s32.totalorder %s126, %s129
      %p135 = scmp.eq.s32.totalorder %s17, 0
      %p136 = por %p134, %p135
      %p137 = scmp.ne.s32.totalorder %s126, %s129
      %p138 = scmp.eq.s32.totalorder %s22, 7
      %p139 = por %p137, %p138
      %p140 = scmp.ne.s32.totalorder %s129, %s130
      %p141 = scmp.eq.s32.totalorder %s22, 0
      %p142 = por %p140, %p141
      %p143 = scmp.ne.s32.totalorder %s129, %s130
      %p144 = scmp.eq.s32.totalorder %s23, 7
      %p145 = por %p143, %p144
      %p147 = scmp.ne.s32.totalorder %s130, %s146
      %p148 = scmp.eq.s32.totalorder %s23, 0
      %p149 = por %p147, %p148
      %s150 = ssub.s32 %s26, %s35
      %p151 = scmp.eq.s32.totalorder %s150, 0
      %s153 = sadd.s32 %s152, 1
      %s154 = scalar_select %p151, %s152, %s153
      %p157 = pneg %p151
      %p158 = scmp.eq.s32.totalorder %s17, 7
      %p159 = por %p157, %p158
      %p160 = scmp.ne.s32.totalorder %s152, %s155
      %p161 = scmp.eq.s32.totalorder %s17, 0
      %p162 = por %p160, %p161
      %p163 = scmp.ne.s32.totalorder %s152, %s155
      %p164 = scmp.eq.s32.totalorder %s22, 7
      %p165 = por %p163, %p164
      %p166 = scmp.ne.s32.totalorder %s155, %s156
      %p167 = scmp.eq.s32.totalorder %s22, 0
      %p168 = por %p166, %p167
      %p169 = scmp.ne.s32.totalorder %s155, %s156
      %p170 = scmp.eq.s32.totalorder %s23, 7
      %p171 = por %p169, %p170
      %p173 = scmp.ne.s32.totalorder %s156, %s172
      %p174 = scmp.eq.s32.totalorder %s23, 0
      %p175 = por %p173, %p174
      %s176 = ssub.s32 %s26, %s35
      %p177 = scmp.eq.s32.totalorder %s176, 0
      %s179 = sadd.s32 %s178, 1
      %s180 = scalar_select %p177, %s178, %s179
      %p183 = pneg %p177
      %p184 = scmp.eq.s32.totalorder %s17, 7
      %p185 = por %p183, %p184
      %p186 = scmp.ne.s32.totalorder %s178, %s181
      %p187 = scmp.eq.s32.totalorder %s17, 0
      %p188 = por %p186, %p187
      %p189 = scmp.ne.s32.totalorder %s178, %s181
      %p190 = scmp.eq.s32.totalorder %s22, 7
      %p191 = por %p189, %p190
      %p192 = scmp.ne.s32.totalorder %s181, %s182
      %p193 = scmp.eq.s32.totalorder %s22, 0
      %p194 = por %p192, %p193
      %p195 = scmp.ne.s32.totalorder %s181, %s182
      %p196 = scmp.eq.s32.totalorder %s23, 7
      %p197 = por %p195, %p196
      %p199 = scmp.ne.s32.totalorder %s182, %s198
      %p200 = scmp.eq.s32.totalorder %s23, 0
      %p201 = por %p199, %p200
      %s202 = ssub.s32 %s26, %s35
      %p203 = scmp.eq.s32.totalorder %s202, 0
      %s205 = sadd.s32 %s204, 1
      %s206 = scalar_select %p203, %s204, %s205
      %p209 = pneg %p203
      %p210 = scmp.eq.s32.totalorder %s17, 7
      %p211 = por %p209, %p210
      %p212 = scmp.ne.s32.totalorder %s204, %s207
      %p213 = scmp.eq.s32.totalorder %s17, 0
      %p214 = por %p212, %p213
      %p215 = scmp.ne.s32.totalorder %s204, %s207
      %p216 = scmp.eq.s32.totalorder %s22, 7
      %p217 = por %p215, %p216
      %p218 = scmp.ne.s32.totalorder %s207, %s208
      %p219 = scmp.eq.s32.totalorder %s22, 0
      %p220 = por %p218, %p219
      %p221 = scmp.ne.s32.totalorder %s207, %s208
      %p222 = scmp.eq.s32.totalorder %s23, 7
      %p223 = por %p221, %p222
      %p225 = scmp.ne.s32.totalorder %s208, %s224
      %p226 = scmp.eq.s32.totalorder %s23, 0
      %p227 = por %p225, %p226
      %s229 = sadd.s32 %s228, 1
      %p232 = scmp.eq.s32.totalorder %s17, 7
      %p233 = scmp.ne.s32.totalorder %s228, %s230
      %p234 = scmp.eq.s32.totalorder %s17, 0
      %p235 = por %p233, %p234
      %p236 = scmp.ne.s32.totalorder %s228, %s230
      %p237 = scmp.eq.s32.totalorder %s22, 7
      %p238 = por %p236, %p237
      %p239 = scmp.ne.s32.totalorder %s230, %s231
      %p240 = scmp.eq.s32.totalorder %s22, 0
      %p241 = por %p239, %p240
      %p242 = scmp.ne.s32.totalorder %s230, %s231
      %p243 = scmp.eq.s32.totalorder %s23, 7
      %p244 = por %p242, %p243
      %p246 = scmp.ne.s32.totalorder %s231, %s245
      %p247 = scmp.eq.s32.totalorder %s23, 0
      %p248 = por %p246, %p247
      %s249 = ssub.s32 %s24, %s43
      %s250 = ssub.s32 %s25, %s39
      %s251 = sor.u32 %s249, %s250
      %p252 = scmp.eq.s32.totalorder %s251, 0
      %s254 = sadd.s32 %s253, 1
      %s255 = scalar_select %p252, %s253, %s254
      %p258 = pneg %p252
      %p259 = scmp.eq.s32.totalorder %s17, 7
      %p260 = por %p258, %p259
      %p261 = scmp.ne.s32.totalorder %s253, %s256
      %p262 = scmp.eq.s32.totalorder %s17, 0
      %p263 = por %p261, %p262
      %p264 = scmp.ne.s32.totalorder %s253, %s256
      %p265 = scmp.eq.s32.totalorder %s22, 7
      %p266 = por %p264, %p265
      %p267 = scmp.ne.s32.totalorder %s256, %s257
      %p268 = scmp.eq.s32.totalorder %s22, 0
      %p269 = por %p267, %p268
      %p270 = scmp.ne.s32.totalorder %s256, %s257
      %p271 = scmp.eq.s32.totalorder %s23, 7
      %p272 = por %p270, %p271
      %p274 = scmp.ne.s32.totalorder %s257, %s273
      %p275 = scmp.eq.s32.totalorder %s23, 0
      %p276 = por %p274, %p275
      %p277 = scmp.le.s32.totalorder 1, %s17
      %p278 = scmp.lt.s32.totalorder %s17, 9
      %p279 = pnand %p277, %p278
      %p280 = pneg %p279
      // Predicated region
      $region9: #{dit_block.5} parent=5 // pred_check
        _
      $region10: #{dit_block.5} parent=5 // pred_check_branch
        %282 = sbr.rel (%p279) target = $region12
      $region11: #{dit_block.5} parent=5 // pred_region
        %s283 = ssub.s32 %s17, 1
        // Predicated region
        $region13: #{dit_block.5} parent=11 // pred_check
          %p284 = pneg %p241
        $region14: #{dit_block.5} parent=11 // pred_check_branch
          %286 = sbr.rel (%p284) target = $region16
        $region15: #{dit_block.5} parent=11 // pred_region
          _
        $region16: #{dit_block.5} parent=11 // pred_fallthru
          _
      $region12: #{dit_block.5} parent=5 // pred_fallthru
        _
      %p287 = scmp.lt.s32.totalorder %s17, 8
      // Predicated region
      $region17: #{dit_block.5} parent=5 // pred_check
        %p288 = pneg %p287
      $region18: #{dit_block.5} parent=5 // pred_check_branch
        %290 = sbr.rel (%p288) target = $region20
      $region19: #{dit_block.5} parent=5 // pred_region
        // Predicated region
        $region21: #{dit_block.5} parent=19 // pred_check
          %p291 = pneg %p58
        $region22: #{dit_block.5} parent=19 // pred_check_branch
          %293 = sbr.rel (%p291) target = $region24
        $region23: #{dit_block.5} parent=19 // pred_region
          %p294 = scmp.lt.s32.totalorder %s24, 1
          %s295 = scalar_select %p294, %s24, 1
          %p296 = scmp.lt.s32.totalorder %s25, 1
          %s297 = scalar_select %p296, %s25, 1
          %s298 = smul.addr %s295, 2
          %s299 = sadd.s32 %s297, %s298
          %s300 = smul.addr %s299, 8
          %s301 = scalar_lea.vmem %s0, %s300
        $region24: #{dit_block.5} parent=19 // pred_fallthru
          _
        // Predicated region
        $region25: #{dit_block.5} parent=19 // pred_check
          %p302 = pneg %p84
        $region26: #{dit_block.5} parent=19 // pred_check_branch
          %304 = sbr.rel (%p302) target = $region28
        $region27: #{dit_block.5} parent=19 // pred_region
          %p305 = scmp.lt.s32.totalorder %s24, 1
          %s306 = scalar_select %p305, %s24, 1
          %s307 = scalar_lea.vmem %s1, %s306
        $region28: #{dit_block.5} parent=19 // pred_fallthru
          _
        // Predicated region
        $region29: #{dit_block.5} parent=19 // pred_check
          %p308 = pneg %p110
        $region30: #{dit_block.5} parent=19 // pred_check_branch
          %310 = sbr.rel (%p308) target = $region32
        $region31: #{dit_block.5} parent=19 // pred_region
          %p311 = scmp.lt.s32.totalorder %s24, 1
          %s312 = scalar_select %p311, %s24, 1
          %s313 = scalar_lea.vmem %s2, %s312
        $region32: #{dit_block.5} parent=19 // pred_fallthru
          _
        // Predicated region
        $region33: #{dit_block.5} parent=19 // pred_check
          %p314 = pneg %p136
        $region34: #{dit_block.5} parent=19 // pred_check_branch
          %316 = sbr.rel (%p314) target = $region36
        $region35: #{dit_block.5} parent=19 // pred_region
          %p317 = scmp.lt.s32.totalorder %s24, 1
          %s318 = scalar_select %p317, %s24, 1
          %s319 = scalar_lea.vmem %s3, %s318
        $region36: #{dit_block.5} parent=19 // pred_fallthru
          _
        // Predicated region
        $region37: #{dit_block.5} parent=19 // pred_check
          %p320 = pneg %p162
        $region38: #{dit_block.5} parent=19 // pred_check_branch
          %322 = sbr.rel (%p320) target = $region40
        $region39: #{dit_block.5} parent=19 // pred_region
          %s323 = sand.u32 %s152, 1
          %s324 = sand.u32 %s152, 1
          %s325 = smul.addr %s324, 32
          %s326 = scalar_lea.vmem [#allocation4], %s325
          %s327 = smul.addr %s26, 4
          %s328 = scalar_lea.vmem %s4, %s327
          // Predicated region
          $region41: #{dit_block.5} parent=39 // pred_check
            _
          $region42: #{dit_block.5} parent=39 // pred_check_branch
            %330 = sbr.rel (0) target = $region44
          $region43: #{dit_block.5} parent=39 // pred_region
            // Predicated region
            $region45: #{dit_block.5} parent=43 // pred_check
              _
            $region46: #{dit_block.5} parent=43 // pred_check_branch
              %332 = sbr.rel target = $region48
            $region47: #{dit_block.5} parent=43 // pred_region
              // Predicated region
              $region60: #{dit_block.5} parent=47 // pred_check
                _
              $region61: #{dit_block.5} parent=47 // pred_check_branch
                %362 = sbr.rel (0) target = $region63
              $region62: #{dit_block.5} parent=47 // pred_region
                loop: start=0, step=1, limit=1
                $region64: #{dit_block.5} parent=62 // loop_pre_header
                  _
                $region65: #{dit_block.5} parent=62 // loop_header
                  %s364 = sphi 0, %s368
                  %p365 = scmp.ge.s32.totalorder %s364, 1
                  %s369 = sphi %s328, %s328
                  %s370 = sphi %s326, %s326
                $region66: #{dit_block.5} parent=62 // loop_header_branch
                  %367 = sbr.rel (%p365) target = $region70
                $region67: #{dit_block.5} parent=62 // loop_body
                  _
                $region68: #{dit_block.5} parent=62 // loop_footer
                  %s368 = sadd.s32 1, %s364
                $region69: #{dit_block.5} parent=62 // loop_footer_branch
                  %363 = sbr.rel target = $region65
                $region70: #{dit_block.5} parent=62 // loop_exit
                  _
                %s372 = ssub.s32 16, 1
                loop: start=0, step=1, limit=1
                $region71: #{dit_block.5} parent=62 // loop_pre_header
                  _
                $region72: #{dit_block.5} parent=62 // loop_header
                  %s374 = sphi 0, %s378
                  %p375 = scmp.ge.s32.totalorder %s374, 1
                  %s379 = sphi %s328, %s328
                  %s380 = sphi %s326, %s326
                $region73: #{dit_block.5} parent=62 // loop_header_branch
                  %377 = sbr.rel (%p375) target = $region77
                $region74: #{dit_block.5} parent=62 // loop_body
                  %v381 = vld [vmem:[%s379] sm:%s372]
                  %382 = vst [vmem:[%s380] sm:%s372] %v381
                  %v383 = vld [vmem:[%s379 + $0x8] sm:%s372]
                  %384 = vst [vmem:[%s380 + $0x4] sm:%s372] %v383
                  %v385 = vld [vmem:[%s379 + $0x10] sm:%s372]
                  %386 = vst [vmem:[%s380 + $0x8] sm:%s372] %v385
                  %v387 = vld [vmem:[%s379 + $0x18] sm:%s372]
                  %388 = vst [vmem:[%s380 + $0xc] sm:%s372] %v387
                  %v389 = vld [vmem:[%s379 + $0x20] sm:%s372]
                  %390 = vst [vmem:[%s380 + $0x10] sm:%s372] %v389
                  %v391 = vld [vmem:[%s379 + $0x28] sm:%s372]
                  %392 = vst [vmem:[%s380 + $0x14] sm:%s372] %v391
                  %v393 = vld [vmem:[%s379 + $0x30] sm:%s372]
                  %394 = vst [vmem:[%s380 + $0x18] sm:%s372] %v393
                  %v395 = vld [vmem:[%s379 + $0x38] sm:%s372]
                  %396 = vst [vmem:[%s380 + $0x1c] sm:%s372] %v395
                $region75: #{dit_block.5} parent=62 // loop_footer
                  %s378 = sadd.s32 1, %s374
                $region76: #{dit_block.5} parent=62 // loop_footer_branch
                  %373 = sbr.rel target = $region72
                $region77: #{dit_block.5} parent=62 // loop_exit
                  _
              $region63: #{dit_block.5} parent=47 // pred_fallthru
                _
            $region48: #{dit_block.5} parent=43 // pred_fallthru
              _
            // Predicated region
            $region49: #{dit_block.5} parent=43 // pred_check
              _
            $region50: #{dit_block.5} parent=43 // pred_check_branch
              %334 = sbr.rel (0) target = $region52
            $region51: #{dit_block.5} parent=43 // pred_region
              %s336 = ssub.s32 16, 1
              loop: start=0, step=1, limit=1
              $region53: #{dit_block.5} parent=51 // loop_pre_header
                _
              $region54: #{dit_block.5} parent=51 // loop_header
                %s338 = sphi 0, %s342
                %p339 = scmp.ge.s32.totalorder %s338, 1
                %s343 = sphi %s328, %s328
                %s344 = sphi %s326, %s326
              $region55: #{dit_block.5} parent=51 // loop_header_branch
                %341 = sbr.rel (%p339) target = $region59
              $region56: #{dit_block.5} parent=51 // loop_body
                %v345 = vld [vmem:[%s343] sm:%s336]
                %346 = vst [vmem:[%s344] sm:%s336] %v345
                %v347 = vld [vmem:[%s343 + $0x8] sm:%s336]
                %348 = vst [vmem:[%s344 + $0x4] sm:%s336] %v347
                %v349 = vld [vmem:[%s343 + $0x10] sm:%s336]
                %350 = vst [vmem:[%s344 + $0x8] sm:%s336] %v349
                %v351 = vld [vmem:[%s343 + $0x18] sm:%s336]
                %352 = vst [vmem:[%s344 + $0xc] sm:%s336] %v351
                %v353 = vld [vmem:[%s343 + $0x20] sm:%s336]
                %354 = vst [vmem:[%s344 + $0x10] sm:%s336] %v353
                %v355 = vld [vmem:[%s343 + $0x28] sm:%s336]
                %356 = vst [vmem:[%s344 + $0x14] sm:%s336] %v355
                %v357 = vld [vmem:[%s343 + $0x30] sm:%s336]
                %358 = vst [vmem:[%s344 + $0x18] sm:%s336] %v357
                %v359 = vld [vmem:[%s343 + $0x38] sm:%s336]
                %360 = vst [vmem:[%s344 + $0x1c] sm:%s336] %v359
              $region57: #{dit_block.5} parent=51 // loop_footer
                %s342 = sadd.s32 1, %s338
              $region58: #{dit_block.5} parent=51 // loop_footer_branch
                %337 = sbr.rel target = $region54
              $region59: #{dit_block.5} parent=51 // loop_exit
                _
            $region52: #{dit_block.5} parent=43 // pred_fallthru
              _
          $region44: #{dit_block.5} parent=39 // pred_fallthru
            _
          %397 = vnop
        $region40: #{dit_block.5} parent=19 // pred_fallthru
          _
        // Predicated region
        $region78: #{dit_block.5} parent=19 // pred_check
          %p398 = pneg %p188
        $region79: #{dit_block.5} parent=19 // pred_check_branch
          %400 = sbr.rel (%p398) target = $region81
        $region80: #{dit_block.5} parent=19 // pred_region
          %p401 = scmp.lt.s32.totalorder %s26, 1
          %s402 = scalar_select %p401, %s26, 1
          %s403 = scalar_lea.vmem %s5, %s402
        $region81: #{dit_block.5} parent=19 // pred_fallthru
          _
        // Predicated region
        $region82: #{dit_block.5} parent=19 // pred_check
          %p404 = pneg %p214
        $region83: #{dit_block.5} parent=19 // pred_check_branch
          %406 = sbr.rel (%p404) target = $region85
        $region84: #{dit_block.5} parent=19 // pred_region
          %s407 = smul.u32 16, %s26
          %p408 = scmp.lt.s32.totalorder %s407, 31
          %s409 = scalar_select %p408, %s407, 31
          %s410 = smul.addr %s409, 4
          %s411 = scalar_lea.vmem %s6, %s410
          %s412 = smul.u32 16, %s26
        $region85: #{dit_block.5} parent=19 // pred_fallthru
          _
      $region20: #{dit_block.5} parent=5 // pred_fallthru
        _
      %p413 = scmp.le.s32.totalorder 1, %s17
      %p414 = scmp.lt.s32.totalorder %s17, 9
      %p415 = pnand %p413, %p414
      %p416 = pneg %p415
      // Predicated region
      $region86: #{dit_block.5} parent=5 // pred_check
        _
      $region87: #{dit_block.5} parent=5 // pred_check_branch
        %418 = sbr.rel (%p415) target = $region89
      $region88: #{dit_block.5} parent=5 // pred_region
        %s419 = ssub.s32 %s17, 1
        %s420 = sand.u32 %s155, 1
        %s421 = sand.u32 %s155, 1
        %s422 = smul.addr %s421, 32
        %s423 = scalar_lea.vmem [#allocation4], %s422
        // Predicated region
        $region90: #{dit_block.5} parent=88 // pred_check
          %p424 = pneg %p168
        $region91: #{dit_block.5} parent=88 // pred_check_branch
          %426 = sbr.rel (%p424) target = $region93
        $region92: #{dit_block.5} parent=88 // pred_region
          _
        $region93: #{dit_block.5} parent=88 // pred_fallthru
          _
        %p427 = scmp.lt.s32.totalorder %s27, 1
        %s428 = scalar_select %p427, %s27, 1
        %p429 = scmp.lt.s32.totalorder %s28, 1
        %s430 = scalar_select %p429, %s28, 1
        %s431 = smul.addr %s428, 2
        %s432 = sadd.s32 %s430, %s431
        %s433 = smul.addr %s432, 8
        %s434 = scalar_lea.vmem %s0, %s433
        %p435 = pneg %p64
        %p436 = pneg %p61
        %p437 = scmp.lt.s32.totalorder %s27, 1
        %s438 = scalar_select %p437, %s27, 1
        %s439 = scalar_lea.vmem %s1, %s438
        %p440 = pneg %p90
        %p441 = pneg %p87
        %p442 = scmp.lt.s32.totalorder %s27, 1
        %s443 = scalar_select %p442, %s27, 1
        %s444 = scalar_lea.vmem %s2, %s443
        %p445 = pneg %p116
        %p446 = pneg %p113
        %p447 = scmp.lt.s32.totalorder %s27, 1
        %s448 = scalar_select %p447, %s27, 1
        %s449 = scalar_lea.vmem %s3, %s448
        %p450 = pneg %p142
        %p451 = pneg %p139
        %s452 = sand.u32 %s155, 1
        %s453 = sand.u32 %s155, 1
        %s454 = smul.addr %s453, 32
        %s455 = scalar_lea.vmem [#allocation4], %s454
        %p456 = pneg %p168
        %p457 = pneg %p165
        %p458 = scmp.lt.s32.totalorder %s29, 1
        %s459 = scalar_select %p458, %s29, 1
        %s460 = scalar_lea.vmem %s5, %s459
        %p461 = pneg %p194
        %p462 = pneg %p191
        %s463 = smul.u32 16, %s29
        %p464 = scmp.lt.s32.totalorder %s463, 31
        %s465 = scalar_select %p464, %s463, 31
        %s466 = smul.addr %s465, 4
        %s467 = scalar_lea.vmem %s6, %s466
        %p468 = pneg %p220
        %p469 = pneg %p217
        %p470 = pneg %p241
        %p471 = pneg %p238
        %p472 = pneg %p269
        %p473 = pneg %p266
        %s474 = sand.u32 %s256, 1
        %s475 = scalar_lea.sflag [#allocation6], %s474
        %s476 = sand.u32 %s256, 1
        %s477 = smul.addr %s476, 8
        %s478 = scalar_lea.vmem [#allocation5], %s477
        %p479 = scmp.lt.s32.totalorder %s27, 1
        %s480 = scalar_select %p479, %s27, 1
        %p481 = scmp.lt.s32.totalorder %s28, 1
        %s482 = scalar_select %p481, %s28, 1
        %s483 = smul.addr %s480, 2
        %s484 = sadd.s32 %s482, %s483
        %s485 = smul.addr %s484, 8
        %s486 = scalar_lea.vmem %s0, %s485
        %p487 = scmp.lt.s32.totalorder %s27, 1
        %s488 = scalar_select %p487, %s27, 1
        %s489 = scalar_lea.vmem %s1, %s488
        %p490 = scmp.lt.s32.totalorder %s27, 1
        %s491 = scalar_select %p490, %s27, 1
        %s492 = scalar_lea.vmem %s2, %s491
        %p493 = scmp.lt.s32.totalorder %s27, 1
        %s494 = scalar_select %p493, %s27, 1
        %s495 = scalar_lea.vmem %s3, %s494
        %p496 = scmp.lt.s32.totalorder %s29, 1
        %s497 = scalar_select %p496, %s29, 1
        %s498 = scalar_lea.vmem %s5, %s497
        %s499 = smul.u32 16, %s29
        %p500 = scmp.lt.s32.totalorder %s499, 31
        %s501 = scalar_select %p500, %s499, 31
        %s502 = smul.addr %s501, 4
        %s503 = scalar_lea.vmem %s6, %s502
        %s504 = smul.u32 16, %s29
        %p506 = scmp.eq.s32.totalorder %s29, 0
        // Predicated region
        $region94: #{dit_block.5} parent=88 // pred_check
          %p507 = pneg %p506
        $region95: #{dit_block.5} parent=88 // pred_check_branch
          %509 = sbr.rel (%p507) target = $region97
        $region96: #{dit_block.5} parent=88 // pred_region
          %v510 = vld [vmem:[%s486] sm:$0xff]
          %vm511 = vcmask 523264
          %v512 = vsel %vm511, %v510, 0.0
          %513 = vadd.xlane.f32.xlu0 %v512
          %v514 = vpop.xlane.xlu0 %513
          %v515 = vrcp.pop 64.0
          %v516 = vmul.f32 64.0, %v515
          %v517 = vsub.f32 1.0, %v516
          %v518 = vmul.f32 %v515, %v517
          %v519 = vadd.f32 %v515, %v518
          %vm520 = vweird.f32 %v515
          %v521 = vsel %vm520, %v515, %v519
          %v522 = vmul.f32 %v514, %v521
          %v523 = vsub.f32 %v510, %v522
          %v524 = vmul.f32 %v523, %v523
          %v525 = vsel %vm511, %v524, 0.0
          %526 = vadd.xlane.f32.xlu0 %v525
          %v527 = vpop.xlane.xlu0 %526
          %v528 = vmul.f32 %v527, %v521
          %v529 = vadd.f32 %v528, 1e-06
          %v530 = vrsqrt.pop %v529
          %v531 = vmul.f32 %v530, %v529
          %v532 = vmul.f32 %v531, %v530
          %v533 = vmul.f32 0.5, %v532
          %v534 = vsub.f32 1.5, %v533
          %v535 = vmul.f32 %v530, %v534
          %vm536 = vweird.f32 %v529
          %vm537 = vweird.f32 %v530
          %vm538 = vmor %vm536, %vm537
          %v539 = vsel %vm538, %v530, %v535
          %v540 = vmul.f32 %v523, %v539
          %v541 = vld [vmem:[%s492] sm:$0x1]
          %v542 = vadd.f32 %v541, 1.0
          %v544 = vperm.slane %v542, 0
          %v546 = vmul.f32 %v540, %v544
          %v547 = vld [vmem:[%s489] sm:$0x1]
          %v549 = vperm.slane %v547, 0
          %v551 = vadd.f32 %v546, %v549
          %v552 = vpack.c.bf16 %v551, %v551
          %vm553 = vcmask 519168
          %554 = vst.msk [vmem:[#allocation2] sm:$0xf] %vm553, %v552
          %555 = vst.msk [vmem:[#allocation3] sm:$0xff] %vm511, 0.0
        $region97: #{dit_block.5} parent=88 // pred_fallthru
          _
        %v556 = vld [vmem:[#allocation2] sm:$0xf]
        %v557 = vld [vmem:[%s423] sm:$0xf]
        %v558 = vld [vmem:[%s423 + $0x4] sm:$0xf]
        %v559 = vld [vmem:[%s423 + $0x8] sm:$0xf]
        %v560 = vld [vmem:[%s423 + $0xc] sm:$0xf]
        %v561 = vld [vmem:[%s423 + $0x10] sm:$0xf]
        %v562 = vld [vmem:[%s423 + $0x14] sm:$0xf]
        %v563 = vld [vmem:[%s423 + $0x18] sm:$0xf]
        %v564 = vld [vmem:[%s423 + $0x1c] sm:$0xf]
        %v565 = vld [vmem:[%s498] sm:$0x1]
        %v567 = vperm.slane %v565, 0
        %v577 = vunpack.c.l.b16 %v557
        %v578 = vunpack.c.l.b16 %v558
        %v579 = vunpack.c.l.b16 %v559
        %v580 = vunpack.c.l.b16 %v560
        %v581 = vunpack.c.l.b16 %v561
        %v582 = vunpack.c.l.b16 %v562
        %v583 = vunpack.c.l.b16 %v563
        %v584 = vunpack.c.l.b16 %v564
        %v585 = vpack.c.b16 %v578, %v577
        %v586 = vpack.c.b16 %v580, %v579
        %v587 = vpack.c.b16 %v582, %v581
        %v588 = vpack.c.b16 %v584, %v583
        %vm593 = vcmask 523264
        %v595 = vsel %vm593, %v556, 0
        %597 = vmatpush.bf16.msra.mxu0 0
        %598 = vmatpush.bf16.msra.mxu0 0
        %599 = vmatpush.bf16.msra.mxu0 0
        %600 = vmatpush.bf16.msra.mxu0 0
        %601 = vmatpush.bf16.msra.mxu0 %v588
        %602 = vmatpush.bf16.msra.mxu0 %v587
        %603 = vmatpush.bf16.msra.mxu0 %v586
        %604 = vmatpush.bf16.msra.mxu0 %v585
        %605 = vmatmul.bf16.gmra.mxu0 %v595
        %v606 = vpop.f32.mrf.mxu0
        %v607 = vadd.f32 %v567, %v606
        %v608 = vpop.f32.mrf.mxu0
        %609 = vdwg.mxu0
        %v610 = vxor.u32 %v607, 2147483648
        %v611 = vmul.f32 %v610, 1.442695
        %v612 = vpow.pop %v611
        %v613 = vadd.f32 %v612, 1.0
        %v614 = vrcp.pop %v613
        %v615 = vmul.f32 %v613, %v614
        %v616 = vsub.f32 1.0, %v615
        %v617 = vmul.f32 %v614, %v616
        %v618 = vadd.f32 %v614, %v617
        %vm619 = vweird.f32 %v613
        %vm620 = vweird.f32 %v614
        %vm621 = vmor %vm619, %vm620
        %v622 = vsel %vm621, %v614, %v618
        %v623 = vand.u32 2147483647, %v613
        %vm624 = vcmp.eq.f32.partialorder %v623, 8.507059e+37
        %v625 = vand.u32 %v613, 2147483648
        %v626 = vor.u32 1.1754944e-38, %v625
        %v627 = vsel %vm624, %v626, %v622
        %v628 = vmul.f32 1.0, %v627
        %v629 = vmul.f32 %v607, %v628
        %v630 = vld [vmem:[#allocation3] sm:$0xff]
        %v631 = vpack.c.bf16 %v629, %v629
        %v632 = vld [vmem:[%s503] sm:$0xf]
        %v633 = vld [vmem:[%s503 + $0x4] sm:$0xf]
        %v634 = vld [vmem:[%s503 + $0x8] sm:$0xf]
        %v635 = vld [vmem:[%s503 + $0xc] sm:$0xf]
        %v636 = vld [vmem:[%s503 + $0x10] sm:$0xf]
        %v637 = vld [vmem:[%s503 + $0x14] sm:$0xf]
        %v638 = vld [vmem:[%s503 + $0x18] sm:$0xf]
        %v639 = vld [vmem:[%s503 + $0x1c] sm:$0xf]
        %v640 = vld [vmem:[%s503 + $0x20] sm:$0xf]
        %v641 = vld [vmem:[%s503 + $0x24] sm:$0xf]
        %v642 = vld [vmem:[%s503 + $0x28] sm:$0xf]
        %v643 = vld [vmem:[%s503 + $0x2c] sm:$0xf]
        %v644 = vld [vmem:[%s503 + $0x30] sm:$0xf]
        %v645 = vld [vmem:[%s503 + $0x34] sm:$0xf]
        %v646 = vld [vmem:[%s503 + $0x38] sm:$0xf]
        %v647 = vld [vmem:[%s503 + $0x3c] sm:$0xf]
        %v664 = vunpack.c.l.b16 %v632
        %v665 = vunpack.c.l.b16 %v633
        %v666 = vunpack.c.l.b16 %v634
        %v667 = vunpack.c.l.b16 %v635
        %v668 = vunpack.c.l.b16 %v636
        %v669 = vunpack.c.l.b16 %v637
        %v670 = vunpack.c.l.b16 %v638
        %v671 = vunpack.c.l.b16 %v639
        %v672 = vunpack.c.l.b16 %v640
        %v673 = vunpack.c.l.b16 %v641
        %v674 = vunpack.c.l.b16 %v642
        %v675 = vunpack.c.l.b16 %v643
        %v676 = vunpack.c.l.b16 %v644
        %v677 = vunpack.c.l.b16 %v645
        %v678 = vunpack.c.l.b16 %v646
        %v679 = vunpack.c.l.b16 %v647
        %v680 = vpack.c.b16 %v665, %v664
        %v681 = vpack.c.b16 %v667, %v666
        %v682 = vpack.c.b16 %v669, %v668
        %v683 = vpack.c.b16 %v671, %v670
        %v684 = vpack.c.b16 %v673, %v672
        %v685 = vpack.c.b16 %v675, %v674
        %v686 = vpack.c.b16 %v677, %v676
        %v687 = vpack.c.b16 %v679, %v678
        %696 = vmatpush.bf16.msra.mxu0 %v687
        %697 = vmatpush.bf16.msra.mxu0 %v686
        %698 = vmatpush.bf16.msra.mxu0 %v685
        %699 = vmatpush.bf16.msra.mxu0 %v684
        %700 = vmatpush.bf16.msra.mxu0 %v683
        %701 = vmatpush.bf16.msra.mxu0 %v682
        %702 = vmatpush.bf16.msra.mxu0 %v681
        %703 = vmatpush.bf16.msra.mxu0 %v680
        %704 = vmatmul.bf16.gmra.mxu0 %v631
        %v705 = vpop.f32.mrf.mxu0
        %v706 = vadd.f32 0.0, %v705
        %v707 = vpop.f32.mrf.mxu0
        %708 = vdwg.mxu0
        %v709 = vadd.f32 %v630, %v706
        %710 = vst.msk [vmem:[#allocation3] sm:$0xff] %vm593, %v709
        %p711 = scmp.eq.s32.totalorder %s29, 1
        // Predicated region
        $region98: #{dit_block.5} parent=88 // pred_check
          %p712 = pneg %p711
        $region99: #{dit_block.5} parent=88 // pred_check_branch
          %714 = sbr.rel (%p712) target = $region101
        $region100: #{dit_block.5} parent=88 // pred_region
          %v715 = vld [vmem:[%s486] sm:$0xff]
          %v716 = vld [vmem:[%s495] sm:$0x1]
          %v717 = vld [vmem:[#allocation3] sm:$0xff]
          %v718 = vld [vmem:[%s7] sm:$0x1]
          %v720 = vperm.slane %v718, 0
          %v722 = vadd.f32 %v717, %v720
          %v724 = vperm.slane %v716, 0
          %v726 = vmul.f32 %v724, %v722
          %v727 = vadd.f32 %v715, %v726
          %728 = vst.msk [vmem:[%s478] sm:$0xff] %vm593, %v727
        $region101: #{dit_block.5} parent=88 // pred_fallthru
          _
        %s729 = sand.u32 %s256, 1
        %s730 = scalar_lea.sflag [#allocation6], %s729
        %s731 = sand.u32 %s256, 1
        %s732 = smul.addr %s731, 8
        %s733 = scalar_lea.vmem [#allocation5], %s732
        // Predicated region
        $region102: #{dit_block.5} parent=88 // pred_check
          %p734 = pneg %p266
        $region103: #{dit_block.5} parent=88 // pred_check_branch
          %736 = sbr.rel (%p734) target = $region105
        $region104: #{dit_block.5} parent=88 // pred_region
          %738 = vsyncadd %s730, 0
          %s739 = smul.addr %s27, 2
          %s740 = sadd.s32 %s28, %s739
          %s741 = smul.addr %s740, 8
          %s742 = scalar_lea.hbm %s8, %s741
          %s744 = sshll.u32 %s733, 4
          %s745 = int_to_ptr.vmem [resolvable:$true] %s744
          %s746 = sshll.u32 %s742, 4
          %s747 = int_to_ptr.hbm [resolvable:$true] %s746
          %749 = dma.vmem_to_hbm [thread:$0]  %s745, 128, %s747, %s730
        $region105: #{dit_block.5} parent=88 // pred_fallthru
          _
      $region89: #{dit_block.5} parent=5 // pred_fallthru
        _
      %p750 = scmp.le.s32.totalorder 2, %s17
      // Predicated region
      $region106: #{dit_block.5} parent=5 // pred_check
        %p751 = pneg %p750
      $region107: #{dit_block.5} parent=5 // pred_check_branch
        %753 = sbr.rel (%p751) target = $region109
      $region108: #{dit_block.5} parent=5 // pred_region
        %s754 = ssub.s32 %s17, 2
        // Predicated region
        $region110: #{dit_block.5} parent=108 // pred_check
          %p755 = pneg %p272
        $region111: #{dit_block.5} parent=108 // pred_check_branch
          %757 = sbr.rel (%p755) target = $region113
        $region112: #{dit_block.5} parent=108 // pred_region
          %s758 = sand.u32 %s257, 1
          %s759 = scalar_lea.sflag [#allocation6], %s758
          %s760 = sand.u32 %s257, 1
          %s761 = smul.addr %s760, 8
          %s762 = scalar_lea.vmem [#allocation5], %s761
          %764 = dma.done %s759, 128
        $region113: #{dit_block.5} parent=108 // pred_fallthru
          _
      $region109: #{dit_block.5} parent=5 // pred_fallthru
        _
    $region6: #{dit_block.5} parent=1 // loop_footer
      %s21 = sadd.s32 1, %s17
    $region7: #{dit_block.5} parent=1 // loop_footer_branch
      %16 = sbr.rel target = $region3
    $region8: #{dit_block.5} parent=1 // loop_exit
      _
    %765 = vsyncpa [#allocation6], 1
    %s766 = scalar_lea.sflag [#allocation6], 1
    %767 = vsyncpa %s766, 1

// kernel: dit_block.3
$region0: #{dit_block.3}
  #allocation0 [shape = 'u32[]', space=smem, size = 0x4, offset = 0x4, fixed_abs, tag = 'smem constant byte address 0x4 - core index']
  #allocation1 [shape = 'u32[72,128]{1,0:T(1,128)}', space=vmem, size = 0x9000, scoped, tag = 'internal scratch']
  %s0 = inlined_call_operand.vmem [shape: f32[2,16,64], index: 0, kind: input, shape index: {}]
  %s1 = inlined_call_operand.vmem [shape: f32[2,1,64], index: 1, kind: input, shape index: {}]
  %s2 = inlined_call_operand.vmem [shape: f32[2,1,64], index: 2, kind: input, shape index: {}]
  %s3 = inlined_call_operand.vmem [shape: bf16[64,192], index: 3, kind: input, shape index: {}]
  %s4 = inlined_call_operand.vmem [shape: f32[1,192], index: 4, kind: input, shape index: {}]
  %s5 = inlined_call_operand.vmem [shape: f32[64,4], index: 5, kind: input, shape index: {}]
  %s6 = inlined_call_operand.vmem [shape: f32[4,64], index: 6, kind: input, shape index: {}]
  %s7 = inlined_call_operand.vmem [shape: f32[1,64], index: 7, kind: input, shape index: {}]
  %s8 = inlined_call_operand.vmem [shape: f32[1,64], index: 8, kind: input, shape index: {}]
  %s9 = inlined_call_operand.vmem [shape: bf16[2,4,16,16], index: 9, kind: output, shape index: {0}]
  %s10 = inlined_call_operand.vmem [shape: bf16[2,4,16,16], index: 10, kind: output, shape index: {1}]
  %s11 = inlined_call_operand.vmem [shape: bf16[2,4,16,16], index: 11, kind: output, shape index: {2}]
  %12 = xla_tuple %s9, %s10, %s11
  %s13 = sld [smem:[#allocation0]]
  $region196: #{dit_block.3} parent=0
    _
  %s15 = ssub.s32 1, %s13
  %s16 = scalar_select 0, %s15, %s13
  $region1: #{dit_block.3} parent=0
    #allocation2 [shape = 'u8[16384]{0}', space=vmem, size = 0x4000, scoped, tag = 'output window, operand 0']
    #allocation3 [shape = 'u8[16384]{0}', space=vmem, size = 0x4000, scoped, tag = 'output window, operand 1']
    #allocation4 [shape = 'u8[16384]{0}', space=vmem, size = 0x4000, scoped, tag = 'output window, operand 2']
    loop: start=0, step=1, limit=6
    $region2: #{dit_block.3} parent=1 // loop_pre_header
      _
    $region3: #{dit_block.3} parent=1 // loop_header
      %s18 = sphi 0, %s22
      %p19 = scmp.ge.s32.totalorder %s18, 6
      %s25 = sphi 0, %s37
      %s26 = sphi 0, %s33
      %s27 = sphi 0, %s25
      %s28 = sphi 0, %s26
      %s29 = sphi 0, %s27
      %s30 = sphi 0, %s28
      %s42 = sphi 0, %s44
      %s45 = sphi 0, %s42
      %s46 = sphi 0, %s45
      %s62 = sphi 0, %s46
      %s68 = sphi 0, %s70
      %s71 = sphi 0, %s68
      %s72 = sphi 0, %s71
      %s88 = sphi 0, %s72
      %s94 = sphi 0, %s96
      %s97 = sphi 0, %s94
      %s98 = sphi 0, %s97
      %s114 = sphi 0, %s98
      %s118 = sphi 0, %s118
      %s120 = sphi 0, %s118
      %s121 = sphi 0, %s120
      %s135 = sphi 0, %s121
      %s139 = sphi 0, %s139
      %s141 = sphi 0, %s139
      %s142 = sphi 0, %s141
      %s156 = sphi 0, %s142
      %s160 = sphi 0, %s160
      %s162 = sphi 0, %s160
      %s163 = sphi 0, %s162
      %s177 = sphi 0, %s163
      %s181 = sphi 0, %s181
      %s183 = sphi 0, %s181
      %s184 = sphi 0, %s183
      %s198 = sphi 0, %s184
      %s202 = sphi 0, %s202
      %s204 = sphi 0, %s202
      %s205 = sphi 0, %s204
      %s219 = sphi 0, %s205
      %s223 = sphi 0, %s223
      %s225 = sphi 0, %s223
      %s226 = sphi 0, %s225
      %s240 = sphi 0, %s226
      %s248 = sphi 0, %s250
      %s251 = sphi 0, %s248
      %s252 = sphi 0, %s251
      %s268 = sphi 0, %s252
      %s276 = sphi 0, %s278
      %s279 = sphi 0, %s276
      %s280 = sphi 0, %s279
      %s296 = sphi 0, %s280
      %s304 = sphi 0, %s306
      %s307 = sphi 0, %s304
      %s308 = sphi 0, %s307
      %s324 = sphi 0, %s308
    $region4: #{dit_block.3} parent=1 // loop_header_branch
      %21 = sbr.rel (%p19) target = $region8
    $region5: #{dit_block.3} parent=1 // loop_body
      %s23 = ssub.s32 %s18, 1
      %s24 = ssub.s32 %s18, 2
      %s31 = sadd.s32 1, %s26
      %p32 = scmp.ge.s32.totalorder %s31, 2
      %s33 = scalar_select %p32, 0, %s31
      %s34 = sadd.s32 1, %s25
      %s35 = scalar_select %p32, %s34, %s25
      %p36 = scmp.ge.s32.totalorder %s35, 2
      %s37 = scalar_select %p36, 0, %s35
      %s38 = ssub.s32 %s25, %s37
      %s39 = ssub.s32 %s26, %s33
      %s40 = sor.u32 %s38, %s39
      %p41 = scmp.eq.s32.totalorder %s40, 0
      %s43 = sadd.s32 %s42, 1
      %s44 = scalar_select %p41, %s42, %s43
      %p47 = pneg %p41
      %p48 = scmp.eq.s32.totalorder %s18, 3
      %p49 = por %p47, %p48
      %p50 = scmp.ne.s32.totalorder %s42, %s45
      %p51 = scmp.eq.s32.totalorder %s18, 0
      %p52 = por %p50, %p51
      %p53 = scmp.ne.s32.totalorder %s42, %s45
      %p54 = scmp.eq.s32.totalorder %s23, 3
      %p55 = por %p53, %p54
      %p56 = scmp.ne.s32.totalorder %s45, %s46
      %p57 = scmp.eq.s32.totalorder %s23, 0
      %p58 = por %p56, %p57
      %p59 = scmp.ne.s32.totalorder %s45, %s46
      %p60 = scmp.eq.s32.totalorder %s24, 3
      %p61 = por %p59, %p60
      %p63 = scmp.ne.s32.totalorder %s46, %s62
      %p64 = scmp.eq.s32.totalorder %s24, 0
      %p65 = por %p63, %p64
      %s66 = ssub.s32 %s25, %s37
      %p67 = scmp.eq.s32.totalorder %s66, 0
      %s69 = sadd.s32 %s68, 1
      %s70 = scalar_select %p67, %s68, %s69
      %p73 = pneg %p67
      %p74 = scmp.eq.s32.totalorder %s18, 3
      %p75 = por %p73, %p74
      %p76 = scmp.ne.s32.totalorder %s68, %s71
      %p77 = scmp.eq.s32.totalorder %s18, 0
      %p78 = por %p76, %p77
      %p79 = scmp.ne.s32.totalorder %s68, %s71
      %p80 = scmp.eq.s32.totalorder %s23, 3
      %p81 = por %p79, %p80
      %p82 = scmp.ne.s32.totalorder %s71, %s72
      %p83 = scmp.eq.s32.totalorder %s23, 0
      %p84 = por %p82, %p83
      %p85 = scmp.ne.s32.totalorder %s71, %s72
      %p86 = scmp.eq.s32.totalorder %s24, 3
      %p87 = por %p85, %p86
      %p89 = scmp.ne.s32.totalorder %s72, %s88
      %p90 = scmp.eq.s32.totalorder %s24, 0
      %p91 = por %p89, %p90
      %s92 = ssub.s32 %s25, %s37
      %p93 = scmp.eq.s32.totalorder %s92, 0
      %s95 = sadd.s32 %s94, 1
      %s96 = scalar_select %p93, %s94, %s95
      %p99 = pneg %p93
      %p100 = scmp.eq.s32.totalorder %s18, 3
      %p101 = por %p99, %p100
      %p102 = scmp.ne.s32.totalorder %s94, %s97
      %p103 = scmp.eq.s32.totalorder %s18, 0
      %p104 = por %p102, %p103
      %p105 = scmp.ne.s32.totalorder %s94, %s97
      %p106 = scmp.eq.s32.totalorder %s23, 3
      %p107 = por %p105, %p106
      %p108 = scmp.ne.s32.totalorder %s97, %s98
      %p109 = scmp.eq.s32.totalorder %s23, 0
      %p110 = por %p108, %p109
      %p111 = scmp.ne.s32.totalorder %s97, %s98
      %p112 = scmp.eq.s32.totalorder %s24, 3
      %p113 = por %p111, %p112
      %p115 = scmp.ne.s32.totalorder %s98, %s114
      %p116 = scmp.eq.s32.totalorder %s24, 0
      %p117 = por %p115, %p116
      %s119 = sadd.s32 %s118, 1
      %p122 = scmp.eq.s32.totalorder %s18, 3
      %p123 = scmp.ne.s32.totalorder %s118, %s120
      %p124 = scmp.eq.s32.totalorder %s18, 0
      %p125 = por %p123, %p124
      %p126 = scmp.ne.s32.totalorder %s118, %s120
      %p127 = scmp.eq.s32.totalorder %s23, 3
      %p128 = por %p126, %p127
      %p129 = scmp.ne.s32.totalorder %s120, %s121
      %p130 = scmp.eq.s32.totalorder %s23, 0
      %p131 = por %p129, %p130
      %p132 = scmp.ne.s32.totalorder %s120, %s121
      %p133 = scmp.eq.s32.totalorder %s24, 3
      %p134 = por %p132, %p133
      %p136 = scmp.ne.s32.totalorder %s121, %s135
      %p137 = scmp.eq.s32.totalorder %s24, 0
      %p138 = por %p136, %p137
      %s140 = sadd.s32 %s139, 1
      %p143 = scmp.eq.s32.totalorder %s18, 3
      %p144 = scmp.ne.s32.totalorder %s139, %s141
      %p145 = scmp.eq.s32.totalorder %s18, 0
      %p146 = por %p144, %p145
      %p147 = scmp.ne.s32.totalorder %s139, %s141
      %p148 = scmp.eq.s32.totalorder %s23, 3
      %p149 = por %p147, %p148
      %p150 = scmp.ne.s32.totalorder %s141, %s142
      %p151 = scmp.eq.s32.totalorder %s23, 0
      %p152 = por %p150, %p151
      %p153 = scmp.ne.s32.totalorder %s141, %s142
      %p154 = scmp.eq.s32.totalorder %s24, 3
      %p155 = por %p153, %p154
      %p157 = scmp.ne.s32.totalorder %s142, %s156
      %p158 = scmp.eq.s32.totalorder %s24, 0
      %p159 = por %p157, %p158
      %s161 = sadd.s32 %s160, 1
      %p164 = scmp.eq.s32.totalorder %s18, 3
      %p165 = scmp.ne.s32.totalorder %s160, %s162
      %p166 = scmp.eq.s32.totalorder %s18, 0
      %p167 = por %p165, %p166
      %p168 = scmp.ne.s32.totalorder %s160, %s162
      %p169 = scmp.eq.s32.totalorder %s23, 3
      %p170 = por %p168, %p169
      %p171 = scmp.ne.s32.totalorder %s162, %s163
      %p172 = scmp.eq.s32.totalorder %s23, 0
      %p173 = por %p171, %p172
      %p174 = scmp.ne.s32.totalorder %s162, %s163
      %p175 = scmp.eq.s32.totalorder %s24, 3
      %p176 = por %p174, %p175
      %p178 = scmp.ne.s32.totalorder %s163, %s177
      %p179 = scmp.eq.s32.totalorder %s24, 0
      %p180 = por %p178, %p179
      %s182 = sadd.s32 %s181, 1
      %p185 = scmp.eq.s32.totalorder %s18, 3
      %p186 = scmp.ne.s32.totalorder %s181, %s183
      %p187 = scmp.eq.s32.totalorder %s18, 0
      %p188 = por %p186, %p187
      %p189 = scmp.ne.s32.totalorder %s181, %s183
      %p190 = scmp.eq.s32.totalorder %s23, 3
      %p191 = por %p189, %p190
      %p192 = scmp.ne.s32.totalorder %s183, %s184
      %p193 = scmp.eq.s32.totalorder %s23, 0
      %p194 = por %p192, %p193
      %p195 = scmp.ne.s32.totalorder %s183, %s184
      %p196 = scmp.eq.s32.totalorder %s24, 3
      %p197 = por %p195, %p196
      %p199 = scmp.ne.s32.totalorder %s184, %s198
      %p200 = scmp.eq.s32.totalorder %s24, 0
      %p201 = por %p199, %p200
      %s203 = sadd.s32 %s202, 1
      %p206 = scmp.eq.s32.totalorder %s18, 3
      %p207 = scmp.ne.s32.totalorder %s202, %s204
      %p208 = scmp.eq.s32.totalorder %s18, 0
      %p209 = por %p207, %p208
      %p210 = scmp.ne.s32.totalorder %s202, %s204
      %p211 = scmp.eq.s32.totalorder %s23, 3
      %p212 = por %p210, %p211
      %p213 = scmp.ne.s32.totalorder %s204, %s205
      %p214 = scmp.eq.s32.totalorder %s23, 0
      %p215 = por %p213, %p214
      %p216 = scmp.ne.s32.totalorder %s204, %s205
      %p217 = scmp.eq.s32.totalorder %s24, 3
      %p218 = por %p216, %p217
      %p220 = scmp.ne.s32.totalorder %s205, %s219
      %p221 = scmp.eq.s32.totalorder %s24, 0
      %p222 = por %p220, %p221
      %s224 = sadd.s32 %s223, 1
      %p227 = scmp.eq.s32.totalorder %s18, 3
      %p228 = scmp.ne.s32.totalorder %s223, %s225
      %p229 = scmp.eq.s32.totalorder %s18, 0
      %p230 = por %p228, %p229
      %p231 = scmp.ne.s32.totalorder %s223, %s225
      %p232 = scmp.eq.s32.totalorder %s23, 3
      %p233 = por %p231, %p232
      %p234 = scmp.ne.s32.totalorder %s225, %s226
      %p235 = scmp.eq.s32.totalorder %s23, 0
      %p236 = por %p234, %p235
      %p237 = scmp.ne.s32.totalorder %s225, %s226
      %p238 = scmp.eq.s32.totalorder %s24, 3
      %p239 = por %p237, %p238
      %p241 = scmp.ne.s32.totalorder %s226, %s240
      %p242 = scmp.eq.s32.totalorder %s24, 0
      %p243 = por %p241, %p242
      %s244 = ssub.s32 %s25, %s37
      %s245 = ssub.s32 %s26, %s33
      %s246 = sor.u32 %s244, %s245
      %p247 = scmp.eq.s32.totalorder %s246, 0
      %s249 = sadd.s32 %s248, 1
      %s250 = scalar_select %p247, %s248, %s249
      %p253 = pneg %p247
      %p254 = scmp.eq.s32.totalorder %s18, 3
      %p255 = por %p253, %p254
      %p256 = scmp.ne.s32.totalorder %s248, %s251
      %p257 = scmp.eq.s32.totalorder %s18, 0
      %p258 = por %p256, %p257
      %p259 = scmp.ne.s32.totalorder %s248, %s251
      %p260 = scmp.eq.s32.totalorder %s23, 3
      %p261 = por %p259, %p260
      %p262 = scmp.ne.s32.totalorder %s251, %s252
      %p263 = scmp.eq.s32.totalorder %s23, 0
      %p264 = por %p262, %p263
      %p265 = scmp.ne.s32.totalorder %s251, %s252
      %p266 = scmp.eq.s32.totalorder %s24, 3
      %p267 = por %p265, %p266
      %p269 = scmp.ne.s32.totalorder %s252, %s268
      %p270 = scmp.eq.s32.totalorder %s24, 0
      %p271 = por %p269, %p270
      %s272 = ssub.s32 %s25, %s37
      %s273 = ssub.s32 %s26, %s33
      %s274 = sor.u32 %s272, %s273
      %p275 = scmp.eq.s32.totalorder %s274, 0
      %s277 = sadd.s32 %s276, 1
      %s278 = scalar_select %p275, %s276, %s277
      %p281 = pneg %p275
      %p282 = scmp.eq.s32.totalorder %s18, 3
      %p283 = por %p281, %p282
      %p284 = scmp.ne.s32.totalorder %s276, %s279
      %p285 = scmp.eq.s32.totalorder %s18, 0
      %p286 = por %p284, %p285
      %p287 = scmp.ne.s32.totalorder %s276, %s279
      %p288 = scmp.eq.s32.totalorder %s23, 3
      %p289 = por %p287, %p288
      %p290 = scmp.ne.s32.totalorder %s279, %s280
      %p291 = scmp.eq.s32.totalorder %s23, 0
      %p292 = por %p290, %p291
      %p293 = scmp.ne.s32.totalorder %s279, %s280
      %p294 = scmp.eq.s32.totalorder %s24, 3
      %p295 = por %p293, %p294
      %p297 = scmp.ne.s32.totalorder %s280, %s296
      %p298 = scmp.eq.s32.totalorder %s24, 0
      %p299 = por %p297, %p298
      %s300 = ssub.s32 %s25, %s37
      %s301 = ssub.s32 %s26, %s33
      %s302 = sor.u32 %s300, %s301
      %p303 = scmp.eq.s32.totalorder %s302, 0
      %s305 = sadd.s32 %s304, 1
      %s306 = scalar_select %p303, %s304, %s305
      %p309 = pneg %p303
      %p310 = scmp.eq.s32.totalorder %s18, 3
      %p311 = por %p309, %p310
      %p312 = scmp.ne.s32.totalorder %s304, %s307
      %p313 = scmp.eq.s32.totalorder %s18, 0
      %p314 = por %p312, %p313
      %p315 = scmp.ne.s32.totalorder %s304, %s307
      %p316 = scmp.eq.s32.totalorder %s23, 3
      %p317 = por %p315, %p316
      %p318 = scmp.ne.s32.totalorder %s307, %s308
      %p319 = scmp.eq.s32.totalorder %s23, 0
      %p320 = por %p318, %p319
      %p321 = scmp.ne.s32.totalorder %s307, %s308
      %p322 = scmp.eq.s32.totalorder %s24, 3
      %p323 = por %p321, %p322
      %p325 = scmp.ne.s32.totalorder %s308, %s324
      %p326 = scmp.eq.s32.totalorder %s24, 0
      %p327 = por %p325, %p326
      %p328 = scmp.le.s32.totalorder 1, %s18
      %p329 = scmp.lt.s32.totalorder %s18, 5
      %p330 = pnand %p328, %p329
      %p331 = pneg %p330
      // Predicated region
      $region9: #{dit_block.3} parent=5 // pred_check
        _
      $region10: #{dit_block.3} parent=5 // pred_check_branch
        %333 = sbr.rel (%p330) target = $region12
      $region11: #{dit_block.3} parent=5 // pred_region
        %s334 = ssub.s32 %s18, 1
        // Predicated region
        $region13: #{dit_block.3} parent=11 // pred_check
          %p335 = pneg %p131
        $region14: #{dit_block.3} parent=11 // pred_check_branch
          %337 = sbr.rel (%p335) target = $region16
        $region15: #{dit_block.3} parent=11 // pred_region
          _
        $region16: #{dit_block.3} parent=11 // pred_fallthru
          _
        // Predicated region
        $region17: #{dit_block.3} parent=11 // pred_check
          %p338 = pneg %p152
        $region18: #{dit_block.3} parent=11 // pred_check_branch
          %340 = sbr.rel (%p338) target = $region20
        $region19: #{dit_block.3} parent=11 // pred_region
          _
        $region20: #{dit_block.3} parent=11 // pred_fallthru
          _
        // Predicated region
        $region21: #{dit_block.3} parent=11 // pred_check
          %p341 = pneg %p173
        $region22: #{dit_block.3} parent=11 // pred_check_branch
          %343 = sbr.rel (%p341) target = $region24
        $region23: #{dit_block.3} parent=11 // pred_region
          _
        $region24: #{dit_block.3} parent=11 // pred_fallthru
          _
        // Predicated region
        $region25: #{dit_block.3} parent=11 // pred_check
          %p344 = pneg %p194
        $region26: #{dit_block.3} parent=11 // pred_check_branch
          %346 = sbr.rel (%p344) target = $region28
        $region27: #{dit_block.3} parent=11 // pred_region
          _
        $region28: #{dit_block.3} parent=11 // pred_fallthru
          _
        // Predicated region
        $region29: #{dit_block.3} parent=11 // pred_check
          %p347 = pneg %p215
        $region30: #{dit_block.3} parent=11 // pred_check_branch
          %349 = sbr.rel (%p347) target = $region32
        $region31: #{dit_block.3} parent=11 // pred_region
          _
        $region32: #{dit_block.3} parent=11 // pred_fallthru
          _
        // Predicated region
        $region33: #{dit_block.3} parent=11 // pred_check
          %p350 = pneg %p236
        $region34: #{dit_block.3} parent=11 // pred_check_branch
          %352 = sbr.rel (%p350) target = $region36
        $region35: #{dit_block.3} parent=11 // pred_region
          _
        $region36: #{dit_block.3} parent=11 // pred_fallthru
          _
      $region12: #{dit_block.3} parent=5 // pred_fallthru
        _
      %p353 = scmp.lt.s32.totalorder %s18, 4
      // Predicated region
      $region37: #{dit_block.3} parent=5 // pred_check
        %p354 = pneg %p353
      $region38: #{dit_block.3} parent=5 // pred_check_branch
        %356 = sbr.rel (%p354) target = $region40
      $region39: #{dit_block.3} parent=5 // pred_region
        // Predicated region
        $region41: #{dit_block.3} parent=39 // pred_check
          %p357 = pneg %p52
        $region42: #{dit_block.3} parent=39 // pred_check_branch
          %359 = sbr.rel (%p357) target = $region44
        $region43: #{dit_block.3} parent=39 // pred_region
          %p360 = scmp.lt.s32.totalorder %s25, 1
          %s361 = scalar_select %p360, %s25, 1
          %p362 = scmp.lt.s32.totalorder %s26, 1
          %s363 = scalar_select %p362, %s26, 1
          %s364 = smul.addr %s361, 2
          %s365 = sadd.s32 %s363, %s364
          %s366 = smul.addr %s365, 8
          %s367 = scalar_lea.vmem %s0, %s366
        $region44: #{dit_block.3} parent=39 // pred_fallthru
          _
        // Predicated region
        $region45: #{dit_block.3} parent=39 // pred_check
          %p368 = pneg %p78
        $region46: #{dit_block.3} parent=39 // pred_check_branch
          %370 = sbr.rel (%p368) target = $region48
        $region47: #{dit_block.3} parent=39 // pred_region
          %p371 = scmp.lt.s32.totalorder %s25, 1
          %s372 = scalar_select %p371, %s25, 1
          %s373 = scalar_lea.vmem %s1, %s372
        $region48: #{dit_block.3} parent=39 // pred_fallthru
          _
        // Predicated region
        $region49: #{dit_block.3} parent=39 // pred_check
          %p374 = pneg %p104
        $region50: #{dit_block.3} parent=39 // pred_check_branch
          %376 = sbr.rel (%p374) target = $region52
        $region51: #{dit_block.3} parent=39 // pred_region
          %p377 = scmp.lt.s32.totalorder %s25, 1
          %s378 = scalar_select %p377, %s25, 1
          %s379 = scalar_lea.vmem %s2, %s378
        $region52: #{dit_block.3} parent=39 // pred_fallthru
          _
      $region40: #{dit_block.3} parent=5 // pred_fallthru
        _
      %p380 = scmp.le.s32.totalorder 1, %s18
      %p381 = scmp.lt.s32.totalorder %s18, 5
      %p382 = pnand %p380, %p381
      %p383 = pneg %p382
      // Predicated region
      $region53: #{dit_block.3} parent=5 // pred_check
        _
      $region54: #{dit_block.3} parent=5 // pred_check_branch
        %385 = sbr.rel (%p382) target = $region56
      $region55: #{dit_block.3} parent=5 // pred_region
        %s386 = ssub.s32 %s18, 1
        %p387 = scmp.lt.s32.totalorder %s27, 1
        %s388 = scalar_select %p387, %s27, 1
        %p389 = scmp.lt.s32.totalorder %s28, 1
        %s390 = scalar_select %p389, %s28, 1
        %s391 = smul.addr %s388, 2
        %s392 = sadd.s32 %s390, %s391
        %s393 = smul.addr %s392, 8
        %s394 = scalar_lea.vmem %s0, %s393
        %p395 = pneg %p58
        %p396 = pneg %p55
        %p397 = scmp.lt.s32.totalorder %s27, 1
        %s398 = scalar_select %p397, %s27, 1
        %s399 = scalar_lea.vmem %s1, %s398
        %p400 = pneg %p84
        %p401 = pneg %p81
        %p402 = scmp.lt.s32.totalorder %s27, 1
        %s403 = scalar_select %p402, %s27, 1
        %s404 = scalar_lea.vmem %s2, %s403
        %p405 = pneg %p110
        %p406 = pneg %p107
        %p407 = pneg %p131
        %p408 = pneg %p128
        %p409 = pneg %p152
        %p410 = pneg %p149
        %p411 = pneg %p173
        %p412 = pneg %p170
        %p413 = pneg %p194
        %p414 = pneg %p191
        %p415 = pneg %p215
        %p416 = pneg %p212
        %p417 = pneg %p236
        %p418 = pneg %p233
        %p419 = pneg %p264
        %p420 = pneg %p261
        %s421 = sand.u32 %s251, 1
        %s422 = sand.u32 %s251, 1
        %s423 = smul.addr %s422, 16
        %s424 = scalar_lea.vmem [#allocation2], %s423
        %p425 = pneg %p292
        %p426 = pneg %p289
        %s427 = sand.u32 %s279, 1
        %s428 = sand.u32 %s279, 1
        %s429 = smul.addr %s428, 16
        %s430 = scalar_lea.vmem [#allocation3], %s429
        %p431 = pneg %p320
        %p432 = pneg %p317
        %s433 = sand.u32 %s307, 1
        %s434 = sand.u32 %s307, 1
        %s435 = smul.addr %s434, 16
        %s436 = scalar_lea.vmem [#allocation4], %s435
        %p437 = scmp.lt.s32.totalorder %s27, 1
        %s438 = scalar_select %p437, %s27, 1
        %p439 = scmp.lt.s32.totalorder %s28, 1
        %s440 = scalar_select %p439, %s28, 1
        %s441 = smul.addr %s438, 2
        %s442 = sadd.s32 %s440, %s441
        %s443 = smul.addr %s442, 8
        %s444 = scalar_lea.vmem %s0, %s443
        %p445 = scmp.lt.s32.totalorder %s27, 1
        %s446 = scalar_select %p445, %s27, 1
        %s447 = scalar_lea.vmem %s1, %s446
        %p448 = scmp.lt.s32.totalorder %s27, 1
        %s449 = scalar_select %p448, %s27, 1
        %s450 = scalar_lea.vmem %s2, %s449
        %v452 = vld [vmem:[%s444] sm:$0xff]
        %vm453 = vcmask 523264
        %v454 = vsel %vm453, %v452, 0.0
        %455 = vadd.xlane.f32.xlu0 %v454
        %v456 = vpop.xlane.xlu0 %455
        %v457 = vrcp.pop 64.0
        %v458 = vmul.f32 64.0, %v457
        %v459 = vsub.f32 1.0, %v458
        %v460 = vmul.f32 %v457, %v459
        %v461 = vadd.f32 %v457, %v460
        %vm462 = vweird.f32 %v457
        %v463 = vsel %vm462, %v457, %v461
        %v464 = vmul.f32 %v456, %v463
        %v465 = vsub.f32 %v452, %v464
        %v466 = vmul.f32 %v465, %v465
        %v467 = vsel %vm453, %v466, 0.0
        %468 = vadd.xlane.f32.xlu0 %v467
        %v469 = vpop.xlane.xlu0 %468
        %v470 = vmul.f32 %v469, %v463
        %v471 = vadd.f32 %v470, 1e-06
        %v472 = vrsqrt.pop %v471
        %v473 = vmul.f32 %v472, %v471
        %v474 = vmul.f32 %v473, %v472
        %v475 = vmul.f32 0.5, %v474
        %v476 = vsub.f32 1.5, %v475
        %v477 = vmul.f32 %v472, %v476
        %vm478 = vweird.f32 %v471
        %vm479 = vweird.f32 %v472
        %vm480 = vmor %vm478, %vm479
        %v481 = vsel %vm480, %v472, %v477
        %v482 = vmul.f32 %v465, %v481
        %v483 = vld [vmem:[%s450] sm:$0x1]
        %v484 = vadd.f32 %v483, 1.0
        %v486 = vperm.slane %v484, 0
        %v488 = vmul.f32 %v482, %v486
        %v489 = vld [vmem:[%s447] sm:$0x1]
        %v491 = vperm.slane %v489, 0
        %v493 = vadd.f32 %v488, %v491
        %v494 = vpack.c.bf16 %v493, %v493
        %v495 = vld [vmem:[%s3] sm:$0xff]
        %v496 = vld [vmem:[%s3 + $0x8] sm:$0xff]
        %v497 = vld [vmem:[%s3 + $0x10] sm:$0xff]
        %v498 = vld [vmem:[%s3 + $0x18] sm:$0xff]
        %v499 = vld [vmem:[%s3 + $0x20] sm:$0xff]
        %v500 = vld [vmem:[%s3 + $0x28] sm:$0xff]
        %v501 = vld [vmem:[%s3 + $0x30] sm:$0xff]
        %v502 = vld [vmem:[%s3 + $0x38] sm:$0xff]
        %v503 = vld [vmem:[%s4] sm:$0x3]
        %v505 = vperm.slane %v503, 0
        %v506 = vperm.slane %v503, 1
        %v517 = vunpack.c.l.b16 %v495
        %v518 = vunpack.c.h.b16 %v495
        %v519 = vunpack.c.l.b16 %v496
        %v520 = vunpack.c.h.b16 %v496
        %v521 = vunpack.c.l.b16 %v497
        %v522 = vunpack.c.h.b16 %v497
        %v523 = vunpack.c.l.b16 %v498
        %v524 = vunpack.c.h.b16 %v498
        %v525 = vunpack.c.l.b16 %v499
        %v526 = vunpack.c.h.b16 %v499
        %v527 = vunpack.c.l.b16 %v500
        %v528 = vunpack.c.h.b16 %v500
        %v529 = vunpack.c.l.b16 %v501
        %v530 = vunpack.c.h.b16 %v501
        %v531 = vunpack.c.l.b16 %v502
        %v532 = vunpack.c.h.b16 %v502
        %v533 = vpack.c.b16 %v519, %v517
        %v534 = vpack.c.b16 %v520, %v518
        %v535 = vpack.c.b16 %v523, %v521
        %v536 = vpack.c.b16 %v524, %v522
        %v537 = vpack.c.b16 %v527, %v525
        %v538 = vpack.c.b16 %v528, %v526
        %v539 = vpack.c.b16 %v531, %v529
        %v540 = vpack.c.b16 %v532, %v530
        %v550 = vsel %vm453, %v494, 0
        %552 = vmatpush.bf16.msra.mxu0 0
        %553 = vmatpush.bf16.msra.mxu0 0
        %554 = vmatpush.bf16.msra.mxu0 0
        %555 = vmatpush.bf16.msra.mxu0 0
        %556 = vmatpush.bf16.msra.mxu0 %v539
        %557 = vmatpush.bf16.msra.mxu0 %v537
        %558 = vmatpush.bf16.msra.mxu0 %v535
        %559 = vmatpush.bf16.msra.mxu0 %v533
        %560 = vmatmul.bf16.gmra.mxu0 %v550
        %v561 = vpop.f32.mrf.mxu0
        %v562 = vadd.f32 %v505, %v561
        %v563 = vpop.f32.mrf.mxu0
        %564 = vdwg.mxu0
        %565 = vmatpush.bf16.msra.mxu0 0
        %566 = vmatpush.bf16.msra.mxu0 0
        %567 = vmatpush.bf16.msra.mxu0 0
        %568 = vmatpush.bf16.msra.mxu0 0
        %569 = vmatpush.bf16.msra.mxu0 %v540
        %570 = vmatpush.bf16.msra.mxu0 %v538
        %571 = vmatpush.bf16.msra.mxu0 %v536
        %572 = vmatpush.bf16.msra.mxu0 %v534
        %573 = vmatmul.bf16.gmra.mxu0 %v550
        %v574 = vpop.f32.mrf.mxu0
        %v575 = vadd.f32 %v506, %v574
        %v576 = vpop.f32.mrf.mxu0
        %577 = vdwg.mxu0
        %v578 = vmul.f32 %v562, %v562
        %v579 = vld [vmem:[%s5] sm:$0xff]
        %v580 = vld [vmem:[%s5 + $0x8] sm:$0xff]
        %v581 = vld [vmem:[%s5 + $0x10] sm:$0xff]
        %v582 = vld [vmem:[%s5 + $0x18] sm:$0xff]
        %v583 = vld [vmem:[%s5 + $0x20] sm:$0xff]
        %v584 = vld [vmem:[%s5 + $0x28] sm:$0xff]
        %v585 = vld [vmem:[%s5 + $0x30] sm:$0xff]
        %v586 = vld [vmem:[%s5 + $0x38] sm:$0xff]
        %v588 = vsel %vm453, %v578, 0
        %590 = vmatpush.msra.mxu0 0.0
        %591 = vmatpush.msra.mxu0 0.0
        %592 = vmatpush.msra.mxu0 0.0
        %593 = vmatpush.msra.mxu0 0.0
        %594 = vmatpush.msra.mxu0 0.0
        %595 = vmatpush.msra.mxu0 0.0
        %596 = vmatpush.msra.mxu0 0.0
        %597 = vmatpush.msra.mxu0 0.0
        %598 = vmatpush.msra.mxu0 %v586
        %599 = vmatpush.msra.mxu0 %v585
        %600 = vmatpush.msra.mxu0 %v584
        %601 = vmatpush.msra.mxu0 %v583
        %602 = vmatpush.msra.mxu0 %v582
        %603 = vmatpush.msra.mxu0 %v581
        %604 = vmatpush.msra.mxu0 %v580
        %605 = vmatpush.msra.mxu0 %v579
        %606 = vmatmul.f32.gmra.mxu0 %v588
        %v607 = vpop.f32.mrf.mxu0
        %v608 = vadd.f32 1e-05, %v607
        %609 = vdwg.mxu0
        %v610 = vrsqrt.pop %v608
        %v611 = vmul.f32 %v610, %v608
        %v612 = vmul.f32 %v611, %v610
        %v613 = vmul.f32 0.5, %v612
        %v614 = vsub.f32 1.5, %v613
        %v615 = vmul.f32 %v610, %v614
        %vm616 = vweird.f32 %v608
        %vm617 = vweird.f32 %v610
        %vm618 = vmor %vm616, %vm617
        %v619 = vsel %vm618, %v610, %v615
        %v620 = vld [vmem:[%s6] sm:$0xf]
        %vm621 = vcmask 31744
        %v623 = vsel %vm621, %v619, 0
        %vm625 = vcmask 1043456
        %v627 = vsel %vm625, %v620, 0
        %629 = vmatpush.msra.mxu0 0.0
        %630 = vmatpush.msra.mxu0 0.0
        %631 = vmatpush.msra.mxu0 0.0
        %632 = vmatpush.msra.mxu0 0.0
        %633 = vmatpush.msra.mxu0 0.0
        %634 = vmatpush.msra.mxu0 0.0
        %635 = vmatpush.msra.mxu0 0.0
        %636 = vmatpush.msra.mxu0 0.0
        %637 = vmatpush.msra.mxu0 0.0
        %638 = vmatpush.msra.mxu0 0.0
        %639 = vmatpush.msra.mxu0 0.0
        %640 = vmatpush.msra.mxu0 0.0
        %641 = vmatpush.msra.mxu0 0.0
        %642 = vmatpush.msra.mxu0 0.0
        %643 = vmatpush.msra.mxu0 0.0
        %644 = vmatpush.msra.mxu0 %v627
        %645 = vmatmul.f32.gmra.mxu0 %v623
        %v646 = vpop.f32.mrf.mxu0
        %v647 = vadd.f32 0.0, %v646
        %648 = vdwg.mxu0
        %v649 = vmul.f32 %v562, %v647
        %v650 = vld [vmem:[%s7] sm:$0x1]
        %v652 = vperm.slane %v650, 0
        %v654 = vmul.f32 %v649, %v652
        %v655 = vpack.c.bf16 %v654, %v654
        %656 = vrot.lane.b32.xlu0 %v578, 64
        %v657 = vpop.permute.xlu0 %656
        %v658 = vsel %vm453, %v657, 0
        %660 = vmatpush.msra.mxu0 0.0
        %661 = vmatpush.msra.mxu0 0.0
        %662 = vmatpush.msra.mxu0 0.0
        %663 = vmatpush.msra.mxu0 0.0
        %664 = vmatpush.msra.mxu0 0.0
        %665 = vmatpush.msra.mxu0 0.0
        %666 = vmatpush.msra.mxu0 0.0
        %667 = vmatpush.msra.mxu0 0.0
        %668 = vmatpush.msra.mxu0 %v586
        %669 = vmatpush.msra.mxu0 %v585
        %670 = vmatpush.msra.mxu0 %v584
        %671 = vmatpush.msra.mxu0 %v583
        %672 = vmatpush.msra.mxu0 %v582
        %673 = vmatpush.msra.mxu0 %v581
        %674 = vmatpush.msra.mxu0 %v580
        %675 = vmatpush.msra.mxu0 %v579
        %676 = vmatmul.f32.gmra.mxu0 %v658
        %v677 = vpop.f32.mrf.mxu0
        %v678 = vadd.f32 1e-05, %v677
        %679 = vdwg.mxu0
        %v680 = vrsqrt.pop %v678
        %v681 = vmul.f32 %v680, %v678
        %v682 = vmul.f32 %v681, %v680
        %v683 = vmul.f32 0.5, %v682
        %v684 = vsub.f32 1.5, %v683
        %v685 = vmul.f32 %v680, %v684
        %vm686 = vweird.f32 %v678
        %vm687 = vweird.f32 %v680
        %vm688 = vmor %vm686, %vm687
        %v689 = vsel %vm688, %v680, %v685
        %v691 = vsel %vm621, %v689, 0
        %693 = vmatpush.msra.mxu0 0.0
        %694 = vmatpush.msra.mxu0 0.0
        %695 = vmatpush.msra.mxu0 0.0
        %696 = vmatpush.msra.mxu0 0.0
        %697 = vmatpush.msra.mxu0 0.0
        %698 = vmatpush.msra.mxu0 0.0
        %699 = vmatpush.msra.mxu0 0.0
        %700 = vmatpush.msra.mxu0 0.0
        %701 = vmatpush.msra.mxu0 0.0
        %702 = vmatpush.msra.mxu0 0.0
        %703 = vmatpush.msra.mxu0 0.0
        %704 = vmatpush.msra.mxu0 0.0
        %705 = vmatpush.msra.mxu0 0.0
        %706 = vmatpush.msra.mxu0 0.0
        %707 = vmatpush.msra.mxu0 0.0
        %708 = vmatpush.msra.mxu0 %v627
        %709 = vmatmul.f32.gmra.mxu0 %v691
        %v710 = vpop.f32.mrf.mxu0
        %v711 = vadd.f32 0.0, %v710
        %712 = vdwg.mxu0
        %714 = vrot.lane.b32.xlu0 %v711, 64
        %v715 = vpop.permute.xlu0 %714
        %v717 = vmul.f32 %v562, %v715
        %v718 = vld [vmem:[%s8] sm:$0x1]
        %v720 = vperm.slane %v718, 0
        %721 = vrot.lane.b32.xlu0 %v720, 64
        %v722 = vpop.permute.xlu0 %721
        %v724 = vmul.f32 %v717, %v722
        %v725 = vpack.c.bf16 %v724, %v724
        %v726 = vpack.c.bf16 %v575, %v575
        %vm727 = vcmask 125952
        %728 = vst.msk [vmem:[%s424] sm:$0xf] %vm727, %v655
        %730 = vrot.lane.b32.xlu0 %v725, 64
        %v731 = vpop.permute.xlu0 %730
        %733 = vst.msk [vmem:[%s430] sm:$0xf] %vm727, %v731
        %734 = vst.msk [vmem:[%s436] sm:$0xf] %vm727, %v726
        %736 = vrot.lane.b32.xlu0 %v655, 112
        %v737 = vpop.permute.xlu0 %736
        %s739 = scalar_lea.vmem %s424, 4 [#allocation2]
        %740 = vst.msk [vmem:[%s739] sm:$0xf] %vm727, %v737
        %741 = vrot.lane.b32.xlu0 %v725, 48
        %v742 = vpop.permute.xlu0 %741
        %s744 = scalar_lea.vmem %s430, 4 [#allocation3]
        %745 = vst.msk [vmem:[%s744] sm:$0xf] %vm727, %v742
        %747 = vrot.lane.b32.xlu0 %v726, 112
        %v748 = vpop.permute.xlu0 %747
        %s750 = scalar_lea.vmem %s436, 4 [#allocation4]
        %751 = vst.msk [vmem:[%s750] sm:$0xf] %vm727, %v748
        %752 = vrot.lane.b32.xlu0 %v655, 96
        %v753 = vpop.permute.xlu0 %752
        %s755 = scalar_lea.vmem %s424, 8 [#allocation2]
        %756 = vst.msk [vmem:[%s755] sm:$0xf] %vm727, %v753
        %757 = vrot.lane.b32.xlu0 %v725, 32
        %v758 = vpop.permute.xlu0 %757
        %s760 = scalar_lea.vmem %s430, 8 [#allocation3]
        %761 = vst.msk [vmem:[%s760] sm:$0xf] %vm727, %v758
        %762 = vrot.lane.b32.xlu0 %v726, 96
        %v763 = vpop.permute.xlu0 %762
        %s765 = scalar_lea.vmem %s436, 8 [#allocation4]
        %766 = vst.msk [vmem:[%s765] sm:$0xf] %vm727, %v763
        %767 = vrot.lane.b32.xlu0 %v655, 80
        %v768 = vpop.permute.xlu0 %767
        %s770 = scalar_lea.vmem %s424, 12 [#allocation2]
        %771 = vst.msk [vmem:[%s770] sm:$0xf] %vm727, %v768
        %772 = vrot.lane.b32.xlu0 %v725, 16
        %v773 = vpop.permute.xlu0 %772
        %s775 = scalar_lea.vmem %s430, 12 [#allocation3]
        %776 = vst.msk [vmem:[%s775] sm:$0xf] %vm727, %v773
        %777 = vrot.lane.b32.xlu0 %v726, 80
        %v778 = vpop.permute.xlu0 %777
        %s780 = scalar_lea.vmem %s436, 12 [#allocation4]
        %781 = vst.msk [vmem:[%s780] sm:$0xf] %vm727, %v778
        %s782 = sand.u32 %s251, 1
        %s783 = sand.u32 %s251, 1
        %s784 = smul.addr %s783, 16
        %s785 = scalar_lea.vmem [#allocation2], %s784
        %s786 = sand.u32 %s279, 1
        %s787 = sand.u32 %s279, 1
        %s788 = smul.addr %s787, 16
        %s789 = scalar_lea.vmem [#allocation3], %s788
        %s790 = sand.u32 %s307, 1
        %s791 = sand.u32 %s307, 1
        %s792 = smul.addr %s791, 16
        %s793 = scalar_lea.vmem [#allocation4], %s792
        // Predicated region
        $region57: #{dit_block.3} parent=55 // pred_check
          %p794 = pneg %p261
        $region58: #{dit_block.3} parent=55 // pred_check_branch
          %796 = sbr.rel (%p794) target = $region60
        $region59: #{dit_block.3} parent=55 // pred_region
          %s797 = smul.addr %s27, 8
          %s798 = sadd.s32 %s28, %s797
          %s799 = smul.addr %s798, 4
          %s800 = scalar_lea.vmem %s9, %s799
          // Predicated region
          $region61: #{dit_block.3} parent=59 // pred_check
            _
          $region62: #{dit_block.3} parent=59 // pred_check_branch
            %802 = sbr.rel (0) target = $region64
          $region63: #{dit_block.3} parent=59 // pred_region
            // Predicated region
            $region65: #{dit_block.3} parent=63 // pred_check
              _
            $region66: #{dit_block.3} parent=63 // pred_check_branch
              %804 = sbr.rel target = $region68
            $region67: #{dit_block.3} parent=63 // pred_region
              // Predicated region
              $region80: #{dit_block.3} parent=67 // pred_check
                _
              $region81: #{dit_block.3} parent=67 // pred_check_branch
                %826 = sbr.rel (0) target = $region83
              $region82: #{dit_block.3} parent=67 // pred_region
                loop: start=0, step=1, limit=1
                $region84: #{dit_block.3} parent=82 // loop_pre_header
                  _
                $region85: #{dit_block.3} parent=82 // loop_header
                  %s828 = sphi 0, %s832
                  %p829 = scmp.ge.s32.totalorder %s828, 1
                  %s833 = sphi %s785, %s785
                  %s834 = sphi %s800, %s800
                $region86: #{dit_block.3} parent=82 // loop_header_branch
                  %831 = sbr.rel (%p829) target = $region90
                $region87: #{dit_block.3} parent=82 // loop_body
                  _
                $region88: #{dit_block.3} parent=82 // loop_footer
                  %s832 = sadd.s32 1, %s828
                $region89: #{dit_block.3} parent=82 // loop_footer_branch
                  %827 = sbr.rel target = $region85
                $region90: #{dit_block.3} parent=82 // loop_exit
                  _
                %s836 = ssub.s32 16, 1
                loop: start=0, step=1, limit=1
                $region91: #{dit_block.3} parent=82 // loop_pre_header
                  _
                $region92: #{dit_block.3} parent=82 // loop_header
                  %s838 = sphi 0, %s842
                  %p839 = scmp.ge.s32.totalorder %s838, 1
                  %s843 = sphi %s785, %s785
                  %s844 = sphi %s800, %s800
                $region93: #{dit_block.3} parent=82 // loop_header_branch
                  %841 = sbr.rel (%p839) target = $region97
                $region94: #{dit_block.3} parent=82 // loop_body
                  %v845 = vld [vmem:[%s843] sm:%s836]
                  %846 = vst [vmem:[%s844] sm:%s836] %v845
                  %v847 = vld [vmem:[%s843 + $0x4] sm:%s836]
                  %848 = vst [vmem:[%s844 + $0x8] sm:%s836] %v847
                  %v849 = vld [vmem:[%s843 + $0x8] sm:%s836]
                  %850 = vst [vmem:[%s844 + $0x10] sm:%s836] %v849
                  %v851 = vld [vmem:[%s843 + $0xc] sm:%s836]
                  %852 = vst [vmem:[%s844 + $0x18] sm:%s836] %v851
                $region95: #{dit_block.3} parent=82 // loop_footer
                  %s842 = sadd.s32 1, %s838
                $region96: #{dit_block.3} parent=82 // loop_footer_branch
                  %837 = sbr.rel target = $region92
                $region97: #{dit_block.3} parent=82 // loop_exit
                  _
              $region83: #{dit_block.3} parent=67 // pred_fallthru
                _
            $region68: #{dit_block.3} parent=63 // pred_fallthru
              _
            // Predicated region
            $region69: #{dit_block.3} parent=63 // pred_check
              _
            $region70: #{dit_block.3} parent=63 // pred_check_branch
              %806 = sbr.rel (0) target = $region72
            $region71: #{dit_block.3} parent=63 // pred_region
              %s808 = ssub.s32 16, 1
              loop: start=0, step=1, limit=1
              $region73: #{dit_block.3} parent=71 // loop_pre_header
                _
              $region74: #{dit_block.3} parent=71 // loop_header
                %s810 = sphi 0, %s814
                %p811 = scmp.ge.s32.totalorder %s810, 1
                %s815 = sphi %s785, %s785
                %s816 = sphi %s800, %s800
              $region75: #{dit_block.3} parent=71 // loop_header_branch
                %813 = sbr.rel (%p811) target = $region79
              $region76: #{dit_block.3} parent=71 // loop_body
                %v817 = vld [vmem:[%s815] sm:%s808]
                %818 = vst [vmem:[%s816] sm:%s808] %v817
                %v819 = vld [vmem:[%s815 + $0x4] sm:%s808]
                %820 = vst [vmem:[%s816 + $0x8] sm:%s808] %v819
                %v821 = vld [vmem:[%s815 + $0x8] sm:%s808]
                %822 = vst [vmem:[%s816 + $0x10] sm:%s808] %v821
                %v823 = vld [vmem:[%s815 + $0xc] sm:%s808]
                %824 = vst [vmem:[%s816 + $0x18] sm:%s808] %v823
              $region77: #{dit_block.3} parent=71 // loop_footer
                %s814 = sadd.s32 1, %s810
              $region78: #{dit_block.3} parent=71 // loop_footer_branch
                %809 = sbr.rel target = $region74
              $region79: #{dit_block.3} parent=71 // loop_exit
                _
            $region72: #{dit_block.3} parent=63 // pred_fallthru
              _
          $region64: #{dit_block.3} parent=59 // pred_fallthru
            _
          %853 = vnop
        $region60: #{dit_block.3} parent=55 // pred_fallthru
          _
        // Predicated region
        $region98: #{dit_block.3} parent=55 // pred_check
          %p854 = pneg %p289
        $region99: #{dit_block.3} parent=55 // pred_check_branch
          %856 = sbr.rel (%p854) target = $region101
        $region100: #{dit_block.3} parent=55 // pred_region
          %s857 = smul.addr %s27, 8
          %s858 = sadd.s32 %s28, %s857
          %s859 = smul.addr %s858, 4
          %s860 = scalar_lea.vmem %s10, %s859
          // Predicated region
          $region102: #{dit_block.3} parent=100 // pred_check
            _
          $region103: #{dit_block.3} parent=100 // pred_check_branch
            %862 = sbr.rel (0) target = $region105
          $region104: #{dit_block.3} parent=100 // pred_region
            // Predicated region
            $region106: #{dit_block.3} parent=104 // pred_check
              _
            $region107: #{dit_block.3} parent=104 // pred_check_branch
              %864 = sbr.rel target = $region109
            $region108: #{dit_block.3} parent=104 // pred_region
              // Predicated region
              $region121: #{dit_block.3} parent=108 // pred_check
                _
              $region122: #{dit_block.3} parent=108 // pred_check_branch
                %886 = sbr.rel (0) target = $region124
              $region123: #{dit_block.3} parent=108 // pred_region
                loop: start=0, step=1, limit=1
                $region125: #{dit_block.3} parent=123 // loop_pre_header
                  _
                $region126: #{dit_block.3} parent=123 // loop_header
                  %s888 = sphi 0, %s892
                  %p889 = scmp.ge.s32.totalorder %s888, 1
                  %s893 = sphi %s789, %s789
                  %s894 = sphi %s860, %s860
                $region127: #{dit_block.3} parent=123 // loop_header_branch
                  %891 = sbr.rel (%p889) target = $region131
                $region128: #{dit_block.3} parent=123 // loop_body
                  _
                $region129: #{dit_block.3} parent=123 // loop_footer
                  %s892 = sadd.s32 1, %s888
                $region130: #{dit_block.3} parent=123 // loop_footer_branch
                  %887 = sbr.rel target = $region126
                $region131: #{dit_block.3} parent=123 // loop_exit
                  _
                %s896 = ssub.s32 16, 1
                loop: start=0, step=1, limit=1
                $region132: #{dit_block.3} parent=123 // loop_pre_header
                  _
                $region133: #{dit_block.3} parent=123 // loop_header
                  %s898 = sphi 0, %s902
                  %p899 = scmp.ge.s32.totalorder %s898, 1
                  %s903 = sphi %s789, %s789
                  %s904 = sphi %s860, %s860
                $region134: #{dit_block.3} parent=123 // loop_header_branch
                  %901 = sbr.rel (%p899) target = $region138
                $region135: #{dit_block.3} parent=123 // loop_body
                  %v905 = vld [vmem:[%s903] sm:%s896]
                  %906 = vst [vmem:[%s904] sm:%s896] %v905
                  %v907 = vld [vmem:[%s903 + $0x4] sm:%s896]
                  %908 = vst [vmem:[%s904 + $0x8] sm:%s896] %v907
                  %v909 = vld [vmem:[%s903 + $0x8] sm:%s896]
                  %910 = vst [vmem:[%s904 + $0x10] sm:%s896] %v909
                  %v911 = vld [vmem:[%s903 + $0xc] sm:%s896]
                  %912 = vst [vmem:[%s904 + $0x18] sm:%s896] %v911
                $region136: #{dit_block.3} parent=123 // loop_footer
                  %s902 = sadd.s32 1, %s898
                $region137: #{dit_block.3} parent=123 // loop_footer_branch
                  %897 = sbr.rel target = $region133
                $region138: #{dit_block.3} parent=123 // loop_exit
                  _
              $region124: #{dit_block.3} parent=108 // pred_fallthru
                _
            $region109: #{dit_block.3} parent=104 // pred_fallthru
              _
            // Predicated region
            $region110: #{dit_block.3} parent=104 // pred_check
              _
            $region111: #{dit_block.3} parent=104 // pred_check_branch
              %866 = sbr.rel (0) target = $region113
            $region112: #{dit_block.3} parent=104 // pred_region
              %s868 = ssub.s32 16, 1
              loop: start=0, step=1, limit=1
              $region114: #{dit_block.3} parent=112 // loop_pre_header
                _
              $region115: #{dit_block.3} parent=112 // loop_header
                %s870 = sphi 0, %s874
                %p871 = scmp.ge.s32.totalorder %s870, 1
                %s875 = sphi %s789, %s789
                %s876 = sphi %s860, %s860
              $region116: #{dit_block.3} parent=112 // loop_header_branch
                %873 = sbr.rel (%p871) target = $region120
              $region117: #{dit_block.3} parent=112 // loop_body
                %v877 = vld [vmem:[%s875] sm:%s868]
                %878 = vst [vmem:[%s876] sm:%s868] %v877
                %v879 = vld [vmem:[%s875 + $0x4] sm:%s868]
                %880 = vst [vmem:[%s876 + $0x8] sm:%s868] %v879
                %v881 = vld [vmem:[%s875 + $0x8] sm:%s868]
                %882 = vst [vmem:[%s876 + $0x10] sm:%s868] %v881
                %v883 = vld [vmem:[%s875 + $0xc] sm:%s868]
                %884 = vst [vmem:[%s876 + $0x18] sm:%s868] %v883
              $region118: #{dit_block.3} parent=112 // loop_footer
                %s874 = sadd.s32 1, %s870
              $region119: #{dit_block.3} parent=112 // loop_footer_branch
                %869 = sbr.rel target = $region115
              $region120: #{dit_block.3} parent=112 // loop_exit
                _
            $region113: #{dit_block.3} parent=104 // pred_fallthru
              _
          $region105: #{dit_block.3} parent=100 // pred_fallthru
            _
          %913 = vnop
        $region101: #{dit_block.3} parent=55 // pred_fallthru
          _
        // Predicated region
        $region139: #{dit_block.3} parent=55 // pred_check
          %p914 = pneg %p317
        $region140: #{dit_block.3} parent=55 // pred_check_branch
          %916 = sbr.rel (%p914) target = $region142
        $region141: #{dit_block.3} parent=55 // pred_region
          %s917 = smul.addr %s27, 8
          %s918 = sadd.s32 %s28, %s917
          %s919 = smul.addr %s918, 4
          %s920 = scalar_lea.vmem %s11, %s919
          // Predicated region
          $region143: #{dit_block.3} parent=141 // pred_check
            _
          $region144: #{dit_block.3} parent=141 // pred_check_branch
            %922 = sbr.rel (0) target = $region146
          $region145: #{dit_block.3} parent=141 // pred_region
            // Predicated region
            $region147: #{dit_block.3} parent=145 // pred_check
              _
            $region148: #{dit_block.3} parent=145 // pred_check_branch
              %924 = sbr.rel target = $region150
            $region149: #{dit_block.3} parent=145 // pred_region
              // Predicated region
              $region162: #{dit_block.3} parent=149 // pred_check
                _
              $region163: #{dit_block.3} parent=149 // pred_check_branch
                %946 = sbr.rel (0) target = $region165
              $region164: #{dit_block.3} parent=149 // pred_region
                loop: start=0, step=1, limit=1
                $region166: #{dit_block.3} parent=164 // loop_pre_header
                  _
                $region167: #{dit_block.3} parent=164 // loop_header
                  %s948 = sphi 0, %s952
                  %p949 = scmp.ge.s32.totalorder %s948, 1
                  %s953 = sphi %s793, %s793
                  %s954 = sphi %s920, %s920
                $region168: #{dit_block.3} parent=164 // loop_header_branch
                  %951 = sbr.rel (%p949) target = $region172
                $region169: #{dit_block.3} parent=164 // loop_body
                  _
                $region170: #{dit_block.3} parent=164 // loop_footer
                  %s952 = sadd.s32 1, %s948
                $region171: #{dit_block.3} parent=164 // loop_footer_branch
                  %947 = sbr.rel target = $region167
                $region172: #{dit_block.3} parent=164 // loop_exit
                  _
                %s956 = ssub.s32 16, 1
                loop: start=0, step=1, limit=1
                $region173: #{dit_block.3} parent=164 // loop_pre_header
                  _
                $region174: #{dit_block.3} parent=164 // loop_header
                  %s958 = sphi 0, %s962
                  %p959 = scmp.ge.s32.totalorder %s958, 1
                  %s963 = sphi %s793, %s793
                  %s964 = sphi %s920, %s920
                $region175: #{dit_block.3} parent=164 // loop_header_branch
                  %961 = sbr.rel (%p959) target = $region179
                $region176: #{dit_block.3} parent=164 // loop_body
                  %v965 = vld [vmem:[%s963] sm:%s956]
                  %966 = vst [vmem:[%s964] sm:%s956] %v965
                  %v967 = vld [vmem:[%s963 + $0x4] sm:%s956]
                  %968 = vst [vmem:[%s964 + $0x8] sm:%s956] %v967
                  %v969 = vld [vmem:[%s963 + $0x8] sm:%s956]
                  %970 = vst [vmem:[%s964 + $0x10] sm:%s956] %v969
                  %v971 = vld [vmem:[%s963 + $0xc] sm:%s956]
                  %972 = vst [vmem:[%s964 + $0x18] sm:%s956] %v971
                $region177: #{dit_block.3} parent=164 // loop_footer
                  %s962 = sadd.s32 1, %s958
                $region178: #{dit_block.3} parent=164 // loop_footer_branch
                  %957 = sbr.rel target = $region174
                $region179: #{dit_block.3} parent=164 // loop_exit
                  _
              $region165: #{dit_block.3} parent=149 // pred_fallthru
                _
            $region150: #{dit_block.3} parent=145 // pred_fallthru
              _
            // Predicated region
            $region151: #{dit_block.3} parent=145 // pred_check
              _
            $region152: #{dit_block.3} parent=145 // pred_check_branch
              %926 = sbr.rel (0) target = $region154
            $region153: #{dit_block.3} parent=145 // pred_region
              %s928 = ssub.s32 16, 1
              loop: start=0, step=1, limit=1
              $region155: #{dit_block.3} parent=153 // loop_pre_header
                _
              $region156: #{dit_block.3} parent=153 // loop_header
                %s930 = sphi 0, %s934
                %p931 = scmp.ge.s32.totalorder %s930, 1
                %s935 = sphi %s793, %s793
                %s936 = sphi %s920, %s920
              $region157: #{dit_block.3} parent=153 // loop_header_branch
                %933 = sbr.rel (%p931) target = $region161
              $region158: #{dit_block.3} parent=153 // loop_body
                %v937 = vld [vmem:[%s935] sm:%s928]
                %938 = vst [vmem:[%s936] sm:%s928] %v937
                %v939 = vld [vmem:[%s935 + $0x4] sm:%s928]
                %940 = vst [vmem:[%s936 + $0x8] sm:%s928] %v939
                %v941 = vld [vmem:[%s935 + $0x8] sm:%s928]
                %942 = vst [vmem:[%s936 + $0x10] sm:%s928] %v941
                %v943 = vld [vmem:[%s935 + $0xc] sm:%s928]
                %944 = vst [vmem:[%s936 + $0x18] sm:%s928] %v943
              $region159: #{dit_block.3} parent=153 // loop_footer
                %s934 = sadd.s32 1, %s930
              $region160: #{dit_block.3} parent=153 // loop_footer_branch
                %929 = sbr.rel target = $region156
              $region161: #{dit_block.3} parent=153 // loop_exit
                _
            $region154: #{dit_block.3} parent=145 // pred_fallthru
              _
          $region146: #{dit_block.3} parent=141 // pred_fallthru
            _
          %973 = vnop
        $region142: #{dit_block.3} parent=55 // pred_fallthru
          _
      $region56: #{dit_block.3} parent=5 // pred_fallthru
        _
      %p974 = scmp.le.s32.totalorder 2, %s18
      // Predicated region
      $region180: #{dit_block.3} parent=5 // pred_check
        %p975 = pneg %p974
      $region181: #{dit_block.3} parent=5 // pred_check_branch
        %977 = sbr.rel (%p975) target = $region183
      $region182: #{dit_block.3} parent=5 // pred_region
        %s978 = ssub.s32 %s18, 2
        // Predicated region
        $region184: #{dit_block.3} parent=182 // pred_check
          %p979 = pneg %p267
        $region185: #{dit_block.3} parent=182 // pred_check_branch
          %981 = sbr.rel (%p979) target = $region187
        $region186: #{dit_block.3} parent=182 // pred_region
          %s982 = sand.u32 %s252, 1
          %s983 = sand.u32 %s252, 1
          %s984 = smul.addr %s983, 16
          %s985 = scalar_lea.vmem [#allocation2], %s984
        $region187: #{dit_block.3} parent=182 // pred_fallthru
          _
        // Predicated region
        $region188: #{dit_block.3} parent=182 // pred_check
          %p986 = pneg %p295
        $region189: #{dit_block.3} parent=182 // pred_check_branch
          %988 = sbr.rel (%p986) target = $region191
        $region190: #{dit_block.3} parent=182 // pred_region
          %s989 = sand.u32 %s280, 1
          %s990 = sand.u32 %s280, 1
          %s991 = smul.addr %s990, 16
          %s992 = scalar_lea.vmem [#allocation3], %s991
        $region191: #{dit_block.3} parent=182 // pred_fallthru
          _
        // Predicated region
        $region192: #{dit_block.3} parent=182 // pred_check
          %p993 = pneg %p323
        $region193: #{dit_block.3} parent=182 // pred_check_branch
          %995 = sbr.rel (%p993) target = $region195
        $region194: #{dit_block.3} parent=182 // pred_region
          %s996 = sand.u32 %s308, 1
          %s997 = sand.u32 %s308, 1
          %s998 = smul.addr %s997, 16
          %s999 = scalar_lea.vmem [#allocation4], %s998
        $region195: #{dit_block.3} parent=182 // pred_fallthru
          _
      $region183: #{dit_block.3} parent=5 // pred_fallthru
        _
    $region6: #{dit_block.3} parent=1 // loop_footer
      %s22 = sadd.s32 1, %s18
    $region7: #{dit_block.3} parent=1 // loop_footer_branch
      %17 = sbr.rel target = $region3
    $region8: #{dit_block.3} parent=1 // loop_exit
      _

</llo_original>
